<compile_context>
chip_gen: v6e
topology: v6e:2x2x1
jax: 0.10.0
libtpu: 0.0.40
codegen_flags: <defaults>
</compile_context>

<pallas_src>
import math

import jax
import jax.numpy as jnp
from jax import lax
from jax.experimental import pallas as pl
from jax.experimental.pallas import tpu as pltpu


def fold_bn(bn, eps=1e-5):
    gamma, beta, mean, var = bn
    scale = gamma / jnp.sqrt(var + eps)
    return scale, beta - mean * scale


# ---------------------------------------------------------------------------
# Fused kernel factory.
# ---------------------------------------------------------------------------
def _make_fused_kernel(cfg):
    nd, H, W = cfg["nd"], cfg["H"], cfg["W"]
    in_c, out_c, t = cfg["in_c"], cfg["out_c"], cfg["t"]
    pad, dil = cfg["pad"], cfg["dil"]
    Ho, Wo = cfg["Ho"], cfg["Wo"]
    stride2 = cfg["stride2"]
    shortcut_conv = cfg["shortcut_conv"]
    mm_dtype = cfg["mm_dtype"]
    M = nd * H * W
    M2 = nd * Ho * Wo

    def pw(a, w):
        """(M,K) @ (K,Cout) -> (M,Cout) f32. MXU when K is tile-aligned, else VPU FMAs."""
        K = w.shape[0]
        if K % 8 == 0:
            return jnp.dot(a.astype(mm_dtype), w.astype(mm_dtype),
                           preferred_element_type=jnp.float32)
        acc = a[:, 0:1] * w[0:1, :]
        for c in range(1, K):
            acc = acc + a[:, c:c + 1] * w[c:c + 1, :]
        return acc

    def depthwise(x1, kv, b1, pad_ref):
        """Stride-1 3x3 depthwise (dilation `dil`, zero pad `pad`) + folded-BN bias + ReLU."""
        pad_ref[...] = jnp.zeros(pad_ref.shape, jnp.float32)
        pad_ref[:, pad:pad + H, pad:pad + W, :] = x1
        acc = jnp.zeros((nd, H, W, t), jnp.float32)
        # kv is read once (hoisted) outside this loop; each tap is a distinct (1,t) row.
        for kh in range(3):
            for kw in range(3):
                patch = pad_ref[:, kh * dil:kh * dil + H, kw * dil:kw * dil + W, :]
                acc = acc + patch * kv[3 * kh + kw:3 * kh + kw + 1, :]
        return jnp.maximum(acc + b1, 0.0)

    def maxpool3x3(xv, mp_ref):
        """Stride-1 3x3 max pool with -inf padding; xv: (nd,H,W,in_c)."""
        mp_ref[...] = jnp.full(mp_ref.shape, -jnp.inf, jnp.float32)
        mp_ref[:, 1:1 + H, 1:1 + W, :] = xv
        m = mp_ref[:, 0:H, 0:W, :]
        for kh in range(3):
            for kw in range(3):
                if kh == 0 and kw == 0:
                    continue
                m = jnp.maximum(m, mp_ref[:, kh:kh + H, kw:kw + W, :])
        return m

    def subsample2(v, sub_ref):
        """Spatial stride-2 subsample of a stride-1 (nd,H,W,C) map -> (nd,Ho,Wo,C).
        Rows via a layout-free leading-dim split; columns via per-column copies
        through a VMEM scratch (everything stays on-chip)."""
        C = v.shape[-1]
        vh = v.reshape(nd, Ho, 2, W, C)[:, :, 0]          # even rows
        for j in range(Wo):                               # even columns
            sub_ref[:, :, j:j + 1, :] = vh[:, :, 2 * j:2 * j + 1, :]
        return sub_ref[...]

    if stride2:
        def kernel(x_ref, w0_ref, b0_ref, w1_ref, b1_ref,
                   w2a_ref, w2b_ref, b2_ref, o_ref,
                   dw_pad, mp_pad, sub_dw, sub_mp):
            xv = x_ref[...]                                         # (nd,H,W,in_c)
            xm = xv.reshape(M, in_c)
            x1 = jnp.maximum(pw(xm, w0_ref[...]) + b0_ref[...], 0.0)
            y = depthwise(x1.reshape(nd, H, W, t), w1_ref[...], b1_ref[...], dw_pad)
            x2 = subsample2(y, sub_dw)                              # (nd,Ho,Wo,t)
            x0 = subsample2(maxpool3x3(xv, mp_pad), sub_mp)         # (nd,Ho,Wo,in_c)
            # cat((x0, x2), channel) @ w2  ==  x0 @ w2[:in_c] + x2 @ w2[in_c:]
            out = (pw(x2.reshape(M2, t), w2b_ref[...])
                   + pw(x0.reshape(M2, in_c), w2a_ref[...])
                   + b2_ref[...])
            o_ref[...] = out.reshape(nd, Ho, Wo, out_c)
    elif shortcut_conv:
        def kernel(x_ref, w0_ref, b0_ref, w1_ref, b1_ref,
                   w2_ref, b2_ref, ws_ref, bs_ref, o_ref, dw_pad):
            xm = x_ref[...].reshape(M, in_c)
            x1 = jnp.maximum(pw(xm, w0_ref[...]) + b0_ref[...], 0.0)
            y = depthwise(x1.reshape(nd, H, W, t), w1_ref[...], b1_ref[...], dw_pad)
            res = pw(xm, ws_ref[...]) + bs_ref[...]
            out = pw(y.reshape(M, t), w2_ref[...]) + b2_ref[...] + res
            o_ref[...] = out.reshape(nd, H, W, out_c)
    else:
        def kernel(x_ref, w0_ref, b0_ref, w1_ref, b1_ref,
                   w2_ref, b2_ref, o_ref, dw_pad):
            xm = x_ref[...].reshape(M, in_c)
            x1 = jnp.maximum(pw(xm, w0_ref[...]) + b0_ref[...], 0.0)
            y = depthwise(x1.reshape(nd, H, W, t), w1_ref[...], b1_ref[...], dw_pad)
            out = pw(y.reshape(M, t), w2_ref[...]) + b2_ref[...] + xm   # identity shortcut
            o_ref[...] = out.reshape(nd, H, W, out_c)

    return kernel


# ---------------------------------------------------------------------------
# Parameters (deterministic synthetic init) and forward pass.
# ---------------------------------------------------------------------------
def init_bottleneck_params(key, in_c, out_c, stride, t, second):
    ks = iter(jax.random.split(key, 32))

    def conv_w(cin, cout):
        return jax.random.normal(next(ks), (cin, cout), jnp.float32) / math.sqrt(cin)

    def bn(c):
        g = 1.0 + 0.1 * jax.random.normal(next(ks), (c,), jnp.float32)
        b = 0.1 * jax.random.normal(next(ks), (c,), jnp.float32)
        m = 0.1 * jax.random.normal(next(ks), (c,), jnp.float32)
        v = jax.random.uniform(next(ks), (c,), jnp.float32, minval=0.5, maxval=1.5)
        return (g, b, m, v)

    p = {}
    p["w0"] = conv_w(in_c, t)                                         # 1x1x1 in_c -> t
    p["bn0"] = bn(t)
    p["w1"] = jax.random.normal(next(ks), (3, 3, t), jnp.float32) / 3.0   # depthwise
    p["bn1"] = bn(t)
    c2_in = t if stride == (1, 1, 1) else t + in_c
    p["w2"] = conv_w(c2_in, out_c)                                    # 1x1x1 -> out_c
    p["bn2"] = bn(out_c)
    if stride == (1, 1, 1) and in_c != out_c:
        p["ws"] = conv_w(in_c, out_c)                                 # shortcut conv
        p["bns"] = bn(out_c)
    return p


def bottleneck_forward(params, x, *, in_c, out_c, stride, t, second,
                       mm_dtype=jnp.float32):
    """x: NCDHW float32 (PyTorch layout). Returns NCDHW."""
    assert stride in ((1, 1, 1), (1, 2, 2)), "only (1,1,1)/(1,2,2) strides supported"
    N, C, D, H, W = x.shape
    assert C == in_c
    ND = N * D
    stride2 = stride != (1, 1, 1)
    if stride2:
        assert H % 2 == 0 and W % 2 == 0
        Ho, Wo = H // 2, W // 2
    else:
        Ho, Wo = H, W
    pad, dil = (2, 2) if second else (1, 1)

    # channels-last activation layout (ND, H, W, C); true channel count, no lane padding.
    x_cl = jnp.transpose(x, (0, 2, 3, 4, 1)).reshape(ND, H, W, in_c)

    # Fold BN (inference) into the conv weights on the host.
    s0, b0 = fold_bn(params["bn0"])
    w0f = params["w0"] * s0[None, :]
    s1, b1 = fold_bn(params["bn1"])
    w1f = (params["w1"] * s1).reshape(9, t)
    s2, b2 = fold_bn(params["bn2"])
    w2f = params["w2"] * s2[None, :]

    # Grid over bands of N*D: keep >= 2 parallel steps (v7x megacore) with modest band size.
    nd_tile, grid_n = ND, 1
    while nd_tile % 2 == 0 and (grid_n < 2 or nd_tile > 8):
        nd_tile //= 2
        grid_n *= 2
    # NOTE: for real MobileNet shapes (large H*W*t) also tile H into row bands with a halo.

    cfg = dict(nd=nd_tile, H=H, W=W, in_c=in_c, out_c=out_c, t=t,
               pad=pad, dil=dil, stride2=stride2, Ho=Ho, Wo=Wo,
               shortcut_conv=(not stride2) and (in_c != out_c),
               mm_dtype=mm_dtype)

    def band(i):
        return (i, 0, 0, 0)

    def fixed2(i):
        return (0, 0)

    inputs = [x_cl, w0f, b0.reshape(1, t), w1f, b1.reshape(1, t)]
    in_specs = [
        pl.BlockSpec((nd_tile, H, W, in_c), band),
        pl.BlockSpec((in_c, t), fixed2),
        pl.BlockSpec((1, t), fixed2),
        pl.BlockSpec((9, t), fixed2),
        pl.BlockSpec((1, t), fixed2),
    ]
    scratch = [pltpu.VMEM((nd_tile, H + 2 * pad, W + 2 * pad, t), jnp.float32)]

    if stride2:
        inputs += [w2f[:in_c], w2f[in_c:], b2.reshape(1, out_c)]
        in_specs += [
            pl.BlockSpec((in_c, out_c), fixed2),
            pl.BlockSpec((t, out_c), fixed2),
            pl.BlockSpec((1, out_c), fixed2),
        ]
        scratch += [
            pltpu.VMEM((nd_tile, H + 2, W + 2, in_c), jnp.float32),   # maxpool pad buf
            pltpu.VMEM((nd_tile, Ho, Wo, t), jnp.float32),            # subsampled dw
            pltpu.VMEM((nd_tile, Ho, Wo, in_c), jnp.float32),         # subsampled pool
        ]
    else:
        inputs += [w2f, b2.reshape(1, out_c)]
        in_specs += [
            pl.BlockSpec((t, out_c), fixed2),
            pl.BlockSpec((1, out_c), fixed2),
        ]
        if in_c != out_c:
            ss, bs = fold_bn(params["bns"])
            wsf = params["ws"] * ss[None, :]
            inputs += [wsf, bs.reshape(1, out_c)]
            in_specs += [
                pl.BlockSpec((in_c, out_c), fixed2),
                pl.BlockSpec((1, out_c), fixed2),
            ]

    out = pl.pallas_call(
        _make_fused_kernel(cfg),
        out_shape=jax.ShapeDtypeStruct((ND, Ho, Wo, out_c), jnp.float32),
        grid_spec=pltpu.PrefetchScalarGridSpec(
            num_scalar_prefetch=0,
            grid=(grid_n,),
            in_specs=in_specs,
            out_specs=pl.BlockSpec((nd_tile, Ho, Wo, out_c), band),
            scratch_shapes=scratch,
        ),
        compiler_params=pltpu.CompilerParams(
            dimension_semantics=("parallel",),
            vmem_limit_bytes=48 * 1024 * 1024,
        ),
    )(*inputs)

    out = out.reshape(N, D, Ho, Wo, out_c)
    return jnp.transpose(out, (0, 4, 1, 2, 3))                        # back to NCDHW


# ---------------------------------------------------------------------------
# Pure-JAX reference (correctness check only).
# ---------------------------------------------------------------------------
def bottleneck_ref(params, x, *, in_c, out_c, stride, t, second):
    N, C, D, H, W = x.shape
    x_cl = jnp.transpose(x, (0, 2, 3, 4, 1)).reshape(N * D, H, W, in_c)

    def pw(z, w, bn, relu):
        s, b = fold_bn(bn)
        y = jnp.einsum('...i,io->...o', z, w, precision=lax.Precision.HIGHEST)
        y = y * s + b
        return jnp.maximum(y, 0.0) if relu else y

    x1 = pw(x_cl, params["w0"], params["bn0"], True)
    kern = params["w1"].reshape(3, 3, 1, t)
    if second:
        strides, padp, dil = (1, 1), 2, 2
    else:
        strides, padp, dil = (stride[1], stride[2]), 1, 1
    y = lax.conv_general_dilated(
        x1, kern, window_strides=strides,
        padding=((padp, padp), (padp, padp)), rhs_dilation=(dil, dil),
        dimension_numbers=('NHWC', 'HWIO', 'NHWC'),
        feature_group_count=t, precision=lax.Precision.HIGHEST)
    s1, b1 = fold_bn(params["bn1"])
    x2 = jnp.maximum(y * s1 + b1, 0.0)

    if stride != (1, 1, 1):
        x0 = lax.reduce_window(x_cl, -jnp.inf, lax.max,
                               (1, 3, 3, 1), (1, 2, 2, 1),
                               ((0, 0), (1, 1), (1, 1), (0, 0)))
        x2 = jnp.concatenate([x0, x2], axis=-1)
    out = pw(x2, params["w2"], params["bn2"], False)
    if stride == (1, 1, 1):
        if in_c != out_c:
            out = out + pw(x_cl, params["ws"], params["bns"], False)
        else:
            out = out + x_cl
    Ho, Wo = out.shape[1], out.shape[2]
    return jnp.transpose(out.reshape(N, D, Ho, Wo, out_c), (0, 4, 1, 2, 3))


if __name__ == "__main__":
    key = jax.random.PRNGKey(0)
    kx, k1, k2, k3 = jax.random.split(key, 4)
    x = jax.random.normal(kx, (2, 4, 4, 16, 16), jnp.float32)   # NCDHW

    configs = [
        dict(in_c=4, out_c=8, stride=(1, 1, 1), t=16, second=False),  # conv shortcut
        dict(in_c=4, out_c=8, stride=(1, 2, 2), t=16, second=False),  # maxpool + cat
        dict(in_c=4, out_c=4, stride=(1, 1, 1), t=16, second=True),   # dilated dw, identity
    ]
    for cfg, kk in zip(configs, (k1, k2, k3)):
        params = init_bottleneck_params(kk, cfg["in_c"], cfg["out_c"],
                                        cfg["stride"], cfg["t"], cfg["second"])
        out = bottleneck_forward(params, x, **cfg)
        out = jax.block_until_ready(out)
        ref = bottleneck_ref(params, x, **cfg)
        assert out.shape == ref.shape, (out.shape, ref.shape)
        max_err = float(jnp.max(jnp.abs(out - ref)))
        assert jnp.allclose(out, ref, rtol=5e-2, atol=5e-2), max_err

    print("KERNEL_OK")
</pallas_src>

<mosaic_0001>
module attributes {stable_mosaic.version = 11 : i64} {
  func.func @kernel(%arg0: i32, %arg1: memref<4x16x16x4xf32, #tpu.memory_space<vmem>>, %arg2: memref<4x16xf32, #tpu.memory_space<vmem>>, %arg3: memref<1x16xf32, #tpu.memory_space<vmem>>, %arg4: memref<9x16xf32, #tpu.memory_space<vmem>>, %arg5: memref<1x16xf32, #tpu.memory_space<vmem>>, %arg6: memref<16x8xf32, #tpu.memory_space<vmem>>, %arg7: memref<1x8xf32, #tpu.memory_space<vmem>>, %arg8: memref<4x8xf32, #tpu.memory_space<vmem>>, %arg9: memref<1x8xf32, #tpu.memory_space<vmem>>, %arg10: memref<4x16x16x8xf32, #tpu.memory_space<vmem>>, %arg11: memref<4x18x18x16xf32, #tpu.memory_space<vmem>>) attributes {dimension_semantics = [#tpu.dimension_semantics<parallel>], iteration_bounds = array<i64: 2>, scalar_prefetch = 0 : i64, scratch_operands = 1 : i64, tpu.core_type = #tpu.core_type<tc>, window_params = [{transform_indices = @transform_0, window_bounds = array<i64: 4, 16, 16, 4>}, {pipeline_mode = #tpu.pipeline_mode<synchronous>, transform_indices = @transform_1, window_bounds = array<i64: 4, 16>}, {pipeline_mode = #tpu.pipeline_mode<synchronous>, transform_indices = @transform_2, window_bounds = array<i64: 1, 16>}, {pipeline_mode = #tpu.pipeline_mode<synchronous>, transform_indices = @transform_3, window_bounds = array<i64: 9, 16>}, {pipeline_mode = #tpu.pipeline_mode<synchronous>, transform_indices = @transform_4, window_bounds = array<i64: 1, 16>}, {pipeline_mode = #tpu.pipeline_mode<synchronous>, transform_indices = @transform_5, window_bounds = array<i64: 16, 8>}, {pipeline_mode = #tpu.pipeline_mode<synchronous>, transform_indices = @transform_6, window_bounds = array<i64: 1, 8>}, {pipeline_mode = #tpu.pipeline_mode<synchronous>, transform_indices = @transform_7, window_bounds = array<i64: 4, 8>}, {pipeline_mode = #tpu.pipeline_mode<synchronous>, transform_indices = @transform_8, window_bounds = array<i64: 1, 8>}, {transform_indices = @transform_9, window_bounds = array<i64: 4, 16, 16, 8>}]} {
    %c0 = arith.constant 0 : index
    %c0_0 = arith.constant 0 : index
    %c0_1 = arith.constant 0 : index
    %c0_2 = arith.constant 0 : index
    %0 = vector.load %arg1[%c0, %c0_0, %c0_1, %c0_2] : memref<4x16x16x4xf32, #tpu.memory_space<vmem>>, vector<4x16x16x4xf32>
    %1 = vector.shape_cast %0 : vector<4x16x16x4xf32> to vector<1024x4xf32>
    %c0_3 = arith.constant 0 : index
    %c0_4 = arith.constant 0 : index
    %2 = vector.load %arg2[%c0_3, %c0_4] : memref<4x16xf32, #tpu.memory_space<vmem>>, vector<4x16xf32>
    %3 = vector.extract_strided_slice %1 {offsets = [0, 0], sizes = [1024, 1], strides = [1, 1]} : vector<1024x4xf32> to vector<1024x1xf32>
    %4 = vector.extract_strided_slice %2 {offsets = [0, 0], sizes = [1, 16], strides = [1, 1]} : vector<4x16xf32> to vector<1x16xf32>
    %5 = vector.broadcast %3 : vector<1024x1xf32> to vector<1024x16xf32>
    %6 = vector.broadcast %4 : vector<1x16xf32> to vector<1024x16xf32>
    %7 = arith.mulf %5, %6 : vector<1024x16xf32>
    %8 = vector.extract_strided_slice %1 {offsets = [0, 1], sizes = [1024, 1], strides = [1, 1]} : vector<1024x4xf32> to vector<1024x1xf32>
    %9 = vector.extract_strided_slice %2 {offsets = [1, 0], sizes = [1, 16], strides = [1, 1]} : vector<4x16xf32> to vector<1x16xf32>
    %10 = vector.broadcast %8 : vector<1024x1xf32> to vector<1024x16xf32>
    %11 = vector.broadcast %9 : vector<1x16xf32> to vector<1024x16xf32>
    %12 = arith.mulf %10, %11 : vector<1024x16xf32>
    %13 = arith.addf %7, %12 : vector<1024x16xf32>
    %14 = vector.extract_strided_slice %1 {offsets = [0, 2], sizes = [1024, 1], strides = [1, 1]} : vector<1024x4xf32> to vector<1024x1xf32>
    %15 = vector.extract_strided_slice %2 {offsets = [2, 0], sizes = [1, 16], strides = [1, 1]} : vector<4x16xf32> to vector<1x16xf32>
    %16 = vector.broadcast %14 : vector<1024x1xf32> to vector<1024x16xf32>
    %17 = vector.broadcast %15 : vector<1x16xf32> to vector<1024x16xf32>
    %18 = arith.mulf %16, %17 : vector<1024x16xf32>
    %19 = arith.addf %13, %18 : vector<1024x16xf32>
    %20 = vector.extract_strided_slice %1 {offsets = [0, 3], sizes = [1024, 1], strides = [1, 1]} : vector<1024x4xf32> to vector<1024x1xf32>
    %21 = vector.extract_strided_slice %2 {offsets = [3, 0], sizes = [1, 16], strides = [1, 1]} : vector<4x16xf32> to vector<1x16xf32>
    %22 = vector.broadcast %20 : vector<1024x1xf32> to vector<1024x16xf32>
    %23 = vector.broadcast %21 : vector<1x16xf32> to vector<1024x16xf32>
    %24 = arith.mulf %22, %23 : vector<1024x16xf32>
    %25 = arith.addf %19, %24 : vector<1024x16xf32>
    %c0_5 = arith.constant 0 : index
    %c0_6 = arith.constant 0 : index
    %26 = vector.load %arg3[%c0_5, %c0_6] : memref<1x16xf32, #tpu.memory_space<vmem>>, vector<1x16xf32>
    %27 = vector.broadcast %26 : vector<1x16xf32> to vector<1024x16xf32>
    %28 = arith.addf %25, %27 : vector<1024x16xf32>
    %cst = arith.constant 0.000000e+00 : f32
    %29 = vector.broadcast %cst : f32 to vector<1024x16xf32>
    %30 = arith.maximumf %28, %29 : vector<1024x16xf32>
    %31 = vector.shape_cast %30 : vector<1024x16xf32> to vector<4x16x16x16xf32>
    %c0_7 = arith.constant 0 : index
    %c0_8 = arith.constant 0 : index
    %32 = vector.load %arg4[%c0_7, %c0_8] : memref<9x16xf32, #tpu.memory_space<vmem>>, vector<9x16xf32>
    %c0_9 = arith.constant 0 : index
    %c0_10 = arith.constant 0 : index
    %33 = vector.load %arg5[%c0_9, %c0_10] : memref<1x16xf32, #tpu.memory_space<vmem>>, vector<1x16xf32>
    %cst_11 = arith.constant 0.000000e+00 : f32
    %34 = vector.broadcast %cst_11 : f32 to vector<4x18x18x16xf32>
    %c0_12 = arith.constant 0 : index
    %c0_13 = arith.constant 0 : index
    %c0_14 = arith.constant 0 : index
    %c0_15 = arith.constant 0 : index
    %35 = vector.load %arg11[%c0_12, %c0_13, %c0_14, %c0_15] : memref<4x18x18x16xf32, #tpu.memory_space<vmem>>, vector<4x18x18x16xf32>
    tpu.vector_store %arg11[%c0_12, %c0_13, %c0_14, %c0_15], %34 {strides = array<i32>} : memref<4x18x18x16xf32, #tpu.memory_space<vmem>>, vector<4x18x18x16xf32>,
    %c0_16 = arith.constant 0 : index
    %c1 = arith.constant 1 : index
    %c1_17 = arith.constant 1 : index
    %c0_18 = arith.constant 0 : index
    %36 = vector.load %arg11[%c0_16, %c1, %c1_17, %c0_18] : memref<4x18x18x16xf32, #tpu.memory_space<vmem>>, vector<4x16x16x16xf32>
    tpu.vector_store %arg11[%c0_16, %c1, %c1_17, %c0_18], %31 {strides = array<i32>} : memref<4x18x18x16xf32, #tpu.memory_space<vmem>>, vector<4x16x16x16xf32>,
    %cst_19 = arith.constant 0.000000e+00 : f32
    %37 = vector.broadcast %cst_19 : f32 to vector<4x16x16x16xf32>
    %c0_20 = arith.constant 0 : index
    %c0_21 = arith.constant 0 : index
    %c0_22 = arith.constant 0 : index
    %c0_23 = arith.constant 0 : index
    %38 = vector.load %arg11[%c0_20, %c0_21, %c0_22, %c0_23] : memref<4x18x18x16xf32, #tpu.memory_space<vmem>>, vector<4x16x16x16xf32>
    %39 = vector.extract_strided_slice %32 {offsets = [0, 0], sizes = [1, 16], strides = [1, 1]} : vector<9x16xf32> to vector<1x16xf32>
    %40 = vector.shape_cast %39 : vector<1x16xf32> to vector<1x1x1x16xf32>
    %41 = vector.broadcast %40 : vector<1x1x1x16xf32> to vector<4x16x16x16xf32>
    %42 = arith.mulf %38, %41 : vector<4x16x16x16xf32>
    %43 = arith.addf %37, %42 : vector<4x16x16x16xf32>
    %c0_24 = arith.constant 0 : index
    %c0_25 = arith.constant 0 : index
    %c1_26 = arith.constant 1 : index
    %c0_27 = arith.constant 0 : index
    %44 = vector.load %arg11[%c0_24, %c0_25, %c1_26, %c0_27] : memref<4x18x18x16xf32, #tpu.memory_space<vmem>>, vector<4x16x16x16xf32>
    %45 = vector.extract_strided_slice %32 {offsets = [1, 0], sizes = [1, 16], strides = [1, 1]} : vector<9x16xf32> to vector<1x16xf32>
    %46 = vector.shape_cast %45 : vector<1x16xf32> to vector<1x1x1x16xf32>
    %47 = vector.broadcast %46 : vector<1x1x1x16xf32> to vector<4x16x16x16xf32>
    %48 = arith.mulf %44, %47 : vector<4x16x16x16xf32>
    %49 = arith.addf %43, %48 : vector<4x16x16x16xf32>
    %c0_28 = arith.constant 0 : index
    %c0_29 = arith.constant 0 : index
    %c2 = arith.constant 2 : index
    %c0_30 = arith.constant 0 : index
    %50 = vector.load %arg11[%c0_28, %c0_29, %c2, %c0_30] : memref<4x18x18x16xf32, #tpu.memory_space<vmem>>, vector<4x16x16x16xf32>
    %51 = vector.extract_strided_slice %32 {offsets = [2, 0], sizes = [1, 16], strides = [1, 1]} : vector<9x16xf32> to vector<1x16xf32>
    %52 = vector.shape_cast %51 : vector<1x16xf32> to vector<1x1x1x16xf32>
    %53 = vector.broadcast %52 : vector<1x1x1x16xf32> to vector<4x16x16x16xf32>
    %54 = arith.mulf %50, %53 : vector<4x16x16x16xf32>
    %55 = arith.addf %49, %54 : vector<4x16x16x16xf32>
    %c0_31 = arith.constant 0 : index
    %c1_32 = arith.constant 1 : index
    %c0_33 = arith.constant 0 : index
    %c0_34 = arith.constant 0 : index
    %56 = vector.load %arg11[%c0_31, %c1_32, %c0_33, %c0_34] : memref<4x18x18x16xf32, #tpu.memory_space<vmem>>, vector<4x16x16x16xf32>
    %57 = vector.extract_strided_slice %32 {offsets = [3, 0], sizes = [1, 16], strides = [1, 1]} : vector<9x16xf32> to vector<1x16xf32>
    %58 = vector.shape_cast %57 : vector<1x16xf32> to vector<1x1x1x16xf32>
    %59 = vector.broadcast %58 : vector<1x1x1x16xf32> to vector<4x16x16x16xf32>
    %60 = arith.mulf %56, %59 : vector<4x16x16x16xf32>
    %61 = arith.addf %55, %60 : vector<4x16x16x16xf32>
    %c0_35 = arith.constant 0 : index
    %c1_36 = arith.constant 1 : index
    %c1_37 = arith.constant 1 : index
    %c0_38 = arith.constant 0 : index
    %62 = vector.load %arg11[%c0_35, %c1_36, %c1_37, %c0_38] : memref<4x18x18x16xf32, #tpu.memory_space<vmem>>, vector<4x16x16x16xf32>
    %63 = vector.extract_strided_slice %32 {offsets = [4, 0], sizes = [1, 16], strides = [1, 1]} : vector<9x16xf32> to vector<1x16xf32>
    %64 = vector.shape_cast %63 : vector<1x16xf32> to vector<1x1x1x16xf32>
    %65 = vector.broadcast %64 : vector<1x1x1x16xf32> to vector<4x16x16x16xf32>
    %66 = arith.mulf %62, %65 : vector<4x16x16x16xf32>
    %67 = arith.addf %61, %66 : vector<4x16x16x16xf32>
    %c0_39 = arith.constant 0 : index
    %c1_40 = arith.constant 1 : index
    %c2_41 = arith.constant 2 : index
    %c0_42 = arith.constant 0 : index
    %68 = vector.load %arg11[%c0_39, %c1_40, %c2_41, %c0_42] : memref<4x18x18x16xf32, #tpu.memory_space<vmem>>, vector<4x16x16x16xf32>
    %69 = vector.extract_strided_slice %32 {offsets = [5, 0], sizes = [1, 16], strides = [1, 1]} : vector<9x16xf32> to vector<1x16xf32>
    %70 = vector.shape_cast %69 : vector<1x16xf32> to vector<1x1x1x16xf32>
    %71 = vector.broadcast %70 : vector<1x1x1x16xf32> to vector<4x16x16x16xf32>
    %72 = arith.mulf %68, %71 : vector<4x16x16x16xf32>
    %73 = arith.addf %67, %72 : vector<4x16x16x16xf32>
    %c0_43 = arith.constant 0 : index
    %c2_44 = arith.constant 2 : index
    %c0_45 = arith.constant 0 : index
    %c0_46 = arith.constant 0 : index
    %74 = vector.load %arg11[%c0_43, %c2_44, %c0_45, %c0_46] : memref<4x18x18x16xf32, #tpu.memory_space<vmem>>, vector<4x16x16x16xf32>
    %75 = vector.extract_strided_slice %32 {offsets = [6, 0], sizes = [1, 16], strides = [1, 1]} : vector<9x16xf32> to vector<1x16xf32>
    %76 = vector.shape_cast %75 : vector<1x16xf32> to vector<1x1x1x16xf32>
    %77 = vector.broadcast %76 : vector<1x1x1x16xf32> to vector<4x16x16x16xf32>
    %78 = arith.mulf %74, %77 : vector<4x16x16x16xf32>
    %79 = arith.addf %73, %78 : vector<4x16x16x16xf32>
    %c0_47 = arith.constant 0 : index
    %c2_48 = arith.constant 2 : index
    %c1_49 = arith.constant 1 : index
    %c0_50 = arith.constant 0 : index
    %80 = vector.load %arg11[%c0_47, %c2_48, %c1_49, %c0_50] : memref<4x18x18x16xf32, #tpu.memory_space<vmem>>, vector<4x16x16x16xf32>
    %81 = vector.extract_strided_slice %32 {offsets = [7, 0], sizes = [1, 16], strides = [1, 1]} : vector<9x16xf32> to vector<1x16xf32>
    %82 = vector.shape_cast %81 : vector<1x16xf32> to vector<1x1x1x16xf32>
    %83 = vector.broadcast %82 : vector<1x1x1x16xf32> to vector<4x16x16x16xf32>
    %84 = arith.mulf %80, %83 : vector<4x16x16x16xf32>
    %85 = arith.addf %79, %84 : vector<4x16x16x16xf32>
    %c0_51 = arith.constant 0 : index
    %c2_52 = arith.constant 2 : index
    %c2_53 = arith.constant 2 : index
    %c0_54 = arith.constant 0 : index
    %86 = vector.load %arg11[%c0_51, %c2_52, %c2_53, %c0_54] : memref<4x18x18x16xf32, #tpu.memory_space<vmem>>, vector<4x16x16x16xf32>
    %87 = vector.extract_strided_slice %32 {offsets = [8, 0], sizes = [1, 16], strides = [1, 1]} : vector<9x16xf32> to vector<1x16xf32>
    %88 = vector.shape_cast %87 : vector<1x16xf32> to vector<1x1x1x16xf32>
    %89 = vector.broadcast %88 : vector<1x1x1x16xf32> to vector<4x16x16x16xf32>
    %90 = arith.mulf %86, %89 : vector<4x16x16x16xf32>
    %91 = arith.addf %85, %90 : vector<4x16x16x16xf32>
    %92 = vector.shape_cast %33 : vector<1x16xf32> to vector<1x1x1x16xf32>
    %93 = vector.broadcast %92 : vector<1x1x1x16xf32> to vector<4x16x16x16xf32>
    %94 = arith.addf %91, %93 : vector<4x16x16x16xf32>
    %cst_55 = arith.constant 0.000000e+00 : f32
    %95 = vector.broadcast %cst_55 : f32 to vector<4x16x16x16xf32>
    %96 = arith.maximumf %94, %95 : vector<4x16x16x16xf32>
    %c0_56 = arith.constant 0 : index
    %c0_57 = arith.constant 0 : index
    %97 = vector.load %arg8[%c0_56, %c0_57] : memref<4x8xf32, #tpu.memory_space<vmem>>, vector<4x8xf32>
    %98 = vector.extract_strided_slice %1 {offsets = [0, 0], sizes = [1024, 1], strides = [1, 1]} : vector<1024x4xf32> to vector<1024x1xf32>
    %99 = vector.extract_strided_slice %97 {offsets = [0, 0], sizes = [1, 8], strides = [1, 1]} : vector<4x8xf32> to vector<1x8xf32>
    %100 = vector.broadcast %98 : vector<1024x1xf32> to vector<1024x8xf32>
    %101 = vector.broadcast %99 : vector<1x8xf32> to vector<1024x8xf32>
    %102 = arith.mulf %100, %101 : vector<1024x8xf32>
    %103 = vector.extract_strided_slice %1 {offsets = [0, 1], sizes = [1024, 1], strides = [1, 1]} : vector<1024x4xf32> to vector<1024x1xf32>
    %104 = vector.extract_strided_slice %97 {offsets = [1, 0], sizes = [1, 8], strides = [1, 1]} : vector<4x8xf32> to vector<1x8xf32>
    %105 = vector.broadcast %103 : vector<1024x1xf32> to vector<1024x8xf32>
    %106 = vector.broadcast %104 : vector<1x8xf32> to vector<1024x8xf32>
    %107 = arith.mulf %105, %106 : vector<1024x8xf32>
    %108 = arith.addf %102, %107 : vector<1024x8xf32>
    %109 = vector.extract_strided_slice %1 {offsets = [0, 2], sizes = [1024, 1], strides = [1, 1]} : vector<1024x4xf32> to vector<1024x1xf32>
    %110 = vector.extract_strided_slice %97 {offsets = [2, 0], sizes = [1, 8], strides = [1, 1]} : vector<4x8xf32> to vector<1x8xf32>
    %111 = vector.broadcast %109 : vector<1024x1xf32> to vector<1024x8xf32>
    %112 = vector.broadcast %110 : vector<1x8xf32> to vector<1024x8xf32>
    %113 = arith.mulf %111, %112 : vector<1024x8xf32>
    %114 = arith.addf %108, %113 : vector<1024x8xf32>
    %115 = vector.extract_strided_slice %1 {offsets = [0, 3], sizes = [1024, 1], strides = [1, 1]} : vector<1024x4xf32> to vector<1024x1xf32>
    %116 = vector.extract_strided_slice %97 {offsets = [3, 0], sizes = [1, 8], strides = [1, 1]} : vector<4x8xf32> to vector<1x8xf32>
    %117 = vector.broadcast %115 : vector<1024x1xf32> to vector<1024x8xf32>
    %118 = vector.broadcast %116 : vector<1x8xf32> to vector<1024x8xf32>
    %119 = arith.mulf %117, %118 : vector<1024x8xf32>
    %120 = arith.addf %114, %119 : vector<1024x8xf32>
    %c0_58 = arith.constant 0 : index
    %c0_59 = arith.constant 0 : index
    %121 = vector.load %arg9[%c0_58, %c0_59] : memref<1x8xf32, #tpu.memory_space<vmem>>, vector<1x8xf32>
    %122 = vector.broadcast %121 : vector<1x8xf32> to vector<1024x8xf32>
    %123 = arith.addf %120, %122 : vector<1024x8xf32>
    %124 = vector.shape_cast %96 : vector<4x16x16x16xf32> to vector<1024x16xf32>
    %c0_60 = arith.constant 0 : index
    %c0_61 = arith.constant 0 : index
    %125 = vector.load %arg6[%c0_60, %c0_61] : memref<16x8xf32, #tpu.memory_space<vmem>>, vector<16x8xf32>
    %cst_62 = arith.constant dense<0.000000e+00> : vector<1024x8xf32>
    %126 = tpu.matmul %124, %125, %cst_62 {dimension_numbers = #tpu.dot_dimension_numbers<[1], [0], [0], [1], [0, 0, 1, 1], [], []>} : vector<1024x16xf32>, vector<16x8xf32>, vector<1024x8xf32> -> vector<1024x8xf32>
    %c0_63 = arith.constant 0 : index
    %c0_64 = arith.constant 0 : index
    %127 = vector.load %arg7[%c0_63, %c0_64] : memref<1x8xf32, #tpu.memory_space<vmem>>, vector<1x8xf32>
    %128 = vector.broadcast %127 : vector<1x8xf32> to vector<1024x8xf32>
    %129 = arith.addf %126, %128 : vector<1024x8xf32>
    %130 = arith.addf %129, %123 : vector<1024x8xf32>
    %131 = vector.shape_cast %130 : vector<1024x8xf32> to vector<4x16x16x8xf32>
    %c0_65 = arith.constant 0 : index
    %c0_66 = arith.constant 0 : index
    %c0_67 = arith.constant 0 : index
    %c0_68 = arith.constant 0 : index
    %132 = vector.load %arg10[%c0_65, %c0_66, %c0_67, %c0_68] : memref<4x16x16x8xf32, #tpu.memory_space<vmem>>, vector<4x16x16x8xf32>
    tpu.vector_store %arg10[%c0_65, %c0_66, %c0_67, %c0_68], %131 {strides = array<i32>} : memref<4x16x16x8xf32, #tpu.memory_space<vmem>>, vector<4x16x16x8xf32>,
    return
  }
  func.func @transform_0(%arg0: i32) -> (i32, i32, i32, i32) {
    %c0_i32 = arith.constant 0 : i32
    %c0_i32_0 = arith.constant 0 : i32
    %c0_i32_1 = arith.constant 0 : i32
    %c0_i32_2 = arith.constant 0 : i32
    return %arg0, %c0_i32, %c0_i32_0, %c0_i32_1 : i32, i32, i32, i32
  }
  func.func @transform_1(%arg0: i32) -> (i32, i32) {
    %c0_i32 = arith.constant 0 : i32
    %c0_i32_0 = arith.constant 0 : i32
    %c0_i32_1 = arith.constant 0 : i32
    return %c0_i32, %c0_i32_0 : i32, i32
  }
  func.func @transform_2(%arg0: i32) -> (i32, i32) {
    %c0_i32 = arith.constant 0 : i32
    %c0_i32_0 = arith.constant 0 : i32
    %c0_i32_1 = arith.constant 0 : i32
    return %c0_i32, %c0_i32_0 : i32, i32
  }
  func.func @transform_3(%arg0: i32) -> (i32, i32) {
    %c0_i32 = arith.constant 0 : i32
    %c0_i32_0 = arith.constant 0 : i32
    %c0_i32_1 = arith.constant 0 : i32
    return %c0_i32, %c0_i32_0 : i32, i32
  }
  func.func @transform_4(%arg0: i32) -> (i32, i32) {
    %c0_i32 = arith.constant 0 : i32
    %c0_i32_0 = arith.constant 0 : i32
    %c0_i32_1 = arith.constant 0 : i32
    return %c0_i32, %c0_i32_0 : i32, i32
  }
  func.func @transform_5(%arg0: i32) -> (i32, i32) {
    %c0_i32 = arith.constant 0 : i32
    %c0_i32_0 = arith.constant 0 : i32
    %c0_i32_1 = arith.constant 0 : i32
    return %c0_i32, %c0_i32_0 : i32, i32
  }
  func.func @transform_6(%arg0: i32) -> (i32, i32) {
    %c0_i32 = arith.constant 0 : i32
    %c0_i32_0 = arith.constant 0 : i32
    %c0_i32_1 = arith.constant 0 : i32
    return %c0_i32, %c0_i32_0 : i32, i32
  }
  func.func @transform_7(%arg0: i32) -> (i32, i32) {
    %c0_i32 = arith.constant 0 : i32
    %c0_i32_0 = arith.constant 0 : i32
    %c0_i32_1 = arith.constant 0 : i32
    return %c0_i32, %c0_i32_0 : i32, i32
  }
  func.func @transform_8(%arg0: i32) -> (i32, i32) {
    %c0_i32 = arith.constant 0 : i32
    %c0_i32_0 = arith.constant 0 : i32
    %c0_i32_1 = arith.constant 0 : i32
    return %c0_i32, %c0_i32_0 : i32, i32
  }
  func.func @transform_9(%arg0: i32) -> (i32, i32, i32, i32) {
    %c0_i32 = arith.constant 0 : i32
    %c0_i32_0 = arith.constant 0 : i32
    %c0_i32_1 = arith.constant 0 : i32
    %c0_i32_2 = arith.constant 0 : i32
    return %arg0, %c0_i32, %c0_i32_0, %c0_i32_1 : i32, i32, i32, i32
  }
}

</mosaic_0001>

<llo_original>
// kernel: tpu_custom_call.1
$region0: #{tpu_custom_call.1}
  #allocation0 [shape = 'u32[]', space=smem, size = 0x4, offset = 0x4, fixed_abs, tag = 'smem constant byte address 0x4 - core index']
  #allocation1 [shape = 'u32[144,128]{1,0:T(1,128)}', space=vmem, size = 0x12000, scoped, tag = 'internal scratch']
  #allocation2 [shape = 'f32[4,18,18,16]{3,2,1,0:T(8,128)}', space=vmem, size = 0xd8000, scoped, tag = 'scratch operand']
  %s0 = inlined_call_operand.vmem [shape: f32[8,16,16,4], index: 0, kind: input, shape index: {}]
  %s1 = inlined_call_operand.vmem [shape: f32[4,16], index: 1, kind: input, shape index: {}]
  %s2 = inlined_call_operand.vmem [shape: f32[1,16], index: 2, kind: input, shape index: {}]
  %s3 = inlined_call_operand.vmem [shape: f32[9,16], index: 3, kind: input, shape index: {}]
  %s4 = inlined_call_operand.vmem [shape: f32[1,16], index: 4, kind: input, shape index: {}]
  %s5 = inlined_call_operand.vmem [shape: f32[16,8], index: 5, kind: input, shape index: {}]
  %s6 = inlined_call_operand.vmem [shape: f32[1,8], index: 6, kind: input, shape index: {}]
  %s7 = inlined_call_operand.vmem [shape: f32[4,8], index: 7, kind: input, shape index: {}]
  %s8 = inlined_call_operand.vmem [shape: f32[1,8], index: 8, kind: input, shape index: {}]
  %s9 = inlined_call_operand.vmem [shape: f32[8,16,16,8], index: 9, kind: output, shape index: {}]
  %s10 = sld [smem:[#allocation0]]
  $region69: #{tpu_custom_call.1} parent=0
    _
  %s12 = ssub.s32 1, %s10
  %s13 = scalar_select 0, %s12, %s10
  loop: start=0, step=1, limit=4
  $region2: #{tpu_custom_call.1} parent=0 // loop_pre_header
    _
  $region3: #{tpu_custom_call.1} parent=0 // loop_header
    %s15 = sphi 0, %s19
    %p16 = scmp.ge.s32.totalorder %s15, 4
    %s25 = sphi 0, %s27
    %s28 = sphi 0, %s25
    %s29 = sphi 0, %s28
    %s45 = sphi 0, %s29
    %s49 = sphi 0, %s49
    %s51 = sphi 0, %s49
    %s52 = sphi 0, %s51
    %s66 = sphi 0, %s52
    %s70 = sphi 0, %s70
    %s72 = sphi 0, %s70
    %s73 = sphi 0, %s72
    %s87 = sphi 0, %s73
    %s91 = sphi 0, %s91
    %s93 = sphi 0, %s91
    %s94 = sphi 0, %s93
    %s108 = sphi 0, %s94
    %s112 = sphi 0, %s112
    %s114 = sphi 0, %s112
    %s115 = sphi 0, %s114
    %s129 = sphi 0, %s115
    %s133 = sphi 0, %s133
    %s135 = sphi 0, %s133
    %s136 = sphi 0, %s135
    %s150 = sphi 0, %s136
    %s154 = sphi 0, %s154
    %s156 = sphi 0, %s154
    %s157 = sphi 0, %s156
    %s171 = sphi 0, %s157
    %s175 = sphi 0, %s175
    %s177 = sphi 0, %s175
    %s178 = sphi 0, %s177
    %s192 = sphi 0, %s178
    %s196 = sphi 0, %s196
    %s198 = sphi 0, %s196
    %s199 = sphi 0, %s198
    %s213 = sphi 0, %s199
    %s219 = sphi 0, %s221
    %s222 = sphi 0, %s219
    %s223 = sphi 0, %s222
    %s239 = sphi 0, %s223
  $region4: #{tpu_custom_call.1} parent=0 // loop_header_branch
    %18 = sbr.rel (%p16) target = $region8
  $region5: #{tpu_custom_call.1} parent=0 // loop_body
    %s20 = ssub.s32 %s15, 1
    %s21 = ssub.s32 %s15, 2
    %s22 = sadd.s32 %s15, 1
    %s23 = ssub.s32 %s15, %s22
    %p24 = scmp.eq.s32.totalorder %s23, 0
    %s26 = sadd.s32 %s25, 1
    %s27 = scalar_select %p24, %s25, %s26
    %p30 = pneg %p24
    %p31 = scmp.eq.s32.totalorder %s15, 1
    %p32 = por %p30, %p31
    %p33 = scmp.ne.s32.totalorder %s25, %s28
    %p34 = scmp.eq.s32.totalorder %s15, 0
    %p35 = por %p33, %p34
    %p36 = scmp.ne.s32.totalorder %s25, %s28
    %p37 = scmp.eq.s32.totalorder %s20, 1
    %p38 = por %p36, %p37
    %p39 = scmp.ne.s32.totalorder %s28, %s29
    %p40 = scmp.eq.s32.totalorder %s20, 0
    %p41 = por %p39, %p40
    %p42 = scmp.ne.s32.totalorder %s28, %s29
    %p43 = scmp.eq.s32.totalorder %s21, 1
    %p44 = por %p42, %p43
    %p46 = scmp.ne.s32.totalorder %s29, %s45
    %p47 = scmp.eq.s32.totalorder %s21, 0
    %p48 = por %p46, %p47
    %s50 = sadd.s32 %s49, 1
    %p53 = scmp.eq.s32.totalorder %s15, 1
    %p54 = scmp.ne.s32.totalorder %s49, %s51
    %p55 = scmp.eq.s32.totalorder %s15, 0
    %p56 = por %p54, %p55
    %p57 = scmp.ne.s32.totalorder %s49, %s51
    %p58 = scmp.eq.s32.totalorder %s20, 1
    %p59 = por %p57, %p58
    %p60 = scmp.ne.s32.totalorder %s51, %s52
    %p61 = scmp.eq.s32.totalorder %s20, 0
    %p62 = por %p60, %p61
    %p63 = scmp.ne.s32.totalorder %s51, %s52
    %p64 = scmp.eq.s32.totalorder %s21, 1
    %p65 = por %p63, %p64
    %p67 = scmp.ne.s32.totalorder %s52, %s66
    %p68 = scmp.eq.s32.totalorder %s21, 0
    %p69 = por %p67, %p68
    %s71 = sadd.s32 %s70, 1
    %p74 = scmp.eq.s32.totalorder %s15, 1
    %p75 = scmp.ne.s32.totalorder %s70, %s72
    %p76 = scmp.eq.s32.totalorder %s15, 0
    %p77 = por %p75, %p76
    %p78 = scmp.ne.s32.totalorder %s70, %s72
    %p79 = scmp.eq.s32.totalorder %s20, 1
    %p80 = por %p78, %p79
    %p81 = scmp.ne.s32.totalorder %s72, %s73
    %p82 = scmp.eq.s32.totalorder %s20, 0
    %p83 = por %p81, %p82
    %p84 = scmp.ne.s32.totalorder %s72, %s73
    %p85 = scmp.eq.s32.totalorder %s21, 1
    %p86 = por %p84, %p85
    %p88 = scmp.ne.s32.totalorder %s73, %s87
    %p89 = scmp.eq.s32.totalorder %s21, 0
    %p90 = por %p88, %p89
    %s92 = sadd.s32 %s91, 1
    %p95 = scmp.eq.s32.totalorder %s15, 1
    %p96 = scmp.ne.s32.totalorder %s91, %s93
    %p97 = scmp.eq.s32.totalorder %s15, 0
    %p98 = por %p96, %p97
    %p99 = scmp.ne.s32.totalorder %s91, %s93
    %p100 = scmp.eq.s32.totalorder %s20, 1
    %p101 = por %p99, %p100
    %p102 = scmp.ne.s32.totalorder %s93, %s94
    %p103 = scmp.eq.s32.totalorder %s20, 0
    %p104 = por %p102, %p103
    %p105 = scmp.ne.s32.totalorder %s93, %s94
    %p106 = scmp.eq.s32.totalorder %s21, 1
    %p107 = por %p105, %p106
    %p109 = scmp.ne.s32.totalorder %s94, %s108
    %p110 = scmp.eq.s32.totalorder %s21, 0
    %p111 = por %p109, %p110
    %s113 = sadd.s32 %s112, 1
    %p116 = scmp.eq.s32.totalorder %s15, 1
    %p117 = scmp.ne.s32.totalorder %s112, %s114
    %p118 = scmp.eq.s32.totalorder %s15, 0
    %p119 = por %p117, %p118
    %p120 = scmp.ne.s32.totalorder %s112, %s114
    %p121 = scmp.eq.s32.totalorder %s20, 1
    %p122 = por %p120, %p121
    %p123 = scmp.ne.s32.totalorder %s114, %s115
    %p124 = scmp.eq.s32.totalorder %s20, 0
    %p125 = por %p123, %p124
    %p126 = scmp.ne.s32.totalorder %s114, %s115
    %p127 = scmp.eq.s32.totalorder %s21, 1
    %p128 = por %p126, %p127
    %p130 = scmp.ne.s32.totalorder %s115, %s129
    %p131 = scmp.eq.s32.totalorder %s21, 0
    %p132 = por %p130, %p131
    %s134 = sadd.s32 %s133, 1
    %p137 = scmp.eq.s32.totalorder %s15, 1
    %p138 = scmp.ne.s32.totalorder %s133, %s135
    %p139 = scmp.eq.s32.totalorder %s15, 0
    %p140 = por %p138, %p139
    %p141 = scmp.ne.s32.totalorder %s133, %s135
    %p142 = scmp.eq.s32.totalorder %s20, 1
    %p143 = por %p141, %p142
    %p144 = scmp.ne.s32.totalorder %s135, %s136
    %p145 = scmp.eq.s32.totalorder %s20, 0
    %p146 = por %p144, %p145
    %p147 = scmp.ne.s32.totalorder %s135, %s136
    %p148 = scmp.eq.s32.totalorder %s21, 1
    %p149 = por %p147, %p148
    %p151 = scmp.ne.s32.totalorder %s136, %s150
    %p152 = scmp.eq.s32.totalorder %s21, 0
    %p153 = por %p151, %p152
    %s155 = sadd.s32 %s154, 1
    %p158 = scmp.eq.s32.totalorder %s15, 1
    %p159 = scmp.ne.s32.totalorder %s154, %s156
    %p160 = scmp.eq.s32.totalorder %s15, 0
    %p161 = por %p159, %p160
    %p162 = scmp.ne.s32.totalorder %s154, %s156
    %p163 = scmp.eq.s32.totalorder %s20, 1
    %p164 = por %p162, %p163
    %p165 = scmp.ne.s32.totalorder %s156, %s157
    %p166 = scmp.eq.s32.totalorder %s20, 0
    %p167 = por %p165, %p166
    %p168 = scmp.ne.s32.totalorder %s156, %s157
    %p169 = scmp.eq.s32.totalorder %s21, 1
    %p170 = por %p168, %p169
    %p172 = scmp.ne.s32.totalorder %s157, %s171
    %p173 = scmp.eq.s32.totalorder %s21, 0
    %p174 = por %p172, %p173
    %s176 = sadd.s32 %s175, 1
    %p179 = scmp.eq.s32.totalorder %s15, 1
    %p180 = scmp.ne.s32.totalorder %s175, %s177
    %p181 = scmp.eq.s32.totalorder %s15, 0
    %p182 = por %p180, %p181
    %p183 = scmp.ne.s32.totalorder %s175, %s177
    %p184 = scmp.eq.s32.totalorder %s20, 1
    %p185 = por %p183, %p184
    %p186 = scmp.ne.s32.totalorder %s177, %s178
    %p187 = scmp.eq.s32.totalorder %s20, 0
    %p188 = por %p186, %p187
    %p189 = scmp.ne.s32.totalorder %s177, %s178
    %p190 = scmp.eq.s32.totalorder %s21, 1
    %p191 = por %p189, %p190
    %p193 = scmp.ne.s32.totalorder %s178, %s192
    %p194 = scmp.eq.s32.totalorder %s21, 0
    %p195 = por %p193, %p194
    %s197 = sadd.s32 %s196, 1
    %p200 = scmp.eq.s32.totalorder %s15, 1
    %p201 = scmp.ne.s32.totalorder %s196, %s198
    %p202 = scmp.eq.s32.totalorder %s15, 0
    %p203 = por %p201, %p202
    %p204 = scmp.ne.s32.totalorder %s196, %s198
    %p205 = scmp.eq.s32.totalorder %s20, 1
    %p206 = por %p204, %p205
    %p207 = scmp.ne.s32.totalorder %s198, %s199
    %p208 = scmp.eq.s32.totalorder %s20, 0
    %p209 = por %p207, %p208
    %p210 = scmp.ne.s32.totalorder %s198, %s199
    %p211 = scmp.eq.s32.totalorder %s21, 1
    %p212 = por %p210, %p211
    %p214 = scmp.ne.s32.totalorder %s199, %s213
    %p215 = scmp.eq.s32.totalorder %s21, 0
    %p216 = por %p214, %p215
    %s217 = ssub.s32 %s15, %s22
    %p218 = scmp.eq.s32.totalorder %s217, 0
    %s220 = sadd.s32 %s219, 1
    %s221 = scalar_select %p218, %s219, %s220
    %p224 = pneg %p218
    %p225 = scmp.eq.s32.totalorder %s15, 1
    %p226 = por %p224, %p225
    %p227 = scmp.ne.s32.totalorder %s219, %s222
    %p228 = scmp.eq.s32.totalorder %s15, 0
    %p229 = por %p227, %p228
    %p230 = scmp.ne.s32.totalorder %s219, %s222
    %p231 = scmp.eq.s32.totalorder %s20, 1
    %p232 = por %p230, %p231
    %p233 = scmp.ne.s32.totalorder %s222, %s223
    %p234 = scmp.eq.s32.totalorder %s20, 0
    %p235 = por %p233, %p234
    %p236 = scmp.ne.s32.totalorder %s222, %s223
    %p237 = scmp.eq.s32.totalorder %s21, 1
    %p238 = por %p236, %p237
    %p240 = scmp.ne.s32.totalorder %s223, %s239
    %p241 = scmp.eq.s32.totalorder %s21, 0
    %p242 = por %p240, %p241
    %p243 = scmp.le.s32.totalorder 1, %s15
    %p244 = scmp.lt.s32.totalorder %s15, 3
    %p245 = pnand %p243, %p244
    %p246 = pneg %p245
    // Predicated region
    $region9: #{tpu_custom_call.1} parent=5 // pred_check
      _
    $region10: #{tpu_custom_call.1} parent=5 // pred_check_branch
      %248 = sbr.rel (%p245) target = $region12
    $region11: #{tpu_custom_call.1} parent=5 // pred_region
      %s249 = ssub.s32 %s15, 1
      // Predicated region
      $region13: #{tpu_custom_call.1} parent=11 // pred_check
        %p250 = pneg %p62
      $region14: #{tpu_custom_call.1} parent=11 // pred_check_branch
        %252 = sbr.rel (%p250) target = $region16
      $region15: #{tpu_custom_call.1} parent=11 // pred_region
        _
      $region16: #{tpu_custom_call.1} parent=11 // pred_fallthru
        _
      // Predicated region
      $region17: #{tpu_custom_call.1} parent=11 // pred_check
        %p253 = pneg %p83
      $region18: #{tpu_custom_call.1} parent=11 // pred_check_branch
        %255 = sbr.rel (%p253) target = $region20
      $region19: #{tpu_custom_call.1} parent=11 // pred_region
        _
      $region20: #{tpu_custom_call.1} parent=11 // pred_fallthru
        _
      // Predicated region
      $region21: #{tpu_custom_call.1} parent=11 // pred_check
        %p256 = pneg %p104
      $region22: #{tpu_custom_call.1} parent=11 // pred_check_branch
        %258 = sbr.rel (%p256) target = $region24
      $region23: #{tpu_custom_call.1} parent=11 // pred_region
        _
      $region24: #{tpu_custom_call.1} parent=11 // pred_fallthru
        _
      // Predicated region
      $region25: #{tpu_custom_call.1} parent=11 // pred_check
        %p259 = pneg %p125
      $region26: #{tpu_custom_call.1} parent=11 // pred_check_branch
        %261 = sbr.rel (%p259) target = $region28
      $region27: #{tpu_custom_call.1} parent=11 // pred_region
        _
      $region28: #{tpu_custom_call.1} parent=11 // pred_fallthru
        _
      // Predicated region
      $region29: #{tpu_custom_call.1} parent=11 // pred_check
        %p262 = pneg %p146
      $region30: #{tpu_custom_call.1} parent=11 // pred_check_branch
        %264 = sbr.rel (%p262) target = $region32
      $region31: #{tpu_custom_call.1} parent=11 // pred_region
        _
      $region32: #{tpu_custom_call.1} parent=11 // pred_fallthru
        _
      // Predicated region
      $region33: #{tpu_custom_call.1} parent=11 // pred_check
        %p265 = pneg %p167
      $region34: #{tpu_custom_call.1} parent=11 // pred_check_branch
        %267 = sbr.rel (%p265) target = $region36
      $region35: #{tpu_custom_call.1} parent=11 // pred_region
        _
      $region36: #{tpu_custom_call.1} parent=11 // pred_fallthru
        _
      // Predicated region
      $region37: #{tpu_custom_call.1} parent=11 // pred_check
        %p268 = pneg %p188
      $region38: #{tpu_custom_call.1} parent=11 // pred_check_branch
        %270 = sbr.rel (%p268) target = $region40
      $region39: #{tpu_custom_call.1} parent=11 // pred_region
        _
      $region40: #{tpu_custom_call.1} parent=11 // pred_fallthru
        _
      // Predicated region
      $region41: #{tpu_custom_call.1} parent=11 // pred_check
        %p271 = pneg %p209
      $region42: #{tpu_custom_call.1} parent=11 // pred_check_branch
        %273 = sbr.rel (%p271) target = $region44
      $region43: #{tpu_custom_call.1} parent=11 // pred_region
        _
      $region44: #{tpu_custom_call.1} parent=11 // pred_fallthru
        _
    $region12: #{tpu_custom_call.1} parent=5 // pred_fallthru
      _
    %p274 = scmp.lt.s32.totalorder %s15, 2
    // Predicated region
    $region45: #{tpu_custom_call.1} parent=5 // pred_check
      %p275 = pneg %p274
    $region46: #{tpu_custom_call.1} parent=5 // pred_check_branch
      %277 = sbr.rel (%p275) target = $region48
    $region47: #{tpu_custom_call.1} parent=5 // pred_region
      // Predicated region
      $region49: #{tpu_custom_call.1} parent=47 // pred_check
        %p278 = pneg %p35
      $region50: #{tpu_custom_call.1} parent=47 // pred_check_branch
        %280 = sbr.rel (%p278) target = $region52
      $region51: #{tpu_custom_call.1} parent=47 // pred_region
        %s281 = smul.u32 4, %s15
        %p282 = scmp.lt.s32.totalorder %s281, 7
        %s283 = scalar_select %p282, %s281, 7
        %s284 = smul.addr %s283, 32
        %s285 = smul.addr %s284, 8
        %s286 = scalar_lea.vmem %s0, %s285
        %s287 = smul.u32 4, %s15
      $region52: #{tpu_custom_call.1} parent=47 // pred_fallthru
        _
    $region48: #{tpu_custom_call.1} parent=5 // pred_fallthru
      _
    %p288 = scmp.le.s32.totalorder 1, %s15
    %p289 = scmp.lt.s32.totalorder %s15, 3
    %p290 = pnand %p288, %p289
    %p291 = pneg %p290
    // Predicated region
    $region53: #{tpu_custom_call.1} parent=5 // pred_check
      _
    $region54: #{tpu_custom_call.1} parent=5 // pred_check_branch
      %293 = sbr.rel (%p290) target = $region56
    $region55: #{tpu_custom_call.1} parent=5 // pred_region
      %s294 = ssub.s32 %s15, 1
      %s295 = smul.u32 4, %s20
      %p296 = scmp.lt.s32.totalorder %s295, 7
      %s297 = scalar_select %p296, %s295, 7
      %s298 = smul.addr %s297, 32
      %s299 = smul.addr %s298, 8
      %s300 = scalar_lea.vmem %s0, %s299
      %p301 = pneg %p41
      %p302 = pneg %p38
      %p303 = pneg %p62
      %p304 = pneg %p59
      %p305 = pneg %p83
      %p306 = pneg %p80
      %p307 = pneg %p104
      %p308 = pneg %p101
      %p309 = pneg %p125
      %p310 = pneg %p122
      %p311 = pneg %p146
      %p312 = pneg %p143
      %p313 = pneg %p167
      %p314 = pneg %p164
      %p315 = pneg %p188
      %p316 = pneg %p185
      %p317 = pneg %p209
      %p318 = pneg %p206
      %p319 = pneg %p235
      %p320 = pneg %p232
      %s321 = smul.u32 4, %s20
      %p322 = scmp.lt.s32.totalorder %s321, 7
      %s323 = scalar_select %p322, %s321, 7
      %s324 = smul.addr %s323, 32
      %s325 = smul.addr %s324, 8
      %s326 = scalar_lea.vmem %s9, %s325
      %s327 = smul.u32 4, %s20
      %p328 = scmp.lt.s32.totalorder %s327, 7
      %s329 = scalar_select %p328, %s327, 7
      %s330 = smul.addr %s329, 32
      %s331 = smul.addr %s330, 8
      %s332 = scalar_lea.vmem %s0, %s331
      %s333 = smul.u32 4, %s20
      %s334 = smul.u32 4, %s20
      %p335 = scmp.lt.s32.totalorder %s334, 7
      %s336 = scalar_select %p335, %s334, 7
      %s337 = smul.addr %s336, 32
      %s338 = smul.addr %s337, 8
      %s339 = scalar_lea.vmem %s9, %s338
      %s340 = smul.u32 4, %s20
      %v341 = vld [vmem:[%s332] sm:$0xff]
      %v342 = vld [vmem:[%s332 + $0x8] sm:$0xff]
      %v343 = vld [vmem:[%s332 + $0x10] sm:$0xff]
      %v344 = vld [vmem:[%s332 + $0x18] sm:$0xff]
      %v345 = vld [vmem:[%s332 + $0x20] sm:$0xff]
      %v346 = vld [vmem:[%s332 + $0x28] sm:$0xff]
      %v347 = vld [vmem:[%s332 + $0x30] sm:$0xff]
      %v348 = vld [vmem:[%s332 + $0x38] sm:$0xff]
      %v349 = vld [vmem:[%s332 + $0x40] sm:$0xff]
      %v350 = vld [vmem:[%s332 + $0x48] sm:$0xff]
      %v351 = vld [vmem:[%s332 + $0x50] sm:$0xff]
      %v352 = vld [vmem:[%s332 + $0x58] sm:$0xff]
      %v353 = vld [vmem:[%s332 + $0x60] sm:$0xff]
      %v354 = vld [vmem:[%s332 + $0x68] sm:$0xff]
      %v355 = vld [vmem:[%s332 + $0x70] sm:$0xff]
      %v356 = vld [vmem:[%s332 + $0x78] sm:$0xff]
      %v357 = vld [vmem:[%s332 + $0x80] sm:$0xff]
      %v358 = vld [vmem:[%s332 + $0x88] sm:$0xff]
      %v359 = vld [vmem:[%s332 + $0x90] sm:$0xff]
      %v360 = vld [vmem:[%s332 + $0x98] sm:$0xff]
      %v361 = vld [vmem:[%s332 + $0xa0] sm:$0xff]
      %v362 = vld [vmem:[%s332 + $0xa8] sm:$0xff]
      %v363 = vld [vmem:[%s332 + $0xb0] sm:$0xff]
      %v364 = vld [vmem:[%s332 + $0xb8] sm:$0xff]
      %v365 = vld [vmem:[%s332 + $0xc0] sm:$0xff]
      %v366 = vld [vmem:[%s332 + $0xc8] sm:$0xff]
      %v367 = vld [vmem:[%s332 + $0xd0] sm:$0xff]
      %v368 = vld [vmem:[%s332 + $0xd8] sm:$0xff]
      %v369 = vld [vmem:[%s332 + $0xe0] sm:$0xff]
      %v370 = vld [vmem:[%s332 + $0xe8] sm:$0xff]
      %v371 = vld [vmem:[%s332 + $0xf0] sm:$0xff]
      %v372 = vld [vmem:[%s332 + $0xf8] sm:$0xff]
      %v373 = vld [vmem:[%s332 + $0x100] sm:$0xff]
      %v374 = vld [vmem:[%s332 + $0x108] sm:$0xff]
      %v375 = vld [vmem:[%s332 + $0x110] sm:$0xff]
      %v376 = vld [vmem:[%s332 + $0x118] sm:$0xff]
      %v377 = vld [vmem:[%s332 + $0x120] sm:$0xff]
      %v378 = vld [vmem:[%s332 + $0x128] sm:$0xff]
      %v379 = vld [vmem:[%s332 + $0x130] sm:$0xff]
      %v380 = vld [vmem:[%s332 + $0x138] sm:$0xff]
      %v381 = vld [vmem:[%s332 + $0x140] sm:$0xff]
      %v382 = vld [vmem:[%s332 + $0x148] sm:$0xff]
      %v383 = vld [vmem:[%s332 + $0x150] sm:$0xff]
      %v384 = vld [vmem:[%s332 + $0x158] sm:$0xff]
      %v385 = vld [vmem:[%s332 + $0x160] sm:$0xff]
      %v386 = vld [vmem:[%s332 + $0x168] sm:$0xff]
      %v387 = vld [vmem:[%s332 + $0x170] sm:$0xff]
      %v388 = vld [vmem:[%s332 + $0x178] sm:$0xff]
      %v389 = vld [vmem:[%s332 + $0x180] sm:$0xff]
      %v390 = vld [vmem:[%s332 + $0x188] sm:$0xff]
      %v391 = vld [vmem:[%s332 + $0x190] sm:$0xff]
      %v392 = vld [vmem:[%s332 + $0x198] sm:$0xff]
      %v393 = vld [vmem:[%s332 + $0x1a0] sm:$0xff]
      %v394 = vld [vmem:[%s332 + $0x1a8] sm:$0xff]
      %v395 = vld [vmem:[%s332 + $0x1b0] sm:$0xff]
      %v396 = vld [vmem:[%s332 + $0x1b8] sm:$0xff]
      %v397 = vld [vmem:[%s332 + $0x1c0] sm:$0xff]
      %v398 = vld [vmem:[%s332 + $0x1c8] sm:$0xff]
      %v399 = vld [vmem:[%s332 + $0x1d0] sm:$0xff]
      %v400 = vld [vmem:[%s332 + $0x1d8] sm:$0xff]
      %v401 = vld [vmem:[%s332 + $0x1e0] sm:$0xff]
      %v402 = vld [vmem:[%s332 + $0x1e8] sm:$0xff]
      %v403 = vld [vmem:[%s332 + $0x1f0] sm:$0xff]
      %v404 = vld [vmem:[%s332 + $0x1f8] sm:$0xff]
      %v405 = vld [vmem:[%s332 + $0x200] sm:$0xff]
      %v406 = vld [vmem:[%s332 + $0x208] sm:$0xff]
      %v407 = vld [vmem:[%s332 + $0x210] sm:$0xff]
      %v408 = vld [vmem:[%s332 + $0x218] sm:$0xff]
      %v409 = vld [vmem:[%s332 + $0x220] sm:$0xff]
      %v410 = vld [vmem:[%s332 + $0x228] sm:$0xff]
      %v411 = vld [vmem:[%s332 + $0x230] sm:$0xff]
      %v412 = vld [vmem:[%s332 + $0x238] sm:$0xff]
      %v413 = vld [vmem:[%s332 + $0x240] sm:$0xff]
      %v414 = vld [vmem:[%s332 + $0x248] sm:$0xff]
      %v415 = vld [vmem:[%s332 + $0x250] sm:$0xff]
      %v416 = vld [vmem:[%s332 + $0x258] sm:$0xff]
      %v417 = vld [vmem:[%s332 + $0x260] sm:$0xff]
      %v418 = vld [vmem:[%s332 + $0x268] sm:$0xff]
      %v419 = vld [vmem:[%s332 + $0x270] sm:$0xff]
      %v420 = vld [vmem:[%s332 + $0x278] sm:$0xff]
      %v421 = vld [vmem:[%s332 + $0x280] sm:$0xff]
      %v422 = vld [vmem:[%s332 + $0x288] sm:$0xff]
      %v423 = vld [vmem:[%s332 + $0x290] sm:$0xff]
      %v424 = vld [vmem:[%s332 + $0x298] sm:$0xff]
      %v425 = vld [vmem:[%s332 + $0x2a0] sm:$0xff]
      %v426 = vld [vmem:[%s332 + $0x2a8] sm:$0xff]
      %v427 = vld [vmem:[%s332 + $0x2b0] sm:$0xff]
      %v428 = vld [vmem:[%s332 + $0x2b8] sm:$0xff]
      %v429 = vld [vmem:[%s332 + $0x2c0] sm:$0xff]
      %v430 = vld [vmem:[%s332 + $0x2c8] sm:$0xff]
      %v431 = vld [vmem:[%s332 + $0x2d0] sm:$0xff]
      %v432 = vld [vmem:[%s332 + $0x2d8] sm:$0xff]
      %v433 = vld [vmem:[%s332 + $0x2e0] sm:$0xff]
      %v434 = vld [vmem:[%s332 + $0x2e8] sm:$0xff]
      %v435 = vld [vmem:[%s332 + $0x2f0] sm:$0xff]
      %v436 = vld [vmem:[%s332 + $0x2f8] sm:$0xff]
      %v437 = vld [vmem:[%s332 + $0x300] sm:$0xff]
      %v438 = vld [vmem:[%s332 + $0x308] sm:$0xff]
      %v439 = vld [vmem:[%s332 + $0x310] sm:$0xff]
      %v440 = vld [vmem:[%s332 + $0x318] sm:$0xff]
      %v441 = vld [vmem:[%s332 + $0x320] sm:$0xff]
      %v442 = vld [vmem:[%s332 + $0x328] sm:$0xff]
      %v443 = vld [vmem:[%s332 + $0x330] sm:$0xff]
      %v444 = vld [vmem:[%s332 + $0x338] sm:$0xff]
      %v445 = vld [vmem:[%s332 + $0x340] sm:$0xff]
      %v446 = vld [vmem:[%s332 + $0x348] sm:$0xff]
      %v447 = vld [vmem:[%s332 + $0x350] sm:$0xff]
      %v448 = vld [vmem:[%s332 + $0x358] sm:$0xff]
      %v449 = vld [vmem:[%s332 + $0x360] sm:$0xff]
      %v450 = vld [vmem:[%s332 + $0x368] sm:$0xff]
      %v451 = vld [vmem:[%s332 + $0x370] sm:$0xff]
      %v452 = vld [vmem:[%s332 + $0x378] sm:$0xff]
      %v453 = vld [vmem:[%s332 + $0x380] sm:$0xff]
      %v454 = vld [vmem:[%s332 + $0x388] sm:$0xff]
      %v455 = vld [vmem:[%s332 + $0x390] sm:$0xff]
      %v456 = vld [vmem:[%s332 + $0x398] sm:$0xff]
      %v457 = vld [vmem:[%s332 + $0x3a0] sm:$0xff]
      %v458 = vld [vmem:[%s332 + $0x3a8] sm:$0xff]
      %v459 = vld [vmem:[%s332 + $0x3b0] sm:$0xff]
      %v460 = vld [vmem:[%s332 + $0x3b8] sm:$0xff]
      %v461 = vld [vmem:[%s332 + $0x3c0] sm:$0xff]
      %v462 = vld [vmem:[%s332 + $0x3c8] sm:$0xff]
      %v463 = vld [vmem:[%s332 + $0x3d0] sm:$0xff]
      %v464 = vld [vmem:[%s332 + $0x3d8] sm:$0xff]
      %v465 = vld [vmem:[%s332 + $0x3e0] sm:$0xff]
      %v466 = vld [vmem:[%s332 + $0x3e8] sm:$0xff]
      %v467 = vld [vmem:[%s332 + $0x3f0] sm:$0xff]
      %v468 = vld [vmem:[%s332 + $0x3f8] sm:$0xff]
      %v469 = vld [vmem:[%s1] sm:$0xf]
      %471 = vset.pattern.permute.xlu0 0
      %472 = vperm.xlu0 %471, %v341
      %v473 = vpop.permute.xlu0 %472
      %476 = vset.pattern.permute.xlu0 0
      %477 = vperm.xlu0 %476, %v342
      %v478 = vpop.permute.xlu0 %477
      %481 = vset.pattern.permute.xlu0 0
      %482 = vperm.xlu0 %481, %v343
      %v483 = vpop.permute.xlu0 %482
      %486 = vset.pattern.permute.xlu0 0
      %487 = vperm.xlu0 %486, %v344
      %v488 = vpop.permute.xlu0 %487
      %491 = vset.pattern.permute.xlu0 0
      %492 = vperm.xlu0 %491, %v345
      %v493 = vpop.permute.xlu0 %492
      %496 = vset.pattern.permute.xlu0 0
      %497 = vperm.xlu0 %496, %v346
      %v498 = vpop.permute.xlu0 %497
      %501 = vset.pattern.permute.xlu0 0
      %502 = vperm.xlu0 %501, %v347
      %v503 = vpop.permute.xlu0 %502
      %506 = vset.pattern.permute.xlu0 0
      %507 = vperm.xlu0 %506, %v348
      %v508 = vpop.permute.xlu0 %507
      %511 = vset.pattern.permute.xlu0 0
      %512 = vperm.xlu0 %511, %v349
      %v513 = vpop.permute.xlu0 %512
      %516 = vset.pattern.permute.xlu0 0
      %517 = vperm.xlu0 %516, %v350
      %v518 = vpop.permute.xlu0 %517
      %521 = vset.pattern.permute.xlu0 0
      %522 = vperm.xlu0 %521, %v351
      %v523 = vpop.permute.xlu0 %522
      %526 = vset.pattern.permute.xlu0 0
      %527 = vperm.xlu0 %526, %v352
      %v528 = vpop.permute.xlu0 %527
      %531 = vset.pattern.permute.xlu0 0
      %532 = vperm.xlu0 %531, %v353
      %v533 = vpop.permute.xlu0 %532
      %536 = vset.pattern.permute.xlu0 0
      %537 = vperm.xlu0 %536, %v354
      %v538 = vpop.permute.xlu0 %537
      %541 = vset.pattern.permute.xlu0 0
      %542 = vperm.xlu0 %541, %v355
      %v543 = vpop.permute.xlu0 %542
      %546 = vset.pattern.permute.xlu0 0
      %547 = vperm.xlu0 %546, %v356
      %v548 = vpop.permute.xlu0 %547
      %551 = vset.pattern.permute.xlu0 0
      %552 = vperm.xlu0 %551, %v357
      %v553 = vpop.permute.xlu0 %552
      %556 = vset.pattern.permute.xlu0 0
      %557 = vperm.xlu0 %556, %v358
      %v558 = vpop.permute.xlu0 %557
      %561 = vset.pattern.permute.xlu0 0
      %562 = vperm.xlu0 %561, %v359
      %v563 = vpop.permute.xlu0 %562
      %566 = vset.pattern.permute.xlu0 0
      %567 = vperm.xlu0 %566, %v360
      %v568 = vpop.permute.xlu0 %567
      %571 = vset.pattern.permute.xlu0 0
      %572 = vperm.xlu0 %571, %v361
      %v573 = vpop.permute.xlu0 %572
      %576 = vset.pattern.permute.xlu0 0
      %577 = vperm.xlu0 %576, %v362
      %v578 = vpop.permute.xlu0 %577
      %581 = vset.pattern.permute.xlu0 0
      %582 = vperm.xlu0 %581, %v363
      %v583 = vpop.permute.xlu0 %582
      %586 = vset.pattern.permute.xlu0 0
      %587 = vperm.xlu0 %586, %v364
      %v588 = vpop.permute.xlu0 %587
      %591 = vset.pattern.permute.xlu0 0
      %592 = vperm.xlu0 %591, %v365
      %v593 = vpop.permute.xlu0 %592
      %596 = vset.pattern.permute.xlu0 0
      %597 = vperm.xlu0 %596, %v366
      %v598 = vpop.permute.xlu0 %597
      %601 = vset.pattern.permute.xlu0 0
      %602 = vperm.xlu0 %601, %v367
      %v603 = vpop.permute.xlu0 %602
      %606 = vset.pattern.permute.xlu0 0
      %607 = vperm.xlu0 %606, %v368
      %v608 = vpop.permute.xlu0 %607
      %611 = vset.pattern.permute.xlu0 0
      %612 = vperm.xlu0 %611, %v369
      %v613 = vpop.permute.xlu0 %612
      %616 = vset.pattern.permute.xlu0 0
      %617 = vperm.xlu0 %616, %v370
      %v618 = vpop.permute.xlu0 %617
      %621 = vset.pattern.permute.xlu0 0
      %622 = vperm.xlu0 %621, %v371
      %v623 = vpop.permute.xlu0 %622
      %626 = vset.pattern.permute.xlu0 0
      %627 = vperm.xlu0 %626, %v372
      %v628 = vpop.permute.xlu0 %627
      %631 = vset.pattern.permute.xlu0 0
      %632 = vperm.xlu0 %631, %v373
      %v633 = vpop.permute.xlu0 %632
      %636 = vset.pattern.permute.xlu0 0
      %637 = vperm.xlu0 %636, %v374
      %v638 = vpop.permute.xlu0 %637
      %641 = vset.pattern.permute.xlu0 0
      %642 = vperm.xlu0 %641, %v375
      %v643 = vpop.permute.xlu0 %642
      %646 = vset.pattern.permute.xlu0 0
      %647 = vperm.xlu0 %646, %v376
      %v648 = vpop.permute.xlu0 %647
      %651 = vset.pattern.permute.xlu0 0
      %652 = vperm.xlu0 %651, %v377
      %v653 = vpop.permute.xlu0 %652
      %656 = vset.pattern.permute.xlu0 0
      %657 = vperm.xlu0 %656, %v378
      %v658 = vpop.permute.xlu0 %657
      %661 = vset.pattern.permute.xlu0 0
      %662 = vperm.xlu0 %661, %v379
      %v663 = vpop.permute.xlu0 %662
      %666 = vset.pattern.permute.xlu0 0
      %667 = vperm.xlu0 %666, %v380
      %v668 = vpop.permute.xlu0 %667
      %671 = vset.pattern.permute.xlu0 0
      %672 = vperm.xlu0 %671, %v381
      %v673 = vpop.permute.xlu0 %672
      %676 = vset.pattern.permute.xlu0 0
      %677 = vperm.xlu0 %676, %v382
      %v678 = vpop.permute.xlu0 %677
      %681 = vset.pattern.permute.xlu0 0
      %682 = vperm.xlu0 %681, %v383
      %v683 = vpop.permute.xlu0 %682
      %686 = vset.pattern.permute.xlu0 0
      %687 = vperm.xlu0 %686, %v384
      %v688 = vpop.permute.xlu0 %687
      %691 = vset.pattern.permute.xlu0 0
      %692 = vperm.xlu0 %691, %v385
      %v693 = vpop.permute.xlu0 %692
      %696 = vset.pattern.permute.xlu0 0
      %697 = vperm.xlu0 %696, %v386
      %v698 = vpop.permute.xlu0 %697
      %701 = vset.pattern.permute.xlu0 0
      %702 = vperm.xlu0 %701, %v387
      %v703 = vpop.permute.xlu0 %702
      %706 = vset.pattern.permute.xlu0 0
      %707 = vperm.xlu0 %706, %v388
      %v708 = vpop.permute.xlu0 %707
      %711 = vset.pattern.permute.xlu0 0
      %712 = vperm.xlu0 %711, %v389
      %v713 = vpop.permute.xlu0 %712
      %716 = vset.pattern.permute.xlu0 0
      %717 = vperm.xlu0 %716, %v390
      %v718 = vpop.permute.xlu0 %717
      %721 = vset.pattern.permute.xlu0 0
      %722 = vperm.xlu0 %721, %v391
      %v723 = vpop.permute.xlu0 %722
      %726 = vset.pattern.permute.xlu0 0
      %727 = vperm.xlu0 %726, %v392
      %v728 = vpop.permute.xlu0 %727
      %731 = vset.pattern.permute.xlu0 0
      %732 = vperm.xlu0 %731, %v393
      %v733 = vpop.permute.xlu0 %732
      %736 = vset.pattern.permute.xlu0 0
      %737 = vperm.xlu0 %736, %v394
      %v738 = vpop.permute.xlu0 %737
      %741 = vset.pattern.permute.xlu0 0
      %742 = vperm.xlu0 %741, %v395
      %v743 = vpop.permute.xlu0 %742
      %746 = vset.pattern.permute.xlu0 0
      %747 = vperm.xlu0 %746, %v396
      %v748 = vpop.permute.xlu0 %747
      %751 = vset.pattern.permute.xlu0 0
      %752 = vperm.xlu0 %751, %v397
      %v753 = vpop.permute.xlu0 %752
      %756 = vset.pattern.permute.xlu0 0
      %757 = vperm.xlu0 %756, %v398
      %v758 = vpop.permute.xlu0 %757
      %761 = vset.pattern.permute.xlu0 0
      %762 = vperm.xlu0 %761, %v399
      %v763 = vpop.permute.xlu0 %762
      %766 = vset.pattern.permute.xlu0 0
      %767 = vperm.xlu0 %766, %v400
      %v768 = vpop.permute.xlu0 %767
      %771 = vset.pattern.permute.xlu0 0
      %772 = vperm.xlu0 %771, %v401
      %v773 = vpop.permute.xlu0 %772
      %776 = vset.pattern.permute.xlu0 0
      %777 = vperm.xlu0 %776, %v402
      %v778 = vpop.permute.xlu0 %777
      %781 = vset.pattern.permute.xlu0 0
      %782 = vperm.xlu0 %781, %v403
      %v783 = vpop.permute.xlu0 %782
      %786 = vset.pattern.permute.xlu0 0
      %787 = vperm.xlu0 %786, %v404
      %v788 = vpop.permute.xlu0 %787
      %791 = vset.pattern.permute.xlu0 0
      %792 = vperm.xlu0 %791, %v405
      %v793 = vpop.permute.xlu0 %792
      %796 = vset.pattern.permute.xlu0 0
      %797 = vperm.xlu0 %796, %v406
      %v798 = vpop.permute.xlu0 %797
      %801 = vset.pattern.permute.xlu0 0
      %802 = vperm.xlu0 %801, %v407
      %v803 = vpop.permute.xlu0 %802
      %806 = vset.pattern.permute.xlu0 0
      %807 = vperm.xlu0 %806, %v408
      %v808 = vpop.permute.xlu0 %807
      %811 = vset.pattern.permute.xlu0 0
      %812 = vperm.xlu0 %811, %v409
      %v813 = vpop.permute.xlu0 %812
      %816 = vset.pattern.permute.xlu0 0
      %817 = vperm.xlu0 %816, %v410
      %v818 = vpop.permute.xlu0 %817
      %821 = vset.pattern.permute.xlu0 0
      %822 = vperm.xlu0 %821, %v411
      %v823 = vpop.permute.xlu0 %822
      %826 = vset.pattern.permute.xlu0 0
      %827 = vperm.xlu0 %826, %v412
      %v828 = vpop.permute.xlu0 %827
      %831 = vset.pattern.permute.xlu0 0
      %832 = vperm.xlu0 %831, %v413
      %v833 = vpop.permute.xlu0 %832
      %836 = vset.pattern.permute.xlu0 0
      %837 = vperm.xlu0 %836, %v414
      %v838 = vpop.permute.xlu0 %837
      %841 = vset.pattern.permute.xlu0 0
      %842 = vperm.xlu0 %841, %v415
      %v843 = vpop.permute.xlu0 %842
      %846 = vset.pattern.permute.xlu0 0
      %847 = vperm.xlu0 %846, %v416
      %v848 = vpop.permute.xlu0 %847
      %851 = vset.pattern.permute.xlu0 0
      %852 = vperm.xlu0 %851, %v417
      %v853 = vpop.permute.xlu0 %852
      %856 = vset.pattern.permute.xlu0 0
      %857 = vperm.xlu0 %856, %v418
      %v858 = vpop.permute.xlu0 %857
      %861 = vset.pattern.permute.xlu0 0
      %862 = vperm.xlu0 %861, %v419
      %v863 = vpop.permute.xlu0 %862
      %866 = vset.pattern.permute.xlu0 0
      %867 = vperm.xlu0 %866, %v420
      %v868 = vpop.permute.xlu0 %867
      %871 = vset.pattern.permute.xlu0 0
      %872 = vperm.xlu0 %871, %v421
      %v873 = vpop.permute.xlu0 %872
      %876 = vset.pattern.permute.xlu0 0
      %877 = vperm.xlu0 %876, %v422
      %v878 = vpop.permute.xlu0 %877
      %881 = vset.pattern.permute.xlu0 0
      %882 = vperm.xlu0 %881, %v423
      %v883 = vpop.permute.xlu0 %882
      %886 = vset.pattern.permute.xlu0 0
      %887 = vperm.xlu0 %886, %v424
      %v888 = vpop.permute.xlu0 %887
      %891 = vset.pattern.permute.xlu0 0
      %892 = vperm.xlu0 %891, %v425
      %v893 = vpop.permute.xlu0 %892
      %896 = vset.pattern.permute.xlu0 0
      %897 = vperm.xlu0 %896, %v426
      %v898 = vpop.permute.xlu0 %897
      %901 = vset.pattern.permute.xlu0 0
      %902 = vperm.xlu0 %901, %v427
      %v903 = vpop.permute.xlu0 %902
      %906 = vset.pattern.permute.xlu0 0
      %907 = vperm.xlu0 %906, %v428
      %v908 = vpop.permute.xlu0 %907
      %911 = vset.pattern.permute.xlu0 0
      %912 = vperm.xlu0 %911, %v429
      %v913 = vpop.permute.xlu0 %912
      %916 = vset.pattern.permute.xlu0 0
      %917 = vperm.xlu0 %916, %v430
      %v918 = vpop.permute.xlu0 %917
      %921 = vset.pattern.permute.xlu0 0
      %922 = vperm.xlu0 %921, %v431
      %v923 = vpop.permute.xlu0 %922
      %926 = vset.pattern.permute.xlu0 0
      %927 = vperm.xlu0 %926, %v432
      %v928 = vpop.permute.xlu0 %927
      %931 = vset.pattern.permute.xlu0 0
      %932 = vperm.xlu0 %931, %v433
      %v933 = vpop.permute.xlu0 %932
      %936 = vset.pattern.permute.xlu0 0
      %937 = vperm.xlu0 %936, %v434
      %v938 = vpop.permute.xlu0 %937
      %941 = vset.pattern.permute.xlu0 0
      %942 = vperm.xlu0 %941, %v435
      %v943 = vpop.permute.xlu0 %942
      %946 = vset.pattern.permute.xlu0 0
      %947 = vperm.xlu0 %946, %v436
      %v948 = vpop.permute.xlu0 %947
      %951 = vset.pattern.permute.xlu0 0
      %952 = vperm.xlu0 %951, %v437
      %v953 = vpop.permute.xlu0 %952
      %956 = vset.pattern.permute.xlu0 0
      %957 = vperm.xlu0 %956, %v438
      %v958 = vpop.permute.xlu0 %957
      %961 = vset.pattern.permute.xlu0 0
      %962 = vperm.xlu0 %961, %v439
      %v963 = vpop.permute.xlu0 %962
      %966 = vset.pattern.permute.xlu0 0
      %967 = vperm.xlu0 %966, %v440
      %v968 = vpop.permute.xlu0 %967
      %971 = vset.pattern.permute.xlu0 0
      %972 = vperm.xlu0 %971, %v441
      %v973 = vpop.permute.xlu0 %972
      %976 = vset.pattern.permute.xlu0 0
      %977 = vperm.xlu0 %976, %v442
      %v978 = vpop.permute.xlu0 %977
      %981 = vset.pattern.permute.xlu0 0
      %982 = vperm.xlu0 %981, %v443
      %v983 = vpop.permute.xlu0 %982
      %986 = vset.pattern.permute.xlu0 0
      %987 = vperm.xlu0 %986, %v444
      %v988 = vpop.permute.xlu0 %987
      %991 = vset.pattern.permute.xlu0 0
      %992 = vperm.xlu0 %991, %v445
      %v993 = vpop.permute.xlu0 %992
      %996 = vset.pattern.permute.xlu0 0
      %997 = vperm.xlu0 %996, %v446
      %v998 = vpop.permute.xlu0 %997
      %1001 = vset.pattern.permute.xlu0 0
      %1002 = vperm.xlu0 %1001, %v447
      %v1003 = vpop.permute.xlu0 %1002
      %1006 = vset.pattern.permute.xlu0 0
      %1007 = vperm.xlu0 %1006, %v448
      %v1008 = vpop.permute.xlu0 %1007
      %1011 = vset.pattern.permute.xlu0 0
      %1012 = vperm.xlu0 %1011, %v449
      %v1013 = vpop.permute.xlu0 %1012
      %1016 = vset.pattern.permute.xlu0 0
      %1017 = vperm.xlu0 %1016, %v450
      %v1018 = vpop.permute.xlu0 %1017
      %1021 = vset.pattern.permute.xlu0 0
      %1022 = vperm.xlu0 %1021, %v451
      %v1023 = vpop.permute.xlu0 %1022
      %1026 = vset.pattern.permute.xlu0 0
      %1027 = vperm.xlu0 %1026, %v452
      %v1028 = vpop.permute.xlu0 %1027
      %1031 = vset.pattern.permute.xlu0 0
      %1032 = vperm.xlu0 %1031, %v453
      %v1033 = vpop.permute.xlu0 %1032
      %1036 = vset.pattern.permute.xlu0 0
      %1037 = vperm.xlu0 %1036, %v454
      %v1038 = vpop.permute.xlu0 %1037
      %1041 = vset.pattern.permute.xlu0 0
      %1042 = vperm.xlu0 %1041, %v455
      %v1043 = vpop.permute.xlu0 %1042
      %1046 = vset.pattern.permute.xlu0 0
      %1047 = vperm.xlu0 %1046, %v456
      %v1048 = vpop.permute.xlu0 %1047
      %1051 = vset.pattern.permute.xlu0 0
      %1052 = vperm.xlu0 %1051, %v457
      %v1053 = vpop.permute.xlu0 %1052
      %1056 = vset.pattern.permute.xlu0 0
      %1057 = vperm.xlu0 %1056, %v458
      %v1058 = vpop.permute.xlu0 %1057
      %1061 = vset.pattern.permute.xlu0 0
      %1062 = vperm.xlu0 %1061, %v459
      %v1063 = vpop.permute.xlu0 %1062
      %1066 = vset.pattern.permute.xlu0 0
      %1067 = vperm.xlu0 %1066, %v460
      %v1068 = vpop.permute.xlu0 %1067
      %1071 = vset.pattern.permute.xlu0 0
      %1072 = vperm.xlu0 %1071, %v461
      %v1073 = vpop.permute.xlu0 %1072
      %1076 = vset.pattern.permute.xlu0 0
      %1077 = vperm.xlu0 %1076, %v462
      %v1078 = vpop.permute.xlu0 %1077
      %1081 = vset.pattern.permute.xlu0 0
      %1082 = vperm.xlu0 %1081, %v463
      %v1083 = vpop.permute.xlu0 %1082
      %1086 = vset.pattern.permute.xlu0 0
      %1087 = vperm.xlu0 %1086, %v464
      %v1088 = vpop.permute.xlu0 %1087
      %1091 = vset.pattern.permute.xlu0 0
      %1092 = vperm.xlu0 %1091, %v465
      %v1093 = vpop.permute.xlu0 %1092
      %1096 = vset.pattern.permute.xlu0 0
      %1097 = vperm.xlu0 %1096, %v466
      %v1098 = vpop.permute.xlu0 %1097
      %1101 = vset.pattern.permute.xlu0 0
      %1102 = vperm.xlu0 %1101, %v467
      %v1103 = vpop.permute.xlu0 %1102
      %1106 = vset.pattern.permute.xlu0 0
      %1107 = vperm.xlu0 %1106, %v468
      %v1108 = vpop.permute.xlu0 %1107
      %v1110 = vlaneseq
      %v1111 = vshrl.u32 %v1110, 7
      %v1112 = vsub.s32 0, %v1111
      %v1113 = vrot.slane %v469, %v1112
      %v1114 = vmul.f32 %v473, %v1113
      %v1115 = vmul.f32 %v478, %v1113
      %v1116 = vmul.f32 %v483, %v1113
      %v1117 = vmul.f32 %v488, %v1113
      %v1118 = vmul.f32 %v493, %v1113
      %v1119 = vmul.f32 %v498, %v1113
      %v1120 = vmul.f32 %v503, %v1113
      %v1121 = vmul.f32 %v508, %v1113
      %v1122 = vmul.f32 %v513, %v1113
      %v1123 = vmul.f32 %v518, %v1113
      %v1124 = vmul.f32 %v523, %v1113
      %v1125 = vmul.f32 %v528, %v1113
      %v1126 = vmul.f32 %v533, %v1113
      %v1127 = vmul.f32 %v538, %v1113
      %v1128 = vmul.f32 %v543, %v1113
      %v1129 = vmul.f32 %v548, %v1113
      %v1130 = vmul.f32 %v553, %v1113
      %v1131 = vmul.f32 %v558, %v1113
      %v1132 = vmul.f32 %v563, %v1113
      %v1133 = vmul.f32 %v568, %v1113
      %v1134 = vmul.f32 %v573, %v1113
      %v1135 = vmul.f32 %v578, %v1113
      %v1136 = vmul.f32 %v583, %v1113
      %v1137 = vmul.f32 %v588, %v1113
      %v1138 = vmul.f32 %v593, %v1113
      %v1139 = vmul.f32 %v598, %v1113
      %v1140 = vmul.f32 %v603, %v1113
      %v1141 = vmul.f32 %v608, %v1113
      %v1142 = vmul.f32 %v613, %v1113
      %v1143 = vmul.f32 %v618, %v1113
      %v1144 = vmul.f32 %v623, %v1113
      %v1145 = vmul.f32 %v628, %v1113
      %v1146 = vmul.f32 %v633, %v1113
      %v1147 = vmul.f32 %v638, %v1113
      %v1148 = vmul.f32 %v643, %v1113
      %v1149 = vmul.f32 %v648, %v1113
      %v1150 = vmul.f32 %v653, %v1113
      %v1151 = vmul.f32 %v658, %v1113
      %v1152 = vmul.f32 %v663, %v1113
      %v1153 = vmul.f32 %v668, %v1113
      %v1154 = vmul.f32 %v673, %v1113
      %v1155 = vmul.f32 %v678, %v1113
      %v1156 = vmul.f32 %v683, %v1113
      %v1157 = vmul.f32 %v688, %v1113
      %v1158 = vmul.f32 %v693, %v1113
      %v1159 = vmul.f32 %v698, %v1113
      %v1160 = vmul.f32 %v703, %v1113
      %v1161 = vmul.f32 %v708, %v1113
      %v1162 = vmul.f32 %v713, %v1113
      %v1163 = vmul.f32 %v718, %v1113
      %v1164 = vmul.f32 %v723, %v1113
      %v1165 = vmul.f32 %v728, %v1113
      %v1166 = vmul.f32 %v733, %v1113
      %v1167 = vmul.f32 %v738, %v1113
      %v1168 = vmul.f32 %v743, %v1113
      %v1169 = vmul.f32 %v748, %v1113
      %v1170 = vmul.f32 %v753, %v1113
      %v1171 = vmul.f32 %v758, %v1113
      %v1172 = vmul.f32 %v763, %v1113
      %v1173 = vmul.f32 %v768, %v1113
      %v1174 = vmul.f32 %v773, %v1113
      %v1175 = vmul.f32 %v778, %v1113
      %v1176 = vmul.f32 %v783, %v1113
      %v1177 = vmul.f32 %v788, %v1113
      %v1178 = vmul.f32 %v793, %v1113
      %v1179 = vmul.f32 %v798, %v1113
      %v1180 = vmul.f32 %v803, %v1113
      %v1181 = vmul.f32 %v808, %v1113
      %v1182 = vmul.f32 %v813, %v1113
      %v1183 = vmul.f32 %v818, %v1113
      %v1184 = vmul.f32 %v823, %v1113
      %v1185 = vmul.f32 %v828, %v1113
      %v1186 = vmul.f32 %v833, %v1113
      %v1187 = vmul.f32 %v838, %v1113
      %v1188 = vmul.f32 %v843, %v1113
      %v1189 = vmul.f32 %v848, %v1113
      %v1190 = vmul.f32 %v853, %v1113
      %v1191 = vmul.f32 %v858, %v1113
      %v1192 = vmul.f32 %v863, %v1113
      %v1193 = vmul.f32 %v868, %v1113
      %v1194 = vmul.f32 %v873, %v1113
      %v1195 = vmul.f32 %v878, %v1113
      %v1196 = vmul.f32 %v883, %v1113
      %v1197 = vmul.f32 %v888, %v1113
      %v1198 = vmul.f32 %v893, %v1113
      %v1199 = vmul.f32 %v898, %v1113
      %v1200 = vmul.f32 %v903, %v1113
      %v1201 = vmul.f32 %v908, %v1113
      %v1202 = vmul.f32 %v913, %v1113
      %v1203 = vmul.f32 %v918, %v1113
      %v1204 = vmul.f32 %v923, %v1113
      %v1205 = vmul.f32 %v928, %v1113
      %v1206 = vmul.f32 %v933, %v1113
      %v1207 = vmul.f32 %v938, %v1113
      %v1208 = vmul.f32 %v943, %v1113
      %v1209 = vmul.f32 %v948, %v1113
      %v1210 = vmul.f32 %v953, %v1113
      %v1211 = vmul.f32 %v958, %v1113
      %v1212 = vmul.f32 %v963, %v1113
      %v1213 = vmul.f32 %v968, %v1113
      %v1214 = vmul.f32 %v973, %v1113
      %v1215 = vmul.f32 %v978, %v1113
      %v1216 = vmul.f32 %v983, %v1113
      %v1217 = vmul.f32 %v988, %v1113
      %v1218 = vmul.f32 %v993, %v1113
      %v1219 = vmul.f32 %v998, %v1113
      %v1220 = vmul.f32 %v1003, %v1113
      %v1221 = vmul.f32 %v1008, %v1113
      %v1222 = vmul.f32 %v1013, %v1113
      %v1223 = vmul.f32 %v1018, %v1113
      %v1224 = vmul.f32 %v1023, %v1113
      %v1225 = vmul.f32 %v1028, %v1113
      %v1226 = vmul.f32 %v1033, %v1113
      %v1227 = vmul.f32 %v1038, %v1113
      %v1228 = vmul.f32 %v1043, %v1113
      %v1229 = vmul.f32 %v1048, %v1113
      %v1230 = vmul.f32 %v1053, %v1113
      %v1231 = vmul.f32 %v1058, %v1113
      %v1232 = vmul.f32 %v1063, %v1113
      %v1233 = vmul.f32 %v1068, %v1113
      %v1234 = vmul.f32 %v1073, %v1113
      %v1235 = vmul.f32 %v1078, %v1113
      %v1236 = vmul.f32 %v1083, %v1113
      %v1237 = vmul.f32 %v1088, %v1113
      %v1238 = vmul.f32 %v1093, %v1113
      %v1239 = vmul.f32 %v1098, %v1113
      %v1240 = vmul.f32 %v1103, %v1113
      %v1241 = vmul.f32 %v1108, %v1113
      %1242 = vset.pattern.permute.xlu0 1
      %1243 = vperm.xlu0 %1242, %v341
      %v1244 = vpop.permute.xlu0 %1243
      %1246 = vset.pattern.permute.xlu0 1
      %1247 = vperm.xlu0 %1246, %v342
      %v1248 = vpop.permute.xlu0 %1247
      %1250 = vset.pattern.permute.xlu0 1
      %1251 = vperm.xlu0 %1250, %v343
      %v1252 = vpop.permute.xlu0 %1251
      %1254 = vset.pattern.permute.xlu0 1
      %1255 = vperm.xlu0 %1254, %v344
      %v1256 = vpop.permute.xlu0 %1255
      %1258 = vset.pattern.permute.xlu0 1
      %1259 = vperm.xlu0 %1258, %v345
      %v1260 = vpop.permute.xlu0 %1259
      %1262 = vset.pattern.permute.xlu0 1
      %1263 = vperm.xlu0 %1262, %v346
      %v1264 = vpop.permute.xlu0 %1263
      %1266 = vset.pattern.permute.xlu0 1
      %1267 = vperm.xlu0 %1266, %v347
      %v1268 = vpop.permute.xlu0 %1267
      %1270 = vset.pattern.permute.xlu0 1
      %1271 = vperm.xlu0 %1270, %v348
      %v1272 = vpop.permute.xlu0 %1271
      %1274 = vset.pattern.permute.xlu0 1
      %1275 = vperm.xlu0 %1274, %v349
      %v1276 = vpop.permute.xlu0 %1275
      %1278 = vset.pattern.permute.xlu0 1
      %1279 = vperm.xlu0 %1278, %v350
      %v1280 = vpop.permute.xlu0 %1279
      %1282 = vset.pattern.permute.xlu0 1
      %1283 = vperm.xlu0 %1282, %v351
      %v1284 = vpop.permute.xlu0 %1283
      %1286 = vset.pattern.permute.xlu0 1
      %1287 = vperm.xlu0 %1286, %v352
      %v1288 = vpop.permute.xlu0 %1287
      %1290 = vset.pattern.permute.xlu0 1
      %1291 = vperm.xlu0 %1290, %v353
      %v1292 = vpop.permute.xlu0 %1291
      %1294 = vset.pattern.permute.xlu0 1
      %1295 = vperm.xlu0 %1294, %v354
      %v1296 = vpop.permute.xlu0 %1295
      %1298 = vset.pattern.permute.xlu0 1
      %1299 = vperm.xlu0 %1298, %v355
      %v1300 = vpop.permute.xlu0 %1299
      %1302 = vset.pattern.permute.xlu0 1
      %1303 = vperm.xlu0 %1302, %v356
      %v1304 = vpop.permute.xlu0 %1303
      %1306 = vset.pattern.permute.xlu0 1
      %1307 = vperm.xlu0 %1306, %v357
      %v1308 = vpop.permute.xlu0 %1307
      %1310 = vset.pattern.permute.xlu0 1
      %1311 = vperm.xlu0 %1310, %v358
      %v1312 = vpop.permute.xlu0 %1311
      %1314 = vset.pattern.permute.xlu0 1
      %1315 = vperm.xlu0 %1314, %v359
      %v1316 = vpop.permute.xlu0 %1315
      %1318 = vset.pattern.permute.xlu0 1
      %1319 = vperm.xlu0 %1318, %v360
      %v1320 = vpop.permute.xlu0 %1319
      %1322 = vset.pattern.permute.xlu0 1
      %1323 = vperm.xlu0 %1322, %v361
      %v1324 = vpop.permute.xlu0 %1323
      %1326 = vset.pattern.permute.xlu0 1
      %1327 = vperm.xlu0 %1326, %v362
      %v1328 = vpop.permute.xlu0 %1327
      %1330 = vset.pattern.permute.xlu0 1
      %1331 = vperm.xlu0 %1330, %v363
      %v1332 = vpop.permute.xlu0 %1331
      %1334 = vset.pattern.permute.xlu0 1
      %1335 = vperm.xlu0 %1334, %v364
      %v1336 = vpop.permute.xlu0 %1335
      %1338 = vset.pattern.permute.xlu0 1
      %1339 = vperm.xlu0 %1338, %v365
      %v1340 = vpop.permute.xlu0 %1339
      %1342 = vset.pattern.permute.xlu0 1
      %1343 = vperm.xlu0 %1342, %v366
      %v1344 = vpop.permute.xlu0 %1343
      %1346 = vset.pattern.permute.xlu0 1
      %1347 = vperm.xlu0 %1346, %v367
      %v1348 = vpop.permute.xlu0 %1347
      %1350 = vset.pattern.permute.xlu0 1
      %1351 = vperm.xlu0 %1350, %v368
      %v1352 = vpop.permute.xlu0 %1351
      %1354 = vset.pattern.permute.xlu0 1
      %1355 = vperm.xlu0 %1354, %v369
      %v1356 = vpop.permute.xlu0 %1355
      %1358 = vset.pattern.permute.xlu0 1
      %1359 = vperm.xlu0 %1358, %v370
      %v1360 = vpop.permute.xlu0 %1359
      %1362 = vset.pattern.permute.xlu0 1
      %1363 = vperm.xlu0 %1362, %v371
      %v1364 = vpop.permute.xlu0 %1363
      %1366 = vset.pattern.permute.xlu0 1
      %1367 = vperm.xlu0 %1366, %v372
      %v1368 = vpop.permute.xlu0 %1367
      %1370 = vset.pattern.permute.xlu0 1
      %1371 = vperm.xlu0 %1370, %v373
      %v1372 = vpop.permute.xlu0 %1371
      %1374 = vset.pattern.permute.xlu0 1
      %1375 = vperm.xlu0 %1374, %v374
      %v1376 = vpop.permute.xlu0 %1375
      %1378 = vset.pattern.permute.xlu0 1
      %1379 = vperm.xlu0 %1378, %v375
      %v1380 = vpop.permute.xlu0 %1379
      %1382 = vset.pattern.permute.xlu0 1
      %1383 = vperm.xlu0 %1382, %v376
      %v1384 = vpop.permute.xlu0 %1383
      %1386 = vset.pattern.permute.xlu0 1
      %1387 = vperm.xlu0 %1386, %v377
      %v1388 = vpop.permute.xlu0 %1387
      %1390 = vset.pattern.permute.xlu0 1
      %1391 = vperm.xlu0 %1390, %v378
      %v1392 = vpop.permute.xlu0 %1391
      %1394 = vset.pattern.permute.xlu0 1
      %1395 = vperm.xlu0 %1394, %v379
      %v1396 = vpop.permute.xlu0 %1395
      %1398 = vset.pattern.permute.xlu0 1
      %1399 = vperm.xlu0 %1398, %v380
      %v1400 = vpop.permute.xlu0 %1399
      %1402 = vset.pattern.permute.xlu0 1
      %1403 = vperm.xlu0 %1402, %v381
      %v1404 = vpop.permute.xlu0 %1403
      %1406 = vset.pattern.permute.xlu0 1
      %1407 = vperm.xlu0 %1406, %v382
      %v1408 = vpop.permute.xlu0 %1407
      %1410 = vset.pattern.permute.xlu0 1
      %1411 = vperm.xlu0 %1410, %v383
      %v1412 = vpop.permute.xlu0 %1411
      %1414 = vset.pattern.permute.xlu0 1
      %1415 = vperm.xlu0 %1414, %v384
      %v1416 = vpop.permute.xlu0 %1415
      %1418 = vset.pattern.permute.xlu0 1
      %1419 = vperm.xlu0 %1418, %v385
      %v1420 = vpop.permute.xlu0 %1419
      %1422 = vset.pattern.permute.xlu0 1
      %1423 = vperm.xlu0 %1422, %v386
      %v1424 = vpop.permute.xlu0 %1423
      %1426 = vset.pattern.permute.xlu0 1
      %1427 = vperm.xlu0 %1426, %v387
      %v1428 = vpop.permute.xlu0 %1427
      %1430 = vset.pattern.permute.xlu0 1
      %1431 = vperm.xlu0 %1430, %v388
      %v1432 = vpop.permute.xlu0 %1431
      %1434 = vset.pattern.permute.xlu0 1
      %1435 = vperm.xlu0 %1434, %v389
      %v1436 = vpop.permute.xlu0 %1435
      %1438 = vset.pattern.permute.xlu0 1
      %1439 = vperm.xlu0 %1438, %v390
      %v1440 = vpop.permute.xlu0 %1439
      %1442 = vset.pattern.permute.xlu0 1
      %1443 = vperm.xlu0 %1442, %v391
      %v1444 = vpop.permute.xlu0 %1443
      %1446 = vset.pattern.permute.xlu0 1
      %1447 = vperm.xlu0 %1446, %v392
      %v1448 = vpop.permute.xlu0 %1447
      %1450 = vset.pattern.permute.xlu0 1
      %1451 = vperm.xlu0 %1450, %v393
      %v1452 = vpop.permute.xlu0 %1451
      %1454 = vset.pattern.permute.xlu0 1
      %1455 = vperm.xlu0 %1454, %v394
      %v1456 = vpop.permute.xlu0 %1455
      %1458 = vset.pattern.permute.xlu0 1
      %1459 = vperm.xlu0 %1458, %v395
      %v1460 = vpop.permute.xlu0 %1459
      %1462 = vset.pattern.permute.xlu0 1
      %1463 = vperm.xlu0 %1462, %v396
      %v1464 = vpop.permute.xlu0 %1463
      %1466 = vset.pattern.permute.xlu0 1
      %1467 = vperm.xlu0 %1466, %v397
      %v1468 = vpop.permute.xlu0 %1467
      %1470 = vset.pattern.permute.xlu0 1
      %1471 = vperm.xlu0 %1470, %v398
      %v1472 = vpop.permute.xlu0 %1471
      %1474 = vset.pattern.permute.xlu0 1
      %1475 = vperm.xlu0 %1474, %v399
      %v1476 = vpop.permute.xlu0 %1475
      %1478 = vset.pattern.permute.xlu0 1
      %1479 = vperm.xlu0 %1478, %v400
      %v1480 = vpop.permute.xlu0 %1479
      %1482 = vset.pattern.permute.xlu0 1
      %1483 = vperm.xlu0 %1482, %v401
      %v1484 = vpop.permute.xlu0 %1483
      %1486 = vset.pattern.permute.xlu0 1
      %1487 = vperm.xlu0 %1486, %v402
      %v1488 = vpop.permute.xlu0 %1487
      %1490 = vset.pattern.permute.xlu0 1
      %1491 = vperm.xlu0 %1490, %v403
      %v1492 = vpop.permute.xlu0 %1491
      %1494 = vset.pattern.permute.xlu0 1
      %1495 = vperm.xlu0 %1494, %v404
      %v1496 = vpop.permute.xlu0 %1495
      %1498 = vset.pattern.permute.xlu0 1
      %1499 = vperm.xlu0 %1498, %v405
      %v1500 = vpop.permute.xlu0 %1499
      %1502 = vset.pattern.permute.xlu0 1
      %1503 = vperm.xlu0 %1502, %v406
      %v1504 = vpop.permute.xlu0 %1503
      %1506 = vset.pattern.permute.xlu0 1
      %1507 = vperm.xlu0 %1506, %v407
      %v1508 = vpop.permute.xlu0 %1507
      %1510 = vset.pattern.permute.xlu0 1
      %1511 = vperm.xlu0 %1510, %v408
      %v1512 = vpop.permute.xlu0 %1511
      %1514 = vset.pattern.permute.xlu0 1
      %1515 = vperm.xlu0 %1514, %v409
      %v1516 = vpop.permute.xlu0 %1515
      %1518 = vset.pattern.permute.xlu0 1
      %1519 = vperm.xlu0 %1518, %v410
      %v1520 = vpop.permute.xlu0 %1519
      %1522 = vset.pattern.permute.xlu0 1
      %1523 = vperm.xlu0 %1522, %v411
      %v1524 = vpop.permute.xlu0 %1523
      %1526 = vset.pattern.permute.xlu0 1
      %1527 = vperm.xlu0 %1526, %v412
      %v1528 = vpop.permute.xlu0 %1527
      %1530 = vset.pattern.permute.xlu0 1
      %1531 = vperm.xlu0 %1530, %v413
      %v1532 = vpop.permute.xlu0 %1531
      %1534 = vset.pattern.permute.xlu0 1
      %1535 = vperm.xlu0 %1534, %v414
      %v1536 = vpop.permute.xlu0 %1535
      %1538 = vset.pattern.permute.xlu0 1
      %1539 = vperm.xlu0 %1538, %v415
      %v1540 = vpop.permute.xlu0 %1539
      %1542 = vset.pattern.permute.xlu0 1
      %1543 = vperm.xlu0 %1542, %v416
      %v1544 = vpop.permute.xlu0 %1543
      %1546 = vset.pattern.permute.xlu0 1
      %1547 = vperm.xlu0 %1546, %v417
      %v1548 = vpop.permute.xlu0 %1547
      %1550 = vset.pattern.permute.xlu0 1
      %1551 = vperm.xlu0 %1550, %v418
      %v1552 = vpop.permute.xlu0 %1551
      %1554 = vset.pattern.permute.xlu0 1
      %1555 = vperm.xlu0 %1554, %v419
      %v1556 = vpop.permute.xlu0 %1555
      %1558 = vset.pattern.permute.xlu0 1
      %1559 = vperm.xlu0 %1558, %v420
      %v1560 = vpop.permute.xlu0 %1559
      %1562 = vset.pattern.permute.xlu0 1
      %1563 = vperm.xlu0 %1562, %v421
      %v1564 = vpop.permute.xlu0 %1563
      %1566 = vset.pattern.permute.xlu0 1
      %1567 = vperm.xlu0 %1566, %v422
      %v1568 = vpop.permute.xlu0 %1567
      %1570 = vset.pattern.permute.xlu0 1
      %1571 = vperm.xlu0 %1570, %v423
      %v1572 = vpop.permute.xlu0 %1571
      %1574 = vset.pattern.permute.xlu0 1
      %1575 = vperm.xlu0 %1574, %v424
      %v1576 = vpop.permute.xlu0 %1575
      %1578 = vset.pattern.permute.xlu0 1
      %1579 = vperm.xlu0 %1578, %v425
      %v1580 = vpop.permute.xlu0 %1579
      %1582 = vset.pattern.permute.xlu0 1
      %1583 = vperm.xlu0 %1582, %v426
      %v1584 = vpop.permute.xlu0 %1583
      %1586 = vset.pattern.permute.xlu0 1
      %1587 = vperm.xlu0 %1586, %v427
      %v1588 = vpop.permute.xlu0 %1587
      %1590 = vset.pattern.permute.xlu0 1
      %1591 = vperm.xlu0 %1590, %v428
      %v1592 = vpop.permute.xlu0 %1591
      %1594 = vset.pattern.permute.xlu0 1
      %1595 = vperm.xlu0 %1594, %v429
      %v1596 = vpop.permute.xlu0 %1595
      %1598 = vset.pattern.permute.xlu0 1
      %1599 = vperm.xlu0 %1598, %v430
      %v1600 = vpop.permute.xlu0 %1599
      %1602 = vset.pattern.permute.xlu0 1
      %1603 = vperm.xlu0 %1602, %v431
      %v1604 = vpop.permute.xlu0 %1603
      %1606 = vset.pattern.permute.xlu0 1
      %1607 = vperm.xlu0 %1606, %v432
      %v1608 = vpop.permute.xlu0 %1607
      %1610 = vset.pattern.permute.xlu0 1
      %1611 = vperm.xlu0 %1610, %v433
      %v1612 = vpop.permute.xlu0 %1611
      %1614 = vset.pattern.permute.xlu0 1
      %1615 = vperm.xlu0 %1614, %v434
      %v1616 = vpop.permute.xlu0 %1615
      %1618 = vset.pattern.permute.xlu0 1
      %1619 = vperm.xlu0 %1618, %v435
      %v1620 = vpop.permute.xlu0 %1619
      %1622 = vset.pattern.permute.xlu0 1
      %1623 = vperm.xlu0 %1622, %v436
      %v1624 = vpop.permute.xlu0 %1623
      %1626 = vset.pattern.permute.xlu0 1
      %1627 = vperm.xlu0 %1626, %v437
      %v1628 = vpop.permute.xlu0 %1627
      %1630 = vset.pattern.permute.xlu0 1
      %1631 = vperm.xlu0 %1630, %v438
      %v1632 = vpop.permute.xlu0 %1631
      %1634 = vset.pattern.permute.xlu0 1
      %1635 = vperm.xlu0 %1634, %v439
      %v1636 = vpop.permute.xlu0 %1635
      %1638 = vset.pattern.permute.xlu0 1
      %1639 = vperm.xlu0 %1638, %v440
      %v1640 = vpop.permute.xlu0 %1639
      %1642 = vset.pattern.permute.xlu0 1
      %1643 = vperm.xlu0 %1642, %v441
      %v1644 = vpop.permute.xlu0 %1643
      %1646 = vset.pattern.permute.xlu0 1
      %1647 = vperm.xlu0 %1646, %v442
      %v1648 = vpop.permute.xlu0 %1647
      %1650 = vset.pattern.permute.xlu0 1
      %1651 = vperm.xlu0 %1650, %v443
      %v1652 = vpop.permute.xlu0 %1651
      %1654 = vset.pattern.permute.xlu0 1
      %1655 = vperm.xlu0 %1654, %v444
      %v1656 = vpop.permute.xlu0 %1655
      %1658 = vset.pattern.permute.xlu0 1
      %1659 = vperm.xlu0 %1658, %v445
      %v1660 = vpop.permute.xlu0 %1659
      %1662 = vset.pattern.permute.xlu0 1
      %1663 = vperm.xlu0 %1662, %v446
      %v1664 = vpop.permute.xlu0 %1663
      %1666 = vset.pattern.permute.xlu0 1
      %1667 = vperm.xlu0 %1666, %v447
      %v1668 = vpop.permute.xlu0 %1667
      %1670 = vset.pattern.permute.xlu0 1
      %1671 = vperm.xlu0 %1670, %v448
      %v1672 = vpop.permute.xlu0 %1671
      %1674 = vset.pattern.permute.xlu0 1
      %1675 = vperm.xlu0 %1674, %v449
      %v1676 = vpop.permute.xlu0 %1675
      %1678 = vset.pattern.permute.xlu0 1
      %1679 = vperm.xlu0 %1678, %v450
      %v1680 = vpop.permute.xlu0 %1679
      %1682 = vset.pattern.permute.xlu0 1
      %1683 = vperm.xlu0 %1682, %v451
      %v1684 = vpop.permute.xlu0 %1683
      %1686 = vset.pattern.permute.xlu0 1
      %1687 = vperm.xlu0 %1686, %v452
      %v1688 = vpop.permute.xlu0 %1687
      %1690 = vset.pattern.permute.xlu0 1
      %1691 = vperm.xlu0 %1690, %v453
      %v1692 = vpop.permute.xlu0 %1691
      %1694 = vset.pattern.permute.xlu0 1
      %1695 = vperm.xlu0 %1694, %v454
      %v1696 = vpop.permute.xlu0 %1695
      %1698 = vset.pattern.permute.xlu0 1
      %1699 = vperm.xlu0 %1698, %v455
      %v1700 = vpop.permute.xlu0 %1699
      %1702 = vset.pattern.permute.xlu0 1
      %1703 = vperm.xlu0 %1702, %v456
      %v1704 = vpop.permute.xlu0 %1703
      %1706 = vset.pattern.permute.xlu0 1
      %1707 = vperm.xlu0 %1706, %v457
      %v1708 = vpop.permute.xlu0 %1707
      %1710 = vset.pattern.permute.xlu0 1
      %1711 = vperm.xlu0 %1710, %v458
      %v1712 = vpop.permute.xlu0 %1711
      %1714 = vset.pattern.permute.xlu0 1
      %1715 = vperm.xlu0 %1714, %v459
      %v1716 = vpop.permute.xlu0 %1715
      %1718 = vset.pattern.permute.xlu0 1
      %1719 = vperm.xlu0 %1718, %v460
      %v1720 = vpop.permute.xlu0 %1719
      %1722 = vset.pattern.permute.xlu0 1
      %1723 = vperm.xlu0 %1722, %v461
      %v1724 = vpop.permute.xlu0 %1723
      %1726 = vset.pattern.permute.xlu0 1
      %1727 = vperm.xlu0 %1726, %v462
      %v1728 = vpop.permute.xlu0 %1727
      %1730 = vset.pattern.permute.xlu0 1
      %1731 = vperm.xlu0 %1730, %v463
      %v1732 = vpop.permute.xlu0 %1731
      %1734 = vset.pattern.permute.xlu0 1
      %1735 = vperm.xlu0 %1734, %v464
      %v1736 = vpop.permute.xlu0 %1735
      %1738 = vset.pattern.permute.xlu0 1
      %1739 = vperm.xlu0 %1738, %v465
      %v1740 = vpop.permute.xlu0 %1739
      %1742 = vset.pattern.permute.xlu0 1
      %1743 = vperm.xlu0 %1742, %v466
      %v1744 = vpop.permute.xlu0 %1743
      %1746 = vset.pattern.permute.xlu0 1
      %1747 = vperm.xlu0 %1746, %v467
      %v1748 = vpop.permute.xlu0 %1747
      %1750 = vset.pattern.permute.xlu0 1
      %1751 = vperm.xlu0 %1750, %v468
      %v1752 = vpop.permute.xlu0 %1751
      %v1754 = vlaneseq
      %v1755 = vshrl.u32 %v1754, 7
      %v1756 = vsub.s32 1, %v1755
      %v1757 = vrot.slane %v469, %v1756
      %v1758 = vmul.f32 %v1244, %v1757
      %v1759 = vmul.f32 %v1248, %v1757
      %v1760 = vmul.f32 %v1252, %v1757
      %v1761 = vmul.f32 %v1256, %v1757
      %v1762 = vmul.f32 %v1260, %v1757
      %v1763 = vmul.f32 %v1264, %v1757
      %v1764 = vmul.f32 %v1268, %v1757
      %v1765 = vmul.f32 %v1272, %v1757
      %v1766 = vmul.f32 %v1276, %v1757
      %v1767 = vmul.f32 %v1280, %v1757
      %v1768 = vmul.f32 %v1284, %v1757
      %v1769 = vmul.f32 %v1288, %v1757
      %v1770 = vmul.f32 %v1292, %v1757
      %v1771 = vmul.f32 %v1296, %v1757
      %v1772 = vmul.f32 %v1300, %v1757
      %v1773 = vmul.f32 %v1304, %v1757
      %v1774 = vmul.f32 %v1308, %v1757
      %v1775 = vmul.f32 %v1312, %v1757
      %v1776 = vmul.f32 %v1316, %v1757
      %v1777 = vmul.f32 %v1320, %v1757
      %v1778 = vmul.f32 %v1324, %v1757
      %v1779 = vmul.f32 %v1328, %v1757
      %v1780 = vmul.f32 %v1332, %v1757
      %v1781 = vmul.f32 %v1336, %v1757
      %v1782 = vmul.f32 %v1340, %v1757
      %v1783 = vmul.f32 %v1344, %v1757
      %v1784 = vmul.f32 %v1348, %v1757
      %v1785 = vmul.f32 %v1352, %v1757
      %v1786 = vmul.f32 %v1356, %v1757
      %v1787 = vmul.f32 %v1360, %v1757
      %v1788 = vmul.f32 %v1364, %v1757
      %v1789 = vmul.f32 %v1368, %v1757
      %v1790 = vmul.f32 %v1372, %v1757
      %v1791 = vmul.f32 %v1376, %v1757
      %v1792 = vmul.f32 %v1380, %v1757
      %v1793 = vmul.f32 %v1384, %v1757
      %v1794 = vmul.f32 %v1388, %v1757
      %v1795 = vmul.f32 %v1392, %v1757
      %v1796 = vmul.f32 %v1396, %v1757
      %v1797 = vmul.f32 %v1400, %v1757
      %v1798 = vmul.f32 %v1404, %v1757
      %v1799 = vmul.f32 %v1408, %v1757
      %v1800 = vmul.f32 %v1412, %v1757
      %v1801 = vmul.f32 %v1416, %v1757
      %v1802 = vmul.f32 %v1420, %v1757
      %v1803 = vmul.f32 %v1424, %v1757
      %v1804 = vmul.f32 %v1428, %v1757
      %v1805 = vmul.f32 %v1432, %v1757
      %v1806 = vmul.f32 %v1436, %v1757
      %v1807 = vmul.f32 %v1440, %v1757
      %v1808 = vmul.f32 %v1444, %v1757
      %v1809 = vmul.f32 %v1448, %v1757
      %v1810 = vmul.f32 %v1452, %v1757
      %v1811 = vmul.f32 %v1456, %v1757
      %v1812 = vmul.f32 %v1460, %v1757
      %v1813 = vmul.f32 %v1464, %v1757
      %v1814 = vmul.f32 %v1468, %v1757
      %v1815 = vmul.f32 %v1472, %v1757
      %v1816 = vmul.f32 %v1476, %v1757
      %v1817 = vmul.f32 %v1480, %v1757
      %v1818 = vmul.f32 %v1484, %v1757
      %v1819 = vmul.f32 %v1488, %v1757
      %v1820 = vmul.f32 %v1492, %v1757
      %v1821 = vmul.f32 %v1496, %v1757
      %v1822 = vmul.f32 %v1500, %v1757
      %v1823 = vmul.f32 %v1504, %v1757
      %v1824 = vmul.f32 %v1508, %v1757
      %v1825 = vmul.f32 %v1512, %v1757
      %v1826 = vmul.f32 %v1516, %v1757
      %v1827 = vmul.f32 %v1520, %v1757
      %v1828 = vmul.f32 %v1524, %v1757
      %v1829 = vmul.f32 %v1528, %v1757
      %v1830 = vmul.f32 %v1532, %v1757
      %v1831 = vmul.f32 %v1536, %v1757
      %v1832 = vmul.f32 %v1540, %v1757
      %v1833 = vmul.f32 %v1544, %v1757
      %v1834 = vmul.f32 %v1548, %v1757
      %v1835 = vmul.f32 %v1552, %v1757
      %v1836 = vmul.f32 %v1556, %v1757
      %v1837 = vmul.f32 %v1560, %v1757
      %v1838 = vmul.f32 %v1564, %v1757
      %v1839 = vmul.f32 %v1568, %v1757
      %v1840 = vmul.f32 %v1572, %v1757
      %v1841 = vmul.f32 %v1576, %v1757
      %v1842 = vmul.f32 %v1580, %v1757
      %v1843 = vmul.f32 %v1584, %v1757
      %v1844 = vmul.f32 %v1588, %v1757
      %v1845 = vmul.f32 %v1592, %v1757
      %v1846 = vmul.f32 %v1596, %v1757
      %v1847 = vmul.f32 %v1600, %v1757
      %v1848 = vmul.f32 %v1604, %v1757
      %v1849 = vmul.f32 %v1608, %v1757
      %v1850 = vmul.f32 %v1612, %v1757
      %v1851 = vmul.f32 %v1616, %v1757
      %v1852 = vmul.f32 %v1620, %v1757
      %v1853 = vmul.f32 %v1624, %v1757
      %v1854 = vmul.f32 %v1628, %v1757
      %v1855 = vmul.f32 %v1632, %v1757
      %v1856 = vmul.f32 %v1636, %v1757
      %v1857 = vmul.f32 %v1640, %v1757
      %v1858 = vmul.f32 %v1644, %v1757
      %v1859 = vmul.f32 %v1648, %v1757
      %v1860 = vmul.f32 %v1652, %v1757
      %v1861 = vmul.f32 %v1656, %v1757
      %v1862 = vmul.f32 %v1660, %v1757
      %v1863 = vmul.f32 %v1664, %v1757
      %v1864 = vmul.f32 %v1668, %v1757
      %v1865 = vmul.f32 %v1672, %v1757
      %v1866 = vmul.f32 %v1676, %v1757
      %v1867 = vmul.f32 %v1680, %v1757
      %v1868 = vmul.f32 %v1684, %v1757
      %v1869 = vmul.f32 %v1688, %v1757
      %v1870 = vmul.f32 %v1692, %v1757
      %v1871 = vmul.f32 %v1696, %v1757
      %v1872 = vmul.f32 %v1700, %v1757
      %v1873 = vmul.f32 %v1704, %v1757
      %v1874 = vmul.f32 %v1708, %v1757
      %v1875 = vmul.f32 %v1712, %v1757
      %v1876 = vmul.f32 %v1716, %v1757
      %v1877 = vmul.f32 %v1720, %v1757
      %v1878 = vmul.f32 %v1724, %v1757
      %v1879 = vmul.f32 %v1728, %v1757
      %v1880 = vmul.f32 %v1732, %v1757
      %v1881 = vmul.f32 %v1736, %v1757
      %v1882 = vmul.f32 %v1740, %v1757
      %v1883 = vmul.f32 %v1744, %v1757
      %v1884 = vmul.f32 %v1748, %v1757
      %v1885 = vmul.f32 %v1752, %v1757
      %v1886 = vadd.f32 %v1114, %v1758
      %v1887 = vadd.f32 %v1115, %v1759
      %v1888 = vadd.f32 %v1116, %v1760
      %v1889 = vadd.f32 %v1117, %v1761
      %v1890 = vadd.f32 %v1118, %v1762
      %v1891 = vadd.f32 %v1119, %v1763
      %v1892 = vadd.f32 %v1120, %v1764
      %v1893 = vadd.f32 %v1121, %v1765
      %v1894 = vadd.f32 %v1122, %v1766
      %v1895 = vadd.f32 %v1123, %v1767
      %v1896 = vadd.f32 %v1124, %v1768
      %v1897 = vadd.f32 %v1125, %v1769
      %v1898 = vadd.f32 %v1126, %v1770
      %v1899 = vadd.f32 %v1127, %v1771
      %v1900 = vadd.f32 %v1128, %v1772
      %v1901 = vadd.f32 %v1129, %v1773
      %v1902 = vadd.f32 %v1130, %v1774
      %v1903 = vadd.f32 %v1131, %v1775
      %v1904 = vadd.f32 %v1132, %v1776
      %v1905 = vadd.f32 %v1133, %v1777
      %v1906 = vadd.f32 %v1134, %v1778
      %v1907 = vadd.f32 %v1135, %v1779
      %v1908 = vadd.f32 %v1136, %v1780
      %v1909 = vadd.f32 %v1137, %v1781
      %v1910 = vadd.f32 %v1138, %v1782
      %v1911 = vadd.f32 %v1139, %v1783
      %v1912 = vadd.f32 %v1140, %v1784
      %v1913 = vadd.f32 %v1141, %v1785
      %v1914 = vadd.f32 %v1142, %v1786
      %v1915 = vadd.f32 %v1143, %v1787
      %v1916 = vadd.f32 %v1144, %v1788
      %v1917 = vadd.f32 %v1145, %v1789
      %v1918 = vadd.f32 %v1146, %v1790
      %v1919 = vadd.f32 %v1147, %v1791
      %v1920 = vadd.f32 %v1148, %v1792
      %v1921 = vadd.f32 %v1149, %v1793
      %v1922 = vadd.f32 %v1150, %v1794
      %v1923 = vadd.f32 %v1151, %v1795
      %v1924 = vadd.f32 %v1152, %v1796
      %v1925 = vadd.f32 %v1153, %v1797
      %v1926 = vadd.f32 %v1154, %v1798
      %v1927 = vadd.f32 %v1155, %v1799
      %v1928 = vadd.f32 %v1156, %v1800
      %v1929 = vadd.f32 %v1157, %v1801
      %v1930 = vadd.f32 %v1158, %v1802
      %v1931 = vadd.f32 %v1159, %v1803
      %v1932 = vadd.f32 %v1160, %v1804
      %v1933 = vadd.f32 %v1161, %v1805
      %v1934 = vadd.f32 %v1162, %v1806
      %v1935 = vadd.f32 %v1163, %v1807
      %v1936 = vadd.f32 %v1164, %v1808
      %v1937 = vadd.f32 %v1165, %v1809
      %v1938 = vadd.f32 %v1166, %v1810
      %v1939 = vadd.f32 %v1167, %v1811
      %v1940 = vadd.f32 %v1168, %v1812
      %v1941 = vadd.f32 %v1169, %v1813
      %v1942 = vadd.f32 %v1170, %v1814
      %v1943 = vadd.f32 %v1171, %v1815
      %v1944 = vadd.f32 %v1172, %v1816
      %v1945 = vadd.f32 %v1173, %v1817
      %v1946 = vadd.f32 %v1174, %v1818
      %v1947 = vadd.f32 %v1175, %v1819
      %v1948 = vadd.f32 %v1176, %v1820
      %v1949 = vadd.f32 %v1177, %v1821
      %v1950 = vadd.f32 %v1178, %v1822
      %v1951 = vadd.f32 %v1179, %v1823
      %v1952 = vadd.f32 %v1180, %v1824
      %v1953 = vadd.f32 %v1181, %v1825
      %v1954 = vadd.f32 %v1182, %v1826
      %v1955 = vadd.f32 %v1183, %v1827
      %v1956 = vadd.f32 %v1184, %v1828
      %v1957 = vadd.f32 %v1185, %v1829
      %v1958 = vadd.f32 %v1186, %v1830
      %v1959 = vadd.f32 %v1187, %v1831
      %v1960 = vadd.f32 %v1188, %v1832
      %v1961 = vadd.f32 %v1189, %v1833
      %v1962 = vadd.f32 %v1190, %v1834
      %v1963 = vadd.f32 %v1191, %v1835
      %v1964 = vadd.f32 %v1192, %v1836
      %v1965 = vadd.f32 %v1193, %v1837
      %v1966 = vadd.f32 %v1194, %v1838
      %v1967 = vadd.f32 %v1195, %v1839
      %v1968 = vadd.f32 %v1196, %v1840
      %v1969 = vadd.f32 %v1197, %v1841
      %v1970 = vadd.f32 %v1198, %v1842
      %v1971 = vadd.f32 %v1199, %v1843
      %v1972 = vadd.f32 %v1200, %v1844
      %v1973 = vadd.f32 %v1201, %v1845
      %v1974 = vadd.f32 %v1202, %v1846
      %v1975 = vadd.f32 %v1203, %v1847
      %v1976 = vadd.f32 %v1204, %v1848
      %v1977 = vadd.f32 %v1205, %v1849
      %v1978 = vadd.f32 %v1206, %v1850
      %v1979 = vadd.f32 %v1207, %v1851
      %v1980 = vadd.f32 %v1208, %v1852
      %v1981 = vadd.f32 %v1209, %v1853
      %v1982 = vadd.f32 %v1210, %v1854
      %v1983 = vadd.f32 %v1211, %v1855
      %v1984 = vadd.f32 %v1212, %v1856
      %v1985 = vadd.f32 %v1213, %v1857
      %v1986 = vadd.f32 %v1214, %v1858
      %v1987 = vadd.f32 %v1215, %v1859
      %v1988 = vadd.f32 %v1216, %v1860
      %v1989 = vadd.f32 %v1217, %v1861
      %v1990 = vadd.f32 %v1218, %v1862
      %v1991 = vadd.f32 %v1219, %v1863
      %v1992 = vadd.f32 %v1220, %v1864
      %v1993 = vadd.f32 %v1221, %v1865
      %v1994 = vadd.f32 %v1222, %v1866
      %v1995 = vadd.f32 %v1223, %v1867
      %v1996 = vadd.f32 %v1224, %v1868
      %v1997 = vadd.f32 %v1225, %v1869
      %v1998 = vadd.f32 %v1226, %v1870
      %v1999 = vadd.f32 %v1227, %v1871
      %v2000 = vadd.f32 %v1228, %v1872
      %v2001 = vadd.f32 %v1229, %v1873
      %v2002 = vadd.f32 %v1230, %v1874
      %v2003 = vadd.f32 %v1231, %v1875
      %v2004 = vadd.f32 %v1232, %v1876
      %v2005 = vadd.f32 %v1233, %v1877
      %v2006 = vadd.f32 %v1234, %v1878
      %v2007 = vadd.f32 %v1235, %v1879
      %v2008 = vadd.f32 %v1236, %v1880
      %v2009 = vadd.f32 %v1237, %v1881
      %v2010 = vadd.f32 %v1238, %v1882
      %v2011 = vadd.f32 %v1239, %v1883
      %v2012 = vadd.f32 %v1240, %v1884
      %v2013 = vadd.f32 %v1241, %v1885
      %2014 = vset.pattern.permute.xlu0 2
      %2015 = vperm.xlu0 %2014, %v341
      %v2016 = vpop.permute.xlu0 %2015
      %2018 = vset.pattern.permute.xlu0 2
      %2019 = vperm.xlu0 %2018, %v342
      %v2020 = vpop.permute.xlu0 %2019
      %2022 = vset.pattern.permute.xlu0 2
      %2023 = vperm.xlu0 %2022, %v343
      %v2024 = vpop.permute.xlu0 %2023
      %2026 = vset.pattern.permute.xlu0 2
      %2027 = vperm.xlu0 %2026, %v344
      %v2028 = vpop.permute.xlu0 %2027
      %2030 = vset.pattern.permute.xlu0 2
      %2031 = vperm.xlu0 %2030, %v345
      %v2032 = vpop.permute.xlu0 %2031
      %2034 = vset.pattern.permute.xlu0 2
      %2035 = vperm.xlu0 %2034, %v346
      %v2036 = vpop.permute.xlu0 %2035
      %2038 = vset.pattern.permute.xlu0 2
      %2039 = vperm.xlu0 %2038, %v347
      %v2040 = vpop.permute.xlu0 %2039
      %2042 = vset.pattern.permute.xlu0 2
      %2043 = vperm.xlu0 %2042, %v348
      %v2044 = vpop.permute.xlu0 %2043
      %2046 = vset.pattern.permute.xlu0 2
      %2047 = vperm.xlu0 %2046, %v349
      %v2048 = vpop.permute.xlu0 %2047
      %2050 = vset.pattern.permute.xlu0 2
      %2051 = vperm.xlu0 %2050, %v350
      %v2052 = vpop.permute.xlu0 %2051
      %2054 = vset.pattern.permute.xlu0 2
      %2055 = vperm.xlu0 %2054, %v351
      %v2056 = vpop.permute.xlu0 %2055
      %2058 = vset.pattern.permute.xlu0 2
      %2059 = vperm.xlu0 %2058, %v352
      %v2060 = vpop.permute.xlu0 %2059
      %2062 = vset.pattern.permute.xlu0 2
      %2063 = vperm.xlu0 %2062, %v353
      %v2064 = vpop.permute.xlu0 %2063
      %2066 = vset.pattern.permute.xlu0 2
      %2067 = vperm.xlu0 %2066, %v354
      %v2068 = vpop.permute.xlu0 %2067
      %2070 = vset.pattern.permute.xlu0 2
      %2071 = vperm.xlu0 %2070, %v355
      %v2072 = vpop.permute.xlu0 %2071
      %2074 = vset.pattern.permute.xlu0 2
      %2075 = vperm.xlu0 %2074, %v356
      %v2076 = vpop.permute.xlu0 %2075
      %2078 = vset.pattern.permute.xlu0 2
      %2079 = vperm.xlu0 %2078, %v357
      %v2080 = vpop.permute.xlu0 %2079
      %2082 = vset.pattern.permute.xlu0 2
      %2083 = vperm.xlu0 %2082, %v358
      %v2084 = vpop.permute.xlu0 %2083
      %2086 = vset.pattern.permute.xlu0 2
      %2087 = vperm.xlu0 %2086, %v359
      %v2088 = vpop.permute.xlu0 %2087
      %2090 = vset.pattern.permute.xlu0 2
      %2091 = vperm.xlu0 %2090, %v360
      %v2092 = vpop.permute.xlu0 %2091
      %2094 = vset.pattern.permute.xlu0 2
      %2095 = vperm.xlu0 %2094, %v361
      %v2096 = vpop.permute.xlu0 %2095
      %2098 = vset.pattern.permute.xlu0 2
      %2099 = vperm.xlu0 %2098, %v362
      %v2100 = vpop.permute.xlu0 %2099
      %2102 = vset.pattern.permute.xlu0 2
      %2103 = vperm.xlu0 %2102, %v363
      %v2104 = vpop.permute.xlu0 %2103
      %2106 = vset.pattern.permute.xlu0 2
      %2107 = vperm.xlu0 %2106, %v364
      %v2108 = vpop.permute.xlu0 %2107
      %2110 = vset.pattern.permute.xlu0 2
      %2111 = vperm.xlu0 %2110, %v365
      %v2112 = vpop.permute.xlu0 %2111
      %2114 = vset.pattern.permute.xlu0 2
      %2115 = vperm.xlu0 %2114, %v366
      %v2116 = vpop.permute.xlu0 %2115
      %2118 = vset.pattern.permute.xlu0 2
      %2119 = vperm.xlu0 %2118, %v367
      %v2120 = vpop.permute.xlu0 %2119
      %2122 = vset.pattern.permute.xlu0 2
      %2123 = vperm.xlu0 %2122, %v368
      %v2124 = vpop.permute.xlu0 %2123
      %2126 = vset.pattern.permute.xlu0 2
      %2127 = vperm.xlu0 %2126, %v369
      %v2128 = vpop.permute.xlu0 %2127
      %2130 = vset.pattern.permute.xlu0 2
      %2131 = vperm.xlu0 %2130, %v370
      %v2132 = vpop.permute.xlu0 %2131
      %2134 = vset.pattern.permute.xlu0 2
      %2135 = vperm.xlu0 %2134, %v371
      %v2136 = vpop.permute.xlu0 %2135
      %2138 = vset.pattern.permute.xlu0 2
      %2139 = vperm.xlu0 %2138, %v372
      %v2140 = vpop.permute.xlu0 %2139
      %2142 = vset.pattern.permute.xlu0 2
      %2143 = vperm.xlu0 %2142, %v373
      %v2144 = vpop.permute.xlu0 %2143
      %2146 = vset.pattern.permute.xlu0 2
      %2147 = vperm.xlu0 %2146, %v374
      %v2148 = vpop.permute.xlu0 %2147
      %2150 = vset.pattern.permute.xlu0 2
      %2151 = vperm.xlu0 %2150, %v375
      %v2152 = vpop.permute.xlu0 %2151
      %2154 = vset.pattern.permute.xlu0 2
      %2155 = vperm.xlu0 %2154, %v376
      %v2156 = vpop.permute.xlu0 %2155
      %2158 = vset.pattern.permute.xlu0 2
      %2159 = vperm.xlu0 %2158, %v377
      %v2160 = vpop.permute.xlu0 %2159
      %2162 = vset.pattern.permute.xlu0 2
      %2163 = vperm.xlu0 %2162, %v378
      %v2164 = vpop.permute.xlu0 %2163
      %2166 = vset.pattern.permute.xlu0 2
      %2167 = vperm.xlu0 %2166, %v379
      %v2168 = vpop.permute.xlu0 %2167
      %2170 = vset.pattern.permute.xlu0 2
      %2171 = vperm.xlu0 %2170, %v380
      %v2172 = vpop.permute.xlu0 %2171
      %2174 = vset.pattern.permute.xlu0 2
      %2175 = vperm.xlu0 %2174, %v381
      %v2176 = vpop.permute.xlu0 %2175
      %2178 = vset.pattern.permute.xlu0 2
      %2179 = vperm.xlu0 %2178, %v382
      %v2180 = vpop.permute.xlu0 %2179
      %2182 = vset.pattern.permute.xlu0 2
      %2183 = vperm.xlu0 %2182, %v383
      %v2184 = vpop.permute.xlu0 %2183
      %2186 = vset.pattern.permute.xlu0 2
      %2187 = vperm.xlu0 %2186, %v384
      %v2188 = vpop.permute.xlu0 %2187
      %2190 = vset.pattern.permute.xlu0 2
      %2191 = vperm.xlu0 %2190, %v385
      %v2192 = vpop.permute.xlu0 %2191
      %2194 = vset.pattern.permute.xlu0 2
      %2195 = vperm.xlu0 %2194, %v386
      %v2196 = vpop.permute.xlu0 %2195
      %2198 = vset.pattern.permute.xlu0 2
      %2199 = vperm.xlu0 %2198, %v387
      %v2200 = vpop.permute.xlu0 %2199
      %2202 = vset.pattern.permute.xlu0 2
      %2203 = vperm.xlu0 %2202, %v388
      %v2204 = vpop.permute.xlu0 %2203
      %2206 = vset.pattern.permute.xlu0 2
      %2207 = vperm.xlu0 %2206, %v389
      %v2208 = vpop.permute.xlu0 %2207
      %2210 = vset.pattern.permute.xlu0 2
      %2211 = vperm.xlu0 %2210, %v390
      %v2212 = vpop.permute.xlu0 %2211
      %2214 = vset.pattern.permute.xlu0 2
      %2215 = vperm.xlu0 %2214, %v391
      %v2216 = vpop.permute.xlu0 %2215
      %2218 = vset.pattern.permute.xlu0 2
      %2219 = vperm.xlu0 %2218, %v392
      %v2220 = vpop.permute.xlu0 %2219
      %2222 = vset.pattern.permute.xlu0 2
      %2223 = vperm.xlu0 %2222, %v393
      %v2224 = vpop.permute.xlu0 %2223
      %2226 = vset.pattern.permute.xlu0 2
      %2227 = vperm.xlu0 %2226, %v394
      %v2228 = vpop.permute.xlu0 %2227
      %2230 = vset.pattern.permute.xlu0 2
      %2231 = vperm.xlu0 %2230, %v395
      %v2232 = vpop.permute.xlu0 %2231
      %2234 = vset.pattern.permute.xlu0 2
      %2235 = vperm.xlu0 %2234, %v396
      %v2236 = vpop.permute.xlu0 %2235
      %2238 = vset.pattern.permute.xlu0 2
      %2239 = vperm.xlu0 %2238, %v397
      %v2240 = vpop.permute.xlu0 %2239
      %2242 = vset.pattern.permute.xlu0 2
      %2243 = vperm.xlu0 %2242, %v398
      %v2244 = vpop.permute.xlu0 %2243
      %2246 = vset.pattern.permute.xlu0 2
      %2247 = vperm.xlu0 %2246, %v399
      %v2248 = vpop.permute.xlu0 %2247
      %2250 = vset.pattern.permute.xlu0 2
      %2251 = vperm.xlu0 %2250, %v400
      %v2252 = vpop.permute.xlu0 %2251
      %2254 = vset.pattern.permute.xlu0 2
      %2255 = vperm.xlu0 %2254, %v401
      %v2256 = vpop.permute.xlu0 %2255
      %2258 = vset.pattern.permute.xlu0 2
      %2259 = vperm.xlu0 %2258, %v402
      %v2260 = vpop.permute.xlu0 %2259
      %2262 = vset.pattern.permute.xlu0 2
      %2263 = vperm.xlu0 %2262, %v403
      %v2264 = vpop.permute.xlu0 %2263
      %2266 = vset.pattern.permute.xlu0 2
      %2267 = vperm.xlu0 %2266, %v404
      %v2268 = vpop.permute.xlu0 %2267
      %2270 = vset.pattern.permute.xlu0 2
      %2271 = vperm.xlu0 %2270, %v405
      %v2272 = vpop.permute.xlu0 %2271
      %2274 = vset.pattern.permute.xlu0 2
      %2275 = vperm.xlu0 %2274, %v406
      %v2276 = vpop.permute.xlu0 %2275
      %2278 = vset.pattern.permute.xlu0 2
      %2279 = vperm.xlu0 %2278, %v407
      %v2280 = vpop.permute.xlu0 %2279
      %2282 = vset.pattern.permute.xlu0 2
      %2283 = vperm.xlu0 %2282, %v408
      %v2284 = vpop.permute.xlu0 %2283
      %2286 = vset.pattern.permute.xlu0 2
      %2287 = vperm.xlu0 %2286, %v409
      %v2288 = vpop.permute.xlu0 %2287
      %2290 = vset.pattern.permute.xlu0 2
      %2291 = vperm.xlu0 %2290, %v410
      %v2292 = vpop.permute.xlu0 %2291
      %2294 = vset.pattern.permute.xlu0 2
      %2295 = vperm.xlu0 %2294, %v411
      %v2296 = vpop.permute.xlu0 %2295
      %2298 = vset.pattern.permute.xlu0 2
      %2299 = vperm.xlu0 %2298, %v412
      %v2300 = vpop.permute.xlu0 %2299
      %2302 = vset.pattern.permute.xlu0 2
      %2303 = vperm.xlu0 %2302, %v413
      %v2304 = vpop.permute.xlu0 %2303
      %2306 = vset.pattern.permute.xlu0 2
      %2307 = vperm.xlu0 %2306, %v414
      %v2308 = vpop.permute.xlu0 %2307
      %2310 = vset.pattern.permute.xlu0 2
      %2311 = vperm.xlu0 %2310, %v415
      %v2312 = vpop.permute.xlu0 %2311
      %2314 = vset.pattern.permute.xlu0 2
      %2315 = vperm.xlu0 %2314, %v416
      %v2316 = vpop.permute.xlu0 %2315
      %2318 = vset.pattern.permute.xlu0 2
      %2319 = vperm.xlu0 %2318, %v417
      %v2320 = vpop.permute.xlu0 %2319
      %2322 = vset.pattern.permute.xlu0 2
      %2323 = vperm.xlu0 %2322, %v418
      %v2324 = vpop.permute.xlu0 %2323
      %2326 = vset.pattern.permute.xlu0 2
      %2327 = vperm.xlu0 %2326, %v419
      %v2328 = vpop.permute.xlu0 %2327
      %2330 = vset.pattern.permute.xlu0 2
      %2331 = vperm.xlu0 %2330, %v420
      %v2332 = vpop.permute.xlu0 %2331
      %2334 = vset.pattern.permute.xlu0 2
      %2335 = vperm.xlu0 %2334, %v421
      %v2336 = vpop.permute.xlu0 %2335
      %2338 = vset.pattern.permute.xlu0 2
      %2339 = vperm.xlu0 %2338, %v422
      %v2340 = vpop.permute.xlu0 %2339
      %2342 = vset.pattern.permute.xlu0 2
      %2343 = vperm.xlu0 %2342, %v423
      %v2344 = vpop.permute.xlu0 %2343
      %2346 = vset.pattern.permute.xlu0 2
      %2347 = vperm.xlu0 %2346, %v424
      %v2348 = vpop.permute.xlu0 %2347
      %2350 = vset.pattern.permute.xlu0 2
      %2351 = vperm.xlu0 %2350, %v425
      %v2352 = vpop.permute.xlu0 %2351
      %2354 = vset.pattern.permute.xlu0 2
      %2355 = vperm.xlu0 %2354, %v426
      %v2356 = vpop.permute.xlu0 %2355
      %2358 = vset.pattern.permute.xlu0 2
      %2359 = vperm.xlu0 %2358, %v427
      %v2360 = vpop.permute.xlu0 %2359
      %2362 = vset.pattern.permute.xlu0 2
      %2363 = vperm.xlu0 %2362, %v428
      %v2364 = vpop.permute.xlu0 %2363
      %2366 = vset.pattern.permute.xlu0 2
      %2367 = vperm.xlu0 %2366, %v429
      %v2368 = vpop.permute.xlu0 %2367
      %2370 = vset.pattern.permute.xlu0 2
      %2371 = vperm.xlu0 %2370, %v430
      %v2372 = vpop.permute.xlu0 %2371
      %2374 = vset.pattern.permute.xlu0 2
      %2375 = vperm.xlu0 %2374, %v431
      %v2376 = vpop.permute.xlu0 %2375
      %2378 = vset.pattern.permute.xlu0 2
      %2379 = vperm.xlu0 %2378, %v432
      %v2380 = vpop.permute.xlu0 %2379
      %2382 = vset.pattern.permute.xlu0 2
      %2383 = vperm.xlu0 %2382, %v433
      %v2384 = vpop.permute.xlu0 %2383
      %2386 = vset.pattern.permute.xlu0 2
      %2387 = vperm.xlu0 %2386, %v434
      %v2388 = vpop.permute.xlu0 %2387
      %2390 = vset.pattern.permute.xlu0 2
      %2391 = vperm.xlu0 %2390, %v435
      %v2392 = vpop.permute.xlu0 %2391
      %2394 = vset.pattern.permute.xlu0 2
      %2395 = vperm.xlu0 %2394, %v436
      %v2396 = vpop.permute.xlu0 %2395
      %2398 = vset.pattern.permute.xlu0 2
      %2399 = vperm.xlu0 %2398, %v437
      %v2400 = vpop.permute.xlu0 %2399
      %2402 = vset.pattern.permute.xlu0 2
      %2403 = vperm.xlu0 %2402, %v438
      %v2404 = vpop.permute.xlu0 %2403
      %2406 = vset.pattern.permute.xlu0 2
      %2407 = vperm.xlu0 %2406, %v439
      %v2408 = vpop.permute.xlu0 %2407
      %2410 = vset.pattern.permute.xlu0 2
      %2411 = vperm.xlu0 %2410, %v440
      %v2412 = vpop.permute.xlu0 %2411
      %2414 = vset.pattern.permute.xlu0 2
      %2415 = vperm.xlu0 %2414, %v441
      %v2416 = vpop.permute.xlu0 %2415
      %2418 = vset.pattern.permute.xlu0 2
      %2419 = vperm.xlu0 %2418, %v442
      %v2420 = vpop.permute.xlu0 %2419
      %2422 = vset.pattern.permute.xlu0 2
      %2423 = vperm.xlu0 %2422, %v443
      %v2424 = vpop.permute.xlu0 %2423
      %2426 = vset.pattern.permute.xlu0 2
      %2427 = vperm.xlu0 %2426, %v444
      %v2428 = vpop.permute.xlu0 %2427
      %2430 = vset.pattern.permute.xlu0 2
      %2431 = vperm.xlu0 %2430, %v445
      %v2432 = vpop.permute.xlu0 %2431
      %2434 = vset.pattern.permute.xlu0 2
      %2435 = vperm.xlu0 %2434, %v446
      %v2436 = vpop.permute.xlu0 %2435
      %2438 = vset.pattern.permute.xlu0 2
      %2439 = vperm.xlu0 %2438, %v447
      %v2440 = vpop.permute.xlu0 %2439
      %2442 = vset.pattern.permute.xlu0 2
      %2443 = vperm.xlu0 %2442, %v448
      %v2444 = vpop.permute.xlu0 %2443
      %2446 = vset.pattern.permute.xlu0 2
      %2447 = vperm.xlu0 %2446, %v449
      %v2448 = vpop.permute.xlu0 %2447
      %2450 = vset.pattern.permute.xlu0 2
      %2451 = vperm.xlu0 %2450, %v450
      %v2452 = vpop.permute.xlu0 %2451
      %2454 = vset.pattern.permute.xlu0 2
      %2455 = vperm.xlu0 %2454, %v451
      %v2456 = vpop.permute.xlu0 %2455
      %2458 = vset.pattern.permute.xlu0 2
      %2459 = vperm.xlu0 %2458, %v452
      %v2460 = vpop.permute.xlu0 %2459
      %2462 = vset.pattern.permute.xlu0 2
      %2463 = vperm.xlu0 %2462, %v453
      %v2464 = vpop.permute.xlu0 %2463
      %2466 = vset.pattern.permute.xlu0 2
      %2467 = vperm.xlu0 %2466, %v454
      %v2468 = vpop.permute.xlu0 %2467
      %2470 = vset.pattern.permute.xlu0 2
      %2471 = vperm.xlu0 %2470, %v455
      %v2472 = vpop.permute.xlu0 %2471
      %2474 = vset.pattern.permute.xlu0 2
      %2475 = vperm.xlu0 %2474, %v456
      %v2476 = vpop.permute.xlu0 %2475
      %2478 = vset.pattern.permute.xlu0 2
      %2479 = vperm.xlu0 %2478, %v457
      %v2480 = vpop.permute.xlu0 %2479
      %2482 = vset.pattern.permute.xlu0 2
      %2483 = vperm.xlu0 %2482, %v458
      %v2484 = vpop.permute.xlu0 %2483
      %2486 = vset.pattern.permute.xlu0 2
      %2487 = vperm.xlu0 %2486, %v459
      %v2488 = vpop.permute.xlu0 %2487
      %2490 = vset.pattern.permute.xlu0 2
      %2491 = vperm.xlu0 %2490, %v460
      %v2492 = vpop.permute.xlu0 %2491
      %2494 = vset.pattern.permute.xlu0 2
      %2495 = vperm.xlu0 %2494, %v461
      %v2496 = vpop.permute.xlu0 %2495
      %2498 = vset.pattern.permute.xlu0 2
      %2499 = vperm.xlu0 %2498, %v462
      %v2500 = vpop.permute.xlu0 %2499
      %2502 = vset.pattern.permute.xlu0 2
      %2503 = vperm.xlu0 %2502, %v463
      %v2504 = vpop.permute.xlu0 %2503
      %2506 = vset.pattern.permute.xlu0 2
      %2507 = vperm.xlu0 %2506, %v464
      %v2508 = vpop.permute.xlu0 %2507
      %2510 = vset.pattern.permute.xlu0 2
      %2511 = vperm.xlu0 %2510, %v465
      %v2512 = vpop.permute.xlu0 %2511
      %2514 = vset.pattern.permute.xlu0 2
      %2515 = vperm.xlu0 %2514, %v466
      %v2516 = vpop.permute.xlu0 %2515
      %2518 = vset.pattern.permute.xlu0 2
      %2519 = vperm.xlu0 %2518, %v467
      %v2520 = vpop.permute.xlu0 %2519
      %2522 = vset.pattern.permute.xlu0 2
      %2523 = vperm.xlu0 %2522, %v468
      %v2524 = vpop.permute.xlu0 %2523
      %v2526 = vlaneseq
      %v2527 = vshrl.u32 %v2526, 7
      %v2528 = vsub.s32 2, %v2527
      %v2529 = vrot.slane %v469, %v2528
      %v2530 = vmul.f32 %v2016, %v2529
      %v2531 = vmul.f32 %v2020, %v2529
      %v2532 = vmul.f32 %v2024, %v2529
      %v2533 = vmul.f32 %v2028, %v2529
      %v2534 = vmul.f32 %v2032, %v2529
      %v2535 = vmul.f32 %v2036, %v2529
      %v2536 = vmul.f32 %v2040, %v2529
      %v2537 = vmul.f32 %v2044, %v2529
      %v2538 = vmul.f32 %v2048, %v2529
      %v2539 = vmul.f32 %v2052, %v2529
      %v2540 = vmul.f32 %v2056, %v2529
      %v2541 = vmul.f32 %v2060, %v2529
      %v2542 = vmul.f32 %v2064, %v2529
      %v2543 = vmul.f32 %v2068, %v2529
      %v2544 = vmul.f32 %v2072, %v2529
      %v2545 = vmul.f32 %v2076, %v2529
      %v2546 = vmul.f32 %v2080, %v2529
      %v2547 = vmul.f32 %v2084, %v2529
      %v2548 = vmul.f32 %v2088, %v2529
      %v2549 = vmul.f32 %v2092, %v2529
      %v2550 = vmul.f32 %v2096, %v2529
      %v2551 = vmul.f32 %v2100, %v2529
      %v2552 = vmul.f32 %v2104, %v2529
      %v2553 = vmul.f32 %v2108, %v2529
      %v2554 = vmul.f32 %v2112, %v2529
      %v2555 = vmul.f32 %v2116, %v2529
      %v2556 = vmul.f32 %v2120, %v2529
      %v2557 = vmul.f32 %v2124, %v2529
      %v2558 = vmul.f32 %v2128, %v2529
      %v2559 = vmul.f32 %v2132, %v2529
      %v2560 = vmul.f32 %v2136, %v2529
      %v2561 = vmul.f32 %v2140, %v2529
      %v2562 = vmul.f32 %v2144, %v2529
      %v2563 = vmul.f32 %v2148, %v2529
      %v2564 = vmul.f32 %v2152, %v2529
      %v2565 = vmul.f32 %v2156, %v2529
      %v2566 = vmul.f32 %v2160, %v2529
      %v2567 = vmul.f32 %v2164, %v2529
      %v2568 = vmul.f32 %v2168, %v2529
      %v2569 = vmul.f32 %v2172, %v2529
      %v2570 = vmul.f32 %v2176, %v2529
      %v2571 = vmul.f32 %v2180, %v2529
      %v2572 = vmul.f32 %v2184, %v2529
      %v2573 = vmul.f32 %v2188, %v2529
      %v2574 = vmul.f32 %v2192, %v2529
      %v2575 = vmul.f32 %v2196, %v2529
      %v2576 = vmul.f32 %v2200, %v2529
      %v2577 = vmul.f32 %v2204, %v2529
      %v2578 = vmul.f32 %v2208, %v2529
      %v2579 = vmul.f32 %v2212, %v2529
      %v2580 = vmul.f32 %v2216, %v2529
      %v2581 = vmul.f32 %v2220, %v2529
      %v2582 = vmul.f32 %v2224, %v2529
      %v2583 = vmul.f32 %v2228, %v2529
      %v2584 = vmul.f32 %v2232, %v2529
      %v2585 = vmul.f32 %v2236, %v2529
      %v2586 = vmul.f32 %v2240, %v2529
      %v2587 = vmul.f32 %v2244, %v2529
      %v2588 = vmul.f32 %v2248, %v2529
      %v2589 = vmul.f32 %v2252, %v2529
      %v2590 = vmul.f32 %v2256, %v2529
      %v2591 = vmul.f32 %v2260, %v2529
      %v2592 = vmul.f32 %v2264, %v2529
      %v2593 = vmul.f32 %v2268, %v2529
      %v2594 = vmul.f32 %v2272, %v2529
      %v2595 = vmul.f32 %v2276, %v2529
      %v2596 = vmul.f32 %v2280, %v2529
      %v2597 = vmul.f32 %v2284, %v2529
      %v2598 = vmul.f32 %v2288, %v2529
      %v2599 = vmul.f32 %v2292, %v2529
      %v2600 = vmul.f32 %v2296, %v2529
      %v2601 = vmul.f32 %v2300, %v2529
      %v2602 = vmul.f32 %v2304, %v2529
      %v2603 = vmul.f32 %v2308, %v2529
      %v2604 = vmul.f32 %v2312, %v2529
      %v2605 = vmul.f32 %v2316, %v2529
      %v2606 = vmul.f32 %v2320, %v2529
      %v2607 = vmul.f32 %v2324, %v2529
      %v2608 = vmul.f32 %v2328, %v2529
      %v2609 = vmul.f32 %v2332, %v2529
      %v2610 = vmul.f32 %v2336, %v2529
      %v2611 = vmul.f32 %v2340, %v2529
      %v2612 = vmul.f32 %v2344, %v2529
      %v2613 = vmul.f32 %v2348, %v2529
      %v2614 = vmul.f32 %v2352, %v2529
      %v2615 = vmul.f32 %v2356, %v2529
      %v2616 = vmul.f32 %v2360, %v2529
      %v2617 = vmul.f32 %v2364, %v2529
      %v2618 = vmul.f32 %v2368, %v2529
      %v2619 = vmul.f32 %v2372, %v2529
      %v2620 = vmul.f32 %v2376, %v2529
      %v2621 = vmul.f32 %v2380, %v2529
      %v2622 = vmul.f32 %v2384, %v2529
      %v2623 = vmul.f32 %v2388, %v2529
      %v2624 = vmul.f32 %v2392, %v2529
      %v2625 = vmul.f32 %v2396, %v2529
      %v2626 = vmul.f32 %v2400, %v2529
      %v2627 = vmul.f32 %v2404, %v2529
      %v2628 = vmul.f32 %v2408, %v2529
      %v2629 = vmul.f32 %v2412, %v2529
      %v2630 = vmul.f32 %v2416, %v2529
      %v2631 = vmul.f32 %v2420, %v2529
      %v2632 = vmul.f32 %v2424, %v2529
      %v2633 = vmul.f32 %v2428, %v2529
      %v2634 = vmul.f32 %v2432, %v2529
      %v2635 = vmul.f32 %v2436, %v2529
      %v2636 = vmul.f32 %v2440, %v2529
      %v2637 = vmul.f32 %v2444, %v2529
      %v2638 = vmul.f32 %v2448, %v2529
      %v2639 = vmul.f32 %v2452, %v2529
      %v2640 = vmul.f32 %v2456, %v2529
      %v2641 = vmul.f32 %v2460, %v2529
      %v2642 = vmul.f32 %v2464, %v2529
      %v2643 = vmul.f32 %v2468, %v2529
      %v2644 = vmul.f32 %v2472, %v2529
      %v2645 = vmul.f32 %v2476, %v2529
      %v2646 = vmul.f32 %v2480, %v2529
      %v2647 = vmul.f32 %v2484, %v2529
      %v2648 = vmul.f32 %v2488, %v2529
      %v2649 = vmul.f32 %v2492, %v2529
      %v2650 = vmul.f32 %v2496, %v2529
      %v2651 = vmul.f32 %v2500, %v2529
      %v2652 = vmul.f32 %v2504, %v2529
      %v2653 = vmul.f32 %v2508, %v2529
      %v2654 = vmul.f32 %v2512, %v2529
      %v2655 = vmul.f32 %v2516, %v2529
      %v2656 = vmul.f32 %v2520, %v2529
      %v2657 = vmul.f32 %v2524, %v2529
      %v2658 = vadd.f32 %v1886, %v2530
      %v2659 = vadd.f32 %v1887, %v2531
      %v2660 = vadd.f32 %v1888, %v2532
      %v2661 = vadd.f32 %v1889, %v2533
      %v2662 = vadd.f32 %v1890, %v2534
      %v2663 = vadd.f32 %v1891, %v2535
      %v2664 = vadd.f32 %v1892, %v2536
      %v2665 = vadd.f32 %v1893, %v2537
      %v2666 = vadd.f32 %v1894, %v2538
      %v2667 = vadd.f32 %v1895, %v2539
      %v2668 = vadd.f32 %v1896, %v2540
      %v2669 = vadd.f32 %v1897, %v2541
      %v2670 = vadd.f32 %v1898, %v2542
      %v2671 = vadd.f32 %v1899, %v2543
      %v2672 = vadd.f32 %v1900, %v2544
      %v2673 = vadd.f32 %v1901, %v2545
      %v2674 = vadd.f32 %v1902, %v2546
      %v2675 = vadd.f32 %v1903, %v2547
      %v2676 = vadd.f32 %v1904, %v2548
      %v2677 = vadd.f32 %v1905, %v2549
      %v2678 = vadd.f32 %v1906, %v2550
      %v2679 = vadd.f32 %v1907, %v2551
      %v2680 = vadd.f32 %v1908, %v2552
      %v2681 = vadd.f32 %v1909, %v2553
      %v2682 = vadd.f32 %v1910, %v2554
      %v2683 = vadd.f32 %v1911, %v2555
      %v2684 = vadd.f32 %v1912, %v2556
      %v2685 = vadd.f32 %v1913, %v2557
      %v2686 = vadd.f32 %v1914, %v2558
      %v2687 = vadd.f32 %v1915, %v2559
      %v2688 = vadd.f32 %v1916, %v2560
      %v2689 = vadd.f32 %v1917, %v2561
      %v2690 = vadd.f32 %v1918, %v2562
      %v2691 = vadd.f32 %v1919, %v2563
      %v2692 = vadd.f32 %v1920, %v2564
      %v2693 = vadd.f32 %v1921, %v2565
      %v2694 = vadd.f32 %v1922, %v2566
      %v2695 = vadd.f32 %v1923, %v2567
      %v2696 = vadd.f32 %v1924, %v2568
      %v2697 = vadd.f32 %v1925, %v2569
      %v2698 = vadd.f32 %v1926, %v2570
      %v2699 = vadd.f32 %v1927, %v2571
      %v2700 = vadd.f32 %v1928, %v2572
      %v2701 = vadd.f32 %v1929, %v2573
      %v2702 = vadd.f32 %v1930, %v2574
      %v2703 = vadd.f32 %v1931, %v2575
      %v2704 = vadd.f32 %v1932, %v2576
      %v2705 = vadd.f32 %v1933, %v2577
      %v2706 = vadd.f32 %v1934, %v2578
      %v2707 = vadd.f32 %v1935, %v2579
      %v2708 = vadd.f32 %v1936, %v2580
      %v2709 = vadd.f32 %v1937, %v2581
      %v2710 = vadd.f32 %v1938, %v2582
      %v2711 = vadd.f32 %v1939, %v2583
      %v2712 = vadd.f32 %v1940, %v2584
      %v2713 = vadd.f32 %v1941, %v2585
      %v2714 = vadd.f32 %v1942, %v2586
      %v2715 = vadd.f32 %v1943, %v2587
      %v2716 = vadd.f32 %v1944, %v2588
      %v2717 = vadd.f32 %v1945, %v2589
      %v2718 = vadd.f32 %v1946, %v2590
      %v2719 = vadd.f32 %v1947, %v2591
      %v2720 = vadd.f32 %v1948, %v2592
      %v2721 = vadd.f32 %v1949, %v2593
      %v2722 = vadd.f32 %v1950, %v2594
      %v2723 = vadd.f32 %v1951, %v2595
      %v2724 = vadd.f32 %v1952, %v2596
      %v2725 = vadd.f32 %v1953, %v2597
      %v2726 = vadd.f32 %v1954, %v2598
      %v2727 = vadd.f32 %v1955, %v2599
      %v2728 = vadd.f32 %v1956, %v2600
      %v2729 = vadd.f32 %v1957, %v2601
      %v2730 = vadd.f32 %v1958, %v2602
      %v2731 = vadd.f32 %v1959, %v2603
      %v2732 = vadd.f32 %v1960, %v2604
      %v2733 = vadd.f32 %v1961, %v2605
      %v2734 = vadd.f32 %v1962, %v2606
      %v2735 = vadd.f32 %v1963, %v2607
      %v2736 = vadd.f32 %v1964, %v2608
      %v2737 = vadd.f32 %v1965, %v2609
      %v2738 = vadd.f32 %v1966, %v2610
      %v2739 = vadd.f32 %v1967, %v2611
      %v2740 = vadd.f32 %v1968, %v2612
      %v2741 = vadd.f32 %v1969, %v2613
      %v2742 = vadd.f32 %v1970, %v2614
      %v2743 = vadd.f32 %v1971, %v2615
      %v2744 = vadd.f32 %v1972, %v2616
      %v2745 = vadd.f32 %v1973, %v2617
      %v2746 = vadd.f32 %v1974, %v2618
      %v2747 = vadd.f32 %v1975, %v2619
      %v2748 = vadd.f32 %v1976, %v2620
      %v2749 = vadd.f32 %v1977, %v2621
      %v2750 = vadd.f32 %v1978, %v2622
      %v2751 = vadd.f32 %v1979, %v2623
      %v2752 = vadd.f32 %v1980, %v2624
      %v2753 = vadd.f32 %v1981, %v2625
      %v2754 = vadd.f32 %v1982, %v2626
      %v2755 = vadd.f32 %v1983, %v2627
      %v2756 = vadd.f32 %v1984, %v2628
      %v2757 = vadd.f32 %v1985, %v2629
      %v2758 = vadd.f32 %v1986, %v2630
      %v2759 = vadd.f32 %v1987, %v2631
      %v2760 = vadd.f32 %v1988, %v2632
      %v2761 = vadd.f32 %v1989, %v2633
      %v2762 = vadd.f32 %v1990, %v2634
      %v2763 = vadd.f32 %v1991, %v2635
      %v2764 = vadd.f32 %v1992, %v2636
      %v2765 = vadd.f32 %v1993, %v2637
      %v2766 = vadd.f32 %v1994, %v2638
      %v2767 = vadd.f32 %v1995, %v2639
      %v2768 = vadd.f32 %v1996, %v2640
      %v2769 = vadd.f32 %v1997, %v2641
      %v2770 = vadd.f32 %v1998, %v2642
      %v2771 = vadd.f32 %v1999, %v2643
      %v2772 = vadd.f32 %v2000, %v2644
      %v2773 = vadd.f32 %v2001, %v2645
      %v2774 = vadd.f32 %v2002, %v2646
      %v2775 = vadd.f32 %v2003, %v2647
      %v2776 = vadd.f32 %v2004, %v2648
      %v2777 = vadd.f32 %v2005, %v2649
      %v2778 = vadd.f32 %v2006, %v2650
      %v2779 = vadd.f32 %v2007, %v2651
      %v2780 = vadd.f32 %v2008, %v2652
      %v2781 = vadd.f32 %v2009, %v2653
      %v2782 = vadd.f32 %v2010, %v2654
      %v2783 = vadd.f32 %v2011, %v2655
      %v2784 = vadd.f32 %v2012, %v2656
      %v2785 = vadd.f32 %v2013, %v2657
      %2786 = vset.pattern.permute.xlu0 3
      %2787 = vperm.xlu0 %2786, %v341
      %v2788 = vpop.permute.xlu0 %2787
      %2790 = vset.pattern.permute.xlu0 3
      %2791 = vperm.xlu0 %2790, %v342
      %v2792 = vpop.permute.xlu0 %2791
      %2794 = vset.pattern.permute.xlu0 3
      %2795 = vperm.xlu0 %2794, %v343
      %v2796 = vpop.permute.xlu0 %2795
      %2798 = vset.pattern.permute.xlu0 3
      %2799 = vperm.xlu0 %2798, %v344
      %v2800 = vpop.permute.xlu0 %2799
      %2802 = vset.pattern.permute.xlu0 3
      %2803 = vperm.xlu0 %2802, %v345
      %v2804 = vpop.permute.xlu0 %2803
      %2806 = vset.pattern.permute.xlu0 3
      %2807 = vperm.xlu0 %2806, %v346
      %v2808 = vpop.permute.xlu0 %2807
      %2810 = vset.pattern.permute.xlu0 3
      %2811 = vperm.xlu0 %2810, %v347
      %v2812 = vpop.permute.xlu0 %2811
      %2814 = vset.pattern.permute.xlu0 3
      %2815 = vperm.xlu0 %2814, %v348
      %v2816 = vpop.permute.xlu0 %2815
      %2818 = vset.pattern.permute.xlu0 3
      %2819 = vperm.xlu0 %2818, %v349
      %v2820 = vpop.permute.xlu0 %2819
      %2822 = vset.pattern.permute.xlu0 3
      %2823 = vperm.xlu0 %2822, %v350
      %v2824 = vpop.permute.xlu0 %2823
      %2826 = vset.pattern.permute.xlu0 3
      %2827 = vperm.xlu0 %2826, %v351
      %v2828 = vpop.permute.xlu0 %2827
      %2830 = vset.pattern.permute.xlu0 3
      %2831 = vperm.xlu0 %2830, %v352
      %v2832 = vpop.permute.xlu0 %2831
      %2834 = vset.pattern.permute.xlu0 3
      %2835 = vperm.xlu0 %2834, %v353
      %v2836 = vpop.permute.xlu0 %2835
      %2838 = vset.pattern.permute.xlu0 3
      %2839 = vperm.xlu0 %2838, %v354
      %v2840 = vpop.permute.xlu0 %2839
      %2842 = vset.pattern.permute.xlu0 3
      %2843 = vperm.xlu0 %2842, %v355
      %v2844 = vpop.permute.xlu0 %2843
      %2846 = vset.pattern.permute.xlu0 3
      %2847 = vperm.xlu0 %2846, %v356
      %v2848 = vpop.permute.xlu0 %2847
      %2850 = vset.pattern.permute.xlu0 3
      %2851 = vperm.xlu0 %2850, %v357
      %v2852 = vpop.permute.xlu0 %2851
      %2854 = vset.pattern.permute.xlu0 3
      %2855 = vperm.xlu0 %2854, %v358
      %v2856 = vpop.permute.xlu0 %2855
      %2858 = vset.pattern.permute.xlu0 3
      %2859 = vperm.xlu0 %2858, %v359
      %v2860 = vpop.permute.xlu0 %2859
      %2862 = vset.pattern.permute.xlu0 3
      %2863 = vperm.xlu0 %2862, %v360
      %v2864 = vpop.permute.xlu0 %2863
      %2866 = vset.pattern.permute.xlu0 3
      %2867 = vperm.xlu0 %2866, %v361
      %v2868 = vpop.permute.xlu0 %2867
      %2870 = vset.pattern.permute.xlu0 3
      %2871 = vperm.xlu0 %2870, %v362
      %v2872 = vpop.permute.xlu0 %2871
      %2874 = vset.pattern.permute.xlu0 3
      %2875 = vperm.xlu0 %2874, %v363
      %v2876 = vpop.permute.xlu0 %2875
      %2878 = vset.pattern.permute.xlu0 3
      %2879 = vperm.xlu0 %2878, %v364
      %v2880 = vpop.permute.xlu0 %2879
      %2882 = vset.pattern.permute.xlu0 3
      %2883 = vperm.xlu0 %2882, %v365
      %v2884 = vpop.permute.xlu0 %2883
      %2886 = vset.pattern.permute.xlu0 3
      %2887 = vperm.xlu0 %2886, %v366
      %v2888 = vpop.permute.xlu0 %2887
      %2890 = vset.pattern.permute.xlu0 3
      %2891 = vperm.xlu0 %2890, %v367
      %v2892 = vpop.permute.xlu0 %2891
      %2894 = vset.pattern.permute.xlu0 3
      %2895 = vperm.xlu0 %2894, %v368
      %v2896 = vpop.permute.xlu0 %2895
      %2898 = vset.pattern.permute.xlu0 3
      %2899 = vperm.xlu0 %2898, %v369
      %v2900 = vpop.permute.xlu0 %2899
      %2902 = vset.pattern.permute.xlu0 3
      %2903 = vperm.xlu0 %2902, %v370
      %v2904 = vpop.permute.xlu0 %2903
      %2906 = vset.pattern.permute.xlu0 3
      %2907 = vperm.xlu0 %2906, %v371
      %v2908 = vpop.permute.xlu0 %2907
      %2910 = vset.pattern.permute.xlu0 3
      %2911 = vperm.xlu0 %2910, %v372
      %v2912 = vpop.permute.xlu0 %2911
      %2914 = vset.pattern.permute.xlu0 3
      %2915 = vperm.xlu0 %2914, %v373
      %v2916 = vpop.permute.xlu0 %2915
      %2918 = vset.pattern.permute.xlu0 3
      %2919 = vperm.xlu0 %2918, %v374
      %v2920 = vpop.permute.xlu0 %2919
      %2922 = vset.pattern.permute.xlu0 3
      %2923 = vperm.xlu0 %2922, %v375
      %v2924 = vpop.permute.xlu0 %2923
      %2926 = vset.pattern.permute.xlu0 3
      %2927 = vperm.xlu0 %2926, %v376
      %v2928 = vpop.permute.xlu0 %2927
      %2930 = vset.pattern.permute.xlu0 3
      %2931 = vperm.xlu0 %2930, %v377
      %v2932 = vpop.permute.xlu0 %2931
      %2934 = vset.pattern.permute.xlu0 3
      %2935 = vperm.xlu0 %2934, %v378
      %v2936 = vpop.permute.xlu0 %2935
      %2938 = vset.pattern.permute.xlu0 3
      %2939 = vperm.xlu0 %2938, %v379
      %v2940 = vpop.permute.xlu0 %2939
      %2942 = vset.pattern.permute.xlu0 3
      %2943 = vperm.xlu0 %2942, %v380
      %v2944 = vpop.permute.xlu0 %2943
      %2946 = vset.pattern.permute.xlu0 3
      %2947 = vperm.xlu0 %2946, %v381
      %v2948 = vpop.permute.xlu0 %2947
      %2950 = vset.pattern.permute.xlu0 3
      %2951 = vperm.xlu0 %2950, %v382
      %v2952 = vpop.permute.xlu0 %2951
      %2954 = vset.pattern.permute.xlu0 3
      %2955 = vperm.xlu0 %2954, %v383
      %v2956 = vpop.permute.xlu0 %2955
      %2958 = vset.pattern.permute.xlu0 3
      %2959 = vperm.xlu0 %2958, %v384
      %v2960 = vpop.permute.xlu0 %2959
      %2962 = vset.pattern.permute.xlu0 3
      %2963 = vperm.xlu0 %2962, %v385
      %v2964 = vpop.permute.xlu0 %2963
      %2966 = vset.pattern.permute.xlu0 3
      %2967 = vperm.xlu0 %2966, %v386
      %v2968 = vpop.permute.xlu0 %2967
      %2970 = vset.pattern.permute.xlu0 3
      %2971 = vperm.xlu0 %2970, %v387
      %v2972 = vpop.permute.xlu0 %2971
      %2974 = vset.pattern.permute.xlu0 3
      %2975 = vperm.xlu0 %2974, %v388
      %v2976 = vpop.permute.xlu0 %2975
      %2978 = vset.pattern.permute.xlu0 3
      %2979 = vperm.xlu0 %2978, %v389
      %v2980 = vpop.permute.xlu0 %2979
      %2982 = vset.pattern.permute.xlu0 3
      %2983 = vperm.xlu0 %2982, %v390
      %v2984 = vpop.permute.xlu0 %2983
      %2986 = vset.pattern.permute.xlu0 3
      %2987 = vperm.xlu0 %2986, %v391
      %v2988 = vpop.permute.xlu0 %2987
      %2990 = vset.pattern.permute.xlu0 3
      %2991 = vperm.xlu0 %2990, %v392
      %v2992 = vpop.permute.xlu0 %2991
      %2994 = vset.pattern.permute.xlu0 3
      %2995 = vperm.xlu0 %2994, %v393
      %v2996 = vpop.permute.xlu0 %2995
      %2998 = vset.pattern.permute.xlu0 3
      %2999 = vperm.xlu0 %2998, %v394
      %v3000 = vpop.permute.xlu0 %2999
      %3002 = vset.pattern.permute.xlu0 3
      %3003 = vperm.xlu0 %3002, %v395
      %v3004 = vpop.permute.xlu0 %3003
      %3006 = vset.pattern.permute.xlu0 3
      %3007 = vperm.xlu0 %3006, %v396
      %v3008 = vpop.permute.xlu0 %3007
      %3010 = vset.pattern.permute.xlu0 3
      %3011 = vperm.xlu0 %3010, %v397
      %v3012 = vpop.permute.xlu0 %3011
      %3014 = vset.pattern.permute.xlu0 3
      %3015 = vperm.xlu0 %3014, %v398
      %v3016 = vpop.permute.xlu0 %3015
      %3018 = vset.pattern.permute.xlu0 3
      %3019 = vperm.xlu0 %3018, %v399
      %v3020 = vpop.permute.xlu0 %3019
      %3022 = vset.pattern.permute.xlu0 3
      %3023 = vperm.xlu0 %3022, %v400
      %v3024 = vpop.permute.xlu0 %3023
      %3026 = vset.pattern.permute.xlu0 3
      %3027 = vperm.xlu0 %3026, %v401
      %v3028 = vpop.permute.xlu0 %3027
      %3030 = vset.pattern.permute.xlu0 3
      %3031 = vperm.xlu0 %3030, %v402
      %v3032 = vpop.permute.xlu0 %3031
      %3034 = vset.pattern.permute.xlu0 3
      %3035 = vperm.xlu0 %3034, %v403
      %v3036 = vpop.permute.xlu0 %3035
      %3038 = vset.pattern.permute.xlu0 3
      %3039 = vperm.xlu0 %3038, %v404
      %v3040 = vpop.permute.xlu0 %3039
      %3042 = vset.pattern.permute.xlu0 3
      %3043 = vperm.xlu0 %3042, %v405
      %v3044 = vpop.permute.xlu0 %3043
      %3046 = vset.pattern.permute.xlu0 3
      %3047 = vperm.xlu0 %3046, %v406
      %v3048 = vpop.permute.xlu0 %3047
      %3050 = vset.pattern.permute.xlu0 3
      %3051 = vperm.xlu0 %3050, %v407
      %v3052 = vpop.permute.xlu0 %3051
      %3054 = vset.pattern.permute.xlu0 3
      %3055 = vperm.xlu0 %3054, %v408
      %v3056 = vpop.permute.xlu0 %3055
      %3058 = vset.pattern.permute.xlu0 3
      %3059 = vperm.xlu0 %3058, %v409
      %v3060 = vpop.permute.xlu0 %3059
      %3062 = vset.pattern.permute.xlu0 3
      %3063 = vperm.xlu0 %3062, %v410
      %v3064 = vpop.permute.xlu0 %3063
      %3066 = vset.pattern.permute.xlu0 3
      %3067 = vperm.xlu0 %3066, %v411
      %v3068 = vpop.permute.xlu0 %3067
      %3070 = vset.pattern.permute.xlu0 3
      %3071 = vperm.xlu0 %3070, %v412
      %v3072 = vpop.permute.xlu0 %3071
      %3074 = vset.pattern.permute.xlu0 3
      %3075 = vperm.xlu0 %3074, %v413
      %v3076 = vpop.permute.xlu0 %3075
      %3078 = vset.pattern.permute.xlu0 3
      %3079 = vperm.xlu0 %3078, %v414
      %v3080 = vpop.permute.xlu0 %3079
      %3082 = vset.pattern.permute.xlu0 3
      %3083 = vperm.xlu0 %3082, %v415
      %v3084 = vpop.permute.xlu0 %3083
      %3086 = vset.pattern.permute.xlu0 3
      %3087 = vperm.xlu0 %3086, %v416
      %v3088 = vpop.permute.xlu0 %3087
      %3090 = vset.pattern.permute.xlu0 3
      %3091 = vperm.xlu0 %3090, %v417
      %v3092 = vpop.permute.xlu0 %3091
      %3094 = vset.pattern.permute.xlu0 3
      %3095 = vperm.xlu0 %3094, %v418
      %v3096 = vpop.permute.xlu0 %3095
      %3098 = vset.pattern.permute.xlu0 3
      %3099 = vperm.xlu0 %3098, %v419
      %v3100 = vpop.permute.xlu0 %3099
      %3102 = vset.pattern.permute.xlu0 3
      %3103 = vperm.xlu0 %3102, %v420
      %v3104 = vpop.permute.xlu0 %3103
      %3106 = vset.pattern.permute.xlu0 3
      %3107 = vperm.xlu0 %3106, %v421
      %v3108 = vpop.permute.xlu0 %3107
      %3110 = vset.pattern.permute.xlu0 3
      %3111 = vperm.xlu0 %3110, %v422
      %v3112 = vpop.permute.xlu0 %3111
      %3114 = vset.pattern.permute.xlu0 3
      %3115 = vperm.xlu0 %3114, %v423
      %v3116 = vpop.permute.xlu0 %3115
      %3118 = vset.pattern.permute.xlu0 3
      %3119 = vperm.xlu0 %3118, %v424
      %v3120 = vpop.permute.xlu0 %3119
      %3122 = vset.pattern.permute.xlu0 3
      %3123 = vperm.xlu0 %3122, %v425
      %v3124 = vpop.permute.xlu0 %3123
      %3126 = vset.pattern.permute.xlu0 3
      %3127 = vperm.xlu0 %3126, %v426
      %v3128 = vpop.permute.xlu0 %3127
      %3130 = vset.pattern.permute.xlu0 3
      %3131 = vperm.xlu0 %3130, %v427
      %v3132 = vpop.permute.xlu0 %3131
      %3134 = vset.pattern.permute.xlu0 3
      %3135 = vperm.xlu0 %3134, %v428
      %v3136 = vpop.permute.xlu0 %3135
      %3138 = vset.pattern.permute.xlu0 3
      %3139 = vperm.xlu0 %3138, %v429
      %v3140 = vpop.permute.xlu0 %3139
      %3142 = vset.pattern.permute.xlu0 3
      %3143 = vperm.xlu0 %3142, %v430
      %v3144 = vpop.permute.xlu0 %3143
      %3146 = vset.pattern.permute.xlu0 3
      %3147 = vperm.xlu0 %3146, %v431
      %v3148 = vpop.permute.xlu0 %3147
      %3150 = vset.pattern.permute.xlu0 3
      %3151 = vperm.xlu0 %3150, %v432
      %v3152 = vpop.permute.xlu0 %3151
      %3154 = vset.pattern.permute.xlu0 3
      %3155 = vperm.xlu0 %3154, %v433
      %v3156 = vpop.permute.xlu0 %3155
      %3158 = vset.pattern.permute.xlu0 3
      %3159 = vperm.xlu0 %3158, %v434
      %v3160 = vpop.permute.xlu0 %3159
      %3162 = vset.pattern.permute.xlu0 3
      %3163 = vperm.xlu0 %3162, %v435
      %v3164 = vpop.permute.xlu0 %3163
      %3166 = vset.pattern.permute.xlu0 3
      %3167 = vperm.xlu0 %3166, %v436
      %v3168 = vpop.permute.xlu0 %3167
      %3170 = vset.pattern.permute.xlu0 3
      %3171 = vperm.xlu0 %3170, %v437
      %v3172 = vpop.permute.xlu0 %3171
      %3174 = vset.pattern.permute.xlu0 3
      %3175 = vperm.xlu0 %3174, %v438
      %v3176 = vpop.permute.xlu0 %3175
      %3178 = vset.pattern.permute.xlu0 3
      %3179 = vperm.xlu0 %3178, %v439
      %v3180 = vpop.permute.xlu0 %3179
      %3182 = vset.pattern.permute.xlu0 3
      %3183 = vperm.xlu0 %3182, %v440
      %v3184 = vpop.permute.xlu0 %3183
      %3186 = vset.pattern.permute.xlu0 3
      %3187 = vperm.xlu0 %3186, %v441
      %v3188 = vpop.permute.xlu0 %3187
      %3190 = vset.pattern.permute.xlu0 3
      %3191 = vperm.xlu0 %3190, %v442
      %v3192 = vpop.permute.xlu0 %3191
      %3194 = vset.pattern.permute.xlu0 3
      %3195 = vperm.xlu0 %3194, %v443
      %v3196 = vpop.permute.xlu0 %3195
      %3198 = vset.pattern.permute.xlu0 3
      %3199 = vperm.xlu0 %3198, %v444
      %v3200 = vpop.permute.xlu0 %3199
      %3202 = vset.pattern.permute.xlu0 3
      %3203 = vperm.xlu0 %3202, %v445
      %v3204 = vpop.permute.xlu0 %3203
      %3206 = vset.pattern.permute.xlu0 3
      %3207 = vperm.xlu0 %3206, %v446
      %v3208 = vpop.permute.xlu0 %3207
      %3210 = vset.pattern.permute.xlu0 3
      %3211 = vperm.xlu0 %3210, %v447
      %v3212 = vpop.permute.xlu0 %3211
      %3214 = vset.pattern.permute.xlu0 3
      %3215 = vperm.xlu0 %3214, %v448
      %v3216 = vpop.permute.xlu0 %3215
      %3218 = vset.pattern.permute.xlu0 3
      %3219 = vperm.xlu0 %3218, %v449
      %v3220 = vpop.permute.xlu0 %3219
      %3222 = vset.pattern.permute.xlu0 3
      %3223 = vperm.xlu0 %3222, %v450
      %v3224 = vpop.permute.xlu0 %3223
      %3226 = vset.pattern.permute.xlu0 3
      %3227 = vperm.xlu0 %3226, %v451
      %v3228 = vpop.permute.xlu0 %3227
      %3230 = vset.pattern.permute.xlu0 3
      %3231 = vperm.xlu0 %3230, %v452
      %v3232 = vpop.permute.xlu0 %3231
      %3234 = vset.pattern.permute.xlu0 3
      %3235 = vperm.xlu0 %3234, %v453
      %v3236 = vpop.permute.xlu0 %3235
      %3238 = vset.pattern.permute.xlu0 3
      %3239 = vperm.xlu0 %3238, %v454
      %v3240 = vpop.permute.xlu0 %3239
      %3242 = vset.pattern.permute.xlu0 3
      %3243 = vperm.xlu0 %3242, %v455
      %v3244 = vpop.permute.xlu0 %3243
      %3246 = vset.pattern.permute.xlu0 3
      %3247 = vperm.xlu0 %3246, %v456
      %v3248 = vpop.permute.xlu0 %3247
      %3250 = vset.pattern.permute.xlu0 3
      %3251 = vperm.xlu0 %3250, %v457
      %v3252 = vpop.permute.xlu0 %3251
      %3254 = vset.pattern.permute.xlu0 3
      %3255 = vperm.xlu0 %3254, %v458
      %v3256 = vpop.permute.xlu0 %3255
      %3258 = vset.pattern.permute.xlu0 3
      %3259 = vperm.xlu0 %3258, %v459
      %v3260 = vpop.permute.xlu0 %3259
      %3262 = vset.pattern.permute.xlu0 3
      %3263 = vperm.xlu0 %3262, %v460
      %v3264 = vpop.permute.xlu0 %3263
      %3266 = vset.pattern.permute.xlu0 3
      %3267 = vperm.xlu0 %3266, %v461
      %v3268 = vpop.permute.xlu0 %3267
      %3270 = vset.pattern.permute.xlu0 3
      %3271 = vperm.xlu0 %3270, %v462
      %v3272 = vpop.permute.xlu0 %3271
      %3274 = vset.pattern.permute.xlu0 3
      %3275 = vperm.xlu0 %3274, %v463
      %v3276 = vpop.permute.xlu0 %3275
      %3278 = vset.pattern.permute.xlu0 3
      %3279 = vperm.xlu0 %3278, %v464
      %v3280 = vpop.permute.xlu0 %3279
      %3282 = vset.pattern.permute.xlu0 3
      %3283 = vperm.xlu0 %3282, %v465
      %v3284 = vpop.permute.xlu0 %3283
      %3286 = vset.pattern.permute.xlu0 3
      %3287 = vperm.xlu0 %3286, %v466
      %v3288 = vpop.permute.xlu0 %3287
      %3290 = vset.pattern.permute.xlu0 3
      %3291 = vperm.xlu0 %3290, %v467
      %v3292 = vpop.permute.xlu0 %3291
      %3294 = vset.pattern.permute.xlu0 3
      %3295 = vperm.xlu0 %3294, %v468
      %v3296 = vpop.permute.xlu0 %3295
      %v3298 = vlaneseq
      %v3299 = vshrl.u32 %v3298, 7
      %v3300 = vsub.s32 3, %v3299
      %v3301 = vrot.slane %v469, %v3300
      %v3302 = vmul.f32 %v2788, %v3301
      %v3303 = vmul.f32 %v2792, %v3301
      %v3304 = vmul.f32 %v2796, %v3301
      %v3305 = vmul.f32 %v2800, %v3301
      %v3306 = vmul.f32 %v2804, %v3301
      %v3307 = vmul.f32 %v2808, %v3301
      %v3308 = vmul.f32 %v2812, %v3301
      %v3309 = vmul.f32 %v2816, %v3301
      %v3310 = vmul.f32 %v2820, %v3301
      %v3311 = vmul.f32 %v2824, %v3301
      %v3312 = vmul.f32 %v2828, %v3301
      %v3313 = vmul.f32 %v2832, %v3301
      %v3314 = vmul.f32 %v2836, %v3301
      %v3315 = vmul.f32 %v2840, %v3301
      %v3316 = vmul.f32 %v2844, %v3301
      %v3317 = vmul.f32 %v2848, %v3301
      %v3318 = vmul.f32 %v2852, %v3301
      %v3319 = vmul.f32 %v2856, %v3301
      %v3320 = vmul.f32 %v2860, %v3301
      %v3321 = vmul.f32 %v2864, %v3301
      %v3322 = vmul.f32 %v2868, %v3301
      %v3323 = vmul.f32 %v2872, %v3301
      %v3324 = vmul.f32 %v2876, %v3301
      %v3325 = vmul.f32 %v2880, %v3301
      %v3326 = vmul.f32 %v2884, %v3301
      %v3327 = vmul.f32 %v2888, %v3301
      %v3328 = vmul.f32 %v2892, %v3301
      %v3329 = vmul.f32 %v2896, %v3301
      %v3330 = vmul.f32 %v2900, %v3301
      %v3331 = vmul.f32 %v2904, %v3301
      %v3332 = vmul.f32 %v2908, %v3301
      %v3333 = vmul.f32 %v2912, %v3301
      %v3334 = vmul.f32 %v2916, %v3301
      %v3335 = vmul.f32 %v2920, %v3301
      %v3336 = vmul.f32 %v2924, %v3301
      %v3337 = vmul.f32 %v2928, %v3301
      %v3338 = vmul.f32 %v2932, %v3301
      %v3339 = vmul.f32 %v2936, %v3301
      %v3340 = vmul.f32 %v2940, %v3301
      %v3341 = vmul.f32 %v2944, %v3301
      %v3342 = vmul.f32 %v2948, %v3301
      %v3343 = vmul.f32 %v2952, %v3301
      %v3344 = vmul.f32 %v2956, %v3301
      %v3345 = vmul.f32 %v2960, %v3301
      %v3346 = vmul.f32 %v2964, %v3301
      %v3347 = vmul.f32 %v2968, %v3301
      %v3348 = vmul.f32 %v2972, %v3301
      %v3349 = vmul.f32 %v2976, %v3301
      %v3350 = vmul.f32 %v2980, %v3301
      %v3351 = vmul.f32 %v2984, %v3301
      %v3352 = vmul.f32 %v2988, %v3301
      %v3353 = vmul.f32 %v2992, %v3301
      %v3354 = vmul.f32 %v2996, %v3301
      %v3355 = vmul.f32 %v3000, %v3301
      %v3356 = vmul.f32 %v3004, %v3301
      %v3357 = vmul.f32 %v3008, %v3301
      %v3358 = vmul.f32 %v3012, %v3301
      %v3359 = vmul.f32 %v3016, %v3301
      %v3360 = vmul.f32 %v3020, %v3301
      %v3361 = vmul.f32 %v3024, %v3301
      %v3362 = vmul.f32 %v3028, %v3301
      %v3363 = vmul.f32 %v3032, %v3301
      %v3364 = vmul.f32 %v3036, %v3301
      %v3365 = vmul.f32 %v3040, %v3301
      %v3366 = vmul.f32 %v3044, %v3301
      %v3367 = vmul.f32 %v3048, %v3301
      %v3368 = vmul.f32 %v3052, %v3301
      %v3369 = vmul.f32 %v3056, %v3301
      %v3370 = vmul.f32 %v3060, %v3301
      %v3371 = vmul.f32 %v3064, %v3301
      %v3372 = vmul.f32 %v3068, %v3301
      %v3373 = vmul.f32 %v3072, %v3301
      %v3374 = vmul.f32 %v3076, %v3301
      %v3375 = vmul.f32 %v3080, %v3301
      %v3376 = vmul.f32 %v3084, %v3301
      %v3377 = vmul.f32 %v3088, %v3301
      %v3378 = vmul.f32 %v3092, %v3301
      %v3379 = vmul.f32 %v3096, %v3301
      %v3380 = vmul.f32 %v3100, %v3301
      %v3381 = vmul.f32 %v3104, %v3301
      %v3382 = vmul.f32 %v3108, %v3301
      %v3383 = vmul.f32 %v3112, %v3301
      %v3384 = vmul.f32 %v3116, %v3301
      %v3385 = vmul.f32 %v3120, %v3301
      %v3386 = vmul.f32 %v3124, %v3301
      %v3387 = vmul.f32 %v3128, %v3301
      %v3388 = vmul.f32 %v3132, %v3301
      %v3389 = vmul.f32 %v3136, %v3301
      %v3390 = vmul.f32 %v3140, %v3301
      %v3391 = vmul.f32 %v3144, %v3301
      %v3392 = vmul.f32 %v3148, %v3301
      %v3393 = vmul.f32 %v3152, %v3301
      %v3394 = vmul.f32 %v3156, %v3301
      %v3395 = vmul.f32 %v3160, %v3301
      %v3396 = vmul.f32 %v3164, %v3301
      %v3397 = vmul.f32 %v3168, %v3301
      %v3398 = vmul.f32 %v3172, %v3301
      %v3399 = vmul.f32 %v3176, %v3301
      %v3400 = vmul.f32 %v3180, %v3301
      %v3401 = vmul.f32 %v3184, %v3301
      %v3402 = vmul.f32 %v3188, %v3301
      %v3403 = vmul.f32 %v3192, %v3301
      %v3404 = vmul.f32 %v3196, %v3301
      %v3405 = vmul.f32 %v3200, %v3301
      %v3406 = vmul.f32 %v3204, %v3301
      %v3407 = vmul.f32 %v3208, %v3301
      %v3408 = vmul.f32 %v3212, %v3301
      %v3409 = vmul.f32 %v3216, %v3301
      %v3410 = vmul.f32 %v3220, %v3301
      %v3411 = vmul.f32 %v3224, %v3301
      %v3412 = vmul.f32 %v3228, %v3301
      %v3413 = vmul.f32 %v3232, %v3301
      %v3414 = vmul.f32 %v3236, %v3301
      %v3415 = vmul.f32 %v3240, %v3301
      %v3416 = vmul.f32 %v3244, %v3301
      %v3417 = vmul.f32 %v3248, %v3301
      %v3418 = vmul.f32 %v3252, %v3301
      %v3419 = vmul.f32 %v3256, %v3301
      %v3420 = vmul.f32 %v3260, %v3301
      %v3421 = vmul.f32 %v3264, %v3301
      %v3422 = vmul.f32 %v3268, %v3301
      %v3423 = vmul.f32 %v3272, %v3301
      %v3424 = vmul.f32 %v3276, %v3301
      %v3425 = vmul.f32 %v3280, %v3301
      %v3426 = vmul.f32 %v3284, %v3301
      %v3427 = vmul.f32 %v3288, %v3301
      %v3428 = vmul.f32 %v3292, %v3301
      %v3429 = vmul.f32 %v3296, %v3301
      %v3430 = vadd.f32 %v2658, %v3302
      %v3431 = vadd.f32 %v2659, %v3303
      %v3432 = vadd.f32 %v2660, %v3304
      %v3433 = vadd.f32 %v2661, %v3305
      %v3434 = vadd.f32 %v2662, %v3306
      %v3435 = vadd.f32 %v2663, %v3307
      %v3436 = vadd.f32 %v2664, %v3308
      %v3437 = vadd.f32 %v2665, %v3309
      %v3438 = vadd.f32 %v2666, %v3310
      %v3439 = vadd.f32 %v2667, %v3311
      %v3440 = vadd.f32 %v2668, %v3312
      %v3441 = vadd.f32 %v2669, %v3313
      %v3442 = vadd.f32 %v2670, %v3314
      %v3443 = vadd.f32 %v2671, %v3315
      %v3444 = vadd.f32 %v2672, %v3316
      %v3445 = vadd.f32 %v2673, %v3317
      %v3446 = vadd.f32 %v2674, %v3318
      %v3447 = vadd.f32 %v2675, %v3319
      %v3448 = vadd.f32 %v2676, %v3320
      %v3449 = vadd.f32 %v2677, %v3321
      %v3450 = vadd.f32 %v2678, %v3322
      %v3451 = vadd.f32 %v2679, %v3323
      %v3452 = vadd.f32 %v2680, %v3324
      %v3453 = vadd.f32 %v2681, %v3325
      %v3454 = vadd.f32 %v2682, %v3326
      %v3455 = vadd.f32 %v2683, %v3327
      %v3456 = vadd.f32 %v2684, %v3328
      %v3457 = vadd.f32 %v2685, %v3329
      %v3458 = vadd.f32 %v2686, %v3330
      %v3459 = vadd.f32 %v2687, %v3331
      %v3460 = vadd.f32 %v2688, %v3332
      %v3461 = vadd.f32 %v2689, %v3333
      %v3462 = vadd.f32 %v2690, %v3334
      %v3463 = vadd.f32 %v2691, %v3335
      %v3464 = vadd.f32 %v2692, %v3336
      %v3465 = vadd.f32 %v2693, %v3337
      %v3466 = vadd.f32 %v2694, %v3338
      %v3467 = vadd.f32 %v2695, %v3339
      %v3468 = vadd.f32 %v2696, %v3340
      %v3469 = vadd.f32 %v2697, %v3341
      %v3470 = vadd.f32 %v2698, %v3342
      %v3471 = vadd.f32 %v2699, %v3343
      %v3472 = vadd.f32 %v2700, %v3344
      %v3473 = vadd.f32 %v2701, %v3345
      %v3474 = vadd.f32 %v2702, %v3346
      %v3475 = vadd.f32 %v2703, %v3347
      %v3476 = vadd.f32 %v2704, %v3348
      %v3477 = vadd.f32 %v2705, %v3349
      %v3478 = vadd.f32 %v2706, %v3350
      %v3479 = vadd.f32 %v2707, %v3351
      %v3480 = vadd.f32 %v2708, %v3352
      %v3481 = vadd.f32 %v2709, %v3353
      %v3482 = vadd.f32 %v2710, %v3354
      %v3483 = vadd.f32 %v2711, %v3355
      %v3484 = vadd.f32 %v2712, %v3356
      %v3485 = vadd.f32 %v2713, %v3357
      %v3486 = vadd.f32 %v2714, %v3358
      %v3487 = vadd.f32 %v2715, %v3359
      %v3488 = vadd.f32 %v2716, %v3360
      %v3489 = vadd.f32 %v2717, %v3361
      %v3490 = vadd.f32 %v2718, %v3362
      %v3491 = vadd.f32 %v2719, %v3363
      %v3492 = vadd.f32 %v2720, %v3364
      %v3493 = vadd.f32 %v2721, %v3365
      %v3494 = vadd.f32 %v2722, %v3366
      %v3495 = vadd.f32 %v2723, %v3367
      %v3496 = vadd.f32 %v2724, %v3368
      %v3497 = vadd.f32 %v2725, %v3369
      %v3498 = vadd.f32 %v2726, %v3370
      %v3499 = vadd.f32 %v2727, %v3371
      %v3500 = vadd.f32 %v2728, %v3372
      %v3501 = vadd.f32 %v2729, %v3373
      %v3502 = vadd.f32 %v2730, %v3374
      %v3503 = vadd.f32 %v2731, %v3375
      %v3504 = vadd.f32 %v2732, %v3376
      %v3505 = vadd.f32 %v2733, %v3377
      %v3506 = vadd.f32 %v2734, %v3378
      %v3507 = vadd.f32 %v2735, %v3379
      %v3508 = vadd.f32 %v2736, %v3380
      %v3509 = vadd.f32 %v2737, %v3381
      %v3510 = vadd.f32 %v2738, %v3382
      %v3511 = vadd.f32 %v2739, %v3383
      %v3512 = vadd.f32 %v2740, %v3384
      %v3513 = vadd.f32 %v2741, %v3385
      %v3514 = vadd.f32 %v2742, %v3386
      %v3515 = vadd.f32 %v2743, %v3387
      %v3516 = vadd.f32 %v2744, %v3388
      %v3517 = vadd.f32 %v2745, %v3389
      %v3518 = vadd.f32 %v2746, %v3390
      %v3519 = vadd.f32 %v2747, %v3391
      %v3520 = vadd.f32 %v2748, %v3392
      %v3521 = vadd.f32 %v2749, %v3393
      %v3522 = vadd.f32 %v2750, %v3394
      %v3523 = vadd.f32 %v2751, %v3395
      %v3524 = vadd.f32 %v2752, %v3396
      %v3525 = vadd.f32 %v2753, %v3397
      %v3526 = vadd.f32 %v2754, %v3398
      %v3527 = vadd.f32 %v2755, %v3399
      %v3528 = vadd.f32 %v2756, %v3400
      %v3529 = vadd.f32 %v2757, %v3401
      %v3530 = vadd.f32 %v2758, %v3402
      %v3531 = vadd.f32 %v2759, %v3403
      %v3532 = vadd.f32 %v2760, %v3404
      %v3533 = vadd.f32 %v2761, %v3405
      %v3534 = vadd.f32 %v2762, %v3406
      %v3535 = vadd.f32 %v2763, %v3407
      %v3536 = vadd.f32 %v2764, %v3408
      %v3537 = vadd.f32 %v2765, %v3409
      %v3538 = vadd.f32 %v2766, %v3410
      %v3539 = vadd.f32 %v2767, %v3411
      %v3540 = vadd.f32 %v2768, %v3412
      %v3541 = vadd.f32 %v2769, %v3413
      %v3542 = vadd.f32 %v2770, %v3414
      %v3543 = vadd.f32 %v2771, %v3415
      %v3544 = vadd.f32 %v2772, %v3416
      %v3545 = vadd.f32 %v2773, %v3417
      %v3546 = vadd.f32 %v2774, %v3418
      %v3547 = vadd.f32 %v2775, %v3419
      %v3548 = vadd.f32 %v2776, %v3420
      %v3549 = vadd.f32 %v2777, %v3421
      %v3550 = vadd.f32 %v2778, %v3422
      %v3551 = vadd.f32 %v2779, %v3423
      %v3552 = vadd.f32 %v2780, %v3424
      %v3553 = vadd.f32 %v2781, %v3425
      %v3554 = vadd.f32 %v2782, %v3426
      %v3555 = vadd.f32 %v2783, %v3427
      %v3556 = vadd.f32 %v2784, %v3428
      %v3557 = vadd.f32 %v2785, %v3429
      %v3558 = vld [vmem:[%s2] sm:$0x1]
      %v3560 = vlaneseq
      %v3561 = vshrl.u32 %v3560, 7
      %v3562 = vsub.s32 0, %v3561
      %v3563 = vrot.slane %v3558, %v3562
      %v3565 = vadd.f32 %v3430, %v3563
      %v3566 = vadd.f32 %v3431, %v3563
      %v3567 = vadd.f32 %v3432, %v3563
      %v3568 = vadd.f32 %v3433, %v3563
      %v3569 = vadd.f32 %v3434, %v3563
      %v3570 = vadd.f32 %v3435, %v3563
      %v3571 = vadd.f32 %v3436, %v3563
      %v3572 = vadd.f32 %v3437, %v3563
      %v3573 = vadd.f32 %v3438, %v3563
      %v3574 = vadd.f32 %v3439, %v3563
      %v3575 = vadd.f32 %v3440, %v3563
      %v3576 = vadd.f32 %v3441, %v3563
      %v3577 = vadd.f32 %v3442, %v3563
      %v3578 = vadd.f32 %v3443, %v3563
      %v3579 = vadd.f32 %v3444, %v3563
      %v3580 = vadd.f32 %v3445, %v3563
      %v3581 = vadd.f32 %v3446, %v3563
      %v3582 = vadd.f32 %v3447, %v3563
      %v3583 = vadd.f32 %v3448, %v3563
      %v3584 = vadd.f32 %v3449, %v3563
      %v3585 = vadd.f32 %v3450, %v3563
      %v3586 = vadd.f32 %v3451, %v3563
      %v3587 = vadd.f32 %v3452, %v3563
      %v3588 = vadd.f32 %v3453, %v3563
      %v3589 = vadd.f32 %v3454, %v3563
      %v3590 = vadd.f32 %v3455, %v3563
      %v3591 = vadd.f32 %v3456, %v3563
      %v3592 = vadd.f32 %v3457, %v3563
      %v3593 = vadd.f32 %v3458, %v3563
      %v3594 = vadd.f32 %v3459, %v3563
      %v3595 = vadd.f32 %v3460, %v3563
      %v3596 = vadd.f32 %v3461, %v3563
      %v3597 = vadd.f32 %v3462, %v3563
      %v3598 = vadd.f32 %v3463, %v3563
      %v3599 = vadd.f32 %v3464, %v3563
      %v3600 = vadd.f32 %v3465, %v3563
      %v3601 = vadd.f32 %v3466, %v3563
      %v3602 = vadd.f32 %v3467, %v3563
      %v3603 = vadd.f32 %v3468, %v3563
      %v3604 = vadd.f32 %v3469, %v3563
      %v3605 = vadd.f32 %v3470, %v3563
      %v3606 = vadd.f32 %v3471, %v3563
      %v3607 = vadd.f32 %v3472, %v3563
      %v3608 = vadd.f32 %v3473, %v3563
      %v3609 = vadd.f32 %v3474, %v3563
      %v3610 = vadd.f32 %v3475, %v3563
      %v3611 = vadd.f32 %v3476, %v3563
      %v3612 = vadd.f32 %v3477, %v3563
      %v3613 = vadd.f32 %v3478, %v3563
      %v3614 = vadd.f32 %v3479, %v3563
      %v3615 = vadd.f32 %v3480, %v3563
      %v3616 = vadd.f32 %v3481, %v3563
      %v3617 = vadd.f32 %v3482, %v3563
      %v3618 = vadd.f32 %v3483, %v3563
      %v3619 = vadd.f32 %v3484, %v3563
      %v3620 = vadd.f32 %v3485, %v3563
      %v3621 = vadd.f32 %v3486, %v3563
      %v3622 = vadd.f32 %v3487, %v3563
      %v3623 = vadd.f32 %v3488, %v3563
      %v3624 = vadd.f32 %v3489, %v3563
      %v3625 = vadd.f32 %v3490, %v3563
      %v3626 = vadd.f32 %v3491, %v3563
      %v3627 = vadd.f32 %v3492, %v3563
      %v3628 = vadd.f32 %v3493, %v3563
      %v3629 = vadd.f32 %v3494, %v3563
      %v3630 = vadd.f32 %v3495, %v3563
      %v3631 = vadd.f32 %v3496, %v3563
      %v3632 = vadd.f32 %v3497, %v3563
      %v3633 = vadd.f32 %v3498, %v3563
      %v3634 = vadd.f32 %v3499, %v3563
      %v3635 = vadd.f32 %v3500, %v3563
      %v3636 = vadd.f32 %v3501, %v3563
      %v3637 = vadd.f32 %v3502, %v3563
      %v3638 = vadd.f32 %v3503, %v3563
      %v3639 = vadd.f32 %v3504, %v3563
      %v3640 = vadd.f32 %v3505, %v3563
      %v3641 = vadd.f32 %v3506, %v3563
      %v3642 = vadd.f32 %v3507, %v3563
      %v3643 = vadd.f32 %v3508, %v3563
      %v3644 = vadd.f32 %v3509, %v3563
      %v3645 = vadd.f32 %v3510, %v3563
      %v3646 = vadd.f32 %v3511, %v3563
      %v3647 = vadd.f32 %v3512, %v3563
      %v3648 = vadd.f32 %v3513, %v3563
      %v3649 = vadd.f32 %v3514, %v3563
      %v3650 = vadd.f32 %v3515, %v3563
      %v3651 = vadd.f32 %v3516, %v3563
      %v3652 = vadd.f32 %v3517, %v3563
      %v3653 = vadd.f32 %v3518, %v3563
      %v3654 = vadd.f32 %v3519, %v3563
      %v3655 = vadd.f32 %v3520, %v3563
      %v3656 = vadd.f32 %v3521, %v3563
      %v3657 = vadd.f32 %v3522, %v3563
      %v3658 = vadd.f32 %v3523, %v3563
      %v3659 = vadd.f32 %v3524, %v3563
      %v3660 = vadd.f32 %v3525, %v3563
      %v3661 = vadd.f32 %v3526, %v3563
      %v3662 = vadd.f32 %v3527, %v3563
      %v3663 = vadd.f32 %v3528, %v3563
      %v3664 = vadd.f32 %v3529, %v3563
      %v3665 = vadd.f32 %v3530, %v3563
      %v3666 = vadd.f32 %v3531, %v3563
      %v3667 = vadd.f32 %v3532, %v3563
      %v3668 = vadd.f32 %v3533, %v3563
      %v3669 = vadd.f32 %v3534, %v3563
      %v3670 = vadd.f32 %v3535, %v3563
      %v3671 = vadd.f32 %v3536, %v3563
      %v3672 = vadd.f32 %v3537, %v3563
      %v3673 = vadd.f32 %v3538, %v3563
      %v3674 = vadd.f32 %v3539, %v3563
      %v3675 = vadd.f32 %v3540, %v3563
      %v3676 = vadd.f32 %v3541, %v3563
      %v3677 = vadd.f32 %v3542, %v3563
      %v3678 = vadd.f32 %v3543, %v3563
      %v3679 = vadd.f32 %v3544, %v3563
      %v3680 = vadd.f32 %v3545, %v3563
      %v3681 = vadd.f32 %v3546, %v3563
      %v3682 = vadd.f32 %v3547, %v3563
      %v3683 = vadd.f32 %v3548, %v3563
      %v3684 = vadd.f32 %v3549, %v3563
      %v3685 = vadd.f32 %v3550, %v3563
      %v3686 = vadd.f32 %v3551, %v3563
      %v3687 = vadd.f32 %v3552, %v3563
      %v3688 = vadd.f32 %v3553, %v3563
      %v3689 = vadd.f32 %v3554, %v3563
      %v3690 = vadd.f32 %v3555, %v3563
      %v3691 = vadd.f32 %v3556, %v3563
      %v3692 = vadd.f32 %v3557, %v3563
      %v3693 = vmax.f32 %v3565, 0.0
      %v3694 = vmax.f32 %v3566, 0.0
      %v3695 = vmax.f32 %v3567, 0.0
      %v3696 = vmax.f32 %v3568, 0.0
      %v3697 = vmax.f32 %v3569, 0.0
      %v3698 = vmax.f32 %v3570, 0.0
      %v3699 = vmax.f32 %v3571, 0.0
      %v3700 = vmax.f32 %v3572, 0.0
      %v3701 = vmax.f32 %v3573, 0.0
      %v3702 = vmax.f32 %v3574, 0.0
      %v3703 = vmax.f32 %v3575, 0.0
      %v3704 = vmax.f32 %v3576, 0.0
      %v3705 = vmax.f32 %v3577, 0.0
      %v3706 = vmax.f32 %v3578, 0.0
      %v3707 = vmax.f32 %v3579, 0.0
      %v3708 = vmax.f32 %v3580, 0.0
      %v3709 = vmax.f32 %v3581, 0.0
      %v3710 = vmax.f32 %v3582, 0.0
      %v3711 = vmax.f32 %v3583, 0.0
      %v3712 = vmax.f32 %v3584, 0.0
      %v3713 = vmax.f32 %v3585, 0.0
      %v3714 = vmax.f32 %v3586, 0.0
      %v3715 = vmax.f32 %v3587, 0.0
      %v3716 = vmax.f32 %v3588, 0.0
      %v3717 = vmax.f32 %v3589, 0.0
      %v3718 = vmax.f32 %v3590, 0.0
      %v3719 = vmax.f32 %v3591, 0.0
      %v3720 = vmax.f32 %v3592, 0.0
      %v3721 = vmax.f32 %v3593, 0.0
      %v3722 = vmax.f32 %v3594, 0.0
      %v3723 = vmax.f32 %v3595, 0.0
      %v3724 = vmax.f32 %v3596, 0.0
      %v3725 = vmax.f32 %v3597, 0.0
      %v3726 = vmax.f32 %v3598, 0.0
      %v3727 = vmax.f32 %v3599, 0.0
      %v3728 = vmax.f32 %v3600, 0.0
      %v3729 = vmax.f32 %v3601, 0.0
      %v3730 = vmax.f32 %v3602, 0.0
      %v3731 = vmax.f32 %v3603, 0.0
      %v3732 = vmax.f32 %v3604, 0.0
      %v3733 = vmax.f32 %v3605, 0.0
      %v3734 = vmax.f32 %v3606, 0.0
      %v3735 = vmax.f32 %v3607, 0.0
      %v3736 = vmax.f32 %v3608, 0.0
      %v3737 = vmax.f32 %v3609, 0.0
      %v3738 = vmax.f32 %v3610, 0.0
      %v3739 = vmax.f32 %v3611, 0.0
      %v3740 = vmax.f32 %v3612, 0.0
      %v3741 = vmax.f32 %v3613, 0.0
      %v3742 = vmax.f32 %v3614, 0.0
      %v3743 = vmax.f32 %v3615, 0.0
      %v3744 = vmax.f32 %v3616, 0.0
      %v3745 = vmax.f32 %v3617, 0.0
      %v3746 = vmax.f32 %v3618, 0.0
      %v3747 = vmax.f32 %v3619, 0.0
      %v3748 = vmax.f32 %v3620, 0.0
      %v3749 = vmax.f32 %v3621, 0.0
      %v3750 = vmax.f32 %v3622, 0.0
      %v3751 = vmax.f32 %v3623, 0.0
      %v3752 = vmax.f32 %v3624, 0.0
      %v3753 = vmax.f32 %v3625, 0.0
      %v3754 = vmax.f32 %v3626, 0.0
      %v3755 = vmax.f32 %v3627, 0.0
      %v3756 = vmax.f32 %v3628, 0.0
      %v3757 = vmax.f32 %v3629, 0.0
      %v3758 = vmax.f32 %v3630, 0.0
      %v3759 = vmax.f32 %v3631, 0.0
      %v3760 = vmax.f32 %v3632, 0.0
      %v3761 = vmax.f32 %v3633, 0.0
      %v3762 = vmax.f32 %v3634, 0.0
      %v3763 = vmax.f32 %v3635, 0.0
      %v3764 = vmax.f32 %v3636, 0.0
      %v3765 = vmax.f32 %v3637, 0.0
      %v3766 = vmax.f32 %v3638, 0.0
      %v3767 = vmax.f32 %v3639, 0.0
      %v3768 = vmax.f32 %v3640, 0.0
      %v3769 = vmax.f32 %v3641, 0.0
      %v3770 = vmax.f32 %v3642, 0.0
      %v3771 = vmax.f32 %v3643, 0.0
      %v3772 = vmax.f32 %v3644, 0.0
      %v3773 = vmax.f32 %v3645, 0.0
      %v3774 = vmax.f32 %v3646, 0.0
      %v3775 = vmax.f32 %v3647, 0.0
      %v3776 = vmax.f32 %v3648, 0.0
      %v3777 = vmax.f32 %v3649, 0.0
      %v3778 = vmax.f32 %v3650, 0.0
      %v3779 = vmax.f32 %v3651, 0.0
      %v3780 = vmax.f32 %v3652, 0.0
      %v3781 = vmax.f32 %v3653, 0.0
      %v3782 = vmax.f32 %v3654, 0.0
      %v3783 = vmax.f32 %v3655, 0.0
      %v3784 = vmax.f32 %v3656, 0.0
      %v3785 = vmax.f32 %v3657, 0.0
      %v3786 = vmax.f32 %v3658, 0.0
      %v3787 = vmax.f32 %v3659, 0.0
      %v3788 = vmax.f32 %v3660, 0.0
      %v3789 = vmax.f32 %v3661, 0.0
      %v3790 = vmax.f32 %v3662, 0.0
      %v3791 = vmax.f32 %v3663, 0.0
      %v3792 = vmax.f32 %v3664, 0.0
      %v3793 = vmax.f32 %v3665, 0.0
      %v3794 = vmax.f32 %v3666, 0.0
      %v3795 = vmax.f32 %v3667, 0.0
      %v3796 = vmax.f32 %v3668, 0.0
      %v3797 = vmax.f32 %v3669, 0.0
      %v3798 = vmax.f32 %v3670, 0.0
      %v3799 = vmax.f32 %v3671, 0.0
      %v3800 = vmax.f32 %v3672, 0.0
      %v3801 = vmax.f32 %v3673, 0.0
      %v3802 = vmax.f32 %v3674, 0.0
      %v3803 = vmax.f32 %v3675, 0.0
      %v3804 = vmax.f32 %v3676, 0.0
      %v3805 = vmax.f32 %v3677, 0.0
      %v3806 = vmax.f32 %v3678, 0.0
      %v3807 = vmax.f32 %v3679, 0.0
      %v3808 = vmax.f32 %v3680, 0.0
      %v3809 = vmax.f32 %v3681, 0.0
      %v3810 = vmax.f32 %v3682, 0.0
      %v3811 = vmax.f32 %v3683, 0.0
      %v3812 = vmax.f32 %v3684, 0.0
      %v3813 = vmax.f32 %v3685, 0.0
      %v3814 = vmax.f32 %v3686, 0.0
      %v3815 = vmax.f32 %v3687, 0.0
      %v3816 = vmax.f32 %v3688, 0.0
      %v3817 = vmax.f32 %v3689, 0.0
      %v3818 = vmax.f32 %v3690, 0.0
      %v3819 = vmax.f32 %v3691, 0.0
      %v3820 = vmax.f32 %v3692, 0.0
      %v3821 = vld [vmem:[%s3] sm:$0xff]
      %v3822 = vld [vmem:[%s3 + $0x8] sm:$0x1]
      %v3823 = vld [vmem:[%s4] sm:$0x1]
      %vm3824 = vcmask 130048
      %3825 = vst.msk [vmem:[#allocation2] sm:$0xff] %vm3824, 0.0
      %3826 = vst.msk [vmem:[#allocation2 + $0x8] sm:$0xff] %vm3824, 0.0
      %vm3827 = vcmask 123904
      %3828 = vst.msk [vmem:[#allocation2 + $0x10] sm:$0x3] %vm3827, 0.0
      %3829 = vst.msk [vmem:[#allocation2 + $0x18] sm:$0xff] %vm3824, 0.0
      %3830 = vst.msk [vmem:[#allocation2 + $0x20] sm:$0xff] %vm3824, 0.0
      %3831 = vst.msk [vmem:[#allocation2 + $0x28] sm:$0x3] %vm3827, 0.0
      %3832 = vst.msk [vmem:[#allocation2 + $0x30] sm:$0xff] %vm3824, 0.0
      %3833 = vst.msk [vmem:[#allocation2 + $0x38] sm:$0xff] %vm3824, 0.0
      %3834 = vst.msk [vmem:[#allocation2 + $0x40] sm:$0x3] %vm3827, 0.0
      %3835 = vst.msk [vmem:[#allocation2 + $0x48] sm:$0xff] %vm3824, 0.0
      %3836 = vst.msk [vmem:[#allocation2 + $0x50] sm:$0xff] %vm3824, 0.0
      %3837 = vst.msk [vmem:[#allocation2 + $0x58] sm:$0x3] %vm3827, 0.0
      %3838 = vst.msk [vmem:[#allocation2 + $0x60] sm:$0xff] %vm3824, 0.0
      %3839 = vst.msk [vmem:[#allocation2 + $0x68] sm:$0xff] %vm3824, 0.0
      %3840 = vst.msk [vmem:[#allocation2 + $0x70] sm:$0x3] %vm3827, 0.0
      %3841 = vst.msk [vmem:[#allocation2 + $0x78] sm:$0xff] %vm3824, 0.0
      %3842 = vst.msk [vmem:[#allocation2 + $0x80] sm:$0xff] %vm3824, 0.0
      %3843 = vst.msk [vmem:[#allocation2 + $0x88] sm:$0x3] %vm3827, 0.0
      %3844 = vst.msk [vmem:[#allocation2 + $0x90] sm:$0xff] %vm3824, 0.0
      %3845 = vst.msk [vmem:[#allocation2 + $0x98] sm:$0xff] %vm3824, 0.0
      %3846 = vst.msk [vmem:[#allocation2 + $0xa0] sm:$0x3] %vm3827, 0.0
      %3847 = vst.msk [vmem:[#allocation2 + $0xa8] sm:$0xff] %vm3824, 0.0
      %3848 = vst.msk [vmem:[#allocation2 + $0xb0] sm:$0xff] %vm3824, 0.0
      %3849 = vst.msk [vmem:[#allocation2 + $0xb8] sm:$0x3] %vm3827, 0.0
      %3850 = vst.msk [vmem:[#allocation2 + $0xc0] sm:$0xff] %vm3824, 0.0
      %3851 = vst.msk [vmem:[#allocation2 + $0xc8] sm:$0xff] %vm3824, 0.0
      %3852 = vst.msk [vmem:[#allocation2 + $0xd0] sm:$0x3] %vm3827, 0.0
      %3853 = vst.msk [vmem:[#allocation2 + $0xd8] sm:$0xff] %vm3824, 0.0
      %3854 = vst.msk [vmem:[#allocation2 + $0xe0] sm:$0xff] %vm3824, 0.0
      %3855 = vst.msk [vmem:[#allocation2 + $0xe8] sm:$0x3] %vm3827, 0.0
      %3856 = vst.msk [vmem:[#allocation2 + $0xf0] sm:$0xff] %vm3824, 0.0
      %3857 = vst.msk [vmem:[#allocation2 + $0xf8] sm:$0xff] %vm3824, 0.0
      %3858 = vst.msk [vmem:[#allocation2 + $0x100] sm:$0x3] %vm3827, 0.0
      %3859 = vst.msk [vmem:[#allocation2 + $0x108] sm:$0xff] %vm3824, 0.0
      %3860 = vst.msk [vmem:[#allocation2 + $0x110] sm:$0xff] %vm3824, 0.0
      %3861 = vst.msk [vmem:[#allocation2 + $0x118] sm:$0x3] %vm3827, 0.0
      %3862 = vst.msk [vmem:[#allocation2 + $0x120] sm:$0xff] %vm3824, 0.0
      %3863 = vst.msk [vmem:[#allocation2 + $0x128] sm:$0xff] %vm3824, 0.0
      %3864 = vst.msk [vmem:[#allocation2 + $0x130] sm:$0x3] %vm3827, 0.0
      %3865 = vst.msk [vmem:[#allocation2 + $0x138] sm:$0xff] %vm3824, 0.0
      %3866 = vst.msk [vmem:[#allocation2 + $0x140] sm:$0xff] %vm3824, 0.0
      %3867 = vst.msk [vmem:[#allocation2 + $0x148] sm:$0x3] %vm3827, 0.0
      %3868 = vst.msk [vmem:[#allocation2 + $0x150] sm:$0xff] %vm3824, 0.0
      %3869 = vst.msk [vmem:[#allocation2 + $0x158] sm:$0xff] %vm3824, 0.0
      %3870 = vst.msk [vmem:[#allocation2 + $0x160] sm:$0x3] %vm3827, 0.0
      %3871 = vst.msk [vmem:[#allocation2 + $0x168] sm:$0xff] %vm3824, 0.0
      %3872 = vst.msk [vmem:[#allocation2 + $0x170] sm:$0xff] %vm3824, 0.0
      %3873 = vst.msk [vmem:[#allocation2 + $0x178] sm:$0x3] %vm3827, 0.0
      %3874 = vst.msk [vmem:[#allocation2 + $0x180] sm:$0xff] %vm3824, 0.0
      %3875 = vst.msk [vmem:[#allocation2 + $0x188] sm:$0xff] %vm3824, 0.0
      %3876 = vst.msk [vmem:[#allocation2 + $0x190] sm:$0x3] %vm3827, 0.0
      %3877 = vst.msk [vmem:[#allocation2 + $0x198] sm:$0xff] %vm3824, 0.0
      %3878 = vst.msk [vmem:[#allocation2 + $0x1a0] sm:$0xff] %vm3824, 0.0
      %3879 = vst.msk [vmem:[#allocation2 + $0x1a8] sm:$0x3] %vm3827, 0.0
      %3880 = vst.msk [vmem:[#allocation2 + $0x1b0] sm:$0xff] %vm3824, 0.0
      %3881 = vst.msk [vmem:[#allocation2 + $0x1b8] sm:$0xff] %vm3824, 0.0
      %3882 = vst.msk [vmem:[#allocation2 + $0x1c0] sm:$0x3] %vm3827, 0.0
      %3883 = vst.msk [vmem:[#allocation2 + $0x1c8] sm:$0xff] %vm3824, 0.0
      %3884 = vst.msk [vmem:[#allocation2 + $0x1d0] sm:$0xff] %vm3824, 0.0
      %3885 = vst.msk [vmem:[#allocation2 + $0x1d8] sm:$0x3] %vm3827, 0.0
      %3886 = vst.msk [vmem:[#allocation2 + $0x1e0] sm:$0xff] %vm3824, 0.0
      %3887 = vst.msk [vmem:[#allocation2 + $0x1e8] sm:$0xff] %vm3824, 0.0
      %3888 = vst.msk [vmem:[#allocation2 + $0x1f0] sm:$0x3] %vm3827, 0.0
      %3889 = vst.msk [vmem:[#allocation2 + $0x1f8] sm:$0xff] %vm3824, 0.0
      %3890 = vst.msk [vmem:[#allocation2 + $0x200] sm:$0xff] %vm3824, 0.0
      %3891 = vst.msk [vmem:[#allocation2 + $0x208] sm:$0x3] %vm3827, 0.0
      %3892 = vst.msk [vmem:[#allocation2 + $0x210] sm:$0xff] %vm3824, 0.0
      %3893 = vst.msk [vmem:[#allocation2 + $0x218] sm:$0xff] %vm3824, 0.0
      %3894 = vst.msk [vmem:[#allocation2 + $0x220] sm:$0x3] %vm3827, 0.0
      %3895 = vst.msk [vmem:[#allocation2 + $0x228] sm:$0xff] %vm3824, 0.0
      %3896 = vst.msk [vmem:[#allocation2 + $0x230] sm:$0xff] %vm3824, 0.0
      %3897 = vst.msk [vmem:[#allocation2 + $0x238] sm:$0x3] %vm3827, 0.0
      %3898 = vst.msk [vmem:[#allocation2 + $0x240] sm:$0xff] %vm3824, 0.0
      %3899 = vst.msk [vmem:[#allocation2 + $0x248] sm:$0xff] %vm3824, 0.0
      %3900 = vst.msk [vmem:[#allocation2 + $0x250] sm:$0x3] %vm3827, 0.0
      %3901 = vst.msk [vmem:[#allocation2 + $0x258] sm:$0xff] %vm3824, 0.0
      %3902 = vst.msk [vmem:[#allocation2 + $0x260] sm:$0xff] %vm3824, 0.0
      %3903 = vst.msk [vmem:[#allocation2 + $0x268] sm:$0x3] %vm3827, 0.0
      %3904 = vst.msk [vmem:[#allocation2 + $0x270] sm:$0xff] %vm3824, 0.0
      %3905 = vst.msk [vmem:[#allocation2 + $0x278] sm:$0xff] %vm3824, 0.0
      %3906 = vst.msk [vmem:[#allocation2 + $0x280] sm:$0x3] %vm3827, 0.0
      %3907 = vst.msk [vmem:[#allocation2 + $0x288] sm:$0xff] %vm3824, 0.0
      %3908 = vst.msk [vmem:[#allocation2 + $0x290] sm:$0xff] %vm3824, 0.0
      %3909 = vst.msk [vmem:[#allocation2 + $0x298] sm:$0x3] %vm3827, 0.0
      %3910 = vst.msk [vmem:[#allocation2 + $0x2a0] sm:$0xff] %vm3824, 0.0
      %3911 = vst.msk [vmem:[#allocation2 + $0x2a8] sm:$0xff] %vm3824, 0.0
      %3912 = vst.msk [vmem:[#allocation2 + $0x2b0] sm:$0x3] %vm3827, 0.0
      %3913 = vst.msk [vmem:[#allocation2 + $0x2b8] sm:$0xff] %vm3824, 0.0
      %3914 = vst.msk [vmem:[#allocation2 + $0x2c0] sm:$0xff] %vm3824, 0.0
      %3915 = vst.msk [vmem:[#allocation2 + $0x2c8] sm:$0x3] %vm3827, 0.0
      %3916 = vst.msk [vmem:[#allocation2 + $0x2d0] sm:$0xff] %vm3824, 0.0
      %3917 = vst.msk [vmem:[#allocation2 + $0x2d8] sm:$0xff] %vm3824, 0.0
      %3918 = vst.msk [vmem:[#allocation2 + $0x2e0] sm:$0x3] %vm3827, 0.0
      %3919 = vst.msk [vmem:[#allocation2 + $0x2e8] sm:$0xff] %vm3824, 0.0
      %3920 = vst.msk [vmem:[#allocation2 + $0x2f0] sm:$0xff] %vm3824, 0.0
      %3921 = vst.msk [vmem:[#allocation2 + $0x2f8] sm:$0x3] %vm3827, 0.0
      %3922 = vst.msk [vmem:[#allocation2 + $0x300] sm:$0xff] %vm3824, 0.0
      %3923 = vst.msk [vmem:[#allocation2 + $0x308] sm:$0xff] %vm3824, 0.0
      %3924 = vst.msk [vmem:[#allocation2 + $0x310] sm:$0x3] %vm3827, 0.0
      %3925 = vst.msk [vmem:[#allocation2 + $0x318] sm:$0xff] %vm3824, 0.0
      %3926 = vst.msk [vmem:[#allocation2 + $0x320] sm:$0xff] %vm3824, 0.0
      %3927 = vst.msk [vmem:[#allocation2 + $0x328] sm:$0x3] %vm3827, 0.0
      %3928 = vst.msk [vmem:[#allocation2 + $0x330] sm:$0xff] %vm3824, 0.0
      %3929 = vst.msk [vmem:[#allocation2 + $0x338] sm:$0xff] %vm3824, 0.0
      %3930 = vst.msk [vmem:[#allocation2 + $0x340] sm:$0x3] %vm3827, 0.0
      %3931 = vst.msk [vmem:[#allocation2 + $0x348] sm:$0xff] %vm3824, 0.0
      %3932 = vst.msk [vmem:[#allocation2 + $0x350] sm:$0xff] %vm3824, 0.0
      %3933 = vst.msk [vmem:[#allocation2 + $0x358] sm:$0x3] %vm3827, 0.0
      %3934 = vst.msk [vmem:[#allocation2 + $0x360] sm:$0xff] %vm3824, 0.0
      %3935 = vst.msk [vmem:[#allocation2 + $0x368] sm:$0xff] %vm3824, 0.0
      %3936 = vst.msk [vmem:[#allocation2 + $0x370] sm:$0x3] %vm3827, 0.0
      %3937 = vst.msk [vmem:[#allocation2 + $0x378] sm:$0xff] %vm3824, 0.0
      %3938 = vst.msk [vmem:[#allocation2 + $0x380] sm:$0xff] %vm3824, 0.0
      %3939 = vst.msk [vmem:[#allocation2 + $0x388] sm:$0x3] %vm3827, 0.0
      %3940 = vst.msk [vmem:[#allocation2 + $0x390] sm:$0xff] %vm3824, 0.0
      %3941 = vst.msk [vmem:[#allocation2 + $0x398] sm:$0xff] %vm3824, 0.0
      %3942 = vst.msk [vmem:[#allocation2 + $0x3a0] sm:$0x3] %vm3827, 0.0
      %3943 = vst.msk [vmem:[#allocation2 + $0x3a8] sm:$0xff] %vm3824, 0.0
      %3944 = vst.msk [vmem:[#allocation2 + $0x3b0] sm:$0xff] %vm3824, 0.0
      %3945 = vst.msk [vmem:[#allocation2 + $0x3b8] sm:$0x3] %vm3827, 0.0
      %3946 = vst.msk [vmem:[#allocation2 + $0x3c0] sm:$0xff] %vm3824, 0.0
      %3947 = vst.msk [vmem:[#allocation2 + $0x3c8] sm:$0xff] %vm3824, 0.0
      %3948 = vst.msk [vmem:[#allocation2 + $0x3d0] sm:$0x3] %vm3827, 0.0
      %3949 = vst.msk [vmem:[#allocation2 + $0x3d8] sm:$0xff] %vm3824, 0.0
      %3950 = vst.msk [vmem:[#allocation2 + $0x3e0] sm:$0xff] %vm3824, 0.0
      %3951 = vst.msk [vmem:[#allocation2 + $0x3e8] sm:$0x3] %vm3827, 0.0
      %3952 = vst.msk [vmem:[#allocation2 + $0x3f0] sm:$0xff] %vm3824, 0.0
      %3953 = vst.msk [vmem:[#allocation2 + $0x3f8] sm:$0xff] %vm3824, 0.0
      %3954 = vst.msk [vmem:[#allocation2 + $0x400] sm:$0x3] %vm3827, 0.0
      %3955 = vst.msk [vmem:[#allocation2 + $0x408] sm:$0xff] %vm3824, 0.0
      %3956 = vst.msk [vmem:[#allocation2 + $0x410] sm:$0xff] %vm3824, 0.0
      %3957 = vst.msk [vmem:[#allocation2 + $0x418] sm:$0x3] %vm3827, 0.0
      %3958 = vst.msk [vmem:[#allocation2 + $0x420] sm:$0xff] %vm3824, 0.0
      %3959 = vst.msk [vmem:[#allocation2 + $0x428] sm:$0xff] %vm3824, 0.0
      %3960 = vst.msk [vmem:[#allocation2 + $0x430] sm:$0x3] %vm3827, 0.0
      %3961 = vst.msk [vmem:[#allocation2 + $0x438] sm:$0xff] %vm3824, 0.0
      %3962 = vst.msk [vmem:[#allocation2 + $0x440] sm:$0xff] %vm3824, 0.0
      %3963 = vst.msk [vmem:[#allocation2 + $0x448] sm:$0x3] %vm3827, 0.0
      %3964 = vst.msk [vmem:[#allocation2 + $0x450] sm:$0xff] %vm3824, 0.0
      %3965 = vst.msk [vmem:[#allocation2 + $0x458] sm:$0xff] %vm3824, 0.0
      %3966 = vst.msk [vmem:[#allocation2 + $0x460] sm:$0x3] %vm3827, 0.0
      %3967 = vst.msk [vmem:[#allocation2 + $0x468] sm:$0xff] %vm3824, 0.0
      %3968 = vst.msk [vmem:[#allocation2 + $0x470] sm:$0xff] %vm3824, 0.0
      %3969 = vst.msk [vmem:[#allocation2 + $0x478] sm:$0x3] %vm3827, 0.0
      %3970 = vst.msk [vmem:[#allocation2 + $0x480] sm:$0xff] %vm3824, 0.0
      %3971 = vst.msk [vmem:[#allocation2 + $0x488] sm:$0xff] %vm3824, 0.0
      %3972 = vst.msk [vmem:[#allocation2 + $0x490] sm:$0x3] %vm3827, 0.0
      %3973 = vst.msk [vmem:[#allocation2 + $0x498] sm:$0xff] %vm3824, 0.0
      %3974 = vst.msk [vmem:[#allocation2 + $0x4a0] sm:$0xff] %vm3824, 0.0
      %3975 = vst.msk [vmem:[#allocation2 + $0x4a8] sm:$0x3] %vm3827, 0.0
      %3976 = vst.msk [vmem:[#allocation2 + $0x4b0] sm:$0xff] %vm3824, 0.0
      %3977 = vst.msk [vmem:[#allocation2 + $0x4b8] sm:$0xff] %vm3824, 0.0
      %3978 = vst.msk [vmem:[#allocation2 + $0x4c0] sm:$0x3] %vm3827, 0.0
      %3979 = vst.msk [vmem:[#allocation2 + $0x4c8] sm:$0xff] %vm3824, 0.0
      %3980 = vst.msk [vmem:[#allocation2 + $0x4d0] sm:$0xff] %vm3824, 0.0
      %3981 = vst.msk [vmem:[#allocation2 + $0x4d8] sm:$0x3] %vm3827, 0.0
      %3982 = vst.msk [vmem:[#allocation2 + $0x4e0] sm:$0xff] %vm3824, 0.0
      %3983 = vst.msk [vmem:[#allocation2 + $0x4e8] sm:$0xff] %vm3824, 0.0
      %3984 = vst.msk [vmem:[#allocation2 + $0x4f0] sm:$0x3] %vm3827, 0.0
      %3985 = vst.msk [vmem:[#allocation2 + $0x4f8] sm:$0xff] %vm3824, 0.0
      %3986 = vst.msk [vmem:[#allocation2 + $0x500] sm:$0xff] %vm3824, 0.0
      %3987 = vst.msk [vmem:[#allocation2 + $0x508] sm:$0x3] %vm3827, 0.0
      %3988 = vst.msk [vmem:[#allocation2 + $0x510] sm:$0xff] %vm3824, 0.0
      %3989 = vst.msk [vmem:[#allocation2 + $0x518] sm:$0xff] %vm3824, 0.0
      %3990 = vst.msk [vmem:[#allocation2 + $0x520] sm:$0x3] %vm3827, 0.0
      %3991 = vst.msk [vmem:[#allocation2 + $0x528] sm:$0xff] %vm3824, 0.0
      %3992 = vst.msk [vmem:[#allocation2 + $0x530] sm:$0xff] %vm3824, 0.0
      %3993 = vst.msk [vmem:[#allocation2 + $0x538] sm:$0x3] %vm3827, 0.0
      %3994 = vst.msk [vmem:[#allocation2 + $0x540] sm:$0xff] %vm3824, 0.0
      %3995 = vst.msk [vmem:[#allocation2 + $0x548] sm:$0xff] %vm3824, 0.0
      %3996 = vst.msk [vmem:[#allocation2 + $0x550] sm:$0x3] %vm3827, 0.0
      %3997 = vst.msk [vmem:[#allocation2 + $0x558] sm:$0xff] %vm3824, 0.0
      %3998 = vst.msk [vmem:[#allocation2 + $0x560] sm:$0xff] %vm3824, 0.0
      %3999 = vst.msk [vmem:[#allocation2 + $0x568] sm:$0x3] %vm3827, 0.0
      %4000 = vst.msk [vmem:[#allocation2 + $0x570] sm:$0xff] %vm3824, 0.0
      %4001 = vst.msk [vmem:[#allocation2 + $0x578] sm:$0xff] %vm3824, 0.0
      %4002 = vst.msk [vmem:[#allocation2 + $0x580] sm:$0x3] %vm3827, 0.0
      %4003 = vst.msk [vmem:[#allocation2 + $0x588] sm:$0xff] %vm3824, 0.0
      %4004 = vst.msk [vmem:[#allocation2 + $0x590] sm:$0xff] %vm3824, 0.0
      %4005 = vst.msk [vmem:[#allocation2 + $0x598] sm:$0x3] %vm3827, 0.0
      %4006 = vst.msk [vmem:[#allocation2 + $0x5a0] sm:$0xff] %vm3824, 0.0
      %4007 = vst.msk [vmem:[#allocation2 + $0x5a8] sm:$0xff] %vm3824, 0.0
      %4008 = vst.msk [vmem:[#allocation2 + $0x5b0] sm:$0x3] %vm3827, 0.0
      %4009 = vst.msk [vmem:[#allocation2 + $0x5b8] sm:$0xff] %vm3824, 0.0
      %4010 = vst.msk [vmem:[#allocation2 + $0x5c0] sm:$0xff] %vm3824, 0.0
      %4011 = vst.msk [vmem:[#allocation2 + $0x5c8] sm:$0x3] %vm3827, 0.0
      %4012 = vst.msk [vmem:[#allocation2 + $0x5d0] sm:$0xff] %vm3824, 0.0
      %4013 = vst.msk [vmem:[#allocation2 + $0x5d8] sm:$0xff] %vm3824, 0.0
      %4014 = vst.msk [vmem:[#allocation2 + $0x5e0] sm:$0x3] %vm3827, 0.0
      %4015 = vst.msk [vmem:[#allocation2 + $0x5e8] sm:$0xff] %vm3824, 0.0
      %4016 = vst.msk [vmem:[#allocation2 + $0x5f0] sm:$0xff] %vm3824, 0.0
      %4017 = vst.msk [vmem:[#allocation2 + $0x5f8] sm:$0x3] %vm3827, 0.0
      %4018 = vst.msk [vmem:[#allocation2 + $0x600] sm:$0xff] %vm3824, 0.0
      %4019 = vst.msk [vmem:[#allocation2 + $0x608] sm:$0xff] %vm3824, 0.0
      %4020 = vst.msk [vmem:[#allocation2 + $0x610] sm:$0x3] %vm3827, 0.0
      %4021 = vst.msk [vmem:[#allocation2 + $0x618] sm:$0xff] %vm3824, 0.0
      %4022 = vst.msk [vmem:[#allocation2 + $0x620] sm:$0xff] %vm3824, 0.0
      %4023 = vst.msk [vmem:[#allocation2 + $0x628] sm:$0x3] %vm3827, 0.0
      %4024 = vst.msk [vmem:[#allocation2 + $0x630] sm:$0xff] %vm3824, 0.0
      %4025 = vst.msk [vmem:[#allocation2 + $0x638] sm:$0xff] %vm3824, 0.0
      %4026 = vst.msk [vmem:[#allocation2 + $0x640] sm:$0x3] %vm3827, 0.0
      %4027 = vst.msk [vmem:[#allocation2 + $0x648] sm:$0xff] %vm3824, 0.0
      %4028 = vst.msk [vmem:[#allocation2 + $0x650] sm:$0xff] %vm3824, 0.0
      %4029 = vst.msk [vmem:[#allocation2 + $0x658] sm:$0x3] %vm3827, 0.0
      %4030 = vst.msk [vmem:[#allocation2 + $0x660] sm:$0xff] %vm3824, 0.0
      %4031 = vst.msk [vmem:[#allocation2 + $0x668] sm:$0xff] %vm3824, 0.0
      %4032 = vst.msk [vmem:[#allocation2 + $0x670] sm:$0x3] %vm3827, 0.0
      %4033 = vst.msk [vmem:[#allocation2 + $0x678] sm:$0xff] %vm3824, 0.0
      %4034 = vst.msk [vmem:[#allocation2 + $0x680] sm:$0xff] %vm3824, 0.0
      %4035 = vst.msk [vmem:[#allocation2 + $0x688] sm:$0x3] %vm3827, 0.0
      %4036 = vst.msk [vmem:[#allocation2 + $0x690] sm:$0xff] %vm3824, 0.0
      %4037 = vst.msk [vmem:[#allocation2 + $0x698] sm:$0xff] %vm3824, 0.0
      %4038 = vst.msk [vmem:[#allocation2 + $0x6a0] sm:$0x3] %vm3827, 0.0
      %4039 = vst.msk [vmem:[#allocation2 + $0x6a8] sm:$0xff] %vm3824, 0.0
      %4040 = vst.msk [vmem:[#allocation2 + $0x6b0] sm:$0xff] %vm3824, 0.0
      %4041 = vst.msk [vmem:[#allocation2 + $0x6b8] sm:$0x3] %vm3827, 0.0
      %s4042 = scalar_lea.vmem [#allocation2], 24
      %4043 = vst.msk [vmem:[%s4042 + $0x1] sm:$0xff] %vm3824, %v3693
      %4044 = vst.msk [vmem:[%s4042 + $0x9] sm:$0xff] %vm3824, %v3694
      %4045 = vst.msk [vmem:[%s4042 + $0x19] sm:$0xff] %vm3824, %v3695
      %4046 = vst.msk [vmem:[%s4042 + $0x21] sm:$0xff] %vm3824, %v3696
      %4047 = vst.msk [vmem:[%s4042 + $0x31] sm:$0xff] %vm3824, %v3697
      %4048 = vst.msk [vmem:[%s4042 + $0x39] sm:$0xff] %vm3824, %v3698
      %4049 = vst.msk [vmem:[%s4042 + $0x49] sm:$0xff] %vm3824, %v3699
      %4050 = vst.msk [vmem:[%s4042 + $0x51] sm:$0xff] %vm3824, %v3700
      %4051 = vst.msk [vmem:[%s4042 + $0x61] sm:$0xff] %vm3824, %v3701
      %4052 = vst.msk [vmem:[%s4042 + $0x69] sm:$0xff] %vm3824, %v3702
      %4053 = vst.msk [vmem:[%s4042 + $0x79] sm:$0xff] %vm3824, %v3703
      %4054 = vst.msk [vmem:[%s4042 + $0x81] sm:$0xff] %vm3824, %v3704
      %4055 = vst.msk [vmem:[%s4042 + $0x91] sm:$0xff] %vm3824, %v3705
      %4056 = vst.msk [vmem:[%s4042 + $0x99] sm:$0xff] %vm3824, %v3706
      %4057 = vst.msk [vmem:[%s4042 + $0xa9] sm:$0xff] %vm3824, %v3707
      %4058 = vst.msk [vmem:[%s4042 + $0xb1] sm:$0xff] %vm3824, %v3708
      %4059 = vst.msk [vmem:[%s4042 + $0xc1] sm:$0xff] %vm3824, %v3709
      %4060 = vst.msk [vmem:[%s4042 + $0xc9] sm:$0xff] %vm3824, %v3710
      %4061 = vst.msk [vmem:[%s4042 + $0xd9] sm:$0xff] %vm3824, %v3711
      %4062 = vst.msk [vmem:[%s4042 + $0xe1] sm:$0xff] %vm3824, %v3712
      %4063 = vst.msk [vmem:[%s4042 + $0xf1] sm:$0xff] %vm3824, %v3713
      %4064 = vst.msk [vmem:[%s4042 + $0xf9] sm:$0xff] %vm3824, %v3714
      %4065 = vst.msk [vmem:[%s4042 + $0x109] sm:$0xff] %vm3824, %v3715
      %4066 = vst.msk [vmem:[%s4042 + $0x111] sm:$0xff] %vm3824, %v3716
      %4067 = vst.msk [vmem:[%s4042 + $0x121] sm:$0xff] %vm3824, %v3717
      %4068 = vst.msk [vmem:[%s4042 + $0x129] sm:$0xff] %vm3824, %v3718
      %4069 = vst.msk [vmem:[%s4042 + $0x139] sm:$0xff] %vm3824, %v3719
      %4070 = vst.msk [vmem:[%s4042 + $0x141] sm:$0xff] %vm3824, %v3720
      %4071 = vst.msk [vmem:[%s4042 + $0x151] sm:$0xff] %vm3824, %v3721
      %4072 = vst.msk [vmem:[%s4042 + $0x159] sm:$0xff] %vm3824, %v3722
      %4073 = vst.msk [vmem:[%s4042 + $0x169] sm:$0xff] %vm3824, %v3723
      %4074 = vst.msk [vmem:[%s4042 + $0x171] sm:$0xff] %vm3824, %v3724
      %4075 = vst.msk [vmem:[%s4042 + $0x1b1] sm:$0xff] %vm3824, %v3725
      %4076 = vst.msk [vmem:[%s4042 + $0x1b9] sm:$0xff] %vm3824, %v3726
      %4077 = vst.msk [vmem:[%s4042 + $0x1c9] sm:$0xff] %vm3824, %v3727
      %4078 = vst.msk [vmem:[%s4042 + $0x1d1] sm:$0xff] %vm3824, %v3728
      %4079 = vst.msk [vmem:[%s4042 + $0x1e1] sm:$0xff] %vm3824, %v3729
      %4080 = vst.msk [vmem:[%s4042 + $0x1e9] sm:$0xff] %vm3824, %v3730
      %4081 = vst.msk [vmem:[%s4042 + $0x1f9] sm:$0xff] %vm3824, %v3731
      %4082 = vst.msk [vmem:[%s4042 + $0x201] sm:$0xff] %vm3824, %v3732
      %4083 = vst.msk [vmem:[%s4042 + $0x211] sm:$0xff] %vm3824, %v3733
      %4084 = vst.msk [vmem:[%s4042 + $0x219] sm:$0xff] %vm3824, %v3734
      %4085 = vst.msk [vmem:[%s4042 + $0x229] sm:$0xff] %vm3824, %v3735
      %4086 = vst.msk [vmem:[%s4042 + $0x231] sm:$0xff] %vm3824, %v3736
      %4087 = vst.msk [vmem:[%s4042 + $0x241] sm:$0xff] %vm3824, %v3737
      %4088 = vst.msk [vmem:[%s4042 + $0x249] sm:$0xff] %vm3824, %v3738
      %4089 = vst.msk [vmem:[%s4042 + $0x259] sm:$0xff] %vm3824, %v3739
      %4090 = vst.msk [vmem:[%s4042 + $0x261] sm:$0xff] %vm3824, %v3740
      %4091 = vst.msk [vmem:[%s4042 + $0x271] sm:$0xff] %vm3824, %v3741
      %4092 = vst.msk [vmem:[%s4042 + $0x279] sm:$0xff] %vm3824, %v3742
      %4093 = vst.msk [vmem:[%s4042 + $0x289] sm:$0xff] %vm3824, %v3743
      %4094 = vst.msk [vmem:[%s4042 + $0x291] sm:$0xff] %vm3824, %v3744
      %4095 = vst.msk [vmem:[%s4042 + $0x2a1] sm:$0xff] %vm3824, %v3745
      %4096 = vst.msk [vmem:[%s4042 + $0x2a9] sm:$0xff] %vm3824, %v3746
      %4097 = vst.msk [vmem:[%s4042 + $0x2b9] sm:$0xff] %vm3824, %v3747
      %4098 = vst.msk [vmem:[%s4042 + $0x2c1] sm:$0xff] %vm3824, %v3748
      %4099 = vst.msk [vmem:[%s4042 + $0x2d1] sm:$0xff] %vm3824, %v3749
      %4100 = vst.msk [vmem:[%s4042 + $0x2d9] sm:$0xff] %vm3824, %v3750
      %4101 = vst.msk [vmem:[%s4042 + $0x2e9] sm:$0xff] %vm3824, %v3751
      %4102 = vst.msk [vmem:[%s4042 + $0x2f1] sm:$0xff] %vm3824, %v3752
      %4103 = vst.msk [vmem:[%s4042 + $0x301] sm:$0xff] %vm3824, %v3753
      %4104 = vst.msk [vmem:[%s4042 + $0x309] sm:$0xff] %vm3824, %v3754
      %4105 = vst.msk [vmem:[%s4042 + $0x319] sm:$0xff] %vm3824, %v3755
      %4106 = vst.msk [vmem:[%s4042 + $0x321] sm:$0xff] %vm3824, %v3756
      %4107 = vst.msk [vmem:[%s4042 + $0x361] sm:$0xff] %vm3824, %v3757
      %4108 = vst.msk [vmem:[%s4042 + $0x369] sm:$0xff] %vm3824, %v3758
      %4109 = vst.msk [vmem:[%s4042 + $0x379] sm:$0xff] %vm3824, %v3759
      %4110 = vst.msk [vmem:[%s4042 + $0x381] sm:$0xff] %vm3824, %v3760
      %4111 = vst.msk [vmem:[%s4042 + $0x391] sm:$0xff] %vm3824, %v3761
      %4112 = vst.msk [vmem:[%s4042 + $0x399] sm:$0xff] %vm3824, %v3762
      %4113 = vst.msk [vmem:[%s4042 + $0x3a9] sm:$0xff] %vm3824, %v3763
      %4114 = vst.msk [vmem:[%s4042 + $0x3b1] sm:$0xff] %vm3824, %v3764
      %4115 = vst.msk [vmem:[%s4042 + $0x3c1] sm:$0xff] %vm3824, %v3765
      %4116 = vst.msk [vmem:[%s4042 + $0x3c9] sm:$0xff] %vm3824, %v3766
      %4117 = vst.msk [vmem:[%s4042 + $0x3d9] sm:$0xff] %vm3824, %v3767
      %4118 = vst.msk [vmem:[%s4042 + $0x3e1] sm:$0xff] %vm3824, %v3768
      %4119 = vst.msk [vmem:[%s4042 + $0x3f1] sm:$0xff] %vm3824, %v3769
      %4120 = vst.msk [vmem:[%s4042 + $0x3f9] sm:$0xff] %vm3824, %v3770
      %4121 = vst.msk [vmem:[%s4042 + $0x409] sm:$0xff] %vm3824, %v3771
      %4122 = vst.msk [vmem:[%s4042 + $0x411] sm:$0xff] %vm3824, %v3772
      %4123 = vst.msk [vmem:[%s4042 + $0x421] sm:$0xff] %vm3824, %v3773
      %4124 = vst.msk [vmem:[%s4042 + $0x429] sm:$0xff] %vm3824, %v3774
      %4125 = vst.msk [vmem:[%s4042 + $0x439] sm:$0xff] %vm3824, %v3775
      %4126 = vst.msk [vmem:[%s4042 + $0x441] sm:$0xff] %vm3824, %v3776
      %4127 = vst.msk [vmem:[%s4042 + $0x451] sm:$0xff] %vm3824, %v3777
      %4128 = vst.msk [vmem:[%s4042 + $0x459] sm:$0xff] %vm3824, %v3778
      %4129 = vst.msk [vmem:[%s4042 + $0x469] sm:$0xff] %vm3824, %v3779
      %4130 = vst.msk [vmem:[%s4042 + $0x471] sm:$0xff] %vm3824, %v3780
      %4131 = vst.msk [vmem:[%s4042 + $0x481] sm:$0xff] %vm3824, %v3781
      %4132 = vst.msk [vmem:[%s4042 + $0x489] sm:$0xff] %vm3824, %v3782
      %4133 = vst.msk [vmem:[%s4042 + $0x499] sm:$0xff] %vm3824, %v3783
      %4134 = vst.msk [vmem:[%s4042 + $0x4a1] sm:$0xff] %vm3824, %v3784
      %4135 = vst.msk [vmem:[%s4042 + $0x4b1] sm:$0xff] %vm3824, %v3785
      %4136 = vst.msk [vmem:[%s4042 + $0x4b9] sm:$0xff] %vm3824, %v3786
      %4137 = vst.msk [vmem:[%s4042 + $0x4c9] sm:$0xff] %vm3824, %v3787
      %4138 = vst.msk [vmem:[%s4042 + $0x4d1] sm:$0xff] %vm3824, %v3788
      %4139 = vst.msk [vmem:[%s4042 + $0x511] sm:$0xff] %vm3824, %v3789
      %4140 = vst.msk [vmem:[%s4042 + $0x519] sm:$0xff] %vm3824, %v3790
      %4141 = vst.msk [vmem:[%s4042 + $0x529] sm:$0xff] %vm3824, %v3791
      %4142 = vst.msk [vmem:[%s4042 + $0x531] sm:$0xff] %vm3824, %v3792
      %4143 = vst.msk [vmem:[%s4042 + $0x541] sm:$0xff] %vm3824, %v3793
      %4144 = vst.msk [vmem:[%s4042 + $0x549] sm:$0xff] %vm3824, %v3794
      %4145 = vst.msk [vmem:[%s4042 + $0x559] sm:$0xff] %vm3824, %v3795
      %4146 = vst.msk [vmem:[%s4042 + $0x561] sm:$0xff] %vm3824, %v3796
      %4147 = vst.msk [vmem:[%s4042 + $0x571] sm:$0xff] %vm3824, %v3797
      %4148 = vst.msk [vmem:[%s4042 + $0x579] sm:$0xff] %vm3824, %v3798
      %4149 = vst.msk [vmem:[%s4042 + $0x589] sm:$0xff] %vm3824, %v3799
      %4150 = vst.msk [vmem:[%s4042 + $0x591] sm:$0xff] %vm3824, %v3800
      %4151 = vst.msk [vmem:[%s4042 + $0x5a1] sm:$0xff] %vm3824, %v3801
      %4152 = vst.msk [vmem:[%s4042 + $0x5a9] sm:$0xff] %vm3824, %v3802
      %4153 = vst.msk [vmem:[%s4042 + $0x5b9] sm:$0xff] %vm3824, %v3803
      %4154 = vst.msk [vmem:[%s4042 + $0x5c1] sm:$0xff] %vm3824, %v3804
      %4155 = vst.msk [vmem:[%s4042 + $0x5d1] sm:$0xff] %vm3824, %v3805
      %4156 = vst.msk [vmem:[%s4042 + $0x5d9] sm:$0xff] %vm3824, %v3806
      %4157 = vst.msk [vmem:[%s4042 + $0x5e9] sm:$0xff] %vm3824, %v3807
      %4158 = vst.msk [vmem:[%s4042 + $0x5f1] sm:$0xff] %vm3824, %v3808
      %4159 = vst.msk [vmem:[%s4042 + $0x601] sm:$0xff] %vm3824, %v3809
      %4160 = vst.msk [vmem:[%s4042 + $0x609] sm:$0xff] %vm3824, %v3810
      %4161 = vst.msk [vmem:[%s4042 + $0x619] sm:$0xff] %vm3824, %v3811
      %4162 = vst.msk [vmem:[%s4042 + $0x621] sm:$0xff] %vm3824, %v3812
      %4163 = vst.msk [vmem:[%s4042 + $0x631] sm:$0xff] %vm3824, %v3813
      %4164 = vst.msk [vmem:[%s4042 + $0x639] sm:$0xff] %vm3824, %v3814
      %4165 = vst.msk [vmem:[%s4042 + $0x649] sm:$0xff] %vm3824, %v3815
      %4166 = vst.msk [vmem:[%s4042 + $0x651] sm:$0xff] %vm3824, %v3816
      %4167 = vst.msk [vmem:[%s4042 + $0x661] sm:$0xff] %vm3824, %v3817
      %4168 = vst.msk [vmem:[%s4042 + $0x669] sm:$0xff] %vm3824, %v3818
      %4169 = vst.msk [vmem:[%s4042 + $0x679] sm:$0xff] %vm3824, %v3819
      %4170 = vst.msk [vmem:[%s4042 + $0x681] sm:$0xff] %vm3824, %v3820
      %v4171 = vld [vmem:[#allocation2] sm:$0xff]
      %v4172 = vld [vmem:[#allocation2 + $0x8] sm:$0xff]
      %v4173 = vld [vmem:[#allocation2 + $0x18] sm:$0xff]
      %v4174 = vld [vmem:[#allocation2 + $0x20] sm:$0xff]
      %v4175 = vld [vmem:[#allocation2 + $0x30] sm:$0xff]
      %v4176 = vld [vmem:[#allocation2 + $0x38] sm:$0xff]
      %v4177 = vld [vmem:[#allocation2 + $0x48] sm:$0xff]
      %v4178 = vld [vmem:[#allocation2 + $0x50] sm:$0xff]
      %v4179 = vld [vmem:[#allocation2 + $0x60] sm:$0xff]
      %v4180 = vld [vmem:[#allocation2 + $0x68] sm:$0xff]
      %v4181 = vld [vmem:[#allocation2 + $0x78] sm:$0xff]
      %v4182 = vld [vmem:[#allocation2 + $0x80] sm:$0xff]
      %v4183 = vld [vmem:[#allocation2 + $0x90] sm:$0xff]
      %v4184 = vld [vmem:[#allocation2 + $0x98] sm:$0xff]
      %v4185 = vld [vmem:[#allocation2 + $0xa8] sm:$0xff]
      %v4186 = vld [vmem:[#allocation2 + $0xb0] sm:$0xff]
      %v4187 = vld [vmem:[#allocation2 + $0xc0] sm:$0xff]
      %v4188 = vld [vmem:[#allocation2 + $0xc8] sm:$0xff]
      %v4189 = vld [vmem:[#allocation2 + $0xd8] sm:$0xff]
      %v4190 = vld [vmem:[#allocation2 + $0xe0] sm:$0xff]
      %v4191 = vld [vmem:[#allocation2 + $0xf0] sm:$0xff]
      %v4192 = vld [vmem:[#allocation2 + $0xf8] sm:$0xff]
      %v4193 = vld [vmem:[#allocation2 + $0x108] sm:$0xff]
      %v4194 = vld [vmem:[#allocation2 + $0x110] sm:$0xff]
      %v4195 = vld [vmem:[#allocation2 + $0x120] sm:$0xff]
      %v4196 = vld [vmem:[#allocation2 + $0x128] sm:$0xff]
      %v4197 = vld [vmem:[#allocation2 + $0x138] sm:$0xff]
      %v4198 = vld [vmem:[#allocation2 + $0x140] sm:$0xff]
      %v4199 = vld [vmem:[#allocation2 + $0x150] sm:$0xff]
      %v4200 = vld [vmem:[#allocation2 + $0x158] sm:$0xff]
      %v4201 = vld [vmem:[#allocation2 + $0x168] sm:$0xff]
      %v4202 = vld [vmem:[#allocation2 + $0x170] sm:$0xff]
      %v4203 = vld [vmem:[#allocation2 + $0x1b0] sm:$0xff]
      %v4204 = vld [vmem:[#allocation2 + $0x1b8] sm:$0xff]
      %v4205 = vld [vmem:[#allocation2 + $0x1c8] sm:$0xff]
      %v4206 = vld [vmem:[#allocation2 + $0x1d0] sm:$0xff]
      %v4207 = vld [vmem:[#allocation2 + $0x1e0] sm:$0xff]
      %v4208 = vld [vmem:[#allocation2 + $0x1e8] sm:$0xff]
      %v4209 = vld [vmem:[#allocation2 + $0x1f8] sm:$0xff]
      %v4210 = vld [vmem:[#allocation2 + $0x200] sm:$0xff]
      %v4211 = vld [vmem:[#allocation2 + $0x210] sm:$0xff]
      %v4212 = vld [vmem:[#allocation2 + $0x218] sm:$0xff]
      %v4213 = vld [vmem:[#allocation2 + $0x228] sm:$0xff]
      %v4214 = vld [vmem:[#allocation2 + $0x230] sm:$0xff]
      %v4215 = vld [vmem:[#allocation2 + $0x240] sm:$0xff]
      %v4216 = vld [vmem:[#allocation2 + $0x248] sm:$0xff]
      %v4217 = vld [vmem:[#allocation2 + $0x258] sm:$0xff]
      %v4218 = vld [vmem:[#allocation2 + $0x260] sm:$0xff]
      %v4219 = vld [vmem:[#allocation2 + $0x270] sm:$0xff]
      %v4220 = vld [vmem:[#allocation2 + $0x278] sm:$0xff]
      %v4221 = vld [vmem:[#allocation2 + $0x288] sm:$0xff]
      %v4222 = vld [vmem:[#allocation2 + $0x290] sm:$0xff]
      %v4223 = vld [vmem:[#allocation2 + $0x2a0] sm:$0xff]
      %v4224 = vld [vmem:[#allocation2 + $0x2a8] sm:$0xff]
      %v4225 = vld [vmem:[#allocation2 + $0x2b8] sm:$0xff]
      %v4226 = vld [vmem:[#allocation2 + $0x2c0] sm:$0xff]
      %v4227 = vld [vmem:[#allocation2 + $0x2d0] sm:$0xff]
      %v4228 = vld [vmem:[#allocation2 + $0x2d8] sm:$0xff]
      %v4229 = vld [vmem:[#allocation2 + $0x2e8] sm:$0xff]
      %v4230 = vld [vmem:[#allocation2 + $0x2f0] sm:$0xff]
      %v4231 = vld [vmem:[#allocation2 + $0x300] sm:$0xff]
      %v4232 = vld [vmem:[#allocation2 + $0x308] sm:$0xff]
      %v4233 = vld [vmem:[#allocation2 + $0x318] sm:$0xff]
      %v4234 = vld [vmem:[#allocation2 + $0x320] sm:$0xff]
      %v4235 = vld [vmem:[#allocation2 + $0x360] sm:$0xff]
      %v4236 = vld [vmem:[#allocation2 + $0x368] sm:$0xff]
      %v4237 = vld [vmem:[#allocation2 + $0x378] sm:$0xff]
      %v4238 = vld [vmem:[#allocation2 + $0x380] sm:$0xff]
      %v4239 = vld [vmem:[#allocation2 + $0x390] sm:$0xff]
      %v4240 = vld [vmem:[#allocation2 + $0x398] sm:$0xff]
      %v4241 = vld [vmem:[#allocation2 + $0x3a8] sm:$0xff]
      %v4242 = vld [vmem:[#allocation2 + $0x3b0] sm:$0xff]
      %v4243 = vld [vmem:[#allocation2 + $0x3c0] sm:$0xff]
      %v4244 = vld [vmem:[#allocation2 + $0x3c8] sm:$0xff]
      %v4245 = vld [vmem:[#allocation2 + $0x3d8] sm:$0xff]
      %v4246 = vld [vmem:[#allocation2 + $0x3e0] sm:$0xff]
      %v4247 = vld [vmem:[#allocation2 + $0x3f0] sm:$0xff]
      %v4248 = vld [vmem:[#allocation2 + $0x3f8] sm:$0xff]
      %v4249 = vld [vmem:[#allocation2 + $0x408] sm:$0xff]
      %v4250 = vld [vmem:[#allocation2 + $0x410] sm:$0xff]
      %v4251 = vld [vmem:[#allocation2 + $0x420] sm:$0xff]
      %v4252 = vld [vmem:[#allocation2 + $0x428] sm:$0xff]
      %v4253 = vld [vmem:[#allocation2 + $0x438] sm:$0xff]
      %v4254 = vld [vmem:[#allocation2 + $0x440] sm:$0xff]
      %v4255 = vld [vmem:[#allocation2 + $0x450] sm:$0xff]
      %v4256 = vld [vmem:[#allocation2 + $0x458] sm:$0xff]
      %v4257 = vld [vmem:[#allocation2 + $0x468] sm:$0xff]
      %v4258 = vld [vmem:[#allocation2 + $0x470] sm:$0xff]
      %v4259 = vld [vmem:[#allocation2 + $0x480] sm:$0xff]
      %v4260 = vld [vmem:[#allocation2 + $0x488] sm:$0xff]
      %v4261 = vld [vmem:[#allocation2 + $0x498] sm:$0xff]
      %v4262 = vld [vmem:[#allocation2 + $0x4a0] sm:$0xff]
      %v4263 = vld [vmem:[#allocation2 + $0x4b0] sm:$0xff]
      %v4264 = vld [vmem:[#allocation2 + $0x4b8] sm:$0xff]
      %v4265 = vld [vmem:[#allocation2 + $0x4c8] sm:$0xff]
      %v4266 = vld [vmem:[#allocation2 + $0x4d0] sm:$0xff]
      %v4267 = vld [vmem:[#allocation2 + $0x510] sm:$0xff]
      %v4268 = vld [vmem:[#allocation2 + $0x518] sm:$0xff]
      %v4269 = vld [vmem:[#allocation2 + $0x528] sm:$0xff]
      %v4270 = vld [vmem:[#allocation2 + $0x530] sm:$0xff]
      %v4271 = vld [vmem:[#allocation2 + $0x540] sm:$0xff]
      %v4272 = vld [vmem:[#allocation2 + $0x548] sm:$0xff]
      %v4273 = vld [vmem:[#allocation2 + $0x558] sm:$0xff]
      %v4274 = vld [vmem:[#allocation2 + $0x560] sm:$0xff]
      %v4275 = vld [vmem:[#allocation2 + $0x570] sm:$0xff]
      %v4276 = vld [vmem:[#allocation2 + $0x578] sm:$0xff]
      %v4277 = vld [vmem:[#allocation2 + $0x588] sm:$0xff]
      %v4278 = vld [vmem:[#allocation2 + $0x590] sm:$0xff]
      %v4279 = vld [vmem:[#allocation2 + $0x5a0] sm:$0xff]
      %v4280 = vld [vmem:[#allocation2 + $0x5a8] sm:$0xff]
      %v4281 = vld [vmem:[#allocation2 + $0x5b8] sm:$0xff]
      %v4282 = vld [vmem:[#allocation2 + $0x5c0] sm:$0xff]
      %v4283 = vld [vmem:[#allocation2 + $0x5d0] sm:$0xff]
      %v4284 = vld [vmem:[#allocation2 + $0x5d8] sm:$0xff]
      %v4285 = vld [vmem:[#allocation2 + $0x5e8] sm:$0xff]
      %v4286 = vld [vmem:[#allocation2 + $0x5f0] sm:$0xff]
      %v4287 = vld [vmem:[#allocation2 + $0x600] sm:$0xff]
      %v4288 = vld [vmem:[#allocation2 + $0x608] sm:$0xff]
      %v4289 = vld [vmem:[#allocation2 + $0x618] sm:$0xff]
      %v4290 = vld [vmem:[#allocation2 + $0x620] sm:$0xff]
      %v4291 = vld [vmem:[#allocation2 + $0x630] sm:$0xff]
      %v4292 = vld [vmem:[#allocation2 + $0x638] sm:$0xff]
      %v4293 = vld [vmem:[#allocation2 + $0x648] sm:$0xff]
      %v4294 = vld [vmem:[#allocation2 + $0x650] sm:$0xff]
      %v4295 = vld [vmem:[#allocation2 + $0x660] sm:$0xff]
      %v4296 = vld [vmem:[#allocation2 + $0x668] sm:$0xff]
      %v4297 = vld [vmem:[#allocation2 + $0x678] sm:$0xff]
      %v4298 = vld [vmem:[#allocation2 + $0x680] sm:$0xff]
      %v4299 = vlaneseq
      %v4300 = vshrl.u32 %v4299, 7
      %v4301 = vsub.s32 0, %v4300
      %v4302 = vrot.slane %v3821, %v4301
      %v4303 = vmul.f32 %v4171, %v4302
      %v4304 = vmul.f32 %v4172, %v4302
      %v4305 = vmul.f32 %v4173, %v4302
      %v4306 = vmul.f32 %v4174, %v4302
      %v4307 = vmul.f32 %v4175, %v4302
      %v4308 = vmul.f32 %v4176, %v4302
      %v4309 = vmul.f32 %v4177, %v4302
      %v4310 = vmul.f32 %v4178, %v4302
      %v4311 = vmul.f32 %v4179, %v4302
      %v4312 = vmul.f32 %v4180, %v4302
      %v4313 = vmul.f32 %v4181, %v4302
      %v4314 = vmul.f32 %v4182, %v4302
      %v4315 = vmul.f32 %v4183, %v4302
      %v4316 = vmul.f32 %v4184, %v4302
      %v4317 = vmul.f32 %v4185, %v4302
      %v4318 = vmul.f32 %v4186, %v4302
      %v4319 = vmul.f32 %v4187, %v4302
      %v4320 = vmul.f32 %v4188, %v4302
      %v4321 = vmul.f32 %v4189, %v4302
      %v4322 = vmul.f32 %v4190, %v4302
      %v4323 = vmul.f32 %v4191, %v4302
      %v4324 = vmul.f32 %v4192, %v4302
      %v4325 = vmul.f32 %v4193, %v4302
      %v4326 = vmul.f32 %v4194, %v4302
      %v4327 = vmul.f32 %v4195, %v4302
      %v4328 = vmul.f32 %v4196, %v4302
      %v4329 = vmul.f32 %v4197, %v4302
      %v4330 = vmul.f32 %v4198, %v4302
      %v4331 = vmul.f32 %v4199, %v4302
      %v4332 = vmul.f32 %v4200, %v4302
      %v4333 = vmul.f32 %v4201, %v4302
      %v4334 = vmul.f32 %v4202, %v4302
      %v4335 = vmul.f32 %v4203, %v4302
      %v4336 = vmul.f32 %v4204, %v4302
      %v4337 = vmul.f32 %v4205, %v4302
      %v4338 = vmul.f32 %v4206, %v4302
      %v4339 = vmul.f32 %v4207, %v4302
      %v4340 = vmul.f32 %v4208, %v4302
      %v4341 = vmul.f32 %v4209, %v4302
      %v4342 = vmul.f32 %v4210, %v4302
      %v4343 = vmul.f32 %v4211, %v4302
      %v4344 = vmul.f32 %v4212, %v4302
      %v4345 = vmul.f32 %v4213, %v4302
      %v4346 = vmul.f32 %v4214, %v4302
      %v4347 = vmul.f32 %v4215, %v4302
      %v4348 = vmul.f32 %v4216, %v4302
      %v4349 = vmul.f32 %v4217, %v4302
      %v4350 = vmul.f32 %v4218, %v4302
      %v4351 = vmul.f32 %v4219, %v4302
      %v4352 = vmul.f32 %v4220, %v4302
      %v4353 = vmul.f32 %v4221, %v4302
      %v4354 = vmul.f32 %v4222, %v4302
      %v4355 = vmul.f32 %v4223, %v4302
      %v4356 = vmul.f32 %v4224, %v4302
      %v4357 = vmul.f32 %v4225, %v4302
      %v4358 = vmul.f32 %v4226, %v4302
      %v4359 = vmul.f32 %v4227, %v4302
      %v4360 = vmul.f32 %v4228, %v4302
      %v4361 = vmul.f32 %v4229, %v4302
      %v4362 = vmul.f32 %v4230, %v4302
      %v4363 = vmul.f32 %v4231, %v4302
      %v4364 = vmul.f32 %v4232, %v4302
      %v4365 = vmul.f32 %v4233, %v4302
      %v4366 = vmul.f32 %v4234, %v4302
      %v4367 = vmul.f32 %v4235, %v4302
      %v4368 = vmul.f32 %v4236, %v4302
      %v4369 = vmul.f32 %v4237, %v4302
      %v4370 = vmul.f32 %v4238, %v4302
      %v4371 = vmul.f32 %v4239, %v4302
      %v4372 = vmul.f32 %v4240, %v4302
      %v4373 = vmul.f32 %v4241, %v4302
      %v4374 = vmul.f32 %v4242, %v4302
      %v4375 = vmul.f32 %v4243, %v4302
      %v4376 = vmul.f32 %v4244, %v4302
      %v4377 = vmul.f32 %v4245, %v4302
      %v4378 = vmul.f32 %v4246, %v4302
      %v4379 = vmul.f32 %v4247, %v4302
      %v4380 = vmul.f32 %v4248, %v4302
      %v4381 = vmul.f32 %v4249, %v4302
      %v4382 = vmul.f32 %v4250, %v4302
      %v4383 = vmul.f32 %v4251, %v4302
      %v4384 = vmul.f32 %v4252, %v4302
      %v4385 = vmul.f32 %v4253, %v4302
      %v4386 = vmul.f32 %v4254, %v4302
      %v4387 = vmul.f32 %v4255, %v4302
      %v4388 = vmul.f32 %v4256, %v4302
      %v4389 = vmul.f32 %v4257, %v4302
      %v4390 = vmul.f32 %v4258, %v4302
      %v4391 = vmul.f32 %v4259, %v4302
      %v4392 = vmul.f32 %v4260, %v4302
      %v4393 = vmul.f32 %v4261, %v4302
      %v4394 = vmul.f32 %v4262, %v4302
      %v4395 = vmul.f32 %v4263, %v4302
      %v4396 = vmul.f32 %v4264, %v4302
      %v4397 = vmul.f32 %v4265, %v4302
      %v4398 = vmul.f32 %v4266, %v4302
      %v4399 = vmul.f32 %v4267, %v4302
      %v4400 = vmul.f32 %v4268, %v4302
      %v4401 = vmul.f32 %v4269, %v4302
      %v4402 = vmul.f32 %v4270, %v4302
      %v4403 = vmul.f32 %v4271, %v4302
      %v4404 = vmul.f32 %v4272, %v4302
      %v4405 = vmul.f32 %v4273, %v4302
      %v4406 = vmul.f32 %v4274, %v4302
      %v4407 = vmul.f32 %v4275, %v4302
      %v4408 = vmul.f32 %v4276, %v4302
      %v4409 = vmul.f32 %v4277, %v4302
      %v4410 = vmul.f32 %v4278, %v4302
      %v4411 = vmul.f32 %v4279, %v4302
      %v4412 = vmul.f32 %v4280, %v4302
      %v4413 = vmul.f32 %v4281, %v4302
      %v4414 = vmul.f32 %v4282, %v4302
      %v4415 = vmul.f32 %v4283, %v4302
      %v4416 = vmul.f32 %v4284, %v4302
      %v4417 = vmul.f32 %v4285, %v4302
      %v4418 = vmul.f32 %v4286, %v4302
      %v4419 = vmul.f32 %v4287, %v4302
      %v4420 = vmul.f32 %v4288, %v4302
      %v4421 = vmul.f32 %v4289, %v4302
      %v4422 = vmul.f32 %v4290, %v4302
      %v4423 = vmul.f32 %v4291, %v4302
      %v4424 = vmul.f32 %v4292, %v4302
      %v4425 = vmul.f32 %v4293, %v4302
      %v4426 = vmul.f32 %v4294, %v4302
      %v4427 = vmul.f32 %v4295, %v4302
      %v4428 = vmul.f32 %v4296, %v4302
      %v4429 = vmul.f32 %v4297, %v4302
      %v4430 = vmul.f32 %v4298, %v4302
      %v4431 = vadd.f32 %v4303, 0.0
      %v4432 = vadd.f32 %v4304, 0.0
      %v4433 = vadd.f32 %v4305, 0.0
      %v4434 = vadd.f32 %v4306, 0.0
      %v4435 = vadd.f32 %v4307, 0.0
      %v4436 = vadd.f32 %v4308, 0.0
      %v4437 = vadd.f32 %v4309, 0.0
      %v4438 = vadd.f32 %v4310, 0.0
      %v4439 = vadd.f32 %v4311, 0.0
      %v4440 = vadd.f32 %v4312, 0.0
      %v4441 = vadd.f32 %v4313, 0.0
      %v4442 = vadd.f32 %v4314, 0.0
      %v4443 = vadd.f32 %v4315, 0.0
      %v4444 = vadd.f32 %v4316, 0.0
      %v4445 = vadd.f32 %v4317, 0.0
      %v4446 = vadd.f32 %v4318, 0.0
      %v4447 = vadd.f32 %v4319, 0.0
      %v4448 = vadd.f32 %v4320, 0.0
      %v4449 = vadd.f32 %v4321, 0.0
      %v4450 = vadd.f32 %v4322, 0.0
      %v4451 = vadd.f32 %v4323, 0.0
      %v4452 = vadd.f32 %v4324, 0.0
      %v4453 = vadd.f32 %v4325, 0.0
      %v4454 = vadd.f32 %v4326, 0.0
      %v4455 = vadd.f32 %v4327, 0.0
      %v4456 = vadd.f32 %v4328, 0.0
      %v4457 = vadd.f32 %v4329, 0.0
      %v4458 = vadd.f32 %v4330, 0.0
      %v4459 = vadd.f32 %v4331, 0.0
      %v4460 = vadd.f32 %v4332, 0.0
      %v4461 = vadd.f32 %v4333, 0.0
      %v4462 = vadd.f32 %v4334, 0.0
      %v4463 = vadd.f32 %v4335, 0.0
      %v4464 = vadd.f32 %v4336, 0.0
      %v4465 = vadd.f32 %v4337, 0.0
      %v4466 = vadd.f32 %v4338, 0.0
      %v4467 = vadd.f32 %v4339, 0.0
      %v4468 = vadd.f32 %v4340, 0.0
      %v4469 = vadd.f32 %v4341, 0.0
      %v4470 = vadd.f32 %v4342, 0.0
      %v4471 = vadd.f32 %v4343, 0.0
      %v4472 = vadd.f32 %v4344, 0.0
      %v4473 = vadd.f32 %v4345, 0.0
      %v4474 = vadd.f32 %v4346, 0.0
      %v4475 = vadd.f32 %v4347, 0.0
      %v4476 = vadd.f32 %v4348, 0.0
      %v4477 = vadd.f32 %v4349, 0.0
      %v4478 = vadd.f32 %v4350, 0.0
      %v4479 = vadd.f32 %v4351, 0.0
      %v4480 = vadd.f32 %v4352, 0.0
      %v4481 = vadd.f32 %v4353, 0.0
      %v4482 = vadd.f32 %v4354, 0.0
      %v4483 = vadd.f32 %v4355, 0.0
      %v4484 = vadd.f32 %v4356, 0.0
      %v4485 = vadd.f32 %v4357, 0.0
      %v4486 = vadd.f32 %v4358, 0.0
      %v4487 = vadd.f32 %v4359, 0.0
      %v4488 = vadd.f32 %v4360, 0.0
      %v4489 = vadd.f32 %v4361, 0.0
      %v4490 = vadd.f32 %v4362, 0.0
      %v4491 = vadd.f32 %v4363, 0.0
      %v4492 = vadd.f32 %v4364, 0.0
      %v4493 = vadd.f32 %v4365, 0.0
      %v4494 = vadd.f32 %v4366, 0.0
      %v4495 = vadd.f32 %v4367, 0.0
      %v4496 = vadd.f32 %v4368, 0.0
      %v4497 = vadd.f32 %v4369, 0.0
      %v4498 = vadd.f32 %v4370, 0.0
      %v4499 = vadd.f32 %v4371, 0.0
      %v4500 = vadd.f32 %v4372, 0.0
      %v4501 = vadd.f32 %v4373, 0.0
      %v4502 = vadd.f32 %v4374, 0.0
      %v4503 = vadd.f32 %v4375, 0.0
      %v4504 = vadd.f32 %v4376, 0.0
      %v4505 = vadd.f32 %v4377, 0.0
      %v4506 = vadd.f32 %v4378, 0.0
      %v4507 = vadd.f32 %v4379, 0.0
      %v4508 = vadd.f32 %v4380, 0.0
      %v4509 = vadd.f32 %v4381, 0.0
      %v4510 = vadd.f32 %v4382, 0.0
      %v4511 = vadd.f32 %v4383, 0.0
      %v4512 = vadd.f32 %v4384, 0.0
      %v4513 = vadd.f32 %v4385, 0.0
      %v4514 = vadd.f32 %v4386, 0.0
      %v4515 = vadd.f32 %v4387, 0.0
      %v4516 = vadd.f32 %v4388, 0.0
      %v4517 = vadd.f32 %v4389, 0.0
      %v4518 = vadd.f32 %v4390, 0.0
      %v4519 = vadd.f32 %v4391, 0.0
      %v4520 = vadd.f32 %v4392, 0.0
      %v4521 = vadd.f32 %v4393, 0.0
      %v4522 = vadd.f32 %v4394, 0.0
      %v4523 = vadd.f32 %v4395, 0.0
      %v4524 = vadd.f32 %v4396, 0.0
      %v4525 = vadd.f32 %v4397, 0.0
      %v4526 = vadd.f32 %v4398, 0.0
      %v4527 = vadd.f32 %v4399, 0.0
      %v4528 = vadd.f32 %v4400, 0.0
      %v4529 = vadd.f32 %v4401, 0.0
      %v4530 = vadd.f32 %v4402, 0.0
      %v4531 = vadd.f32 %v4403, 0.0
      %v4532 = vadd.f32 %v4404, 0.0
      %v4533 = vadd.f32 %v4405, 0.0
      %v4534 = vadd.f32 %v4406, 0.0
      %v4535 = vadd.f32 %v4407, 0.0
      %v4536 = vadd.f32 %v4408, 0.0
      %v4537 = vadd.f32 %v4409, 0.0
      %v4538 = vadd.f32 %v4410, 0.0
      %v4539 = vadd.f32 %v4411, 0.0
      %v4540 = vadd.f32 %v4412, 0.0
      %v4541 = vadd.f32 %v4413, 0.0
      %v4542 = vadd.f32 %v4414, 0.0
      %v4543 = vadd.f32 %v4415, 0.0
      %v4544 = vadd.f32 %v4416, 0.0
      %v4545 = vadd.f32 %v4417, 0.0
      %v4546 = vadd.f32 %v4418, 0.0
      %v4547 = vadd.f32 %v4419, 0.0
      %v4548 = vadd.f32 %v4420, 0.0
      %v4549 = vadd.f32 %v4421, 0.0
      %v4550 = vadd.f32 %v4422, 0.0
      %v4551 = vadd.f32 %v4423, 0.0
      %v4552 = vadd.f32 %v4424, 0.0
      %v4553 = vadd.f32 %v4425, 0.0
      %v4554 = vadd.f32 %v4426, 0.0
      %v4555 = vadd.f32 %v4427, 0.0
      %v4556 = vadd.f32 %v4428, 0.0
      %v4557 = vadd.f32 %v4429, 0.0
      %v4558 = vadd.f32 %v4430, 0.0
      %v4559 = vld [vmem:[#allocation2 + $0x1] sm:$0xff]
      %v4560 = vld [vmem:[#allocation2 + $0x9] sm:$0xff]
      %v4561 = vld [vmem:[#allocation2 + $0x19] sm:$0xff]
      %v4562 = vld [vmem:[#allocation2 + $0x21] sm:$0xff]
      %v4563 = vld [vmem:[#allocation2 + $0x31] sm:$0xff]
      %v4564 = vld [vmem:[#allocation2 + $0x39] sm:$0xff]
      %v4565 = vld [vmem:[#allocation2 + $0x49] sm:$0xff]
      %v4566 = vld [vmem:[#allocation2 + $0x51] sm:$0xff]
      %v4567 = vld [vmem:[#allocation2 + $0x61] sm:$0xff]
      %v4568 = vld [vmem:[#allocation2 + $0x69] sm:$0xff]
      %v4569 = vld [vmem:[#allocation2 + $0x79] sm:$0xff]
      %v4570 = vld [vmem:[#allocation2 + $0x81] sm:$0xff]
      %v4571 = vld [vmem:[#allocation2 + $0x91] sm:$0xff]
      %v4572 = vld [vmem:[#allocation2 + $0x99] sm:$0xff]
      %v4573 = vld [vmem:[#allocation2 + $0xa9] sm:$0xff]
      %v4574 = vld [vmem:[#allocation2 + $0xb1] sm:$0xff]
      %v4575 = vld [vmem:[#allocation2 + $0xc1] sm:$0xff]
      %v4576 = vld [vmem:[#allocation2 + $0xc9] sm:$0xff]
      %v4577 = vld [vmem:[#allocation2 + $0xd9] sm:$0xff]
      %v4578 = vld [vmem:[#allocation2 + $0xe1] sm:$0xff]
      %v4579 = vld [vmem:[#allocation2 + $0xf1] sm:$0xff]
      %v4580 = vld [vmem:[#allocation2 + $0xf9] sm:$0xff]
      %v4581 = vld [vmem:[#allocation2 + $0x109] sm:$0xff]
      %v4582 = vld [vmem:[#allocation2 + $0x111] sm:$0xff]
      %v4583 = vld [vmem:[#allocation2 + $0x121] sm:$0xff]
      %v4584 = vld [vmem:[#allocation2 + $0x129] sm:$0xff]
      %v4585 = vld [vmem:[#allocation2 + $0x139] sm:$0xff]
      %v4586 = vld [vmem:[#allocation2 + $0x141] sm:$0xff]
      %v4587 = vld [vmem:[#allocation2 + $0x151] sm:$0xff]
      %v4588 = vld [vmem:[#allocation2 + $0x159] sm:$0xff]
      %v4589 = vld [vmem:[#allocation2 + $0x169] sm:$0xff]
      %v4590 = vld [vmem:[#allocation2 + $0x171] sm:$0xff]
      %v4591 = vld [vmem:[#allocation2 + $0x1b1] sm:$0xff]
      %v4592 = vld [vmem:[#allocation2 + $0x1b9] sm:$0xff]
      %v4593 = vld [vmem:[#allocation2 + $0x1c9] sm:$0xff]
      %v4594 = vld [vmem:[#allocation2 + $0x1d1] sm:$0xff]
      %v4595 = vld [vmem:[#allocation2 + $0x1e1] sm:$0xff]
      %v4596 = vld [vmem:[#allocation2 + $0x1e9] sm:$0xff]
      %v4597 = vld [vmem:[#allocation2 + $0x1f9] sm:$0xff]
      %v4598 = vld [vmem:[#allocation2 + $0x201] sm:$0xff]
      %v4599 = vld [vmem:[#allocation2 + $0x211] sm:$0xff]
      %v4600 = vld [vmem:[#allocation2 + $0x219] sm:$0xff]
      %v4601 = vld [vmem:[#allocation2 + $0x229] sm:$0xff]
      %v4602 = vld [vmem:[#allocation2 + $0x231] sm:$0xff]
      %v4603 = vld [vmem:[#allocation2 + $0x241] sm:$0xff]
      %v4604 = vld [vmem:[#allocation2 + $0x249] sm:$0xff]
      %v4605 = vld [vmem:[#allocation2 + $0x259] sm:$0xff]
      %v4606 = vld [vmem:[#allocation2 + $0x261] sm:$0xff]
      %v4607 = vld [vmem:[#allocation2 + $0x271] sm:$0xff]
      %v4608 = vld [vmem:[#allocation2 + $0x279] sm:$0xff]
      %v4609 = vld [vmem:[#allocation2 + $0x289] sm:$0xff]
      %v4610 = vld [vmem:[#allocation2 + $0x291] sm:$0xff]
      %v4611 = vld [vmem:[#allocation2 + $0x2a1] sm:$0xff]
      %v4612 = vld [vmem:[#allocation2 + $0x2a9] sm:$0xff]
      %v4613 = vld [vmem:[#allocation2 + $0x2b9] sm:$0xff]
      %v4614 = vld [vmem:[#allocation2 + $0x2c1] sm:$0xff]
      %v4615 = vld [vmem:[#allocation2 + $0x2d1] sm:$0xff]
      %v4616 = vld [vmem:[#allocation2 + $0x2d9] sm:$0xff]
      %v4617 = vld [vmem:[#allocation2 + $0x2e9] sm:$0xff]
      %v4618 = vld [vmem:[#allocation2 + $0x2f1] sm:$0xff]
      %v4619 = vld [vmem:[#allocation2 + $0x301] sm:$0xff]
      %v4620 = vld [vmem:[#allocation2 + $0x309] sm:$0xff]
      %v4621 = vld [vmem:[#allocation2 + $0x319] sm:$0xff]
      %v4622 = vld [vmem:[#allocation2 + $0x321] sm:$0xff]
      %v4623 = vld [vmem:[#allocation2 + $0x361] sm:$0xff]
      %v4624 = vld [vmem:[#allocation2 + $0x369] sm:$0xff]
      %v4625 = vld [vmem:[#allocation2 + $0x379] sm:$0xff]
      %v4626 = vld [vmem:[#allocation2 + $0x381] sm:$0xff]
      %v4627 = vld [vmem:[#allocation2 + $0x391] sm:$0xff]
      %v4628 = vld [vmem:[#allocation2 + $0x399] sm:$0xff]
      %v4629 = vld [vmem:[#allocation2 + $0x3a9] sm:$0xff]
      %v4630 = vld [vmem:[#allocation2 + $0x3b1] sm:$0xff]
      %v4631 = vld [vmem:[#allocation2 + $0x3c1] sm:$0xff]
      %v4632 = vld [vmem:[#allocation2 + $0x3c9] sm:$0xff]
      %v4633 = vld [vmem:[#allocation2 + $0x3d9] sm:$0xff]
      %v4634 = vld [vmem:[#allocation2 + $0x3e1] sm:$0xff]
      %v4635 = vld [vmem:[#allocation2 + $0x3f1] sm:$0xff]
      %v4636 = vld [vmem:[#allocation2 + $0x3f9] sm:$0xff]
      %v4637 = vld [vmem:[#allocation2 + $0x409] sm:$0xff]
      %v4638 = vld [vmem:[#allocation2 + $0x411] sm:$0xff]
      %v4639 = vld [vmem:[#allocation2 + $0x421] sm:$0xff]
      %v4640 = vld [vmem:[#allocation2 + $0x429] sm:$0xff]
      %v4641 = vld [vmem:[#allocation2 + $0x439] sm:$0xff]
      %v4642 = vld [vmem:[#allocation2 + $0x441] sm:$0xff]
      %v4643 = vld [vmem:[#allocation2 + $0x451] sm:$0xff]
      %v4644 = vld [vmem:[#allocation2 + $0x459] sm:$0xff]
      %v4645 = vld [vmem:[#allocation2 + $0x469] sm:$0xff]
      %v4646 = vld [vmem:[#allocation2 + $0x471] sm:$0xff]
      %v4647 = vld [vmem:[#allocation2 + $0x481] sm:$0xff]
      %v4648 = vld [vmem:[#allocation2 + $0x489] sm:$0xff]
      %v4649 = vld [vmem:[#allocation2 + $0x499] sm:$0xff]
      %v4650 = vld [vmem:[#allocation2 + $0x4a1] sm:$0xff]
      %v4651 = vld [vmem:[#allocation2 + $0x4b1] sm:$0xff]
      %v4652 = vld [vmem:[#allocation2 + $0x4b9] sm:$0xff]
      %v4653 = vld [vmem:[#allocation2 + $0x4c9] sm:$0xff]
      %v4654 = vld [vmem:[#allocation2 + $0x4d1] sm:$0xff]
      %v4655 = vld [vmem:[#allocation2 + $0x511] sm:$0xff]
      %v4656 = vld [vmem:[#allocation2 + $0x519] sm:$0xff]
      %v4657 = vld [vmem:[#allocation2 + $0x529] sm:$0xff]
      %v4658 = vld [vmem:[#allocation2 + $0x531] sm:$0xff]
      %v4659 = vld [vmem:[#allocation2 + $0x541] sm:$0xff]
      %v4660 = vld [vmem:[#allocation2 + $0x549] sm:$0xff]
      %v4661 = vld [vmem:[#allocation2 + $0x559] sm:$0xff]
      %v4662 = vld [vmem:[#allocation2 + $0x561] sm:$0xff]
      %v4663 = vld [vmem:[#allocation2 + $0x571] sm:$0xff]
      %v4664 = vld [vmem:[#allocation2 + $0x579] sm:$0xff]
      %v4665 = vld [vmem:[#allocation2 + $0x589] sm:$0xff]
      %v4666 = vld [vmem:[#allocation2 + $0x591] sm:$0xff]
      %v4667 = vld [vmem:[#allocation2 + $0x5a1] sm:$0xff]
      %v4668 = vld [vmem:[#allocation2 + $0x5a9] sm:$0xff]
      %v4669 = vld [vmem:[#allocation2 + $0x5b9] sm:$0xff]
      %v4670 = vld [vmem:[#allocation2 + $0x5c1] sm:$0xff]
      %v4671 = vld [vmem:[#allocation2 + $0x5d1] sm:$0xff]
      %v4672 = vld [vmem:[#allocation2 + $0x5d9] sm:$0xff]
      %v4673 = vld [vmem:[#allocation2 + $0x5e9] sm:$0xff]
      %v4674 = vld [vmem:[#allocation2 + $0x5f1] sm:$0xff]
      %v4675 = vld [vmem:[#allocation2 + $0x601] sm:$0xff]
      %v4676 = vld [vmem:[#allocation2 + $0x609] sm:$0xff]
      %v4677 = vld [vmem:[#allocation2 + $0x619] sm:$0xff]
      %v4678 = vld [vmem:[#allocation2 + $0x621] sm:$0xff]
      %v4679 = vld [vmem:[#allocation2 + $0x631] sm:$0xff]
      %v4680 = vld [vmem:[#allocation2 + $0x639] sm:$0xff]
      %v4681 = vld [vmem:[#allocation2 + $0x649] sm:$0xff]
      %v4682 = vld [vmem:[#allocation2 + $0x651] sm:$0xff]
      %v4683 = vld [vmem:[#allocation2 + $0x661] sm:$0xff]
      %v4684 = vld [vmem:[#allocation2 + $0x669] sm:$0xff]
      %v4685 = vld [vmem:[#allocation2 + $0x679] sm:$0xff]
      %v4686 = vld [vmem:[#allocation2 + $0x681] sm:$0xff]
      %v4687 = vlaneseq
      %v4688 = vshrl.u32 %v4687, 7
      %v4689 = vsub.s32 1, %v4688
      %v4690 = vrot.slane %v3821, %v4689
      %v4691 = vmul.f32 %v4559, %v4690
      %v4692 = vmul.f32 %v4560, %v4690
      %v4693 = vmul.f32 %v4561, %v4690
      %v4694 = vmul.f32 %v4562, %v4690
      %v4695 = vmul.f32 %v4563, %v4690
      %v4696 = vmul.f32 %v4564, %v4690
      %v4697 = vmul.f32 %v4565, %v4690
      %v4698 = vmul.f32 %v4566, %v4690
      %v4699 = vmul.f32 %v4567, %v4690
      %v4700 = vmul.f32 %v4568, %v4690
      %v4701 = vmul.f32 %v4569, %v4690
      %v4702 = vmul.f32 %v4570, %v4690
      %v4703 = vmul.f32 %v4571, %v4690
      %v4704 = vmul.f32 %v4572, %v4690
      %v4705 = vmul.f32 %v4573, %v4690
      %v4706 = vmul.f32 %v4574, %v4690
      %v4707 = vmul.f32 %v4575, %v4690
      %v4708 = vmul.f32 %v4576, %v4690
      %v4709 = vmul.f32 %v4577, %v4690
      %v4710 = vmul.f32 %v4578, %v4690
      %v4711 = vmul.f32 %v4579, %v4690
      %v4712 = vmul.f32 %v4580, %v4690
      %v4713 = vmul.f32 %v4581, %v4690
      %v4714 = vmul.f32 %v4582, %v4690
      %v4715 = vmul.f32 %v4583, %v4690
      %v4716 = vmul.f32 %v4584, %v4690
      %v4717 = vmul.f32 %v4585, %v4690
      %v4718 = vmul.f32 %v4586, %v4690
      %v4719 = vmul.f32 %v4587, %v4690
      %v4720 = vmul.f32 %v4588, %v4690
      %v4721 = vmul.f32 %v4589, %v4690
      %v4722 = vmul.f32 %v4590, %v4690
      %v4723 = vmul.f32 %v4591, %v4690
      %v4724 = vmul.f32 %v4592, %v4690
      %v4725 = vmul.f32 %v4593, %v4690
      %v4726 = vmul.f32 %v4594, %v4690
      %v4727 = vmul.f32 %v4595, %v4690
      %v4728 = vmul.f32 %v4596, %v4690
      %v4729 = vmul.f32 %v4597, %v4690
      %v4730 = vmul.f32 %v4598, %v4690
      %v4731 = vmul.f32 %v4599, %v4690
      %v4732 = vmul.f32 %v4600, %v4690
      %v4733 = vmul.f32 %v4601, %v4690
      %v4734 = vmul.f32 %v4602, %v4690
      %v4735 = vmul.f32 %v4603, %v4690
      %v4736 = vmul.f32 %v4604, %v4690
      %v4737 = vmul.f32 %v4605, %v4690
      %v4738 = vmul.f32 %v4606, %v4690
      %v4739 = vmul.f32 %v4607, %v4690
      %v4740 = vmul.f32 %v4608, %v4690
      %v4741 = vmul.f32 %v4609, %v4690
      %v4742 = vmul.f32 %v4610, %v4690
      %v4743 = vmul.f32 %v4611, %v4690
      %v4744 = vmul.f32 %v4612, %v4690
      %v4745 = vmul.f32 %v4613, %v4690
      %v4746 = vmul.f32 %v4614, %v4690
      %v4747 = vmul.f32 %v4615, %v4690
      %v4748 = vmul.f32 %v4616, %v4690
      %v4749 = vmul.f32 %v4617, %v4690
      %v4750 = vmul.f32 %v4618, %v4690
      %v4751 = vmul.f32 %v4619, %v4690
      %v4752 = vmul.f32 %v4620, %v4690
      %v4753 = vmul.f32 %v4621, %v4690
      %v4754 = vmul.f32 %v4622, %v4690
      %v4755 = vmul.f32 %v4623, %v4690
      %v4756 = vmul.f32 %v4624, %v4690
      %v4757 = vmul.f32 %v4625, %v4690
      %v4758 = vmul.f32 %v4626, %v4690
      %v4759 = vmul.f32 %v4627, %v4690
      %v4760 = vmul.f32 %v4628, %v4690
      %v4761 = vmul.f32 %v4629, %v4690
      %v4762 = vmul.f32 %v4630, %v4690
      %v4763 = vmul.f32 %v4631, %v4690
      %v4764 = vmul.f32 %v4632, %v4690
      %v4765 = vmul.f32 %v4633, %v4690
      %v4766 = vmul.f32 %v4634, %v4690
      %v4767 = vmul.f32 %v4635, %v4690
      %v4768 = vmul.f32 %v4636, %v4690
      %v4769 = vmul.f32 %v4637, %v4690
      %v4770 = vmul.f32 %v4638, %v4690
      %v4771 = vmul.f32 %v4639, %v4690
      %v4772 = vmul.f32 %v4640, %v4690
      %v4773 = vmul.f32 %v4641, %v4690
      %v4774 = vmul.f32 %v4642, %v4690
      %v4775 = vmul.f32 %v4643, %v4690
      %v4776 = vmul.f32 %v4644, %v4690
      %v4777 = vmul.f32 %v4645, %v4690
      %v4778 = vmul.f32 %v4646, %v4690
      %v4779 = vmul.f32 %v4647, %v4690
      %v4780 = vmul.f32 %v4648, %v4690
      %v4781 = vmul.f32 %v4649, %v4690
      %v4782 = vmul.f32 %v4650, %v4690
      %v4783 = vmul.f32 %v4651, %v4690
      %v4784 = vmul.f32 %v4652, %v4690
      %v4785 = vmul.f32 %v4653, %v4690
      %v4786 = vmul.f32 %v4654, %v4690
      %v4787 = vmul.f32 %v4655, %v4690
      %v4788 = vmul.f32 %v4656, %v4690
      %v4789 = vmul.f32 %v4657, %v4690
      %v4790 = vmul.f32 %v4658, %v4690
      %v4791 = vmul.f32 %v4659, %v4690
      %v4792 = vmul.f32 %v4660, %v4690
      %v4793 = vmul.f32 %v4661, %v4690
      %v4794 = vmul.f32 %v4662, %v4690
      %v4795 = vmul.f32 %v4663, %v4690
      %v4796 = vmul.f32 %v4664, %v4690
      %v4797 = vmul.f32 %v4665, %v4690
      %v4798 = vmul.f32 %v4666, %v4690
      %v4799 = vmul.f32 %v4667, %v4690
      %v4800 = vmul.f32 %v4668, %v4690
      %v4801 = vmul.f32 %v4669, %v4690
      %v4802 = vmul.f32 %v4670, %v4690
      %v4803 = vmul.f32 %v4671, %v4690
      %v4804 = vmul.f32 %v4672, %v4690
      %v4805 = vmul.f32 %v4673, %v4690
      %v4806 = vmul.f32 %v4674, %v4690
      %v4807 = vmul.f32 %v4675, %v4690
      %v4808 = vmul.f32 %v4676, %v4690
      %v4809 = vmul.f32 %v4677, %v4690
      %v4810 = vmul.f32 %v4678, %v4690
      %v4811 = vmul.f32 %v4679, %v4690
      %v4812 = vmul.f32 %v4680, %v4690
      %v4813 = vmul.f32 %v4681, %v4690
      %v4814 = vmul.f32 %v4682, %v4690
      %v4815 = vmul.f32 %v4683, %v4690
      %v4816 = vmul.f32 %v4684, %v4690
      %v4817 = vmul.f32 %v4685, %v4690
      %v4818 = vmul.f32 %v4686, %v4690
      %v4819 = vadd.f32 %v4431, %v4691
      %v4820 = vadd.f32 %v4432, %v4692
      %v4821 = vadd.f32 %v4433, %v4693
      %v4822 = vadd.f32 %v4434, %v4694
      %v4823 = vadd.f32 %v4435, %v4695
      %v4824 = vadd.f32 %v4436, %v4696
      %v4825 = vadd.f32 %v4437, %v4697
      %v4826 = vadd.f32 %v4438, %v4698
      %v4827 = vadd.f32 %v4439, %v4699
      %v4828 = vadd.f32 %v4440, %v4700
      %v4829 = vadd.f32 %v4441, %v4701
      %v4830 = vadd.f32 %v4442, %v4702
      %v4831 = vadd.f32 %v4443, %v4703
      %v4832 = vadd.f32 %v4444, %v4704
      %v4833 = vadd.f32 %v4445, %v4705
      %v4834 = vadd.f32 %v4446, %v4706
      %v4835 = vadd.f32 %v4447, %v4707
      %v4836 = vadd.f32 %v4448, %v4708
      %v4837 = vadd.f32 %v4449, %v4709
      %v4838 = vadd.f32 %v4450, %v4710
      %v4839 = vadd.f32 %v4451, %v4711
      %v4840 = vadd.f32 %v4452, %v4712
      %v4841 = vadd.f32 %v4453, %v4713
      %v4842 = vadd.f32 %v4454, %v4714
      %v4843 = vadd.f32 %v4455, %v4715
      %v4844 = vadd.f32 %v4456, %v4716
      %v4845 = vadd.f32 %v4457, %v4717
      %v4846 = vadd.f32 %v4458, %v4718
      %v4847 = vadd.f32 %v4459, %v4719
      %v4848 = vadd.f32 %v4460, %v4720
      %v4849 = vadd.f32 %v4461, %v4721
      %v4850 = vadd.f32 %v4462, %v4722
      %v4851 = vadd.f32 %v4463, %v4723
      %v4852 = vadd.f32 %v4464, %v4724
      %v4853 = vadd.f32 %v4465, %v4725
      %v4854 = vadd.f32 %v4466, %v4726
      %v4855 = vadd.f32 %v4467, %v4727
      %v4856 = vadd.f32 %v4468, %v4728
      %v4857 = vadd.f32 %v4469, %v4729
      %v4858 = vadd.f32 %v4470, %v4730
      %v4859 = vadd.f32 %v4471, %v4731
      %v4860 = vadd.f32 %v4472, %v4732
      %v4861 = vadd.f32 %v4473, %v4733
      %v4862 = vadd.f32 %v4474, %v4734
      %v4863 = vadd.f32 %v4475, %v4735
      %v4864 = vadd.f32 %v4476, %v4736
      %v4865 = vadd.f32 %v4477, %v4737
      %v4866 = vadd.f32 %v4478, %v4738
      %v4867 = vadd.f32 %v4479, %v4739
      %v4868 = vadd.f32 %v4480, %v4740
      %v4869 = vadd.f32 %v4481, %v4741
      %v4870 = vadd.f32 %v4482, %v4742
      %v4871 = vadd.f32 %v4483, %v4743
      %v4872 = vadd.f32 %v4484, %v4744
      %v4873 = vadd.f32 %v4485, %v4745
      %v4874 = vadd.f32 %v4486, %v4746
      %v4875 = vadd.f32 %v4487, %v4747
      %v4876 = vadd.f32 %v4488, %v4748
      %v4877 = vadd.f32 %v4489, %v4749
      %v4878 = vadd.f32 %v4490, %v4750
      %v4879 = vadd.f32 %v4491, %v4751
      %v4880 = vadd.f32 %v4492, %v4752
      %v4881 = vadd.f32 %v4493, %v4753
      %v4882 = vadd.f32 %v4494, %v4754
      %v4883 = vadd.f32 %v4495, %v4755
      %v4884 = vadd.f32 %v4496, %v4756
      %v4885 = vadd.f32 %v4497, %v4757
      %v4886 = vadd.f32 %v4498, %v4758
      %v4887 = vadd.f32 %v4499, %v4759
      %v4888 = vadd.f32 %v4500, %v4760
      %v4889 = vadd.f32 %v4501, %v4761
      %v4890 = vadd.f32 %v4502, %v4762
      %v4891 = vadd.f32 %v4503, %v4763
      %v4892 = vadd.f32 %v4504, %v4764
      %v4893 = vadd.f32 %v4505, %v4765
      %v4894 = vadd.f32 %v4506, %v4766
      %v4895 = vadd.f32 %v4507, %v4767
      %v4896 = vadd.f32 %v4508, %v4768
      %v4897 = vadd.f32 %v4509, %v4769
      %v4898 = vadd.f32 %v4510, %v4770
      %v4899 = vadd.f32 %v4511, %v4771
      %v4900 = vadd.f32 %v4512, %v4772
      %v4901 = vadd.f32 %v4513, %v4773
      %v4902 = vadd.f32 %v4514, %v4774
      %v4903 = vadd.f32 %v4515, %v4775
      %v4904 = vadd.f32 %v4516, %v4776
      %v4905 = vadd.f32 %v4517, %v4777
      %v4906 = vadd.f32 %v4518, %v4778
      %v4907 = vadd.f32 %v4519, %v4779
      %v4908 = vadd.f32 %v4520, %v4780
      %v4909 = vadd.f32 %v4521, %v4781
      %v4910 = vadd.f32 %v4522, %v4782
      %v4911 = vadd.f32 %v4523, %v4783
      %v4912 = vadd.f32 %v4524, %v4784
      %v4913 = vadd.f32 %v4525, %v4785
      %v4914 = vadd.f32 %v4526, %v4786
      %v4915 = vadd.f32 %v4527, %v4787
      %v4916 = vadd.f32 %v4528, %v4788
      %v4917 = vadd.f32 %v4529, %v4789
      %v4918 = vadd.f32 %v4530, %v4790
      %v4919 = vadd.f32 %v4531, %v4791
      %v4920 = vadd.f32 %v4532, %v4792
      %v4921 = vadd.f32 %v4533, %v4793
      %v4922 = vadd.f32 %v4534, %v4794
      %v4923 = vadd.f32 %v4535, %v4795
      %v4924 = vadd.f32 %v4536, %v4796
      %v4925 = vadd.f32 %v4537, %v4797
      %v4926 = vadd.f32 %v4538, %v4798
      %v4927 = vadd.f32 %v4539, %v4799
      %v4928 = vadd.f32 %v4540, %v4800
      %v4929 = vadd.f32 %v4541, %v4801
      %v4930 = vadd.f32 %v4542, %v4802
      %v4931 = vadd.f32 %v4543, %v4803
      %v4932 = vadd.f32 %v4544, %v4804
      %v4933 = vadd.f32 %v4545, %v4805
      %v4934 = vadd.f32 %v4546, %v4806
      %v4935 = vadd.f32 %v4547, %v4807
      %v4936 = vadd.f32 %v4548, %v4808
      %v4937 = vadd.f32 %v4549, %v4809
      %v4938 = vadd.f32 %v4550, %v4810
      %v4939 = vadd.f32 %v4551, %v4811
      %v4940 = vadd.f32 %v4552, %v4812
      %v4941 = vadd.f32 %v4553, %v4813
      %v4942 = vadd.f32 %v4554, %v4814
      %v4943 = vadd.f32 %v4555, %v4815
      %v4944 = vadd.f32 %v4556, %v4816
      %v4945 = vadd.f32 %v4557, %v4817
      %v4946 = vadd.f32 %v4558, %v4818
      %v4947 = vld [vmem:[#allocation2 + $0x2] sm:$0xff]
      %v4948 = vld [vmem:[#allocation2 + $0xa] sm:$0xff]
      %v4949 = vld [vmem:[#allocation2 + $0x1a] sm:$0xff]
      %v4950 = vld [vmem:[#allocation2 + $0x22] sm:$0xff]
      %v4951 = vld [vmem:[#allocation2 + $0x32] sm:$0xff]
      %v4952 = vld [vmem:[#allocation2 + $0x3a] sm:$0xff]
      %v4953 = vld [vmem:[#allocation2 + $0x4a] sm:$0xff]
      %v4954 = vld [vmem:[#allocation2 + $0x52] sm:$0xff]
      %v4955 = vld [vmem:[#allocation2 + $0x62] sm:$0xff]
      %v4956 = vld [vmem:[#allocation2 + $0x6a] sm:$0xff]
      %v4957 = vld [vmem:[#allocation2 + $0x7a] sm:$0xff]
      %v4958 = vld [vmem:[#allocation2 + $0x82] sm:$0xff]
      %v4959 = vld [vmem:[#allocation2 + $0x92] sm:$0xff]
      %v4960 = vld [vmem:[#allocation2 + $0x9a] sm:$0xff]
      %v4961 = vld [vmem:[#allocation2 + $0xaa] sm:$0xff]
      %v4962 = vld [vmem:[#allocation2 + $0xb2] sm:$0xff]
      %v4963 = vld [vmem:[#allocation2 + $0xc2] sm:$0xff]
      %v4964 = vld [vmem:[#allocation2 + $0xca] sm:$0xff]
      %v4965 = vld [vmem:[#allocation2 + $0xda] sm:$0xff]
      %v4966 = vld [vmem:[#allocation2 + $0xe2] sm:$0xff]
      %v4967 = vld [vmem:[#allocation2 + $0xf2] sm:$0xff]
      %v4968 = vld [vmem:[#allocation2 + $0xfa] sm:$0xff]
      %v4969 = vld [vmem:[#allocation2 + $0x10a] sm:$0xff]
      %v4970 = vld [vmem:[#allocation2 + $0x112] sm:$0xff]
      %v4971 = vld [vmem:[#allocation2 + $0x122] sm:$0xff]
      %v4972 = vld [vmem:[#allocation2 + $0x12a] sm:$0xff]
      %v4973 = vld [vmem:[#allocation2 + $0x13a] sm:$0xff]
      %v4974 = vld [vmem:[#allocation2 + $0x142] sm:$0xff]
      %v4975 = vld [vmem:[#allocation2 + $0x152] sm:$0xff]
      %v4976 = vld [vmem:[#allocation2 + $0x15a] sm:$0xff]
      %v4977 = vld [vmem:[#allocation2 + $0x16a] sm:$0xff]
      %v4978 = vld [vmem:[#allocation2 + $0x172] sm:$0xff]
      %v4979 = vld [vmem:[#allocation2 + $0x1b2] sm:$0xff]
      %v4980 = vld [vmem:[#allocation2 + $0x1ba] sm:$0xff]
      %v4981 = vld [vmem:[#allocation2 + $0x1ca] sm:$0xff]
      %v4982 = vld [vmem:[#allocation2 + $0x1d2] sm:$0xff]
      %v4983 = vld [vmem:[#allocation2 + $0x1e2] sm:$0xff]
      %v4984 = vld [vmem:[#allocation2 + $0x1ea] sm:$0xff]
      %v4985 = vld [vmem:[#allocation2 + $0x1fa] sm:$0xff]
      %v4986 = vld [vmem:[#allocation2 + $0x202] sm:$0xff]
      %v4987 = vld [vmem:[#allocation2 + $0x212] sm:$0xff]
      %v4988 = vld [vmem:[#allocation2 + $0x21a] sm:$0xff]
      %v4989 = vld [vmem:[#allocation2 + $0x22a] sm:$0xff]
      %v4990 = vld [vmem:[#allocation2 + $0x232] sm:$0xff]
      %v4991 = vld [vmem:[#allocation2 + $0x242] sm:$0xff]
      %v4992 = vld [vmem:[#allocation2 + $0x24a] sm:$0xff]
      %v4993 = vld [vmem:[#allocation2 + $0x25a] sm:$0xff]
      %v4994 = vld [vmem:[#allocation2 + $0x262] sm:$0xff]
      %v4995 = vld [vmem:[#allocation2 + $0x272] sm:$0xff]
      %v4996 = vld [vmem:[#allocation2 + $0x27a] sm:$0xff]
      %v4997 = vld [vmem:[#allocation2 + $0x28a] sm:$0xff]
      %v4998 = vld [vmem:[#allocation2 + $0x292] sm:$0xff]
      %v4999 = vld [vmem:[#allocation2 + $0x2a2] sm:$0xff]
      %v5000 = vld [vmem:[#allocation2 + $0x2aa] sm:$0xff]
      %v5001 = vld [vmem:[#allocation2 + $0x2ba] sm:$0xff]
      %v5002 = vld [vmem:[#allocation2 + $0x2c2] sm:$0xff]
      %v5003 = vld [vmem:[#allocation2 + $0x2d2] sm:$0xff]
      %v5004 = vld [vmem:[#allocation2 + $0x2da] sm:$0xff]
      %v5005 = vld [vmem:[#allocation2 + $0x2ea] sm:$0xff]
      %v5006 = vld [vmem:[#allocation2 + $0x2f2] sm:$0xff]
      %v5007 = vld [vmem:[#allocation2 + $0x302] sm:$0xff]
      %v5008 = vld [vmem:[#allocation2 + $0x30a] sm:$0xff]
      %v5009 = vld [vmem:[#allocation2 + $0x31a] sm:$0xff]
      %v5010 = vld [vmem:[#allocation2 + $0x322] sm:$0xff]
      %v5011 = vld [vmem:[#allocation2 + $0x362] sm:$0xff]
      %v5012 = vld [vmem:[#allocation2 + $0x36a] sm:$0xff]
      %v5013 = vld [vmem:[#allocation2 + $0x37a] sm:$0xff]
      %v5014 = vld [vmem:[#allocation2 + $0x382] sm:$0xff]
      %v5015 = vld [vmem:[#allocation2 + $0x392] sm:$0xff]
      %v5016 = vld [vmem:[#allocation2 + $0x39a] sm:$0xff]
      %v5017 = vld [vmem:[#allocation2 + $0x3aa] sm:$0xff]
      %v5018 = vld [vmem:[#allocation2 + $0x3b2] sm:$0xff]
      %v5019 = vld [vmem:[#allocation2 + $0x3c2] sm:$0xff]
      %v5020 = vld [vmem:[#allocation2 + $0x3ca] sm:$0xff]
      %v5021 = vld [vmem:[#allocation2 + $0x3da] sm:$0xff]
      %v5022 = vld [vmem:[#allocation2 + $0x3e2] sm:$0xff]
      %v5023 = vld [vmem:[#allocation2 + $0x3f2] sm:$0xff]
      %v5024 = vld [vmem:[#allocation2 + $0x3fa] sm:$0xff]
      %v5025 = vld [vmem:[#allocation2 + $0x40a] sm:$0xff]
      %v5026 = vld [vmem:[#allocation2 + $0x412] sm:$0xff]
      %v5027 = vld [vmem:[#allocation2 + $0x422] sm:$0xff]
      %v5028 = vld [vmem:[#allocation2 + $0x42a] sm:$0xff]
      %v5029 = vld [vmem:[#allocation2 + $0x43a] sm:$0xff]
      %v5030 = vld [vmem:[#allocation2 + $0x442] sm:$0xff]
      %v5031 = vld [vmem:[#allocation2 + $0x452] sm:$0xff]
      %v5032 = vld [vmem:[#allocation2 + $0x45a] sm:$0xff]
      %v5033 = vld [vmem:[#allocation2 + $0x46a] sm:$0xff]
      %v5034 = vld [vmem:[#allocation2 + $0x472] sm:$0xff]
      %v5035 = vld [vmem:[#allocation2 + $0x482] sm:$0xff]
      %v5036 = vld [vmem:[#allocation2 + $0x48a] sm:$0xff]
      %v5037 = vld [vmem:[#allocation2 + $0x49a] sm:$0xff]
      %v5038 = vld [vmem:[#allocation2 + $0x4a2] sm:$0xff]
      %v5039 = vld [vmem:[#allocation2 + $0x4b2] sm:$0xff]
      %v5040 = vld [vmem:[#allocation2 + $0x4ba] sm:$0xff]
      %v5041 = vld [vmem:[#allocation2 + $0x4ca] sm:$0xff]
      %v5042 = vld [vmem:[#allocation2 + $0x4d2] sm:$0xff]
      %v5043 = vld [vmem:[#allocation2 + $0x512] sm:$0xff]
      %v5044 = vld [vmem:[#allocation2 + $0x51a] sm:$0xff]
      %v5045 = vld [vmem:[#allocation2 + $0x52a] sm:$0xff]
      %v5046 = vld [vmem:[#allocation2 + $0x532] sm:$0xff]
      %v5047 = vld [vmem:[#allocation2 + $0x542] sm:$0xff]
      %v5048 = vld [vmem:[#allocation2 + $0x54a] sm:$0xff]
      %v5049 = vld [vmem:[#allocation2 + $0x55a] sm:$0xff]
      %v5050 = vld [vmem:[#allocation2 + $0x562] sm:$0xff]
      %v5051 = vld [vmem:[#allocation2 + $0x572] sm:$0xff]
      %v5052 = vld [vmem:[#allocation2 + $0x57a] sm:$0xff]
      %v5053 = vld [vmem:[#allocation2 + $0x58a] sm:$0xff]
      %v5054 = vld [vmem:[#allocation2 + $0x592] sm:$0xff]
      %v5055 = vld [vmem:[#allocation2 + $0x5a2] sm:$0xff]
      %v5056 = vld [vmem:[#allocation2 + $0x5aa] sm:$0xff]
      %v5057 = vld [vmem:[#allocation2 + $0x5ba] sm:$0xff]
      %v5058 = vld [vmem:[#allocation2 + $0x5c2] sm:$0xff]
      %v5059 = vld [vmem:[#allocation2 + $0x5d2] sm:$0xff]
      %v5060 = vld [vmem:[#allocation2 + $0x5da] sm:$0xff]
      %v5061 = vld [vmem:[#allocation2 + $0x5ea] sm:$0xff]
      %v5062 = vld [vmem:[#allocation2 + $0x5f2] sm:$0xff]
      %v5063 = vld [vmem:[#allocation2 + $0x602] sm:$0xff]
      %v5064 = vld [vmem:[#allocation2 + $0x60a] sm:$0xff]
      %v5065 = vld [vmem:[#allocation2 + $0x61a] sm:$0xff]
      %v5066 = vld [vmem:[#allocation2 + $0x622] sm:$0xff]
      %v5067 = vld [vmem:[#allocation2 + $0x632] sm:$0xff]
      %v5068 = vld [vmem:[#allocation2 + $0x63a] sm:$0xff]
      %v5069 = vld [vmem:[#allocation2 + $0x64a] sm:$0xff]
      %v5070 = vld [vmem:[#allocation2 + $0x652] sm:$0xff]
      %v5071 = vld [vmem:[#allocation2 + $0x662] sm:$0xff]
      %v5072 = vld [vmem:[#allocation2 + $0x66a] sm:$0xff]
      %v5073 = vld [vmem:[#allocation2 + $0x67a] sm:$0xff]
      %v5074 = vld [vmem:[#allocation2 + $0x682] sm:$0xff]
      %v5075 = vlaneseq
      %v5076 = vshrl.u32 %v5075, 7
      %v5077 = vsub.s32 2, %v5076
      %v5078 = vrot.slane %v3821, %v5077
      %v5079 = vmul.f32 %v4947, %v5078
      %v5080 = vmul.f32 %v4948, %v5078
      %v5081 = vmul.f32 %v4949, %v5078
      %v5082 = vmul.f32 %v4950, %v5078
      %v5083 = vmul.f32 %v4951, %v5078
      %v5084 = vmul.f32 %v4952, %v5078
      %v5085 = vmul.f32 %v4953, %v5078
      %v5086 = vmul.f32 %v4954, %v5078
      %v5087 = vmul.f32 %v4955, %v5078
      %v5088 = vmul.f32 %v4956, %v5078
      %v5089 = vmul.f32 %v4957, %v5078
      %v5090 = vmul.f32 %v4958, %v5078
      %v5091 = vmul.f32 %v4959, %v5078
      %v5092 = vmul.f32 %v4960, %v5078
      %v5093 = vmul.f32 %v4961, %v5078
      %v5094 = vmul.f32 %v4962, %v5078
      %v5095 = vmul.f32 %v4963, %v5078
      %v5096 = vmul.f32 %v4964, %v5078
      %v5097 = vmul.f32 %v4965, %v5078
      %v5098 = vmul.f32 %v4966, %v5078
      %v5099 = vmul.f32 %v4967, %v5078
      %v5100 = vmul.f32 %v4968, %v5078
      %v5101 = vmul.f32 %v4969, %v5078
      %v5102 = vmul.f32 %v4970, %v5078
      %v5103 = vmul.f32 %v4971, %v5078
      %v5104 = vmul.f32 %v4972, %v5078
      %v5105 = vmul.f32 %v4973, %v5078
      %v5106 = vmul.f32 %v4974, %v5078
      %v5107 = vmul.f32 %v4975, %v5078
      %v5108 = vmul.f32 %v4976, %v5078
      %v5109 = vmul.f32 %v4977, %v5078
      %v5110 = vmul.f32 %v4978, %v5078
      %v5111 = vmul.f32 %v4979, %v5078
      %v5112 = vmul.f32 %v4980, %v5078
      %v5113 = vmul.f32 %v4981, %v5078
      %v5114 = vmul.f32 %v4982, %v5078
      %v5115 = vmul.f32 %v4983, %v5078
      %v5116 = vmul.f32 %v4984, %v5078
      %v5117 = vmul.f32 %v4985, %v5078
      %v5118 = vmul.f32 %v4986, %v5078
      %v5119 = vmul.f32 %v4987, %v5078
      %v5120 = vmul.f32 %v4988, %v5078
      %v5121 = vmul.f32 %v4989, %v5078
      %v5122 = vmul.f32 %v4990, %v5078
      %v5123 = vmul.f32 %v4991, %v5078
      %v5124 = vmul.f32 %v4992, %v5078
      %v5125 = vmul.f32 %v4993, %v5078
      %v5126 = vmul.f32 %v4994, %v5078
      %v5127 = vmul.f32 %v4995, %v5078
      %v5128 = vmul.f32 %v4996, %v5078
      %v5129 = vmul.f32 %v4997, %v5078
      %v5130 = vmul.f32 %v4998, %v5078
      %v5131 = vmul.f32 %v4999, %v5078
      %v5132 = vmul.f32 %v5000, %v5078
      %v5133 = vmul.f32 %v5001, %v5078
      %v5134 = vmul.f32 %v5002, %v5078
      %v5135 = vmul.f32 %v5003, %v5078
      %v5136 = vmul.f32 %v5004, %v5078
      %v5137 = vmul.f32 %v5005, %v5078
      %v5138 = vmul.f32 %v5006, %v5078
      %v5139 = vmul.f32 %v5007, %v5078
      %v5140 = vmul.f32 %v5008, %v5078
      %v5141 = vmul.f32 %v5009, %v5078
      %v5142 = vmul.f32 %v5010, %v5078
      %v5143 = vmul.f32 %v5011, %v5078
      %v5144 = vmul.f32 %v5012, %v5078
      %v5145 = vmul.f32 %v5013, %v5078
      %v5146 = vmul.f32 %v5014, %v5078
      %v5147 = vmul.f32 %v5015, %v5078
      %v5148 = vmul.f32 %v5016, %v5078
      %v5149 = vmul.f32 %v5017, %v5078
      %v5150 = vmul.f32 %v5018, %v5078
      %v5151 = vmul.f32 %v5019, %v5078
      %v5152 = vmul.f32 %v5020, %v5078
      %v5153 = vmul.f32 %v5021, %v5078
      %v5154 = vmul.f32 %v5022, %v5078
      %v5155 = vmul.f32 %v5023, %v5078
      %v5156 = vmul.f32 %v5024, %v5078
      %v5157 = vmul.f32 %v5025, %v5078
      %v5158 = vmul.f32 %v5026, %v5078
      %v5159 = vmul.f32 %v5027, %v5078
      %v5160 = vmul.f32 %v5028, %v5078
      %v5161 = vmul.f32 %v5029, %v5078
      %v5162 = vmul.f32 %v5030, %v5078
      %v5163 = vmul.f32 %v5031, %v5078
      %v5164 = vmul.f32 %v5032, %v5078
      %v5165 = vmul.f32 %v5033, %v5078
      %v5166 = vmul.f32 %v5034, %v5078
      %v5167 = vmul.f32 %v5035, %v5078
      %v5168 = vmul.f32 %v5036, %v5078
      %v5169 = vmul.f32 %v5037, %v5078
      %v5170 = vmul.f32 %v5038, %v5078
      %v5171 = vmul.f32 %v5039, %v5078
      %v5172 = vmul.f32 %v5040, %v5078
      %v5173 = vmul.f32 %v5041, %v5078
      %v5174 = vmul.f32 %v5042, %v5078
      %v5175 = vmul.f32 %v5043, %v5078
      %v5176 = vmul.f32 %v5044, %v5078
      %v5177 = vmul.f32 %v5045, %v5078
      %v5178 = vmul.f32 %v5046, %v5078
      %v5179 = vmul.f32 %v5047, %v5078
      %v5180 = vmul.f32 %v5048, %v5078
      %v5181 = vmul.f32 %v5049, %v5078
      %v5182 = vmul.f32 %v5050, %v5078
      %v5183 = vmul.f32 %v5051, %v5078
      %v5184 = vmul.f32 %v5052, %v5078
      %v5185 = vmul.f32 %v5053, %v5078
      %v5186 = vmul.f32 %v5054, %v5078
      %v5187 = vmul.f32 %v5055, %v5078
      %v5188 = vmul.f32 %v5056, %v5078
      %v5189 = vmul.f32 %v5057, %v5078
      %v5190 = vmul.f32 %v5058, %v5078
      %v5191 = vmul.f32 %v5059, %v5078
      %v5192 = vmul.f32 %v5060, %v5078
      %v5193 = vmul.f32 %v5061, %v5078
      %v5194 = vmul.f32 %v5062, %v5078
      %v5195 = vmul.f32 %v5063, %v5078
      %v5196 = vmul.f32 %v5064, %v5078
      %v5197 = vmul.f32 %v5065, %v5078
      %v5198 = vmul.f32 %v5066, %v5078
      %v5199 = vmul.f32 %v5067, %v5078
      %v5200 = vmul.f32 %v5068, %v5078
      %v5201 = vmul.f32 %v5069, %v5078
      %v5202 = vmul.f32 %v5070, %v5078
      %v5203 = vmul.f32 %v5071, %v5078
      %v5204 = vmul.f32 %v5072, %v5078
      %v5205 = vmul.f32 %v5073, %v5078
      %v5206 = vmul.f32 %v5074, %v5078
      %v5207 = vadd.f32 %v4819, %v5079
      %v5208 = vadd.f32 %v4820, %v5080
      %v5209 = vadd.f32 %v4821, %v5081
      %v5210 = vadd.f32 %v4822, %v5082
      %v5211 = vadd.f32 %v4823, %v5083
      %v5212 = vadd.f32 %v4824, %v5084
      %v5213 = vadd.f32 %v4825, %v5085
      %v5214 = vadd.f32 %v4826, %v5086
      %v5215 = vadd.f32 %v4827, %v5087
      %v5216 = vadd.f32 %v4828, %v5088
      %v5217 = vadd.f32 %v4829, %v5089
      %v5218 = vadd.f32 %v4830, %v5090
      %v5219 = vadd.f32 %v4831, %v5091
      %v5220 = vadd.f32 %v4832, %v5092
      %v5221 = vadd.f32 %v4833, %v5093
      %v5222 = vadd.f32 %v4834, %v5094
      %v5223 = vadd.f32 %v4835, %v5095
      %v5224 = vadd.f32 %v4836, %v5096
      %v5225 = vadd.f32 %v4837, %v5097
      %v5226 = vadd.f32 %v4838, %v5098
      %v5227 = vadd.f32 %v4839, %v5099
      %v5228 = vadd.f32 %v4840, %v5100
      %v5229 = vadd.f32 %v4841, %v5101
      %v5230 = vadd.f32 %v4842, %v5102
      %v5231 = vadd.f32 %v4843, %v5103
      %v5232 = vadd.f32 %v4844, %v5104
      %v5233 = vadd.f32 %v4845, %v5105
      %v5234 = vadd.f32 %v4846, %v5106
      %v5235 = vadd.f32 %v4847, %v5107
      %v5236 = vadd.f32 %v4848, %v5108
      %v5237 = vadd.f32 %v4849, %v5109
      %v5238 = vadd.f32 %v4850, %v5110
      %v5239 = vadd.f32 %v4851, %v5111
      %v5240 = vadd.f32 %v4852, %v5112
      %v5241 = vadd.f32 %v4853, %v5113
      %v5242 = vadd.f32 %v4854, %v5114
      %v5243 = vadd.f32 %v4855, %v5115
      %v5244 = vadd.f32 %v4856, %v5116
      %v5245 = vadd.f32 %v4857, %v5117
      %v5246 = vadd.f32 %v4858, %v5118
      %v5247 = vadd.f32 %v4859, %v5119
      %v5248 = vadd.f32 %v4860, %v5120
      %v5249 = vadd.f32 %v4861, %v5121
      %v5250 = vadd.f32 %v4862, %v5122
      %v5251 = vadd.f32 %v4863, %v5123
      %v5252 = vadd.f32 %v4864, %v5124
      %v5253 = vadd.f32 %v4865, %v5125
      %v5254 = vadd.f32 %v4866, %v5126
      %v5255 = vadd.f32 %v4867, %v5127
      %v5256 = vadd.f32 %v4868, %v5128
      %v5257 = vadd.f32 %v4869, %v5129
      %v5258 = vadd.f32 %v4870, %v5130
      %v5259 = vadd.f32 %v4871, %v5131
      %v5260 = vadd.f32 %v4872, %v5132
      %v5261 = vadd.f32 %v4873, %v5133
      %v5262 = vadd.f32 %v4874, %v5134
      %v5263 = vadd.f32 %v4875, %v5135
      %v5264 = vadd.f32 %v4876, %v5136
      %v5265 = vadd.f32 %v4877, %v5137
      %v5266 = vadd.f32 %v4878, %v5138
      %v5267 = vadd.f32 %v4879, %v5139
      %v5268 = vadd.f32 %v4880, %v5140
      %v5269 = vadd.f32 %v4881, %v5141
      %v5270 = vadd.f32 %v4882, %v5142
      %v5271 = vadd.f32 %v4883, %v5143
      %v5272 = vadd.f32 %v4884, %v5144
      %v5273 = vadd.f32 %v4885, %v5145
      %v5274 = vadd.f32 %v4886, %v5146
      %v5275 = vadd.f32 %v4887, %v5147
      %v5276 = vadd.f32 %v4888, %v5148
      %v5277 = vadd.f32 %v4889, %v5149
      %v5278 = vadd.f32 %v4890, %v5150
      %v5279 = vadd.f32 %v4891, %v5151
      %v5280 = vadd.f32 %v4892, %v5152
      %v5281 = vadd.f32 %v4893, %v5153
      %v5282 = vadd.f32 %v4894, %v5154
      %v5283 = vadd.f32 %v4895, %v5155
      %v5284 = vadd.f32 %v4896, %v5156
      %v5285 = vadd.f32 %v4897, %v5157
      %v5286 = vadd.f32 %v4898, %v5158
      %v5287 = vadd.f32 %v4899, %v5159
      %v5288 = vadd.f32 %v4900, %v5160
      %v5289 = vadd.f32 %v4901, %v5161
      %v5290 = vadd.f32 %v4902, %v5162
      %v5291 = vadd.f32 %v4903, %v5163
      %v5292 = vadd.f32 %v4904, %v5164
      %v5293 = vadd.f32 %v4905, %v5165
      %v5294 = vadd.f32 %v4906, %v5166
      %v5295 = vadd.f32 %v4907, %v5167
      %v5296 = vadd.f32 %v4908, %v5168
      %v5297 = vadd.f32 %v4909, %v5169
      %v5298 = vadd.f32 %v4910, %v5170
      %v5299 = vadd.f32 %v4911, %v5171
      %v5300 = vadd.f32 %v4912, %v5172
      %v5301 = vadd.f32 %v4913, %v5173
      %v5302 = vadd.f32 %v4914, %v5174
      %v5303 = vadd.f32 %v4915, %v5175
      %v5304 = vadd.f32 %v4916, %v5176
      %v5305 = vadd.f32 %v4917, %v5177
      %v5306 = vadd.f32 %v4918, %v5178
      %v5307 = vadd.f32 %v4919, %v5179
      %v5308 = vadd.f32 %v4920, %v5180
      %v5309 = vadd.f32 %v4921, %v5181
      %v5310 = vadd.f32 %v4922, %v5182
      %v5311 = vadd.f32 %v4923, %v5183
      %v5312 = vadd.f32 %v4924, %v5184
      %v5313 = vadd.f32 %v4925, %v5185
      %v5314 = vadd.f32 %v4926, %v5186
      %v5315 = vadd.f32 %v4927, %v5187
      %v5316 = vadd.f32 %v4928, %v5188
      %v5317 = vadd.f32 %v4929, %v5189
      %v5318 = vadd.f32 %v4930, %v5190
      %v5319 = vadd.f32 %v4931, %v5191
      %v5320 = vadd.f32 %v4932, %v5192
      %v5321 = vadd.f32 %v4933, %v5193
      %v5322 = vadd.f32 %v4934, %v5194
      %v5323 = vadd.f32 %v4935, %v5195
      %v5324 = vadd.f32 %v4936, %v5196
      %v5325 = vadd.f32 %v4937, %v5197
      %v5326 = vadd.f32 %v4938, %v5198
      %v5327 = vadd.f32 %v4939, %v5199
      %v5328 = vadd.f32 %v4940, %v5200
      %v5329 = vadd.f32 %v4941, %v5201
      %v5330 = vadd.f32 %v4942, %v5202
      %v5331 = vadd.f32 %v4943, %v5203
      %v5332 = vadd.f32 %v4944, %v5204
      %v5333 = vadd.f32 %v4945, %v5205
      %v5334 = vadd.f32 %v4946, %v5206
      %v5335 = vld [vmem:[%s4042] sm:$0xff]
      %v5336 = vld [vmem:[%s4042 + $0x8] sm:$0xff]
      %v5337 = vld [vmem:[%s4042 + $0x18] sm:$0xff]
      %v5338 = vld [vmem:[%s4042 + $0x20] sm:$0xff]
      %v5339 = vld [vmem:[%s4042 + $0x30] sm:$0xff]
      %v5340 = vld [vmem:[%s4042 + $0x38] sm:$0xff]
      %v5341 = vld [vmem:[%s4042 + $0x48] sm:$0xff]
      %v5342 = vld [vmem:[%s4042 + $0x50] sm:$0xff]
      %v5343 = vld [vmem:[%s4042 + $0x60] sm:$0xff]
      %v5344 = vld [vmem:[%s4042 + $0x68] sm:$0xff]
      %v5345 = vld [vmem:[%s4042 + $0x78] sm:$0xff]
      %v5346 = vld [vmem:[%s4042 + $0x80] sm:$0xff]
      %v5347 = vld [vmem:[%s4042 + $0x90] sm:$0xff]
      %v5348 = vld [vmem:[%s4042 + $0x98] sm:$0xff]
      %v5349 = vld [vmem:[%s4042 + $0xa8] sm:$0xff]
      %v5350 = vld [vmem:[%s4042 + $0xb0] sm:$0xff]
      %v5351 = vld [vmem:[%s4042 + $0xc0] sm:$0xff]
      %v5352 = vld [vmem:[%s4042 + $0xc8] sm:$0xff]
      %v5353 = vld [vmem:[%s4042 + $0xd8] sm:$0xff]
      %v5354 = vld [vmem:[%s4042 + $0xe0] sm:$0xff]
      %v5355 = vld [vmem:[%s4042 + $0xf0] sm:$0xff]
      %v5356 = vld [vmem:[%s4042 + $0xf8] sm:$0xff]
      %v5357 = vld [vmem:[%s4042 + $0x108] sm:$0xff]
      %v5358 = vld [vmem:[%s4042 + $0x110] sm:$0xff]
      %v5359 = vld [vmem:[%s4042 + $0x120] sm:$0xff]
      %v5360 = vld [vmem:[%s4042 + $0x128] sm:$0xff]
      %v5361 = vld [vmem:[%s4042 + $0x138] sm:$0xff]
      %v5362 = vld [vmem:[%s4042 + $0x140] sm:$0xff]
      %v5363 = vld [vmem:[%s4042 + $0x150] sm:$0xff]
      %v5364 = vld [vmem:[%s4042 + $0x158] sm:$0xff]
      %v5365 = vld [vmem:[%s4042 + $0x168] sm:$0xff]
      %v5366 = vld [vmem:[%s4042 + $0x170] sm:$0xff]
      %v5367 = vld [vmem:[%s4042 + $0x1b0] sm:$0xff]
      %v5368 = vld [vmem:[%s4042 + $0x1b8] sm:$0xff]
      %v5369 = vld [vmem:[%s4042 + $0x1c8] sm:$0xff]
      %v5370 = vld [vmem:[%s4042 + $0x1d0] sm:$0xff]
      %v5371 = vld [vmem:[%s4042 + $0x1e0] sm:$0xff]
      %v5372 = vld [vmem:[%s4042 + $0x1e8] sm:$0xff]
      %v5373 = vld [vmem:[%s4042 + $0x1f8] sm:$0xff]
      %v5374 = vld [vmem:[%s4042 + $0x200] sm:$0xff]
      %v5375 = vld [vmem:[%s4042 + $0x210] sm:$0xff]
      %v5376 = vld [vmem:[%s4042 + $0x218] sm:$0xff]
      %v5377 = vld [vmem:[%s4042 + $0x228] sm:$0xff]
      %v5378 = vld [vmem:[%s4042 + $0x230] sm:$0xff]
      %v5379 = vld [vmem:[%s4042 + $0x240] sm:$0xff]
      %v5380 = vld [vmem:[%s4042 + $0x248] sm:$0xff]
      %v5381 = vld [vmem:[%s4042 + $0x258] sm:$0xff]
      %v5382 = vld [vmem:[%s4042 + $0x260] sm:$0xff]
      %v5383 = vld [vmem:[%s4042 + $0x270] sm:$0xff]
      %v5384 = vld [vmem:[%s4042 + $0x278] sm:$0xff]
      %v5385 = vld [vmem:[%s4042 + $0x288] sm:$0xff]
      %v5386 = vld [vmem:[%s4042 + $0x290] sm:$0xff]
      %v5387 = vld [vmem:[%s4042 + $0x2a0] sm:$0xff]
      %v5388 = vld [vmem:[%s4042 + $0x2a8] sm:$0xff]
      %v5389 = vld [vmem:[%s4042 + $0x2b8] sm:$0xff]
      %v5390 = vld [vmem:[%s4042 + $0x2c0] sm:$0xff]
      %v5391 = vld [vmem:[%s4042 + $0x2d0] sm:$0xff]
      %v5392 = vld [vmem:[%s4042 + $0x2d8] sm:$0xff]
      %v5393 = vld [vmem:[%s4042 + $0x2e8] sm:$0xff]
      %v5394 = vld [vmem:[%s4042 + $0x2f0] sm:$0xff]
      %v5395 = vld [vmem:[%s4042 + $0x300] sm:$0xff]
      %v5396 = vld [vmem:[%s4042 + $0x308] sm:$0xff]
      %v5397 = vld [vmem:[%s4042 + $0x318] sm:$0xff]
      %v5398 = vld [vmem:[%s4042 + $0x320] sm:$0xff]
      %v5399 = vld [vmem:[%s4042 + $0x360] sm:$0xff]
      %v5400 = vld [vmem:[%s4042 + $0x368] sm:$0xff]
      %v5401 = vld [vmem:[%s4042 + $0x378] sm:$0xff]
      %v5402 = vld [vmem:[%s4042 + $0x380] sm:$0xff]
      %v5403 = vld [vmem:[%s4042 + $0x390] sm:$0xff]
      %v5404 = vld [vmem:[%s4042 + $0x398] sm:$0xff]
      %v5405 = vld [vmem:[%s4042 + $0x3a8] sm:$0xff]
      %v5406 = vld [vmem:[%s4042 + $0x3b0] sm:$0xff]
      %v5407 = vld [vmem:[%s4042 + $0x3c0] sm:$0xff]
      %v5408 = vld [vmem:[%s4042 + $0x3c8] sm:$0xff]
      %v5409 = vld [vmem:[%s4042 + $0x3d8] sm:$0xff]
      %v5410 = vld [vmem:[%s4042 + $0x3e0] sm:$0xff]
      %v5411 = vld [vmem:[%s4042 + $0x3f0] sm:$0xff]
      %v5412 = vld [vmem:[%s4042 + $0x3f8] sm:$0xff]
      %v5413 = vld [vmem:[%s4042 + $0x408] sm:$0xff]
      %v5414 = vld [vmem:[%s4042 + $0x410] sm:$0xff]
      %v5415 = vld [vmem:[%s4042 + $0x420] sm:$0xff]
      %v5416 = vld [vmem:[%s4042 + $0x428] sm:$0xff]
      %v5417 = vld [vmem:[%s4042 + $0x438] sm:$0xff]
      %v5418 = vld [vmem:[%s4042 + $0x440] sm:$0xff]
      %v5419 = vld [vmem:[%s4042 + $0x450] sm:$0xff]
      %v5420 = vld [vmem:[%s4042 + $0x458] sm:$0xff]
      %v5421 = vld [vmem:[%s4042 + $0x468] sm:$0xff]
      %v5422 = vld [vmem:[%s4042 + $0x470] sm:$0xff]
      %v5423 = vld [vmem:[%s4042 + $0x480] sm:$0xff]
      %v5424 = vld [vmem:[%s4042 + $0x488] sm:$0xff]
      %v5425 = vld [vmem:[%s4042 + $0x498] sm:$0xff]
      %v5426 = vld [vmem:[%s4042 + $0x4a0] sm:$0xff]
      %v5427 = vld [vmem:[%s4042 + $0x4b0] sm:$0xff]
      %v5428 = vld [vmem:[%s4042 + $0x4b8] sm:$0xff]
      %v5429 = vld [vmem:[%s4042 + $0x4c8] sm:$0xff]
      %v5430 = vld [vmem:[%s4042 + $0x4d0] sm:$0xff]
      %v5431 = vld [vmem:[%s4042 + $0x510] sm:$0xff]
      %v5432 = vld [vmem:[%s4042 + $0x518] sm:$0xff]
      %v5433 = vld [vmem:[%s4042 + $0x528] sm:$0xff]
      %v5434 = vld [vmem:[%s4042 + $0x530] sm:$0xff]
      %v5435 = vld [vmem:[%s4042 + $0x540] sm:$0xff]
      %v5436 = vld [vmem:[%s4042 + $0x548] sm:$0xff]
      %v5437 = vld [vmem:[%s4042 + $0x558] sm:$0xff]
      %v5438 = vld [vmem:[%s4042 + $0x560] sm:$0xff]
      %v5439 = vld [vmem:[%s4042 + $0x570] sm:$0xff]
      %v5440 = vld [vmem:[%s4042 + $0x578] sm:$0xff]
      %v5441 = vld [vmem:[%s4042 + $0x588] sm:$0xff]
      %v5442 = vld [vmem:[%s4042 + $0x590] sm:$0xff]
      %v5443 = vld [vmem:[%s4042 + $0x5a0] sm:$0xff]
      %v5444 = vld [vmem:[%s4042 + $0x5a8] sm:$0xff]
      %v5445 = vld [vmem:[%s4042 + $0x5b8] sm:$0xff]
      %v5446 = vld [vmem:[%s4042 + $0x5c0] sm:$0xff]
      %v5447 = vld [vmem:[%s4042 + $0x5d0] sm:$0xff]
      %v5448 = vld [vmem:[%s4042 + $0x5d8] sm:$0xff]
      %v5449 = vld [vmem:[%s4042 + $0x5e8] sm:$0xff]
      %v5450 = vld [vmem:[%s4042 + $0x5f0] sm:$0xff]
      %v5451 = vld [vmem:[%s4042 + $0x600] sm:$0xff]
      %v5452 = vld [vmem:[%s4042 + $0x608] sm:$0xff]
      %v5453 = vld [vmem:[%s4042 + $0x618] sm:$0xff]
      %v5454 = vld [vmem:[%s4042 + $0x620] sm:$0xff]
      %v5455 = vld [vmem:[%s4042 + $0x630] sm:$0xff]
      %v5456 = vld [vmem:[%s4042 + $0x638] sm:$0xff]
      %v5457 = vld [vmem:[%s4042 + $0x648] sm:$0xff]
      %v5458 = vld [vmem:[%s4042 + $0x650] sm:$0xff]
      %v5459 = vld [vmem:[%s4042 + $0x660] sm:$0xff]
      %v5460 = vld [vmem:[%s4042 + $0x668] sm:$0xff]
      %v5461 = vld [vmem:[%s4042 + $0x678] sm:$0xff]
      %v5462 = vld [vmem:[%s4042 + $0x680] sm:$0xff]
      %v5463 = vlaneseq
      %v5464 = vshrl.u32 %v5463, 7
      %v5465 = vsub.s32 3, %v5464
      %v5466 = vrot.slane %v3821, %v5465
      %v5467 = vmul.f32 %v5335, %v5466
      %v5468 = vmul.f32 %v5336, %v5466
      %v5469 = vmul.f32 %v5337, %v5466
      %v5470 = vmul.f32 %v5338, %v5466
      %v5471 = vmul.f32 %v5339, %v5466
      %v5472 = vmul.f32 %v5340, %v5466
      %v5473 = vmul.f32 %v5341, %v5466
      %v5474 = vmul.f32 %v5342, %v5466
      %v5475 = vmul.f32 %v5343, %v5466
      %v5476 = vmul.f32 %v5344, %v5466
      %v5477 = vmul.f32 %v5345, %v5466
      %v5478 = vmul.f32 %v5346, %v5466
      %v5479 = vmul.f32 %v5347, %v5466
      %v5480 = vmul.f32 %v5348, %v5466
      %v5481 = vmul.f32 %v5349, %v5466
      %v5482 = vmul.f32 %v5350, %v5466
      %v5483 = vmul.f32 %v5351, %v5466
      %v5484 = vmul.f32 %v5352, %v5466
      %v5485 = vmul.f32 %v5353, %v5466
      %v5486 = vmul.f32 %v5354, %v5466
      %v5487 = vmul.f32 %v5355, %v5466
      %v5488 = vmul.f32 %v5356, %v5466
      %v5489 = vmul.f32 %v5357, %v5466
      %v5490 = vmul.f32 %v5358, %v5466
      %v5491 = vmul.f32 %v5359, %v5466
      %v5492 = vmul.f32 %v5360, %v5466
      %v5493 = vmul.f32 %v5361, %v5466
      %v5494 = vmul.f32 %v5362, %v5466
      %v5495 = vmul.f32 %v5363, %v5466
      %v5496 = vmul.f32 %v5364, %v5466
      %v5497 = vmul.f32 %v5365, %v5466
      %v5498 = vmul.f32 %v5366, %v5466
      %v5499 = vmul.f32 %v5367, %v5466
      %v5500 = vmul.f32 %v5368, %v5466
      %v5501 = vmul.f32 %v5369, %v5466
      %v5502 = vmul.f32 %v5370, %v5466
      %v5503 = vmul.f32 %v5371, %v5466
      %v5504 = vmul.f32 %v5372, %v5466
      %v5505 = vmul.f32 %v5373, %v5466
      %v5506 = vmul.f32 %v5374, %v5466
      %v5507 = vmul.f32 %v5375, %v5466
      %v5508 = vmul.f32 %v5376, %v5466
      %v5509 = vmul.f32 %v5377, %v5466
      %v5510 = vmul.f32 %v5378, %v5466
      %v5511 = vmul.f32 %v5379, %v5466
      %v5512 = vmul.f32 %v5380, %v5466
      %v5513 = vmul.f32 %v5381, %v5466
      %v5514 = vmul.f32 %v5382, %v5466
      %v5515 = vmul.f32 %v5383, %v5466
      %v5516 = vmul.f32 %v5384, %v5466
      %v5517 = vmul.f32 %v5385, %v5466
      %v5518 = vmul.f32 %v5386, %v5466
      %v5519 = vmul.f32 %v5387, %v5466
      %v5520 = vmul.f32 %v5388, %v5466
      %v5521 = vmul.f32 %v5389, %v5466
      %v5522 = vmul.f32 %v5390, %v5466
      %v5523 = vmul.f32 %v5391, %v5466
      %v5524 = vmul.f32 %v5392, %v5466
      %v5525 = vmul.f32 %v5393, %v5466
      %v5526 = vmul.f32 %v5394, %v5466
      %v5527 = vmul.f32 %v5395, %v5466
      %v5528 = vmul.f32 %v5396, %v5466
      %v5529 = vmul.f32 %v5397, %v5466
      %v5530 = vmul.f32 %v5398, %v5466
      %v5531 = vmul.f32 %v5399, %v5466
      %v5532 = vmul.f32 %v5400, %v5466
      %v5533 = vmul.f32 %v5401, %v5466
      %v5534 = vmul.f32 %v5402, %v5466
      %v5535 = vmul.f32 %v5403, %v5466
      %v5536 = vmul.f32 %v5404, %v5466
      %v5537 = vmul.f32 %v5405, %v5466
      %v5538 = vmul.f32 %v5406, %v5466
      %v5539 = vmul.f32 %v5407, %v5466
      %v5540 = vmul.f32 %v5408, %v5466
      %v5541 = vmul.f32 %v5409, %v5466
      %v5542 = vmul.f32 %v5410, %v5466
      %v5543 = vmul.f32 %v5411, %v5466
      %v5544 = vmul.f32 %v5412, %v5466
      %v5545 = vmul.f32 %v5413, %v5466
      %v5546 = vmul.f32 %v5414, %v5466
      %v5547 = vmul.f32 %v5415, %v5466
      %v5548 = vmul.f32 %v5416, %v5466
      %v5549 = vmul.f32 %v5417, %v5466
      %v5550 = vmul.f32 %v5418, %v5466
      %v5551 = vmul.f32 %v5419, %v5466
      %v5552 = vmul.f32 %v5420, %v5466
      %v5553 = vmul.f32 %v5421, %v5466
      %v5554 = vmul.f32 %v5422, %v5466
      %v5555 = vmul.f32 %v5423, %v5466
      %v5556 = vmul.f32 %v5424, %v5466
      %v5557 = vmul.f32 %v5425, %v5466
      %v5558 = vmul.f32 %v5426, %v5466
      %v5559 = vmul.f32 %v5427, %v5466
      %v5560 = vmul.f32 %v5428, %v5466
      %v5561 = vmul.f32 %v5429, %v5466
      %v5562 = vmul.f32 %v5430, %v5466
      %v5563 = vmul.f32 %v5431, %v5466
      %v5564 = vmul.f32 %v5432, %v5466
      %v5565 = vmul.f32 %v5433, %v5466
      %v5566 = vmul.f32 %v5434, %v5466
      %v5567 = vmul.f32 %v5435, %v5466
      %v5568 = vmul.f32 %v5436, %v5466
      %v5569 = vmul.f32 %v5437, %v5466
      %v5570 = vmul.f32 %v5438, %v5466
      %v5571 = vmul.f32 %v5439, %v5466
      %v5572 = vmul.f32 %v5440, %v5466
      %v5573 = vmul.f32 %v5441, %v5466
      %v5574 = vmul.f32 %v5442, %v5466
      %v5575 = vmul.f32 %v5443, %v5466
      %v5576 = vmul.f32 %v5444, %v5466
      %v5577 = vmul.f32 %v5445, %v5466
      %v5578 = vmul.f32 %v5446, %v5466
      %v5579 = vmul.f32 %v5447, %v5466
      %v5580 = vmul.f32 %v5448, %v5466
      %v5581 = vmul.f32 %v5449, %v5466
      %v5582 = vmul.f32 %v5450, %v5466
      %v5583 = vmul.f32 %v5451, %v5466
      %v5584 = vmul.f32 %v5452, %v5466
      %v5585 = vmul.f32 %v5453, %v5466
      %v5586 = vmul.f32 %v5454, %v5466
      %v5587 = vmul.f32 %v5455, %v5466
      %v5588 = vmul.f32 %v5456, %v5466
      %v5589 = vmul.f32 %v5457, %v5466
      %v5590 = vmul.f32 %v5458, %v5466
      %v5591 = vmul.f32 %v5459, %v5466
      %v5592 = vmul.f32 %v5460, %v5466
      %v5593 = vmul.f32 %v5461, %v5466
      %v5594 = vmul.f32 %v5462, %v5466
      %v5595 = vadd.f32 %v5207, %v5467
      %v5596 = vadd.f32 %v5208, %v5468
      %v5597 = vadd.f32 %v5209, %v5469
      %v5598 = vadd.f32 %v5210, %v5470
      %v5599 = vadd.f32 %v5211, %v5471
      %v5600 = vadd.f32 %v5212, %v5472
      %v5601 = vadd.f32 %v5213, %v5473
      %v5602 = vadd.f32 %v5214, %v5474
      %v5603 = vadd.f32 %v5215, %v5475
      %v5604 = vadd.f32 %v5216, %v5476
      %v5605 = vadd.f32 %v5217, %v5477
      %v5606 = vadd.f32 %v5218, %v5478
      %v5607 = vadd.f32 %v5219, %v5479
      %v5608 = vadd.f32 %v5220, %v5480
      %v5609 = vadd.f32 %v5221, %v5481
      %v5610 = vadd.f32 %v5222, %v5482
      %v5611 = vadd.f32 %v5223, %v5483
      %v5612 = vadd.f32 %v5224, %v5484
      %v5613 = vadd.f32 %v5225, %v5485
      %v5614 = vadd.f32 %v5226, %v5486
      %v5615 = vadd.f32 %v5227, %v5487
      %v5616 = vadd.f32 %v5228, %v5488
      %v5617 = vadd.f32 %v5229, %v5489
      %v5618 = vadd.f32 %v5230, %v5490
      %v5619 = vadd.f32 %v5231, %v5491
      %v5620 = vadd.f32 %v5232, %v5492
      %v5621 = vadd.f32 %v5233, %v5493
      %v5622 = vadd.f32 %v5234, %v5494
      %v5623 = vadd.f32 %v5235, %v5495
      %v5624 = vadd.f32 %v5236, %v5496
      %v5625 = vadd.f32 %v5237, %v5497
      %v5626 = vadd.f32 %v5238, %v5498
      %v5627 = vadd.f32 %v5239, %v5499
      %v5628 = vadd.f32 %v5240, %v5500
      %v5629 = vadd.f32 %v5241, %v5501
      %v5630 = vadd.f32 %v5242, %v5502
      %v5631 = vadd.f32 %v5243, %v5503
      %v5632 = vadd.f32 %v5244, %v5504
      %v5633 = vadd.f32 %v5245, %v5505
      %v5634 = vadd.f32 %v5246, %v5506
      %v5635 = vadd.f32 %v5247, %v5507
      %v5636 = vadd.f32 %v5248, %v5508
      %v5637 = vadd.f32 %v5249, %v5509
      %v5638 = vadd.f32 %v5250, %v5510
      %v5639 = vadd.f32 %v5251, %v5511
      %v5640 = vadd.f32 %v5252, %v5512
      %v5641 = vadd.f32 %v5253, %v5513
      %v5642 = vadd.f32 %v5254, %v5514
      %v5643 = vadd.f32 %v5255, %v5515
      %v5644 = vadd.f32 %v5256, %v5516
      %v5645 = vadd.f32 %v5257, %v5517
      %v5646 = vadd.f32 %v5258, %v5518
      %v5647 = vadd.f32 %v5259, %v5519
      %v5648 = vadd.f32 %v5260, %v5520
      %v5649 = vadd.f32 %v5261, %v5521
      %v5650 = vadd.f32 %v5262, %v5522
      %v5651 = vadd.f32 %v5263, %v5523
      %v5652 = vadd.f32 %v5264, %v5524
      %v5653 = vadd.f32 %v5265, %v5525
      %v5654 = vadd.f32 %v5266, %v5526
      %v5655 = vadd.f32 %v5267, %v5527
      %v5656 = vadd.f32 %v5268, %v5528
      %v5657 = vadd.f32 %v5269, %v5529
      %v5658 = vadd.f32 %v5270, %v5530
      %v5659 = vadd.f32 %v5271, %v5531
      %v5660 = vadd.f32 %v5272, %v5532
      %v5661 = vadd.f32 %v5273, %v5533
      %v5662 = vadd.f32 %v5274, %v5534
      %v5663 = vadd.f32 %v5275, %v5535
      %v5664 = vadd.f32 %v5276, %v5536
      %v5665 = vadd.f32 %v5277, %v5537
      %v5666 = vadd.f32 %v5278, %v5538
      %v5667 = vadd.f32 %v5279, %v5539
      %v5668 = vadd.f32 %v5280, %v5540
      %v5669 = vadd.f32 %v5281, %v5541
      %v5670 = vadd.f32 %v5282, %v5542
      %v5671 = vadd.f32 %v5283, %v5543
      %v5672 = vadd.f32 %v5284, %v5544
      %v5673 = vadd.f32 %v5285, %v5545
      %v5674 = vadd.f32 %v5286, %v5546
      %v5675 = vadd.f32 %v5287, %v5547
      %v5676 = vadd.f32 %v5288, %v5548
      %v5677 = vadd.f32 %v5289, %v5549
      %v5678 = vadd.f32 %v5290, %v5550
      %v5679 = vadd.f32 %v5291, %v5551
      %v5680 = vadd.f32 %v5292, %v5552
      %v5681 = vadd.f32 %v5293, %v5553
      %v5682 = vadd.f32 %v5294, %v5554
      %v5683 = vadd.f32 %v5295, %v5555
      %v5684 = vadd.f32 %v5296, %v5556
      %v5685 = vadd.f32 %v5297, %v5557
      %v5686 = vadd.f32 %v5298, %v5558
      %v5687 = vadd.f32 %v5299, %v5559
      %v5688 = vadd.f32 %v5300, %v5560
      %v5689 = vadd.f32 %v5301, %v5561
      %v5690 = vadd.f32 %v5302, %v5562
      %v5691 = vadd.f32 %v5303, %v5563
      %v5692 = vadd.f32 %v5304, %v5564
      %v5693 = vadd.f32 %v5305, %v5565
      %v5694 = vadd.f32 %v5306, %v5566
      %v5695 = vadd.f32 %v5307, %v5567
      %v5696 = vadd.f32 %v5308, %v5568
      %v5697 = vadd.f32 %v5309, %v5569
      %v5698 = vadd.f32 %v5310, %v5570
      %v5699 = vadd.f32 %v5311, %v5571
      %v5700 = vadd.f32 %v5312, %v5572
      %v5701 = vadd.f32 %v5313, %v5573
      %v5702 = vadd.f32 %v5314, %v5574
      %v5703 = vadd.f32 %v5315, %v5575
      %v5704 = vadd.f32 %v5316, %v5576
      %v5705 = vadd.f32 %v5317, %v5577
      %v5706 = vadd.f32 %v5318, %v5578
      %v5707 = vadd.f32 %v5319, %v5579
      %v5708 = vadd.f32 %v5320, %v5580
      %v5709 = vadd.f32 %v5321, %v5581
      %v5710 = vadd.f32 %v5322, %v5582
      %v5711 = vadd.f32 %v5323, %v5583
      %v5712 = vadd.f32 %v5324, %v5584
      %v5713 = vadd.f32 %v5325, %v5585
      %v5714 = vadd.f32 %v5326, %v5586
      %v5715 = vadd.f32 %v5327, %v5587
      %v5716 = vadd.f32 %v5328, %v5588
      %v5717 = vadd.f32 %v5329, %v5589
      %v5718 = vadd.f32 %v5330, %v5590
      %v5719 = vadd.f32 %v5331, %v5591
      %v5720 = vadd.f32 %v5332, %v5592
      %v5721 = vadd.f32 %v5333, %v5593
      %v5722 = vadd.f32 %v5334, %v5594
      %v5723 = vld [vmem:[%s4042 + $0x1] sm:$0xff]
      %v5724 = vld [vmem:[%s4042 + $0x9] sm:$0xff]
      %v5725 = vld [vmem:[%s4042 + $0x19] sm:$0xff]
      %v5726 = vld [vmem:[%s4042 + $0x21] sm:$0xff]
      %v5727 = vld [vmem:[%s4042 + $0x31] sm:$0xff]
      %v5728 = vld [vmem:[%s4042 + $0x39] sm:$0xff]
      %v5729 = vld [vmem:[%s4042 + $0x49] sm:$0xff]
      %v5730 = vld [vmem:[%s4042 + $0x51] sm:$0xff]
      %v5731 = vld [vmem:[%s4042 + $0x61] sm:$0xff]
      %v5732 = vld [vmem:[%s4042 + $0x69] sm:$0xff]
      %v5733 = vld [vmem:[%s4042 + $0x79] sm:$0xff]
      %v5734 = vld [vmem:[%s4042 + $0x81] sm:$0xff]
      %v5735 = vld [vmem:[%s4042 + $0x91] sm:$0xff]
      %v5736 = vld [vmem:[%s4042 + $0x99] sm:$0xff]
      %v5737 = vld [vmem:[%s4042 + $0xa9] sm:$0xff]
      %v5738 = vld [vmem:[%s4042 + $0xb1] sm:$0xff]
      %v5739 = vld [vmem:[%s4042 + $0xc1] sm:$0xff]
      %v5740 = vld [vmem:[%s4042 + $0xc9] sm:$0xff]
      %v5741 = vld [vmem:[%s4042 + $0xd9] sm:$0xff]
      %v5742 = vld [vmem:[%s4042 + $0xe1] sm:$0xff]
      %v5743 = vld [vmem:[%s4042 + $0xf1] sm:$0xff]
      %v5744 = vld [vmem:[%s4042 + $0xf9] sm:$0xff]
      %v5745 = vld [vmem:[%s4042 + $0x109] sm:$0xff]
      %v5746 = vld [vmem:[%s4042 + $0x111] sm:$0xff]
      %v5747 = vld [vmem:[%s4042 + $0x121] sm:$0xff]
      %v5748 = vld [vmem:[%s4042 + $0x129] sm:$0xff]
      %v5749 = vld [vmem:[%s4042 + $0x139] sm:$0xff]
      %v5750 = vld [vmem:[%s4042 + $0x141] sm:$0xff]
      %v5751 = vld [vmem:[%s4042 + $0x151] sm:$0xff]
      %v5752 = vld [vmem:[%s4042 + $0x159] sm:$0xff]
      %v5753 = vld [vmem:[%s4042 + $0x169] sm:$0xff]
      %v5754 = vld [vmem:[%s4042 + $0x171] sm:$0xff]
      %v5755 = vld [vmem:[%s4042 + $0x1b1] sm:$0xff]
      %v5756 = vld [vmem:[%s4042 + $0x1b9] sm:$0xff]
      %v5757 = vld [vmem:[%s4042 + $0x1c9] sm:$0xff]
      %v5758 = vld [vmem:[%s4042 + $0x1d1] sm:$0xff]
      %v5759 = vld [vmem:[%s4042 + $0x1e1] sm:$0xff]
      %v5760 = vld [vmem:[%s4042 + $0x1e9] sm:$0xff]
      %v5761 = vld [vmem:[%s4042 + $0x1f9] sm:$0xff]
      %v5762 = vld [vmem:[%s4042 + $0x201] sm:$0xff]
      %v5763 = vld [vmem:[%s4042 + $0x211] sm:$0xff]
      %v5764 = vld [vmem:[%s4042 + $0x219] sm:$0xff]
      %v5765 = vld [vmem:[%s4042 + $0x229] sm:$0xff]
      %v5766 = vld [vmem:[%s4042 + $0x231] sm:$0xff]
      %v5767 = vld [vmem:[%s4042 + $0x241] sm:$0xff]
      %v5768 = vld [vmem:[%s4042 + $0x249] sm:$0xff]
      %v5769 = vld [vmem:[%s4042 + $0x259] sm:$0xff]
      %v5770 = vld [vmem:[%s4042 + $0x261] sm:$0xff]
      %v5771 = vld [vmem:[%s4042 + $0x271] sm:$0xff]
      %v5772 = vld [vmem:[%s4042 + $0x279] sm:$0xff]
      %v5773 = vld [vmem:[%s4042 + $0x289] sm:$0xff]
      %v5774 = vld [vmem:[%s4042 + $0x291] sm:$0xff]
      %v5775 = vld [vmem:[%s4042 + $0x2a1] sm:$0xff]
      %v5776 = vld [vmem:[%s4042 + $0x2a9] sm:$0xff]
      %v5777 = vld [vmem:[%s4042 + $0x2b9] sm:$0xff]
      %v5778 = vld [vmem:[%s4042 + $0x2c1] sm:$0xff]
      %v5779 = vld [vmem:[%s4042 + $0x2d1] sm:$0xff]
      %v5780 = vld [vmem:[%s4042 + $0x2d9] sm:$0xff]
      %v5781 = vld [vmem:[%s4042 + $0x2e9] sm:$0xff]
      %v5782 = vld [vmem:[%s4042 + $0x2f1] sm:$0xff]
      %v5783 = vld [vmem:[%s4042 + $0x301] sm:$0xff]
      %v5784 = vld [vmem:[%s4042 + $0x309] sm:$0xff]
      %v5785 = vld [vmem:[%s4042 + $0x319] sm:$0xff]
      %v5786 = vld [vmem:[%s4042 + $0x321] sm:$0xff]
      %v5787 = vld [vmem:[%s4042 + $0x361] sm:$0xff]
      %v5788 = vld [vmem:[%s4042 + $0x369] sm:$0xff]
      %v5789 = vld [vmem:[%s4042 + $0x379] sm:$0xff]
      %v5790 = vld [vmem:[%s4042 + $0x381] sm:$0xff]
      %v5791 = vld [vmem:[%s4042 + $0x391] sm:$0xff]
      %v5792 = vld [vmem:[%s4042 + $0x399] sm:$0xff]
      %v5793 = vld [vmem:[%s4042 + $0x3a9] sm:$0xff]
      %v5794 = vld [vmem:[%s4042 + $0x3b1] sm:$0xff]
      %v5795 = vld [vmem:[%s4042 + $0x3c1] sm:$0xff]
      %v5796 = vld [vmem:[%s4042 + $0x3c9] sm:$0xff]
      %v5797 = vld [vmem:[%s4042 + $0x3d9] sm:$0xff]
      %v5798 = vld [vmem:[%s4042 + $0x3e1] sm:$0xff]
      %v5799 = vld [vmem:[%s4042 + $0x3f1] sm:$0xff]
      %v5800 = vld [vmem:[%s4042 + $0x3f9] sm:$0xff]
      %v5801 = vld [vmem:[%s4042 + $0x409] sm:$0xff]
      %v5802 = vld [vmem:[%s4042 + $0x411] sm:$0xff]
      %v5803 = vld [vmem:[%s4042 + $0x421] sm:$0xff]
      %v5804 = vld [vmem:[%s4042 + $0x429] sm:$0xff]
      %v5805 = vld [vmem:[%s4042 + $0x439] sm:$0xff]
      %v5806 = vld [vmem:[%s4042 + $0x441] sm:$0xff]
      %v5807 = vld [vmem:[%s4042 + $0x451] sm:$0xff]
      %v5808 = vld [vmem:[%s4042 + $0x459] sm:$0xff]
      %v5809 = vld [vmem:[%s4042 + $0x469] sm:$0xff]
      %v5810 = vld [vmem:[%s4042 + $0x471] sm:$0xff]
      %v5811 = vld [vmem:[%s4042 + $0x481] sm:$0xff]
      %v5812 = vld [vmem:[%s4042 + $0x489] sm:$0xff]
      %v5813 = vld [vmem:[%s4042 + $0x499] sm:$0xff]
      %v5814 = vld [vmem:[%s4042 + $0x4a1] sm:$0xff]
      %v5815 = vld [vmem:[%s4042 + $0x4b1] sm:$0xff]
      %v5816 = vld [vmem:[%s4042 + $0x4b9] sm:$0xff]
      %v5817 = vld [vmem:[%s4042 + $0x4c9] sm:$0xff]
      %v5818 = vld [vmem:[%s4042 + $0x4d1] sm:$0xff]
      %v5819 = vld [vmem:[%s4042 + $0x511] sm:$0xff]
      %v5820 = vld [vmem:[%s4042 + $0x519] sm:$0xff]
      %v5821 = vld [vmem:[%s4042 + $0x529] sm:$0xff]
      %v5822 = vld [vmem:[%s4042 + $0x531] sm:$0xff]
      %v5823 = vld [vmem:[%s4042 + $0x541] sm:$0xff]
      %v5824 = vld [vmem:[%s4042 + $0x549] sm:$0xff]
      %v5825 = vld [vmem:[%s4042 + $0x559] sm:$0xff]
      %v5826 = vld [vmem:[%s4042 + $0x561] sm:$0xff]
      %v5827 = vld [vmem:[%s4042 + $0x571] sm:$0xff]
      %v5828 = vld [vmem:[%s4042 + $0x579] sm:$0xff]
      %v5829 = vld [vmem:[%s4042 + $0x589] sm:$0xff]
      %v5830 = vld [vmem:[%s4042 + $0x591] sm:$0xff]
      %v5831 = vld [vmem:[%s4042 + $0x5a1] sm:$0xff]
      %v5832 = vld [vmem:[%s4042 + $0x5a9] sm:$0xff]
      %v5833 = vld [vmem:[%s4042 + $0x5b9] sm:$0xff]
      %v5834 = vld [vmem:[%s4042 + $0x5c1] sm:$0xff]
      %v5835 = vld [vmem:[%s4042 + $0x5d1] sm:$0xff]
      %v5836 = vld [vmem:[%s4042 + $0x5d9] sm:$0xff]
      %v5837 = vld [vmem:[%s4042 + $0x5e9] sm:$0xff]
      %v5838 = vld [vmem:[%s4042 + $0x5f1] sm:$0xff]
      %v5839 = vld [vmem:[%s4042 + $0x601] sm:$0xff]
      %v5840 = vld [vmem:[%s4042 + $0x609] sm:$0xff]
      %v5841 = vld [vmem:[%s4042 + $0x619] sm:$0xff]
      %v5842 = vld [vmem:[%s4042 + $0x621] sm:$0xff]
      %v5843 = vld [vmem:[%s4042 + $0x631] sm:$0xff]
      %v5844 = vld [vmem:[%s4042 + $0x639] sm:$0xff]
      %v5845 = vld [vmem:[%s4042 + $0x649] sm:$0xff]
      %v5846 = vld [vmem:[%s4042 + $0x651] sm:$0xff]
      %v5847 = vld [vmem:[%s4042 + $0x661] sm:$0xff]
      %v5848 = vld [vmem:[%s4042 + $0x669] sm:$0xff]
      %v5849 = vld [vmem:[%s4042 + $0x679] sm:$0xff]
      %v5850 = vld [vmem:[%s4042 + $0x681] sm:$0xff]
      %v5851 = vlaneseq
      %v5852 = vshrl.u32 %v5851, 7
      %v5853 = vsub.s32 4, %v5852
      %v5854 = vrot.slane %v3821, %v5853
      %v5855 = vmul.f32 %v5723, %v5854
      %v5856 = vmul.f32 %v5724, %v5854
      %v5857 = vmul.f32 %v5725, %v5854
      %v5858 = vmul.f32 %v5726, %v5854
      %v5859 = vmul.f32 %v5727, %v5854
      %v5860 = vmul.f32 %v5728, %v5854
      %v5861 = vmul.f32 %v5729, %v5854
      %v5862 = vmul.f32 %v5730, %v5854
      %v5863 = vmul.f32 %v5731, %v5854
      %v5864 = vmul.f32 %v5732, %v5854
      %v5865 = vmul.f32 %v5733, %v5854
      %v5866 = vmul.f32 %v5734, %v5854
      %v5867 = vmul.f32 %v5735, %v5854
      %v5868 = vmul.f32 %v5736, %v5854
      %v5869 = vmul.f32 %v5737, %v5854
      %v5870 = vmul.f32 %v5738, %v5854
      %v5871 = vmul.f32 %v5739, %v5854
      %v5872 = vmul.f32 %v5740, %v5854
      %v5873 = vmul.f32 %v5741, %v5854
      %v5874 = vmul.f32 %v5742, %v5854
      %v5875 = vmul.f32 %v5743, %v5854
      %v5876 = vmul.f32 %v5744, %v5854
      %v5877 = vmul.f32 %v5745, %v5854
      %v5878 = vmul.f32 %v5746, %v5854
      %v5879 = vmul.f32 %v5747, %v5854
      %v5880 = vmul.f32 %v5748, %v5854
      %v5881 = vmul.f32 %v5749, %v5854
      %v5882 = vmul.f32 %v5750, %v5854
      %v5883 = vmul.f32 %v5751, %v5854
      %v5884 = vmul.f32 %v5752, %v5854
      %v5885 = vmul.f32 %v5753, %v5854
      %v5886 = vmul.f32 %v5754, %v5854
      %v5887 = vmul.f32 %v5755, %v5854
      %v5888 = vmul.f32 %v5756, %v5854
      %v5889 = vmul.f32 %v5757, %v5854
      %v5890 = vmul.f32 %v5758, %v5854
      %v5891 = vmul.f32 %v5759, %v5854
      %v5892 = vmul.f32 %v5760, %v5854
      %v5893 = vmul.f32 %v5761, %v5854
      %v5894 = vmul.f32 %v5762, %v5854
      %v5895 = vmul.f32 %v5763, %v5854
      %v5896 = vmul.f32 %v5764, %v5854
      %v5897 = vmul.f32 %v5765, %v5854
      %v5898 = vmul.f32 %v5766, %v5854
      %v5899 = vmul.f32 %v5767, %v5854
      %v5900 = vmul.f32 %v5768, %v5854
      %v5901 = vmul.f32 %v5769, %v5854
      %v5902 = vmul.f32 %v5770, %v5854
      %v5903 = vmul.f32 %v5771, %v5854
      %v5904 = vmul.f32 %v5772, %v5854
      %v5905 = vmul.f32 %v5773, %v5854
      %v5906 = vmul.f32 %v5774, %v5854
      %v5907 = vmul.f32 %v5775, %v5854
      %v5908 = vmul.f32 %v5776, %v5854
      %v5909 = vmul.f32 %v5777, %v5854
      %v5910 = vmul.f32 %v5778, %v5854
      %v5911 = vmul.f32 %v5779, %v5854
      %v5912 = vmul.f32 %v5780, %v5854
      %v5913 = vmul.f32 %v5781, %v5854
      %v5914 = vmul.f32 %v5782, %v5854
      %v5915 = vmul.f32 %v5783, %v5854
      %v5916 = vmul.f32 %v5784, %v5854
      %v5917 = vmul.f32 %v5785, %v5854
      %v5918 = vmul.f32 %v5786, %v5854
      %v5919 = vmul.f32 %v5787, %v5854
      %v5920 = vmul.f32 %v5788, %v5854
      %v5921 = vmul.f32 %v5789, %v5854
      %v5922 = vmul.f32 %v5790, %v5854
      %v5923 = vmul.f32 %v5791, %v5854
      %v5924 = vmul.f32 %v5792, %v5854
      %v5925 = vmul.f32 %v5793, %v5854
      %v5926 = vmul.f32 %v5794, %v5854
      %v5927 = vmul.f32 %v5795, %v5854
      %v5928 = vmul.f32 %v5796, %v5854
      %v5929 = vmul.f32 %v5797, %v5854
      %v5930 = vmul.f32 %v5798, %v5854
      %v5931 = vmul.f32 %v5799, %v5854
      %v5932 = vmul.f32 %v5800, %v5854
      %v5933 = vmul.f32 %v5801, %v5854
      %v5934 = vmul.f32 %v5802, %v5854
      %v5935 = vmul.f32 %v5803, %v5854
      %v5936 = vmul.f32 %v5804, %v5854
      %v5937 = vmul.f32 %v5805, %v5854
      %v5938 = vmul.f32 %v5806, %v5854
      %v5939 = vmul.f32 %v5807, %v5854
      %v5940 = vmul.f32 %v5808, %v5854
      %v5941 = vmul.f32 %v5809, %v5854
      %v5942 = vmul.f32 %v5810, %v5854
      %v5943 = vmul.f32 %v5811, %v5854
      %v5944 = vmul.f32 %v5812, %v5854
      %v5945 = vmul.f32 %v5813, %v5854
      %v5946 = vmul.f32 %v5814, %v5854
      %v5947 = vmul.f32 %v5815, %v5854
      %v5948 = vmul.f32 %v5816, %v5854
      %v5949 = vmul.f32 %v5817, %v5854
      %v5950 = vmul.f32 %v5818, %v5854
      %v5951 = vmul.f32 %v5819, %v5854
      %v5952 = vmul.f32 %v5820, %v5854
      %v5953 = vmul.f32 %v5821, %v5854
      %v5954 = vmul.f32 %v5822, %v5854
      %v5955 = vmul.f32 %v5823, %v5854
      %v5956 = vmul.f32 %v5824, %v5854
      %v5957 = vmul.f32 %v5825, %v5854
      %v5958 = vmul.f32 %v5826, %v5854
      %v5959 = vmul.f32 %v5827, %v5854
      %v5960 = vmul.f32 %v5828, %v5854
      %v5961 = vmul.f32 %v5829, %v5854
      %v5962 = vmul.f32 %v5830, %v5854
      %v5963 = vmul.f32 %v5831, %v5854
      %v5964 = vmul.f32 %v5832, %v5854
      %v5965 = vmul.f32 %v5833, %v5854
      %v5966 = vmul.f32 %v5834, %v5854
      %v5967 = vmul.f32 %v5835, %v5854
      %v5968 = vmul.f32 %v5836, %v5854
      %v5969 = vmul.f32 %v5837, %v5854
      %v5970 = vmul.f32 %v5838, %v5854
      %v5971 = vmul.f32 %v5839, %v5854
      %v5972 = vmul.f32 %v5840, %v5854
      %v5973 = vmul.f32 %v5841, %v5854
      %v5974 = vmul.f32 %v5842, %v5854
      %v5975 = vmul.f32 %v5843, %v5854
      %v5976 = vmul.f32 %v5844, %v5854
      %v5977 = vmul.f32 %v5845, %v5854
      %v5978 = vmul.f32 %v5846, %v5854
      %v5979 = vmul.f32 %v5847, %v5854
      %v5980 = vmul.f32 %v5848, %v5854
      %v5981 = vmul.f32 %v5849, %v5854
      %v5982 = vmul.f32 %v5850, %v5854
      %v5983 = vadd.f32 %v5595, %v5855
      %v5984 = vadd.f32 %v5596, %v5856
      %v5985 = vadd.f32 %v5597, %v5857
      %v5986 = vadd.f32 %v5598, %v5858
      %v5987 = vadd.f32 %v5599, %v5859
      %v5988 = vadd.f32 %v5600, %v5860
      %v5989 = vadd.f32 %v5601, %v5861
      %v5990 = vadd.f32 %v5602, %v5862
      %v5991 = vadd.f32 %v5603, %v5863
      %v5992 = vadd.f32 %v5604, %v5864
      %v5993 = vadd.f32 %v5605, %v5865
      %v5994 = vadd.f32 %v5606, %v5866
      %v5995 = vadd.f32 %v5607, %v5867
      %v5996 = vadd.f32 %v5608, %v5868
      %v5997 = vadd.f32 %v5609, %v5869
      %v5998 = vadd.f32 %v5610, %v5870
      %v5999 = vadd.f32 %v5611, %v5871
      %v6000 = vadd.f32 %v5612, %v5872
      %v6001 = vadd.f32 %v5613, %v5873
      %v6002 = vadd.f32 %v5614, %v5874
      %v6003 = vadd.f32 %v5615, %v5875
      %v6004 = vadd.f32 %v5616, %v5876
      %v6005 = vadd.f32 %v5617, %v5877
      %v6006 = vadd.f32 %v5618, %v5878
      %v6007 = vadd.f32 %v5619, %v5879
      %v6008 = vadd.f32 %v5620, %v5880
      %v6009 = vadd.f32 %v5621, %v5881
      %v6010 = vadd.f32 %v5622, %v5882
      %v6011 = vadd.f32 %v5623, %v5883
      %v6012 = vadd.f32 %v5624, %v5884
      %v6013 = vadd.f32 %v5625, %v5885
      %v6014 = vadd.f32 %v5626, %v5886
      %v6015 = vadd.f32 %v5627, %v5887
      %v6016 = vadd.f32 %v5628, %v5888
      %v6017 = vadd.f32 %v5629, %v5889
      %v6018 = vadd.f32 %v5630, %v5890
      %v6019 = vadd.f32 %v5631, %v5891
      %v6020 = vadd.f32 %v5632, %v5892
      %v6021 = vadd.f32 %v5633, %v5893
      %v6022 = vadd.f32 %v5634, %v5894
      %v6023 = vadd.f32 %v5635, %v5895
      %v6024 = vadd.f32 %v5636, %v5896
      %v6025 = vadd.f32 %v5637, %v5897
      %v6026 = vadd.f32 %v5638, %v5898
      %v6027 = vadd.f32 %v5639, %v5899
      %v6028 = vadd.f32 %v5640, %v5900
      %v6029 = vadd.f32 %v5641, %v5901
      %v6030 = vadd.f32 %v5642, %v5902
      %v6031 = vadd.f32 %v5643, %v5903
      %v6032 = vadd.f32 %v5644, %v5904
      %v6033 = vadd.f32 %v5645, %v5905
      %v6034 = vadd.f32 %v5646, %v5906
      %v6035 = vadd.f32 %v5647, %v5907
      %v6036 = vadd.f32 %v5648, %v5908
      %v6037 = vadd.f32 %v5649, %v5909
      %v6038 = vadd.f32 %v5650, %v5910
      %v6039 = vadd.f32 %v5651, %v5911
      %v6040 = vadd.f32 %v5652, %v5912
      %v6041 = vadd.f32 %v5653, %v5913
      %v6042 = vadd.f32 %v5654, %v5914
      %v6043 = vadd.f32 %v5655, %v5915
      %v6044 = vadd.f32 %v5656, %v5916
      %v6045 = vadd.f32 %v5657, %v5917
      %v6046 = vadd.f32 %v5658, %v5918
      %v6047 = vadd.f32 %v5659, %v5919
      %v6048 = vadd.f32 %v5660, %v5920
      %v6049 = vadd.f32 %v5661, %v5921
      %v6050 = vadd.f32 %v5662, %v5922
      %v6051 = vadd.f32 %v5663, %v5923
      %v6052 = vadd.f32 %v5664, %v5924
      %v6053 = vadd.f32 %v5665, %v5925
      %v6054 = vadd.f32 %v5666, %v5926
      %v6055 = vadd.f32 %v5667, %v5927
      %v6056 = vadd.f32 %v5668, %v5928
      %v6057 = vadd.f32 %v5669, %v5929
      %v6058 = vadd.f32 %v5670, %v5930
      %v6059 = vadd.f32 %v5671, %v5931
      %v6060 = vadd.f32 %v5672, %v5932
      %v6061 = vadd.f32 %v5673, %v5933
      %v6062 = vadd.f32 %v5674, %v5934
      %v6063 = vadd.f32 %v5675, %v5935
      %v6064 = vadd.f32 %v5676, %v5936
      %v6065 = vadd.f32 %v5677, %v5937
      %v6066 = vadd.f32 %v5678, %v5938
      %v6067 = vadd.f32 %v5679, %v5939
      %v6068 = vadd.f32 %v5680, %v5940
      %v6069 = vadd.f32 %v5681, %v5941
      %v6070 = vadd.f32 %v5682, %v5942
      %v6071 = vadd.f32 %v5683, %v5943
      %v6072 = vadd.f32 %v5684, %v5944
      %v6073 = vadd.f32 %v5685, %v5945
      %v6074 = vadd.f32 %v5686, %v5946
      %v6075 = vadd.f32 %v5687, %v5947
      %v6076 = vadd.f32 %v5688, %v5948
      %v6077 = vadd.f32 %v5689, %v5949
      %v6078 = vadd.f32 %v5690, %v5950
      %v6079 = vadd.f32 %v5691, %v5951
      %v6080 = vadd.f32 %v5692, %v5952
      %v6081 = vadd.f32 %v5693, %v5953
      %v6082 = vadd.f32 %v5694, %v5954
      %v6083 = vadd.f32 %v5695, %v5955
      %v6084 = vadd.f32 %v5696, %v5956
      %v6085 = vadd.f32 %v5697, %v5957
      %v6086 = vadd.f32 %v5698, %v5958
      %v6087 = vadd.f32 %v5699, %v5959
      %v6088 = vadd.f32 %v5700, %v5960
      %v6089 = vadd.f32 %v5701, %v5961
      %v6090 = vadd.f32 %v5702, %v5962
      %v6091 = vadd.f32 %v5703, %v5963
      %v6092 = vadd.f32 %v5704, %v5964
      %v6093 = vadd.f32 %v5705, %v5965
      %v6094 = vadd.f32 %v5706, %v5966
      %v6095 = vadd.f32 %v5707, %v5967
      %v6096 = vadd.f32 %v5708, %v5968
      %v6097 = vadd.f32 %v5709, %v5969
      %v6098 = vadd.f32 %v5710, %v5970
      %v6099 = vadd.f32 %v5711, %v5971
      %v6100 = vadd.f32 %v5712, %v5972
      %v6101 = vadd.f32 %v5713, %v5973
      %v6102 = vadd.f32 %v5714, %v5974
      %v6103 = vadd.f32 %v5715, %v5975
      %v6104 = vadd.f32 %v5716, %v5976
      %v6105 = vadd.f32 %v5717, %v5977
      %v6106 = vadd.f32 %v5718, %v5978
      %v6107 = vadd.f32 %v5719, %v5979
      %v6108 = vadd.f32 %v5720, %v5980
      %v6109 = vadd.f32 %v5721, %v5981
      %v6110 = vadd.f32 %v5722, %v5982
      %v6111 = vld [vmem:[%s4042 + $0x2] sm:$0xff]
      %v6112 = vld [vmem:[%s4042 + $0xa] sm:$0xff]
      %v6113 = vld [vmem:[%s4042 + $0x1a] sm:$0xff]
      %v6114 = vld [vmem:[%s4042 + $0x22] sm:$0xff]
      %v6115 = vld [vmem:[%s4042 + $0x32] sm:$0xff]
      %v6116 = vld [vmem:[%s4042 + $0x3a] sm:$0xff]
      %v6117 = vld [vmem:[%s4042 + $0x4a] sm:$0xff]
      %v6118 = vld [vmem:[%s4042 + $0x52] sm:$0xff]
      %v6119 = vld [vmem:[%s4042 + $0x62] sm:$0xff]
      %v6120 = vld [vmem:[%s4042 + $0x6a] sm:$0xff]
      %v6121 = vld [vmem:[%s4042 + $0x7a] sm:$0xff]
      %v6122 = vld [vmem:[%s4042 + $0x82] sm:$0xff]
      %v6123 = vld [vmem:[%s4042 + $0x92] sm:$0xff]
      %v6124 = vld [vmem:[%s4042 + $0x9a] sm:$0xff]
      %v6125 = vld [vmem:[%s4042 + $0xaa] sm:$0xff]
      %v6126 = vld [vmem:[%s4042 + $0xb2] sm:$0xff]
      %v6127 = vld [vmem:[%s4042 + $0xc2] sm:$0xff]
      %v6128 = vld [vmem:[%s4042 + $0xca] sm:$0xff]
      %v6129 = vld [vmem:[%s4042 + $0xda] sm:$0xff]
      %v6130 = vld [vmem:[%s4042 + $0xe2] sm:$0xff]
      %v6131 = vld [vmem:[%s4042 + $0xf2] sm:$0xff]
      %v6132 = vld [vmem:[%s4042 + $0xfa] sm:$0xff]
      %v6133 = vld [vmem:[%s4042 + $0x10a] sm:$0xff]
      %v6134 = vld [vmem:[%s4042 + $0x112] sm:$0xff]
      %v6135 = vld [vmem:[%s4042 + $0x122] sm:$0xff]
      %v6136 = vld [vmem:[%s4042 + $0x12a] sm:$0xff]
      %v6137 = vld [vmem:[%s4042 + $0x13a] sm:$0xff]
      %v6138 = vld [vmem:[%s4042 + $0x142] sm:$0xff]
      %v6139 = vld [vmem:[%s4042 + $0x152] sm:$0xff]
      %v6140 = vld [vmem:[%s4042 + $0x15a] sm:$0xff]
      %v6141 = vld [vmem:[%s4042 + $0x16a] sm:$0xff]
      %v6142 = vld [vmem:[%s4042 + $0x172] sm:$0xff]
      %v6143 = vld [vmem:[%s4042 + $0x1b2] sm:$0xff]
      %v6144 = vld [vmem:[%s4042 + $0x1ba] sm:$0xff]
      %v6145 = vld [vmem:[%s4042 + $0x1ca] sm:$0xff]
      %v6146 = vld [vmem:[%s4042 + $0x1d2] sm:$0xff]
      %v6147 = vld [vmem:[%s4042 + $0x1e2] sm:$0xff]
      %v6148 = vld [vmem:[%s4042 + $0x1ea] sm:$0xff]
      %v6149 = vld [vmem:[%s4042 + $0x1fa] sm:$0xff]
      %v6150 = vld [vmem:[%s4042 + $0x202] sm:$0xff]
      %v6151 = vld [vmem:[%s4042 + $0x212] sm:$0xff]
      %v6152 = vld [vmem:[%s4042 + $0x21a] sm:$0xff]
      %v6153 = vld [vmem:[%s4042 + $0x22a] sm:$0xff]
      %v6154 = vld [vmem:[%s4042 + $0x232] sm:$0xff]
      %v6155 = vld [vmem:[%s4042 + $0x242] sm:$0xff]
      %v6156 = vld [vmem:[%s4042 + $0x24a] sm:$0xff]
      %v6157 = vld [vmem:[%s4042 + $0x25a] sm:$0xff]
      %v6158 = vld [vmem:[%s4042 + $0x262] sm:$0xff]
      %v6159 = vld [vmem:[%s4042 + $0x272] sm:$0xff]
      %v6160 = vld [vmem:[%s4042 + $0x27a] sm:$0xff]
      %v6161 = vld [vmem:[%s4042 + $0x28a] sm:$0xff]
      %v6162 = vld [vmem:[%s4042 + $0x292] sm:$0xff]
      %v6163 = vld [vmem:[%s4042 + $0x2a2] sm:$0xff]
      %v6164 = vld [vmem:[%s4042 + $0x2aa] sm:$0xff]
      %v6165 = vld [vmem:[%s4042 + $0x2ba] sm:$0xff]
      %v6166 = vld [vmem:[%s4042 + $0x2c2] sm:$0xff]
      %v6167 = vld [vmem:[%s4042 + $0x2d2] sm:$0xff]
      %v6168 = vld [vmem:[%s4042 + $0x2da] sm:$0xff]
      %v6169 = vld [vmem:[%s4042 + $0x2ea] sm:$0xff]
      %v6170 = vld [vmem:[%s4042 + $0x2f2] sm:$0xff]
      %v6171 = vld [vmem:[%s4042 + $0x302] sm:$0xff]
      %v6172 = vld [vmem:[%s4042 + $0x30a] sm:$0xff]
      %v6173 = vld [vmem:[%s4042 + $0x31a] sm:$0xff]
      %v6174 = vld [vmem:[%s4042 + $0x322] sm:$0xff]
      %v6175 = vld [vmem:[%s4042 + $0x362] sm:$0xff]
      %v6176 = vld [vmem:[%s4042 + $0x36a] sm:$0xff]
      %v6177 = vld [vmem:[%s4042 + $0x37a] sm:$0xff]
      %v6178 = vld [vmem:[%s4042 + $0x382] sm:$0xff]
      %v6179 = vld [vmem:[%s4042 + $0x392] sm:$0xff]
      %v6180 = vld [vmem:[%s4042 + $0x39a] sm:$0xff]
      %v6181 = vld [vmem:[%s4042 + $0x3aa] sm:$0xff]
      %v6182 = vld [vmem:[%s4042 + $0x3b2] sm:$0xff]
      %v6183 = vld [vmem:[%s4042 + $0x3c2] sm:$0xff]
      %v6184 = vld [vmem:[%s4042 + $0x3ca] sm:$0xff]
      %v6185 = vld [vmem:[%s4042 + $0x3da] sm:$0xff]
      %v6186 = vld [vmem:[%s4042 + $0x3e2] sm:$0xff]
      %v6187 = vld [vmem:[%s4042 + $0x3f2] sm:$0xff]
      %v6188 = vld [vmem:[%s4042 + $0x3fa] sm:$0xff]
      %v6189 = vld [vmem:[%s4042 + $0x40a] sm:$0xff]
      %v6190 = vld [vmem:[%s4042 + $0x412] sm:$0xff]
      %v6191 = vld [vmem:[%s4042 + $0x422] sm:$0xff]
      %v6192 = vld [vmem:[%s4042 + $0x42a] sm:$0xff]
      %v6193 = vld [vmem:[%s4042 + $0x43a] sm:$0xff]
      %v6194 = vld [vmem:[%s4042 + $0x442] sm:$0xff]
      %v6195 = vld [vmem:[%s4042 + $0x452] sm:$0xff]
      %v6196 = vld [vmem:[%s4042 + $0x45a] sm:$0xff]
      %v6197 = vld [vmem:[%s4042 + $0x46a] sm:$0xff]
      %v6198 = vld [vmem:[%s4042 + $0x472] sm:$0xff]
      %v6199 = vld [vmem:[%s4042 + $0x482] sm:$0xff]
      %v6200 = vld [vmem:[%s4042 + $0x48a] sm:$0xff]
      %v6201 = vld [vmem:[%s4042 + $0x49a] sm:$0xff]
      %v6202 = vld [vmem:[%s4042 + $0x4a2] sm:$0xff]
      %v6203 = vld [vmem:[%s4042 + $0x4b2] sm:$0xff]
      %v6204 = vld [vmem:[%s4042 + $0x4ba] sm:$0xff]
      %v6205 = vld [vmem:[%s4042 + $0x4ca] sm:$0xff]
      %v6206 = vld [vmem:[%s4042 + $0x4d2] sm:$0xff]
      %v6207 = vld [vmem:[%s4042 + $0x512] sm:$0xff]
      %v6208 = vld [vmem:[%s4042 + $0x51a] sm:$0xff]
      %v6209 = vld [vmem:[%s4042 + $0x52a] sm:$0xff]
      %v6210 = vld [vmem:[%s4042 + $0x532] sm:$0xff]
      %v6211 = vld [vmem:[%s4042 + $0x542] sm:$0xff]
      %v6212 = vld [vmem:[%s4042 + $0x54a] sm:$0xff]
      %v6213 = vld [vmem:[%s4042 + $0x55a] sm:$0xff]
      %v6214 = vld [vmem:[%s4042 + $0x562] sm:$0xff]
      %v6215 = vld [vmem:[%s4042 + $0x572] sm:$0xff]
      %v6216 = vld [vmem:[%s4042 + $0x57a] sm:$0xff]
      %v6217 = vld [vmem:[%s4042 + $0x58a] sm:$0xff]
      %v6218 = vld [vmem:[%s4042 + $0x592] sm:$0xff]
      %v6219 = vld [vmem:[%s4042 + $0x5a2] sm:$0xff]
      %v6220 = vld [vmem:[%s4042 + $0x5aa] sm:$0xff]
      %v6221 = vld [vmem:[%s4042 + $0x5ba] sm:$0xff]
      %v6222 = vld [vmem:[%s4042 + $0x5c2] sm:$0xff]
      %v6223 = vld [vmem:[%s4042 + $0x5d2] sm:$0xff]
      %v6224 = vld [vmem:[%s4042 + $0x5da] sm:$0xff]
      %v6225 = vld [vmem:[%s4042 + $0x5ea] sm:$0xff]
      %v6226 = vld [vmem:[%s4042 + $0x5f2] sm:$0xff]
      %v6227 = vld [vmem:[%s4042 + $0x602] sm:$0xff]
      %v6228 = vld [vmem:[%s4042 + $0x60a] sm:$0xff]
      %v6229 = vld [vmem:[%s4042 + $0x61a] sm:$0xff]
      %v6230 = vld [vmem:[%s4042 + $0x622] sm:$0xff]
      %v6231 = vld [vmem:[%s4042 + $0x632] sm:$0xff]
      %v6232 = vld [vmem:[%s4042 + $0x63a] sm:$0xff]
      %v6233 = vld [vmem:[%s4042 + $0x64a] sm:$0xff]
      %v6234 = vld [vmem:[%s4042 + $0x652] sm:$0xff]
      %v6235 = vld [vmem:[%s4042 + $0x662] sm:$0xff]
      %v6236 = vld [vmem:[%s4042 + $0x66a] sm:$0xff]
      %v6237 = vld [vmem:[%s4042 + $0x67a] sm:$0xff]
      %v6238 = vld [vmem:[%s4042 + $0x682] sm:$0xff]
      %v6239 = vlaneseq
      %v6240 = vshrl.u32 %v6239, 7
      %v6241 = vsub.s32 5, %v6240
      %v6242 = vrot.slane %v3821, %v6241
      %v6243 = vmul.f32 %v6111, %v6242
      %v6244 = vmul.f32 %v6112, %v6242
      %v6245 = vmul.f32 %v6113, %v6242
      %v6246 = vmul.f32 %v6114, %v6242
      %v6247 = vmul.f32 %v6115, %v6242
      %v6248 = vmul.f32 %v6116, %v6242
      %v6249 = vmul.f32 %v6117, %v6242
      %v6250 = vmul.f32 %v6118, %v6242
      %v6251 = vmul.f32 %v6119, %v6242
      %v6252 = vmul.f32 %v6120, %v6242
      %v6253 = vmul.f32 %v6121, %v6242
      %v6254 = vmul.f32 %v6122, %v6242
      %v6255 = vmul.f32 %v6123, %v6242
      %v6256 = vmul.f32 %v6124, %v6242
      %v6257 = vmul.f32 %v6125, %v6242
      %v6258 = vmul.f32 %v6126, %v6242
      %v6259 = vmul.f32 %v6127, %v6242
      %v6260 = vmul.f32 %v6128, %v6242
      %v6261 = vmul.f32 %v6129, %v6242
      %v6262 = vmul.f32 %v6130, %v6242
      %v6263 = vmul.f32 %v6131, %v6242
      %v6264 = vmul.f32 %v6132, %v6242
      %v6265 = vmul.f32 %v6133, %v6242
      %v6266 = vmul.f32 %v6134, %v6242
      %v6267 = vmul.f32 %v6135, %v6242
      %v6268 = vmul.f32 %v6136, %v6242
      %v6269 = vmul.f32 %v6137, %v6242
      %v6270 = vmul.f32 %v6138, %v6242
      %v6271 = vmul.f32 %v6139, %v6242
      %v6272 = vmul.f32 %v6140, %v6242
      %v6273 = vmul.f32 %v6141, %v6242
      %v6274 = vmul.f32 %v6142, %v6242
      %v6275 = vmul.f32 %v6143, %v6242
      %v6276 = vmul.f32 %v6144, %v6242
      %v6277 = vmul.f32 %v6145, %v6242
      %v6278 = vmul.f32 %v6146, %v6242
      %v6279 = vmul.f32 %v6147, %v6242
      %v6280 = vmul.f32 %v6148, %v6242
      %v6281 = vmul.f32 %v6149, %v6242
      %v6282 = vmul.f32 %v6150, %v6242
      %v6283 = vmul.f32 %v6151, %v6242
      %v6284 = vmul.f32 %v6152, %v6242
      %v6285 = vmul.f32 %v6153, %v6242
      %v6286 = vmul.f32 %v6154, %v6242
      %v6287 = vmul.f32 %v6155, %v6242
      %v6288 = vmul.f32 %v6156, %v6242
      %v6289 = vmul.f32 %v6157, %v6242
      %v6290 = vmul.f32 %v6158, %v6242
      %v6291 = vmul.f32 %v6159, %v6242
      %v6292 = vmul.f32 %v6160, %v6242
      %v6293 = vmul.f32 %v6161, %v6242
      %v6294 = vmul.f32 %v6162, %v6242
      %v6295 = vmul.f32 %v6163, %v6242
      %v6296 = vmul.f32 %v6164, %v6242
      %v6297 = vmul.f32 %v6165, %v6242
      %v6298 = vmul.f32 %v6166, %v6242
      %v6299 = vmul.f32 %v6167, %v6242
      %v6300 = vmul.f32 %v6168, %v6242
      %v6301 = vmul.f32 %v6169, %v6242
      %v6302 = vmul.f32 %v6170, %v6242
      %v6303 = vmul.f32 %v6171, %v6242
      %v6304 = vmul.f32 %v6172, %v6242
      %v6305 = vmul.f32 %v6173, %v6242
      %v6306 = vmul.f32 %v6174, %v6242
      %v6307 = vmul.f32 %v6175, %v6242
      %v6308 = vmul.f32 %v6176, %v6242
      %v6309 = vmul.f32 %v6177, %v6242
      %v6310 = vmul.f32 %v6178, %v6242
      %v6311 = vmul.f32 %v6179, %v6242
      %v6312 = vmul.f32 %v6180, %v6242
      %v6313 = vmul.f32 %v6181, %v6242
      %v6314 = vmul.f32 %v6182, %v6242
      %v6315 = vmul.f32 %v6183, %v6242
      %v6316 = vmul.f32 %v6184, %v6242
      %v6317 = vmul.f32 %v6185, %v6242
      %v6318 = vmul.f32 %v6186, %v6242
      %v6319 = vmul.f32 %v6187, %v6242
      %v6320 = vmul.f32 %v6188, %v6242
      %v6321 = vmul.f32 %v6189, %v6242
      %v6322 = vmul.f32 %v6190, %v6242
      %v6323 = vmul.f32 %v6191, %v6242
      %v6324 = vmul.f32 %v6192, %v6242
      %v6325 = vmul.f32 %v6193, %v6242
      %v6326 = vmul.f32 %v6194, %v6242
      %v6327 = vmul.f32 %v6195, %v6242
      %v6328 = vmul.f32 %v6196, %v6242
      %v6329 = vmul.f32 %v6197, %v6242
      %v6330 = vmul.f32 %v6198, %v6242
      %v6331 = vmul.f32 %v6199, %v6242
      %v6332 = vmul.f32 %v6200, %v6242
      %v6333 = vmul.f32 %v6201, %v6242
      %v6334 = vmul.f32 %v6202, %v6242
      %v6335 = vmul.f32 %v6203, %v6242
      %v6336 = vmul.f32 %v6204, %v6242
      %v6337 = vmul.f32 %v6205, %v6242
      %v6338 = vmul.f32 %v6206, %v6242
      %v6339 = vmul.f32 %v6207, %v6242
      %v6340 = vmul.f32 %v6208, %v6242
      %v6341 = vmul.f32 %v6209, %v6242
      %v6342 = vmul.f32 %v6210, %v6242
      %v6343 = vmul.f32 %v6211, %v6242
      %v6344 = vmul.f32 %v6212, %v6242
      %v6345 = vmul.f32 %v6213, %v6242
      %v6346 = vmul.f32 %v6214, %v6242
      %v6347 = vmul.f32 %v6215, %v6242
      %v6348 = vmul.f32 %v6216, %v6242
      %v6349 = vmul.f32 %v6217, %v6242
      %v6350 = vmul.f32 %v6218, %v6242
      %v6351 = vmul.f32 %v6219, %v6242
      %v6352 = vmul.f32 %v6220, %v6242
      %v6353 = vmul.f32 %v6221, %v6242
      %v6354 = vmul.f32 %v6222, %v6242
      %v6355 = vmul.f32 %v6223, %v6242
      %v6356 = vmul.f32 %v6224, %v6242
      %v6357 = vmul.f32 %v6225, %v6242
      %v6358 = vmul.f32 %v6226, %v6242
      %v6359 = vmul.f32 %v6227, %v6242
      %v6360 = vmul.f32 %v6228, %v6242
      %v6361 = vmul.f32 %v6229, %v6242
      %v6362 = vmul.f32 %v6230, %v6242
      %v6363 = vmul.f32 %v6231, %v6242
      %v6364 = vmul.f32 %v6232, %v6242
      %v6365 = vmul.f32 %v6233, %v6242
      %v6366 = vmul.f32 %v6234, %v6242
      %v6367 = vmul.f32 %v6235, %v6242
      %v6368 = vmul.f32 %v6236, %v6242
      %v6369 = vmul.f32 %v6237, %v6242
      %v6370 = vmul.f32 %v6238, %v6242
      %v6371 = vadd.f32 %v5983, %v6243
      %v6372 = vadd.f32 %v5984, %v6244
      %v6373 = vadd.f32 %v5985, %v6245
      %v6374 = vadd.f32 %v5986, %v6246
      %v6375 = vadd.f32 %v5987, %v6247
      %v6376 = vadd.f32 %v5988, %v6248
      %v6377 = vadd.f32 %v5989, %v6249
      %v6378 = vadd.f32 %v5990, %v6250
      %v6379 = vadd.f32 %v5991, %v6251
      %v6380 = vadd.f32 %v5992, %v6252
      %v6381 = vadd.f32 %v5993, %v6253
      %v6382 = vadd.f32 %v5994, %v6254
      %v6383 = vadd.f32 %v5995, %v6255
      %v6384 = vadd.f32 %v5996, %v6256
      %v6385 = vadd.f32 %v5997, %v6257
      %v6386 = vadd.f32 %v5998, %v6258
      %v6387 = vadd.f32 %v5999, %v6259
      %v6388 = vadd.f32 %v6000, %v6260
      %v6389 = vadd.f32 %v6001, %v6261
      %v6390 = vadd.f32 %v6002, %v6262
      %v6391 = vadd.f32 %v6003, %v6263
      %v6392 = vadd.f32 %v6004, %v6264
      %v6393 = vadd.f32 %v6005, %v6265
      %v6394 = vadd.f32 %v6006, %v6266
      %v6395 = vadd.f32 %v6007, %v6267
      %v6396 = vadd.f32 %v6008, %v6268
      %v6397 = vadd.f32 %v6009, %v6269
      %v6398 = vadd.f32 %v6010, %v6270
      %v6399 = vadd.f32 %v6011, %v6271
      %v6400 = vadd.f32 %v6012, %v6272
      %v6401 = vadd.f32 %v6013, %v6273
      %v6402 = vadd.f32 %v6014, %v6274
      %v6403 = vadd.f32 %v6015, %v6275
      %v6404 = vadd.f32 %v6016, %v6276
      %v6405 = vadd.f32 %v6017, %v6277
      %v6406 = vadd.f32 %v6018, %v6278
      %v6407 = vadd.f32 %v6019, %v6279
      %v6408 = vadd.f32 %v6020, %v6280
      %v6409 = vadd.f32 %v6021, %v6281
      %v6410 = vadd.f32 %v6022, %v6282
      %v6411 = vadd.f32 %v6023, %v6283
      %v6412 = vadd.f32 %v6024, %v6284
      %v6413 = vadd.f32 %v6025, %v6285
      %v6414 = vadd.f32 %v6026, %v6286
      %v6415 = vadd.f32 %v6027, %v6287
      %v6416 = vadd.f32 %v6028, %v6288
      %v6417 = vadd.f32 %v6029, %v6289
      %v6418 = vadd.f32 %v6030, %v6290
      %v6419 = vadd.f32 %v6031, %v6291
      %v6420 = vadd.f32 %v6032, %v6292
      %v6421 = vadd.f32 %v6033, %v6293
      %v6422 = vadd.f32 %v6034, %v6294
      %v6423 = vadd.f32 %v6035, %v6295
      %v6424 = vadd.f32 %v6036, %v6296
      %v6425 = vadd.f32 %v6037, %v6297
      %v6426 = vadd.f32 %v6038, %v6298
      %v6427 = vadd.f32 %v6039, %v6299
      %v6428 = vadd.f32 %v6040, %v6300
      %v6429 = vadd.f32 %v6041, %v6301
      %v6430 = vadd.f32 %v6042, %v6302
      %v6431 = vadd.f32 %v6043, %v6303
      %v6432 = vadd.f32 %v6044, %v6304
      %v6433 = vadd.f32 %v6045, %v6305
      %v6434 = vadd.f32 %v6046, %v6306
      %v6435 = vadd.f32 %v6047, %v6307
      %v6436 = vadd.f32 %v6048, %v6308
      %v6437 = vadd.f32 %v6049, %v6309
      %v6438 = vadd.f32 %v6050, %v6310
      %v6439 = vadd.f32 %v6051, %v6311
      %v6440 = vadd.f32 %v6052, %v6312
      %v6441 = vadd.f32 %v6053, %v6313
      %v6442 = vadd.f32 %v6054, %v6314
      %v6443 = vadd.f32 %v6055, %v6315
      %v6444 = vadd.f32 %v6056, %v6316
      %v6445 = vadd.f32 %v6057, %v6317
      %v6446 = vadd.f32 %v6058, %v6318
      %v6447 = vadd.f32 %v6059, %v6319
      %v6448 = vadd.f32 %v6060, %v6320
      %v6449 = vadd.f32 %v6061, %v6321
      %v6450 = vadd.f32 %v6062, %v6322
      %v6451 = vadd.f32 %v6063, %v6323
      %v6452 = vadd.f32 %v6064, %v6324
      %v6453 = vadd.f32 %v6065, %v6325
      %v6454 = vadd.f32 %v6066, %v6326
      %v6455 = vadd.f32 %v6067, %v6327
      %v6456 = vadd.f32 %v6068, %v6328
      %v6457 = vadd.f32 %v6069, %v6329
      %v6458 = vadd.f32 %v6070, %v6330
      %v6459 = vadd.f32 %v6071, %v6331
      %v6460 = vadd.f32 %v6072, %v6332
      %v6461 = vadd.f32 %v6073, %v6333
      %v6462 = vadd.f32 %v6074, %v6334
      %v6463 = vadd.f32 %v6075, %v6335
      %v6464 = vadd.f32 %v6076, %v6336
      %v6465 = vadd.f32 %v6077, %v6337
      %v6466 = vadd.f32 %v6078, %v6338
      %v6467 = vadd.f32 %v6079, %v6339
      %v6468 = vadd.f32 %v6080, %v6340
      %v6469 = vadd.f32 %v6081, %v6341
      %v6470 = vadd.f32 %v6082, %v6342
      %v6471 = vadd.f32 %v6083, %v6343
      %v6472 = vadd.f32 %v6084, %v6344
      %v6473 = vadd.f32 %v6085, %v6345
      %v6474 = vadd.f32 %v6086, %v6346
      %v6475 = vadd.f32 %v6087, %v6347
      %v6476 = vadd.f32 %v6088, %v6348
      %v6477 = vadd.f32 %v6089, %v6349
      %v6478 = vadd.f32 %v6090, %v6350
      %v6479 = vadd.f32 %v6091, %v6351
      %v6480 = vadd.f32 %v6092, %v6352
      %v6481 = vadd.f32 %v6093, %v6353
      %v6482 = vadd.f32 %v6094, %v6354
      %v6483 = vadd.f32 %v6095, %v6355
      %v6484 = vadd.f32 %v6096, %v6356
      %v6485 = vadd.f32 %v6097, %v6357
      %v6486 = vadd.f32 %v6098, %v6358
      %v6487 = vadd.f32 %v6099, %v6359
      %v6488 = vadd.f32 %v6100, %v6360
      %v6489 = vadd.f32 %v6101, %v6361
      %v6490 = vadd.f32 %v6102, %v6362
      %v6491 = vadd.f32 %v6103, %v6363
      %v6492 = vadd.f32 %v6104, %v6364
      %v6493 = vadd.f32 %v6105, %v6365
      %v6494 = vadd.f32 %v6106, %v6366
      %v6495 = vadd.f32 %v6107, %v6367
      %v6496 = vadd.f32 %v6108, %v6368
      %v6497 = vadd.f32 %v6109, %v6369
      %v6498 = vadd.f32 %v6110, %v6370
      %s6499 = scalar_lea.vmem [#allocation2], 48
      %v6500 = vld [vmem:[%s6499] sm:$0xff]
      %v6501 = vld [vmem:[%s6499 + $0x8] sm:$0xff]
      %v6502 = vld [vmem:[%s6499 + $0x18] sm:$0xff]
      %v6503 = vld [vmem:[%s6499 + $0x20] sm:$0xff]
      %v6504 = vld [vmem:[%s6499 + $0x30] sm:$0xff]
      %v6505 = vld [vmem:[%s6499 + $0x38] sm:$0xff]
      %v6506 = vld [vmem:[%s6499 + $0x48] sm:$0xff]
      %v6507 = vld [vmem:[%s6499 + $0x50] sm:$0xff]
      %v6508 = vld [vmem:[%s6499 + $0x60] sm:$0xff]
      %v6509 = vld [vmem:[%s6499 + $0x68] sm:$0xff]
      %v6510 = vld [vmem:[%s6499 + $0x78] sm:$0xff]
      %v6511 = vld [vmem:[%s6499 + $0x80] sm:$0xff]
      %v6512 = vld [vmem:[%s6499 + $0x90] sm:$0xff]
      %v6513 = vld [vmem:[%s6499 + $0x98] sm:$0xff]
      %v6514 = vld [vmem:[%s6499 + $0xa8] sm:$0xff]
      %v6515 = vld [vmem:[%s6499 + $0xb0] sm:$0xff]
      %v6516 = vld [vmem:[%s6499 + $0xc0] sm:$0xff]
      %v6517 = vld [vmem:[%s6499 + $0xc8] sm:$0xff]
      %v6518 = vld [vmem:[%s6499 + $0xd8] sm:$0xff]
      %v6519 = vld [vmem:[%s6499 + $0xe0] sm:$0xff]
      %v6520 = vld [vmem:[%s6499 + $0xf0] sm:$0xff]
      %v6521 = vld [vmem:[%s6499 + $0xf8] sm:$0xff]
      %v6522 = vld [vmem:[%s6499 + $0x108] sm:$0xff]
      %v6523 = vld [vmem:[%s6499 + $0x110] sm:$0xff]
      %v6524 = vld [vmem:[%s6499 + $0x120] sm:$0xff]
      %v6525 = vld [vmem:[%s6499 + $0x128] sm:$0xff]
      %v6526 = vld [vmem:[%s6499 + $0x138] sm:$0xff]
      %v6527 = vld [vmem:[%s6499 + $0x140] sm:$0xff]
      %v6528 = vld [vmem:[%s6499 + $0x150] sm:$0xff]
      %v6529 = vld [vmem:[%s6499 + $0x158] sm:$0xff]
      %v6530 = vld [vmem:[%s6499 + $0x168] sm:$0xff]
      %v6531 = vld [vmem:[%s6499 + $0x170] sm:$0xff]
      %v6532 = vld [vmem:[%s6499 + $0x1b0] sm:$0xff]
      %v6533 = vld [vmem:[%s6499 + $0x1b8] sm:$0xff]
      %v6534 = vld [vmem:[%s6499 + $0x1c8] sm:$0xff]
      %v6535 = vld [vmem:[%s6499 + $0x1d0] sm:$0xff]
      %v6536 = vld [vmem:[%s6499 + $0x1e0] sm:$0xff]
      %v6537 = vld [vmem:[%s6499 + $0x1e8] sm:$0xff]
      %v6538 = vld [vmem:[%s6499 + $0x1f8] sm:$0xff]
      %v6539 = vld [vmem:[%s6499 + $0x200] sm:$0xff]
      %v6540 = vld [vmem:[%s6499 + $0x210] sm:$0xff]
      %v6541 = vld [vmem:[%s6499 + $0x218] sm:$0xff]
      %v6542 = vld [vmem:[%s6499 + $0x228] sm:$0xff]
      %v6543 = vld [vmem:[%s6499 + $0x230] sm:$0xff]
      %v6544 = vld [vmem:[%s6499 + $0x240] sm:$0xff]
      %v6545 = vld [vmem:[%s6499 + $0x248] sm:$0xff]
      %v6546 = vld [vmem:[%s6499 + $0x258] sm:$0xff]
      %v6547 = vld [vmem:[%s6499 + $0x260] sm:$0xff]
      %v6548 = vld [vmem:[%s6499 + $0x270] sm:$0xff]
      %v6549 = vld [vmem:[%s6499 + $0x278] sm:$0xff]
      %v6550 = vld [vmem:[%s6499 + $0x288] sm:$0xff]
      %v6551 = vld [vmem:[%s6499 + $0x290] sm:$0xff]
      %v6552 = vld [vmem:[%s6499 + $0x2a0] sm:$0xff]
      %v6553 = vld [vmem:[%s6499 + $0x2a8] sm:$0xff]
      %v6554 = vld [vmem:[%s6499 + $0x2b8] sm:$0xff]
      %v6555 = vld [vmem:[%s6499 + $0x2c0] sm:$0xff]
      %v6556 = vld [vmem:[%s6499 + $0x2d0] sm:$0xff]
      %v6557 = vld [vmem:[%s6499 + $0x2d8] sm:$0xff]
      %v6558 = vld [vmem:[%s6499 + $0x2e8] sm:$0xff]
      %v6559 = vld [vmem:[%s6499 + $0x2f0] sm:$0xff]
      %v6560 = vld [vmem:[%s6499 + $0x300] sm:$0xff]
      %v6561 = vld [vmem:[%s6499 + $0x308] sm:$0xff]
      %v6562 = vld [vmem:[%s6499 + $0x318] sm:$0xff]
      %v6563 = vld [vmem:[%s6499 + $0x320] sm:$0xff]
      %v6564 = vld [vmem:[%s6499 + $0x360] sm:$0xff]
      %v6565 = vld [vmem:[%s6499 + $0x368] sm:$0xff]
      %v6566 = vld [vmem:[%s6499 + $0x378] sm:$0xff]
      %v6567 = vld [vmem:[%s6499 + $0x380] sm:$0xff]
      %v6568 = vld [vmem:[%s6499 + $0x390] sm:$0xff]
      %v6569 = vld [vmem:[%s6499 + $0x398] sm:$0xff]
      %v6570 = vld [vmem:[%s6499 + $0x3a8] sm:$0xff]
      %v6571 = vld [vmem:[%s6499 + $0x3b0] sm:$0xff]
      %v6572 = vld [vmem:[%s6499 + $0x3c0] sm:$0xff]
      %v6573 = vld [vmem:[%s6499 + $0x3c8] sm:$0xff]
      %v6574 = vld [vmem:[%s6499 + $0x3d8] sm:$0xff]
      %v6575 = vld [vmem:[%s6499 + $0x3e0] sm:$0xff]
      %v6576 = vld [vmem:[%s6499 + $0x3f0] sm:$0xff]
      %v6577 = vld [vmem:[%s6499 + $0x3f8] sm:$0xff]
      %v6578 = vld [vmem:[%s6499 + $0x408] sm:$0xff]
      %v6579 = vld [vmem:[%s6499 + $0x410] sm:$0xff]
      %v6580 = vld [vmem:[%s6499 + $0x420] sm:$0xff]
      %v6581 = vld [vmem:[%s6499 + $0x428] sm:$0xff]
      %v6582 = vld [vmem:[%s6499 + $0x438] sm:$0xff]
      %v6583 = vld [vmem:[%s6499 + $0x440] sm:$0xff]
      %v6584 = vld [vmem:[%s6499 + $0x450] sm:$0xff]
      %v6585 = vld [vmem:[%s6499 + $0x458] sm:$0xff]
      %v6586 = vld [vmem:[%s6499 + $0x468] sm:$0xff]
      %v6587 = vld [vmem:[%s6499 + $0x470] sm:$0xff]
      %v6588 = vld [vmem:[%s6499 + $0x480] sm:$0xff]
      %v6589 = vld [vmem:[%s6499 + $0x488] sm:$0xff]
      %v6590 = vld [vmem:[%s6499 + $0x498] sm:$0xff]
      %v6591 = vld [vmem:[%s6499 + $0x4a0] sm:$0xff]
      %v6592 = vld [vmem:[%s6499 + $0x4b0] sm:$0xff]
      %v6593 = vld [vmem:[%s6499 + $0x4b8] sm:$0xff]
      %v6594 = vld [vmem:[%s6499 + $0x4c8] sm:$0xff]
      %v6595 = vld [vmem:[%s6499 + $0x4d0] sm:$0xff]
      %v6596 = vld [vmem:[%s6499 + $0x510] sm:$0xff]
      %v6597 = vld [vmem:[%s6499 + $0x518] sm:$0xff]
      %v6598 = vld [vmem:[%s6499 + $0x528] sm:$0xff]
      %v6599 = vld [vmem:[%s6499 + $0x530] sm:$0xff]
      %v6600 = vld [vmem:[%s6499 + $0x540] sm:$0xff]
      %v6601 = vld [vmem:[%s6499 + $0x548] sm:$0xff]
      %v6602 = vld [vmem:[%s6499 + $0x558] sm:$0xff]
      %v6603 = vld [vmem:[%s6499 + $0x560] sm:$0xff]
      %v6604 = vld [vmem:[%s6499 + $0x570] sm:$0xff]
      %v6605 = vld [vmem:[%s6499 + $0x578] sm:$0xff]
      %v6606 = vld [vmem:[%s6499 + $0x588] sm:$0xff]
      %v6607 = vld [vmem:[%s6499 + $0x590] sm:$0xff]
      %v6608 = vld [vmem:[%s6499 + $0x5a0] sm:$0xff]
      %v6609 = vld [vmem:[%s6499 + $0x5a8] sm:$0xff]
      %v6610 = vld [vmem:[%s6499 + $0x5b8] sm:$0xff]
      %v6611 = vld [vmem:[%s6499 + $0x5c0] sm:$0xff]
      %v6612 = vld [vmem:[%s6499 + $0x5d0] sm:$0xff]
      %v6613 = vld [vmem:[%s6499 + $0x5d8] sm:$0xff]
      %v6614 = vld [vmem:[%s6499 + $0x5e8] sm:$0xff]
      %v6615 = vld [vmem:[%s6499 + $0x5f0] sm:$0xff]
      %v6616 = vld [vmem:[%s6499 + $0x600] sm:$0xff]
      %v6617 = vld [vmem:[%s6499 + $0x608] sm:$0xff]
      %v6618 = vld [vmem:[%s6499 + $0x618] sm:$0xff]
      %v6619 = vld [vmem:[%s6499 + $0x620] sm:$0xff]
      %v6620 = vld [vmem:[%s6499 + $0x630] sm:$0xff]
      %v6621 = vld [vmem:[%s6499 + $0x638] sm:$0xff]
      %v6622 = vld [vmem:[%s6499 + $0x648] sm:$0xff]
      %v6623 = vld [vmem:[%s6499 + $0x650] sm:$0xff]
      %v6624 = vld [vmem:[%s6499 + $0x660] sm:$0xff]
      %v6625 = vld [vmem:[%s6499 + $0x668] sm:$0xff]
      %v6626 = vld [vmem:[%s6499 + $0x678] sm:$0xff]
      %v6627 = vld [vmem:[%s6499 + $0x680] sm:$0xff]
      %v6628 = vlaneseq
      %v6629 = vshrl.u32 %v6628, 7
      %v6630 = vsub.s32 6, %v6629
      %v6631 = vrot.slane %v3821, %v6630
      %v6632 = vmul.f32 %v6500, %v6631
      %v6633 = vmul.f32 %v6501, %v6631
      %v6634 = vmul.f32 %v6502, %v6631
      %v6635 = vmul.f32 %v6503, %v6631
      %v6636 = vmul.f32 %v6504, %v6631
      %v6637 = vmul.f32 %v6505, %v6631
      %v6638 = vmul.f32 %v6506, %v6631
      %v6639 = vmul.f32 %v6507, %v6631
      %v6640 = vmul.f32 %v6508, %v6631
      %v6641 = vmul.f32 %v6509, %v6631
      %v6642 = vmul.f32 %v6510, %v6631
      %v6643 = vmul.f32 %v6511, %v6631
      %v6644 = vmul.f32 %v6512, %v6631
      %v6645 = vmul.f32 %v6513, %v6631
      %v6646 = vmul.f32 %v6514, %v6631
      %v6647 = vmul.f32 %v6515, %v6631
      %v6648 = vmul.f32 %v6516, %v6631
      %v6649 = vmul.f32 %v6517, %v6631
      %v6650 = vmul.f32 %v6518, %v6631
      %v6651 = vmul.f32 %v6519, %v6631
      %v6652 = vmul.f32 %v6520, %v6631
      %v6653 = vmul.f32 %v6521, %v6631
      %v6654 = vmul.f32 %v6522, %v6631
      %v6655 = vmul.f32 %v6523, %v6631
      %v6656 = vmul.f32 %v6524, %v6631
      %v6657 = vmul.f32 %v6525, %v6631
      %v6658 = vmul.f32 %v6526, %v6631
      %v6659 = vmul.f32 %v6527, %v6631
      %v6660 = vmul.f32 %v6528, %v6631
      %v6661 = vmul.f32 %v6529, %v6631
      %v6662 = vmul.f32 %v6530, %v6631
      %v6663 = vmul.f32 %v6531, %v6631
      %v6664 = vmul.f32 %v6532, %v6631
      %v6665 = vmul.f32 %v6533, %v6631
      %v6666 = vmul.f32 %v6534, %v6631
      %v6667 = vmul.f32 %v6535, %v6631
      %v6668 = vmul.f32 %v6536, %v6631
      %v6669 = vmul.f32 %v6537, %v6631
      %v6670 = vmul.f32 %v6538, %v6631
      %v6671 = vmul.f32 %v6539, %v6631
      %v6672 = vmul.f32 %v6540, %v6631
      %v6673 = vmul.f32 %v6541, %v6631
      %v6674 = vmul.f32 %v6542, %v6631
      %v6675 = vmul.f32 %v6543, %v6631
      %v6676 = vmul.f32 %v6544, %v6631
      %v6677 = vmul.f32 %v6545, %v6631
      %v6678 = vmul.f32 %v6546, %v6631
      %v6679 = vmul.f32 %v6547, %v6631
      %v6680 = vmul.f32 %v6548, %v6631
      %v6681 = vmul.f32 %v6549, %v6631
      %v6682 = vmul.f32 %v6550, %v6631
      %v6683 = vmul.f32 %v6551, %v6631
      %v6684 = vmul.f32 %v6552, %v6631
      %v6685 = vmul.f32 %v6553, %v6631
      %v6686 = vmul.f32 %v6554, %v6631
      %v6687 = vmul.f32 %v6555, %v6631
      %v6688 = vmul.f32 %v6556, %v6631
      %v6689 = vmul.f32 %v6557, %v6631
      %v6690 = vmul.f32 %v6558, %v6631
      %v6691 = vmul.f32 %v6559, %v6631
      %v6692 = vmul.f32 %v6560, %v6631
      %v6693 = vmul.f32 %v6561, %v6631
      %v6694 = vmul.f32 %v6562, %v6631
      %v6695 = vmul.f32 %v6563, %v6631
      %v6696 = vmul.f32 %v6564, %v6631
      %v6697 = vmul.f32 %v6565, %v6631
      %v6698 = vmul.f32 %v6566, %v6631
      %v6699 = vmul.f32 %v6567, %v6631
      %v6700 = vmul.f32 %v6568, %v6631
      %v6701 = vmul.f32 %v6569, %v6631
      %v6702 = vmul.f32 %v6570, %v6631
      %v6703 = vmul.f32 %v6571, %v6631
      %v6704 = vmul.f32 %v6572, %v6631
      %v6705 = vmul.f32 %v6573, %v6631
      %v6706 = vmul.f32 %v6574, %v6631
      %v6707 = vmul.f32 %v6575, %v6631
      %v6708 = vmul.f32 %v6576, %v6631
      %v6709 = vmul.f32 %v6577, %v6631
      %v6710 = vmul.f32 %v6578, %v6631
      %v6711 = vmul.f32 %v6579, %v6631
      %v6712 = vmul.f32 %v6580, %v6631
      %v6713 = vmul.f32 %v6581, %v6631
      %v6714 = vmul.f32 %v6582, %v6631
      %v6715 = vmul.f32 %v6583, %v6631
      %v6716 = vmul.f32 %v6584, %v6631
      %v6717 = vmul.f32 %v6585, %v6631
      %v6718 = vmul.f32 %v6586, %v6631
      %v6719 = vmul.f32 %v6587, %v6631
      %v6720 = vmul.f32 %v6588, %v6631
      %v6721 = vmul.f32 %v6589, %v6631
      %v6722 = vmul.f32 %v6590, %v6631
      %v6723 = vmul.f32 %v6591, %v6631
      %v6724 = vmul.f32 %v6592, %v6631
      %v6725 = vmul.f32 %v6593, %v6631
      %v6726 = vmul.f32 %v6594, %v6631
      %v6727 = vmul.f32 %v6595, %v6631
      %v6728 = vmul.f32 %v6596, %v6631
      %v6729 = vmul.f32 %v6597, %v6631
      %v6730 = vmul.f32 %v6598, %v6631
      %v6731 = vmul.f32 %v6599, %v6631
      %v6732 = vmul.f32 %v6600, %v6631
      %v6733 = vmul.f32 %v6601, %v6631
      %v6734 = vmul.f32 %v6602, %v6631
      %v6735 = vmul.f32 %v6603, %v6631
      %v6736 = vmul.f32 %v6604, %v6631
      %v6737 = vmul.f32 %v6605, %v6631
      %v6738 = vmul.f32 %v6606, %v6631
      %v6739 = vmul.f32 %v6607, %v6631
      %v6740 = vmul.f32 %v6608, %v6631
      %v6741 = vmul.f32 %v6609, %v6631
      %v6742 = vmul.f32 %v6610, %v6631
      %v6743 = vmul.f32 %v6611, %v6631
      %v6744 = vmul.f32 %v6612, %v6631
      %v6745 = vmul.f32 %v6613, %v6631
      %v6746 = vmul.f32 %v6614, %v6631
      %v6747 = vmul.f32 %v6615, %v6631
      %v6748 = vmul.f32 %v6616, %v6631
      %v6749 = vmul.f32 %v6617, %v6631
      %v6750 = vmul.f32 %v6618, %v6631
      %v6751 = vmul.f32 %v6619, %v6631
      %v6752 = vmul.f32 %v6620, %v6631
      %v6753 = vmul.f32 %v6621, %v6631
      %v6754 = vmul.f32 %v6622, %v6631
      %v6755 = vmul.f32 %v6623, %v6631
      %v6756 = vmul.f32 %v6624, %v6631
      %v6757 = vmul.f32 %v6625, %v6631
      %v6758 = vmul.f32 %v6626, %v6631
      %v6759 = vmul.f32 %v6627, %v6631
      %v6760 = vadd.f32 %v6371, %v6632
      %v6761 = vadd.f32 %v6372, %v6633
      %v6762 = vadd.f32 %v6373, %v6634
      %v6763 = vadd.f32 %v6374, %v6635
      %v6764 = vadd.f32 %v6375, %v6636
      %v6765 = vadd.f32 %v6376, %v6637
      %v6766 = vadd.f32 %v6377, %v6638
      %v6767 = vadd.f32 %v6378, %v6639
      %v6768 = vadd.f32 %v6379, %v6640
      %v6769 = vadd.f32 %v6380, %v6641
      %v6770 = vadd.f32 %v6381, %v6642
      %v6771 = vadd.f32 %v6382, %v6643
      %v6772 = vadd.f32 %v6383, %v6644
      %v6773 = vadd.f32 %v6384, %v6645
      %v6774 = vadd.f32 %v6385, %v6646
      %v6775 = vadd.f32 %v6386, %v6647
      %v6776 = vadd.f32 %v6387, %v6648
      %v6777 = vadd.f32 %v6388, %v6649
      %v6778 = vadd.f32 %v6389, %v6650
      %v6779 = vadd.f32 %v6390, %v6651
      %v6780 = vadd.f32 %v6391, %v6652
      %v6781 = vadd.f32 %v6392, %v6653
      %v6782 = vadd.f32 %v6393, %v6654
      %v6783 = vadd.f32 %v6394, %v6655
      %v6784 = vadd.f32 %v6395, %v6656
      %v6785 = vadd.f32 %v6396, %v6657
      %v6786 = vadd.f32 %v6397, %v6658
      %v6787 = vadd.f32 %v6398, %v6659
      %v6788 = vadd.f32 %v6399, %v6660
      %v6789 = vadd.f32 %v6400, %v6661
      %v6790 = vadd.f32 %v6401, %v6662
      %v6791 = vadd.f32 %v6402, %v6663
      %v6792 = vadd.f32 %v6403, %v6664
      %v6793 = vadd.f32 %v6404, %v6665
      %v6794 = vadd.f32 %v6405, %v6666
      %v6795 = vadd.f32 %v6406, %v6667
      %v6796 = vadd.f32 %v6407, %v6668
      %v6797 = vadd.f32 %v6408, %v6669
      %v6798 = vadd.f32 %v6409, %v6670
      %v6799 = vadd.f32 %v6410, %v6671
      %v6800 = vadd.f32 %v6411, %v6672
      %v6801 = vadd.f32 %v6412, %v6673
      %v6802 = vadd.f32 %v6413, %v6674
      %v6803 = vadd.f32 %v6414, %v6675
      %v6804 = vadd.f32 %v6415, %v6676
      %v6805 = vadd.f32 %v6416, %v6677
      %v6806 = vadd.f32 %v6417, %v6678
      %v6807 = vadd.f32 %v6418, %v6679
      %v6808 = vadd.f32 %v6419, %v6680
      %v6809 = vadd.f32 %v6420, %v6681
      %v6810 = vadd.f32 %v6421, %v6682
      %v6811 = vadd.f32 %v6422, %v6683
      %v6812 = vadd.f32 %v6423, %v6684
      %v6813 = vadd.f32 %v6424, %v6685
      %v6814 = vadd.f32 %v6425, %v6686
      %v6815 = vadd.f32 %v6426, %v6687
      %v6816 = vadd.f32 %v6427, %v6688
      %v6817 = vadd.f32 %v6428, %v6689
      %v6818 = vadd.f32 %v6429, %v6690
      %v6819 = vadd.f32 %v6430, %v6691
      %v6820 = vadd.f32 %v6431, %v6692
      %v6821 = vadd.f32 %v6432, %v6693
      %v6822 = vadd.f32 %v6433, %v6694
      %v6823 = vadd.f32 %v6434, %v6695
      %v6824 = vadd.f32 %v6435, %v6696
      %v6825 = vadd.f32 %v6436, %v6697
      %v6826 = vadd.f32 %v6437, %v6698
      %v6827 = vadd.f32 %v6438, %v6699
      %v6828 = vadd.f32 %v6439, %v6700
      %v6829 = vadd.f32 %v6440, %v6701
      %v6830 = vadd.f32 %v6441, %v6702
      %v6831 = vadd.f32 %v6442, %v6703
      %v6832 = vadd.f32 %v6443, %v6704
      %v6833 = vadd.f32 %v6444, %v6705
      %v6834 = vadd.f32 %v6445, %v6706
      %v6835 = vadd.f32 %v6446, %v6707
      %v6836 = vadd.f32 %v6447, %v6708
      %v6837 = vadd.f32 %v6448, %v6709
      %v6838 = vadd.f32 %v6449, %v6710
      %v6839 = vadd.f32 %v6450, %v6711
      %v6840 = vadd.f32 %v6451, %v6712
      %v6841 = vadd.f32 %v6452, %v6713
      %v6842 = vadd.f32 %v6453, %v6714
      %v6843 = vadd.f32 %v6454, %v6715
      %v6844 = vadd.f32 %v6455, %v6716
      %v6845 = vadd.f32 %v6456, %v6717
      %v6846 = vadd.f32 %v6457, %v6718
      %v6847 = vadd.f32 %v6458, %v6719
      %v6848 = vadd.f32 %v6459, %v6720
      %v6849 = vadd.f32 %v6460, %v6721
      %v6850 = vadd.f32 %v6461, %v6722
      %v6851 = vadd.f32 %v6462, %v6723
      %v6852 = vadd.f32 %v6463, %v6724
      %v6853 = vadd.f32 %v6464, %v6725
      %v6854 = vadd.f32 %v6465, %v6726
      %v6855 = vadd.f32 %v6466, %v6727
      %v6856 = vadd.f32 %v6467, %v6728
      %v6857 = vadd.f32 %v6468, %v6729
      %v6858 = vadd.f32 %v6469, %v6730
      %v6859 = vadd.f32 %v6470, %v6731
      %v6860 = vadd.f32 %v6471, %v6732
      %v6861 = vadd.f32 %v6472, %v6733
      %v6862 = vadd.f32 %v6473, %v6734
      %v6863 = vadd.f32 %v6474, %v6735
      %v6864 = vadd.f32 %v6475, %v6736
      %v6865 = vadd.f32 %v6476, %v6737
      %v6866 = vadd.f32 %v6477, %v6738
      %v6867 = vadd.f32 %v6478, %v6739
      %v6868 = vadd.f32 %v6479, %v6740
      %v6869 = vadd.f32 %v6480, %v6741
      %v6870 = vadd.f32 %v6481, %v6742
      %v6871 = vadd.f32 %v6482, %v6743
      %v6872 = vadd.f32 %v6483, %v6744
      %v6873 = vadd.f32 %v6484, %v6745
      %v6874 = vadd.f32 %v6485, %v6746
      %v6875 = vadd.f32 %v6486, %v6747
      %v6876 = vadd.f32 %v6487, %v6748
      %v6877 = vadd.f32 %v6488, %v6749
      %v6878 = vadd.f32 %v6489, %v6750
      %v6879 = vadd.f32 %v6490, %v6751
      %v6880 = vadd.f32 %v6491, %v6752
      %v6881 = vadd.f32 %v6492, %v6753
      %v6882 = vadd.f32 %v6493, %v6754
      %v6883 = vadd.f32 %v6494, %v6755
      %v6884 = vadd.f32 %v6495, %v6756
      %v6885 = vadd.f32 %v6496, %v6757
      %v6886 = vadd.f32 %v6497, %v6758
      %v6887 = vadd.f32 %v6498, %v6759
      %v6888 = vld [vmem:[%s6499 + $0x1] sm:$0xff]
      %v6889 = vld [vmem:[%s6499 + $0x9] sm:$0xff]
      %v6890 = vld [vmem:[%s6499 + $0x19] sm:$0xff]
      %v6891 = vld [vmem:[%s6499 + $0x21] sm:$0xff]
      %v6892 = vld [vmem:[%s6499 + $0x31] sm:$0xff]
      %v6893 = vld [vmem:[%s6499 + $0x39] sm:$0xff]
      %v6894 = vld [vmem:[%s6499 + $0x49] sm:$0xff]
      %v6895 = vld [vmem:[%s6499 + $0x51] sm:$0xff]
      %v6896 = vld [vmem:[%s6499 + $0x61] sm:$0xff]
      %v6897 = vld [vmem:[%s6499 + $0x69] sm:$0xff]
      %v6898 = vld [vmem:[%s6499 + $0x79] sm:$0xff]
      %v6899 = vld [vmem:[%s6499 + $0x81] sm:$0xff]
      %v6900 = vld [vmem:[%s6499 + $0x91] sm:$0xff]
      %v6901 = vld [vmem:[%s6499 + $0x99] sm:$0xff]
      %v6902 = vld [vmem:[%s6499 + $0xa9] sm:$0xff]
      %v6903 = vld [vmem:[%s6499 + $0xb1] sm:$0xff]
      %v6904 = vld [vmem:[%s6499 + $0xc1] sm:$0xff]
      %v6905 = vld [vmem:[%s6499 + $0xc9] sm:$0xff]
      %v6906 = vld [vmem:[%s6499 + $0xd9] sm:$0xff]
      %v6907 = vld [vmem:[%s6499 + $0xe1] sm:$0xff]
      %v6908 = vld [vmem:[%s6499 + $0xf1] sm:$0xff]
      %v6909 = vld [vmem:[%s6499 + $0xf9] sm:$0xff]
      %v6910 = vld [vmem:[%s6499 + $0x109] sm:$0xff]
      %v6911 = vld [vmem:[%s6499 + $0x111] sm:$0xff]
      %v6912 = vld [vmem:[%s6499 + $0x121] sm:$0xff]
      %v6913 = vld [vmem:[%s6499 + $0x129] sm:$0xff]
      %v6914 = vld [vmem:[%s6499 + $0x139] sm:$0xff]
      %v6915 = vld [vmem:[%s6499 + $0x141] sm:$0xff]
      %v6916 = vld [vmem:[%s6499 + $0x151] sm:$0xff]
      %v6917 = vld [vmem:[%s6499 + $0x159] sm:$0xff]
      %v6918 = vld [vmem:[%s6499 + $0x169] sm:$0xff]
      %v6919 = vld [vmem:[%s6499 + $0x171] sm:$0xff]
      %v6920 = vld [vmem:[%s6499 + $0x1b1] sm:$0xff]
      %v6921 = vld [vmem:[%s6499 + $0x1b9] sm:$0xff]
      %v6922 = vld [vmem:[%s6499 + $0x1c9] sm:$0xff]
      %v6923 = vld [vmem:[%s6499 + $0x1d1] sm:$0xff]
      %v6924 = vld [vmem:[%s6499 + $0x1e1] sm:$0xff]
      %v6925 = vld [vmem:[%s6499 + $0x1e9] sm:$0xff]
      %v6926 = vld [vmem:[%s6499 + $0x1f9] sm:$0xff]
      %v6927 = vld [vmem:[%s6499 + $0x201] sm:$0xff]
      %v6928 = vld [vmem:[%s6499 + $0x211] sm:$0xff]
      %v6929 = vld [vmem:[%s6499 + $0x219] sm:$0xff]
      %v6930 = vld [vmem:[%s6499 + $0x229] sm:$0xff]
      %v6931 = vld [vmem:[%s6499 + $0x231] sm:$0xff]
      %v6932 = vld [vmem:[%s6499 + $0x241] sm:$0xff]
      %v6933 = vld [vmem:[%s6499 + $0x249] sm:$0xff]
      %v6934 = vld [vmem:[%s6499 + $0x259] sm:$0xff]
      %v6935 = vld [vmem:[%s6499 + $0x261] sm:$0xff]
      %v6936 = vld [vmem:[%s6499 + $0x271] sm:$0xff]
      %v6937 = vld [vmem:[%s6499 + $0x279] sm:$0xff]
      %v6938 = vld [vmem:[%s6499 + $0x289] sm:$0xff]
      %v6939 = vld [vmem:[%s6499 + $0x291] sm:$0xff]
      %v6940 = vld [vmem:[%s6499 + $0x2a1] sm:$0xff]
      %v6941 = vld [vmem:[%s6499 + $0x2a9] sm:$0xff]
      %v6942 = vld [vmem:[%s6499 + $0x2b9] sm:$0xff]
      %v6943 = vld [vmem:[%s6499 + $0x2c1] sm:$0xff]
      %v6944 = vld [vmem:[%s6499 + $0x2d1] sm:$0xff]
      %v6945 = vld [vmem:[%s6499 + $0x2d9] sm:$0xff]
      %v6946 = vld [vmem:[%s6499 + $0x2e9] sm:$0xff]
      %v6947 = vld [vmem:[%s6499 + $0x2f1] sm:$0xff]
      %v6948 = vld [vmem:[%s6499 + $0x301] sm:$0xff]
      %v6949 = vld [vmem:[%s6499 + $0x309] sm:$0xff]
      %v6950 = vld [vmem:[%s6499 + $0x319] sm:$0xff]
      %v6951 = vld [vmem:[%s6499 + $0x321] sm:$0xff]
      %v6952 = vld [vmem:[%s6499 + $0x361] sm:$0xff]
      %v6953 = vld [vmem:[%s6499 + $0x369] sm:$0xff]
      %v6954 = vld [vmem:[%s6499 + $0x379] sm:$0xff]
      %v6955 = vld [vmem:[%s6499 + $0x381] sm:$0xff]
      %v6956 = vld [vmem:[%s6499 + $0x391] sm:$0xff]
      %v6957 = vld [vmem:[%s6499 + $0x399] sm:$0xff]
      %v6958 = vld [vmem:[%s6499 + $0x3a9] sm:$0xff]
      %v6959 = vld [vmem:[%s6499 + $0x3b1] sm:$0xff]
      %v6960 = vld [vmem:[%s6499 + $0x3c1] sm:$0xff]
      %v6961 = vld [vmem:[%s6499 + $0x3c9] sm:$0xff]
      %v6962 = vld [vmem:[%s6499 + $0x3d9] sm:$0xff]
      %v6963 = vld [vmem:[%s6499 + $0x3e1] sm:$0xff]
      %v6964 = vld [vmem:[%s6499 + $0x3f1] sm:$0xff]
      %v6965 = vld [vmem:[%s6499 + $0x3f9] sm:$0xff]
      %v6966 = vld [vmem:[%s6499 + $0x409] sm:$0xff]
      %v6967 = vld [vmem:[%s6499 + $0x411] sm:$0xff]
      %v6968 = vld [vmem:[%s6499 + $0x421] sm:$0xff]
      %v6969 = vld [vmem:[%s6499 + $0x429] sm:$0xff]
      %v6970 = vld [vmem:[%s6499 + $0x439] sm:$0xff]
      %v6971 = vld [vmem:[%s6499 + $0x441] sm:$0xff]
      %v6972 = vld [vmem:[%s6499 + $0x451] sm:$0xff]
      %v6973 = vld [vmem:[%s6499 + $0x459] sm:$0xff]
      %v6974 = vld [vmem:[%s6499 + $0x469] sm:$0xff]
      %v6975 = vld [vmem:[%s6499 + $0x471] sm:$0xff]
      %v6976 = vld [vmem:[%s6499 + $0x481] sm:$0xff]
      %v6977 = vld [vmem:[%s6499 + $0x489] sm:$0xff]
      %v6978 = vld [vmem:[%s6499 + $0x499] sm:$0xff]
      %v6979 = vld [vmem:[%s6499 + $0x4a1] sm:$0xff]
      %v6980 = vld [vmem:[%s6499 + $0x4b1] sm:$0xff]
      %v6981 = vld [vmem:[%s6499 + $0x4b9] sm:$0xff]
      %v6982 = vld [vmem:[%s6499 + $0x4c9] sm:$0xff]
      %v6983 = vld [vmem:[%s6499 + $0x4d1] sm:$0xff]
      %v6984 = vld [vmem:[%s6499 + $0x511] sm:$0xff]
      %v6985 = vld [vmem:[%s6499 + $0x519] sm:$0xff]
      %v6986 = vld [vmem:[%s6499 + $0x529] sm:$0xff]
      %v6987 = vld [vmem:[%s6499 + $0x531] sm:$0xff]
      %v6988 = vld [vmem:[%s6499 + $0x541] sm:$0xff]
      %v6989 = vld [vmem:[%s6499 + $0x549] sm:$0xff]
      %v6990 = vld [vmem:[%s6499 + $0x559] sm:$0xff]
      %v6991 = vld [vmem:[%s6499 + $0x561] sm:$0xff]
      %v6992 = vld [vmem:[%s6499 + $0x571] sm:$0xff]
      %v6993 = vld [vmem:[%s6499 + $0x579] sm:$0xff]
      %v6994 = vld [vmem:[%s6499 + $0x589] sm:$0xff]
      %v6995 = vld [vmem:[%s6499 + $0x591] sm:$0xff]
      %v6996 = vld [vmem:[%s6499 + $0x5a1] sm:$0xff]
      %v6997 = vld [vmem:[%s6499 + $0x5a9] sm:$0xff]
      %v6998 = vld [vmem:[%s6499 + $0x5b9] sm:$0xff]
      %v6999 = vld [vmem:[%s6499 + $0x5c1] sm:$0xff]
      %v7000 = vld [vmem:[%s6499 + $0x5d1] sm:$0xff]
      %v7001 = vld [vmem:[%s6499 + $0x5d9] sm:$0xff]
      %v7002 = vld [vmem:[%s6499 + $0x5e9] sm:$0xff]
      %v7003 = vld [vmem:[%s6499 + $0x5f1] sm:$0xff]
      %v7004 = vld [vmem:[%s6499 + $0x601] sm:$0xff]
      %v7005 = vld [vmem:[%s6499 + $0x609] sm:$0xff]
      %v7006 = vld [vmem:[%s6499 + $0x619] sm:$0xff]
      %v7007 = vld [vmem:[%s6499 + $0x621] sm:$0xff]
      %v7008 = vld [vmem:[%s6499 + $0x631] sm:$0xff]
      %v7009 = vld [vmem:[%s6499 + $0x639] sm:$0xff]
      %v7010 = vld [vmem:[%s6499 + $0x649] sm:$0xff]
      %v7011 = vld [vmem:[%s6499 + $0x651] sm:$0xff]
      %v7012 = vld [vmem:[%s6499 + $0x661] sm:$0xff]
      %v7013 = vld [vmem:[%s6499 + $0x669] sm:$0xff]
      %v7014 = vld [vmem:[%s6499 + $0x679] sm:$0xff]
      %v7015 = vld [vmem:[%s6499 + $0x681] sm:$0xff]
      %v7016 = vlaneseq
      %v7017 = vshrl.u32 %v7016, 7
      %v7018 = vsub.s32 7, %v7017
      %v7019 = vrot.slane %v3821, %v7018
      %v7020 = vmul.f32 %v6888, %v7019
      %v7021 = vmul.f32 %v6889, %v7019
      %v7022 = vmul.f32 %v6890, %v7019
      %v7023 = vmul.f32 %v6891, %v7019
      %v7024 = vmul.f32 %v6892, %v7019
      %v7025 = vmul.f32 %v6893, %v7019
      %v7026 = vmul.f32 %v6894, %v7019
      %v7027 = vmul.f32 %v6895, %v7019
      %v7028 = vmul.f32 %v6896, %v7019
      %v7029 = vmul.f32 %v6897, %v7019
      %v7030 = vmul.f32 %v6898, %v7019
      %v7031 = vmul.f32 %v6899, %v7019
      %v7032 = vmul.f32 %v6900, %v7019
      %v7033 = vmul.f32 %v6901, %v7019
      %v7034 = vmul.f32 %v6902, %v7019
      %v7035 = vmul.f32 %v6903, %v7019
      %v7036 = vmul.f32 %v6904, %v7019
      %v7037 = vmul.f32 %v6905, %v7019
      %v7038 = vmul.f32 %v6906, %v7019
      %v7039 = vmul.f32 %v6907, %v7019
      %v7040 = vmul.f32 %v6908, %v7019
      %v7041 = vmul.f32 %v6909, %v7019
      %v7042 = vmul.f32 %v6910, %v7019
      %v7043 = vmul.f32 %v6911, %v7019
      %v7044 = vmul.f32 %v6912, %v7019
      %v7045 = vmul.f32 %v6913, %v7019
      %v7046 = vmul.f32 %v6914, %v7019
      %v7047 = vmul.f32 %v6915, %v7019
      %v7048 = vmul.f32 %v6916, %v7019
      %v7049 = vmul.f32 %v6917, %v7019
      %v7050 = vmul.f32 %v6918, %v7019
      %v7051 = vmul.f32 %v6919, %v7019
      %v7052 = vmul.f32 %v6920, %v7019
      %v7053 = vmul.f32 %v6921, %v7019
      %v7054 = vmul.f32 %v6922, %v7019
      %v7055 = vmul.f32 %v6923, %v7019
      %v7056 = vmul.f32 %v6924, %v7019
      %v7057 = vmul.f32 %v6925, %v7019
      %v7058 = vmul.f32 %v6926, %v7019
      %v7059 = vmul.f32 %v6927, %v7019
      %v7060 = vmul.f32 %v6928, %v7019
      %v7061 = vmul.f32 %v6929, %v7019
      %v7062 = vmul.f32 %v6930, %v7019
      %v7063 = vmul.f32 %v6931, %v7019
      %v7064 = vmul.f32 %v6932, %v7019
      %v7065 = vmul.f32 %v6933, %v7019
      %v7066 = vmul.f32 %v6934, %v7019
      %v7067 = vmul.f32 %v6935, %v7019
      %v7068 = vmul.f32 %v6936, %v7019
      %v7069 = vmul.f32 %v6937, %v7019
      %v7070 = vmul.f32 %v6938, %v7019
      %v7071 = vmul.f32 %v6939, %v7019
      %v7072 = vmul.f32 %v6940, %v7019
      %v7073 = vmul.f32 %v6941, %v7019
      %v7074 = vmul.f32 %v6942, %v7019
      %v7075 = vmul.f32 %v6943, %v7019
      %v7076 = vmul.f32 %v6944, %v7019
      %v7077 = vmul.f32 %v6945, %v7019
      %v7078 = vmul.f32 %v6946, %v7019
      %v7079 = vmul.f32 %v6947, %v7019
      %v7080 = vmul.f32 %v6948, %v7019
      %v7081 = vmul.f32 %v6949, %v7019
      %v7082 = vmul.f32 %v6950, %v7019
      %v7083 = vmul.f32 %v6951, %v7019
      %v7084 = vmul.f32 %v6952, %v7019
      %v7085 = vmul.f32 %v6953, %v7019
      %v7086 = vmul.f32 %v6954, %v7019
      %v7087 = vmul.f32 %v6955, %v7019
      %v7088 = vmul.f32 %v6956, %v7019
      %v7089 = vmul.f32 %v6957, %v7019
      %v7090 = vmul.f32 %v6958, %v7019
      %v7091 = vmul.f32 %v6959, %v7019
      %v7092 = vmul.f32 %v6960, %v7019
      %v7093 = vmul.f32 %v6961, %v7019
      %v7094 = vmul.f32 %v6962, %v7019
      %v7095 = vmul.f32 %v6963, %v7019
      %v7096 = vmul.f32 %v6964, %v7019
      %v7097 = vmul.f32 %v6965, %v7019
      %v7098 = vmul.f32 %v6966, %v7019
      %v7099 = vmul.f32 %v6967, %v7019
      %v7100 = vmul.f32 %v6968, %v7019
      %v7101 = vmul.f32 %v6969, %v7019
      %v7102 = vmul.f32 %v6970, %v7019
      %v7103 = vmul.f32 %v6971, %v7019
      %v7104 = vmul.f32 %v6972, %v7019
      %v7105 = vmul.f32 %v6973, %v7019
      %v7106 = vmul.f32 %v6974, %v7019
      %v7107 = vmul.f32 %v6975, %v7019
      %v7108 = vmul.f32 %v6976, %v7019
      %v7109 = vmul.f32 %v6977, %v7019
      %v7110 = vmul.f32 %v6978, %v7019
      %v7111 = vmul.f32 %v6979, %v7019
      %v7112 = vmul.f32 %v6980, %v7019
      %v7113 = vmul.f32 %v6981, %v7019
      %v7114 = vmul.f32 %v6982, %v7019
      %v7115 = vmul.f32 %v6983, %v7019
      %v7116 = vmul.f32 %v6984, %v7019
      %v7117 = vmul.f32 %v6985, %v7019
      %v7118 = vmul.f32 %v6986, %v7019
      %v7119 = vmul.f32 %v6987, %v7019
      %v7120 = vmul.f32 %v6988, %v7019
      %v7121 = vmul.f32 %v6989, %v7019
      %v7122 = vmul.f32 %v6990, %v7019
      %v7123 = vmul.f32 %v6991, %v7019
      %v7124 = vmul.f32 %v6992, %v7019
      %v7125 = vmul.f32 %v6993, %v7019
      %v7126 = vmul.f32 %v6994, %v7019
      %v7127 = vmul.f32 %v6995, %v7019
      %v7128 = vmul.f32 %v6996, %v7019
      %v7129 = vmul.f32 %v6997, %v7019
      %v7130 = vmul.f32 %v6998, %v7019
      %v7131 = vmul.f32 %v6999, %v7019
      %v7132 = vmul.f32 %v7000, %v7019
      %v7133 = vmul.f32 %v7001, %v7019
      %v7134 = vmul.f32 %v7002, %v7019
      %v7135 = vmul.f32 %v7003, %v7019
      %v7136 = vmul.f32 %v7004, %v7019
      %v7137 = vmul.f32 %v7005, %v7019
      %v7138 = vmul.f32 %v7006, %v7019
      %v7139 = vmul.f32 %v7007, %v7019
      %v7140 = vmul.f32 %v7008, %v7019
      %v7141 = vmul.f32 %v7009, %v7019
      %v7142 = vmul.f32 %v7010, %v7019
      %v7143 = vmul.f32 %v7011, %v7019
      %v7144 = vmul.f32 %v7012, %v7019
      %v7145 = vmul.f32 %v7013, %v7019
      %v7146 = vmul.f32 %v7014, %v7019
      %v7147 = vmul.f32 %v7015, %v7019
      %v7148 = vadd.f32 %v6760, %v7020
      %v7149 = vadd.f32 %v6761, %v7021
      %v7150 = vadd.f32 %v6762, %v7022
      %v7151 = vadd.f32 %v6763, %v7023
      %v7152 = vadd.f32 %v6764, %v7024
      %v7153 = vadd.f32 %v6765, %v7025
      %v7154 = vadd.f32 %v6766, %v7026
      %v7155 = vadd.f32 %v6767, %v7027
      %v7156 = vadd.f32 %v6768, %v7028
      %v7157 = vadd.f32 %v6769, %v7029
      %v7158 = vadd.f32 %v6770, %v7030
      %v7159 = vadd.f32 %v6771, %v7031
      %v7160 = vadd.f32 %v6772, %v7032
      %v7161 = vadd.f32 %v6773, %v7033
      %v7162 = vadd.f32 %v6774, %v7034
      %v7163 = vadd.f32 %v6775, %v7035
      %v7164 = vadd.f32 %v6776, %v7036
      %v7165 = vadd.f32 %v6777, %v7037
      %v7166 = vadd.f32 %v6778, %v7038
      %v7167 = vadd.f32 %v6779, %v7039
      %v7168 = vadd.f32 %v6780, %v7040
      %v7169 = vadd.f32 %v6781, %v7041
      %v7170 = vadd.f32 %v6782, %v7042
      %v7171 = vadd.f32 %v6783, %v7043
      %v7172 = vadd.f32 %v6784, %v7044
      %v7173 = vadd.f32 %v6785, %v7045
      %v7174 = vadd.f32 %v6786, %v7046
      %v7175 = vadd.f32 %v6787, %v7047
      %v7176 = vadd.f32 %v6788, %v7048
      %v7177 = vadd.f32 %v6789, %v7049
      %v7178 = vadd.f32 %v6790, %v7050
      %v7179 = vadd.f32 %v6791, %v7051
      %v7180 = vadd.f32 %v6792, %v7052
      %v7181 = vadd.f32 %v6793, %v7053
      %v7182 = vadd.f32 %v6794, %v7054
      %v7183 = vadd.f32 %v6795, %v7055
      %v7184 = vadd.f32 %v6796, %v7056
      %v7185 = vadd.f32 %v6797, %v7057
      %v7186 = vadd.f32 %v6798, %v7058
      %v7187 = vadd.f32 %v6799, %v7059
      %v7188 = vadd.f32 %v6800, %v7060
      %v7189 = vadd.f32 %v6801, %v7061
      %v7190 = vadd.f32 %v6802, %v7062
      %v7191 = vadd.f32 %v6803, %v7063
      %v7192 = vadd.f32 %v6804, %v7064
      %v7193 = vadd.f32 %v6805, %v7065
      %v7194 = vadd.f32 %v6806, %v7066
      %v7195 = vadd.f32 %v6807, %v7067
      %v7196 = vadd.f32 %v6808, %v7068
      %v7197 = vadd.f32 %v6809, %v7069
      %v7198 = vadd.f32 %v6810, %v7070
      %v7199 = vadd.f32 %v6811, %v7071
      %v7200 = vadd.f32 %v6812, %v7072
      %v7201 = vadd.f32 %v6813, %v7073
      %v7202 = vadd.f32 %v6814, %v7074
      %v7203 = vadd.f32 %v6815, %v7075
      %v7204 = vadd.f32 %v6816, %v7076
      %v7205 = vadd.f32 %v6817, %v7077
      %v7206 = vadd.f32 %v6818, %v7078
      %v7207 = vadd.f32 %v6819, %v7079
      %v7208 = vadd.f32 %v6820, %v7080
      %v7209 = vadd.f32 %v6821, %v7081
      %v7210 = vadd.f32 %v6822, %v7082
      %v7211 = vadd.f32 %v6823, %v7083
      %v7212 = vadd.f32 %v6824, %v7084
      %v7213 = vadd.f32 %v6825, %v7085
      %v7214 = vadd.f32 %v6826, %v7086
      %v7215 = vadd.f32 %v6827, %v7087
      %v7216 = vadd.f32 %v6828, %v7088
      %v7217 = vadd.f32 %v6829, %v7089
      %v7218 = vadd.f32 %v6830, %v7090
      %v7219 = vadd.f32 %v6831, %v7091
      %v7220 = vadd.f32 %v6832, %v7092
      %v7221 = vadd.f32 %v6833, %v7093
      %v7222 = vadd.f32 %v6834, %v7094
      %v7223 = vadd.f32 %v6835, %v7095
      %v7224 = vadd.f32 %v6836, %v7096
      %v7225 = vadd.f32 %v6837, %v7097
      %v7226 = vadd.f32 %v6838, %v7098
      %v7227 = vadd.f32 %v6839, %v7099
      %v7228 = vadd.f32 %v6840, %v7100
      %v7229 = vadd.f32 %v6841, %v7101
      %v7230 = vadd.f32 %v6842, %v7102
      %v7231 = vadd.f32 %v6843, %v7103
      %v7232 = vadd.f32 %v6844, %v7104
      %v7233 = vadd.f32 %v6845, %v7105
      %v7234 = vadd.f32 %v6846, %v7106
      %v7235 = vadd.f32 %v6847, %v7107
      %v7236 = vadd.f32 %v6848, %v7108
      %v7237 = vadd.f32 %v6849, %v7109
      %v7238 = vadd.f32 %v6850, %v7110
      %v7239 = vadd.f32 %v6851, %v7111
      %v7240 = vadd.f32 %v6852, %v7112
      %v7241 = vadd.f32 %v6853, %v7113
      %v7242 = vadd.f32 %v6854, %v7114
      %v7243 = vadd.f32 %v6855, %v7115
      %v7244 = vadd.f32 %v6856, %v7116
      %v7245 = vadd.f32 %v6857, %v7117
      %v7246 = vadd.f32 %v6858, %v7118
      %v7247 = vadd.f32 %v6859, %v7119
      %v7248 = vadd.f32 %v6860, %v7120
      %v7249 = vadd.f32 %v6861, %v7121
      %v7250 = vadd.f32 %v6862, %v7122
      %v7251 = vadd.f32 %v6863, %v7123
      %v7252 = vadd.f32 %v6864, %v7124
      %v7253 = vadd.f32 %v6865, %v7125
      %v7254 = vadd.f32 %v6866, %v7126
      %v7255 = vadd.f32 %v6867, %v7127
      %v7256 = vadd.f32 %v6868, %v7128
      %v7257 = vadd.f32 %v6869, %v7129
      %v7258 = vadd.f32 %v6870, %v7130
      %v7259 = vadd.f32 %v6871, %v7131
      %v7260 = vadd.f32 %v6872, %v7132
      %v7261 = vadd.f32 %v6873, %v7133
      %v7262 = vadd.f32 %v6874, %v7134
      %v7263 = vadd.f32 %v6875, %v7135
      %v7264 = vadd.f32 %v6876, %v7136
      %v7265 = vadd.f32 %v6877, %v7137
      %v7266 = vadd.f32 %v6878, %v7138
      %v7267 = vadd.f32 %v6879, %v7139
      %v7268 = vadd.f32 %v6880, %v7140
      %v7269 = vadd.f32 %v6881, %v7141
      %v7270 = vadd.f32 %v6882, %v7142
      %v7271 = vadd.f32 %v6883, %v7143
      %v7272 = vadd.f32 %v6884, %v7144
      %v7273 = vadd.f32 %v6885, %v7145
      %v7274 = vadd.f32 %v6886, %v7146
      %v7275 = vadd.f32 %v6887, %v7147
      %v7276 = vld [vmem:[%s6499 + $0x2] sm:$0xff]
      %v7277 = vld [vmem:[%s6499 + $0xa] sm:$0xff]
      %v7278 = vld [vmem:[%s6499 + $0x1a] sm:$0xff]
      %v7279 = vld [vmem:[%s6499 + $0x22] sm:$0xff]
      %v7280 = vld [vmem:[%s6499 + $0x32] sm:$0xff]
      %v7281 = vld [vmem:[%s6499 + $0x3a] sm:$0xff]
      %v7282 = vld [vmem:[%s6499 + $0x4a] sm:$0xff]
      %v7283 = vld [vmem:[%s6499 + $0x52] sm:$0xff]
      %v7284 = vld [vmem:[%s6499 + $0x62] sm:$0xff]
      %v7285 = vld [vmem:[%s6499 + $0x6a] sm:$0xff]
      %v7286 = vld [vmem:[%s6499 + $0x7a] sm:$0xff]
      %v7287 = vld [vmem:[%s6499 + $0x82] sm:$0xff]
      %v7288 = vld [vmem:[%s6499 + $0x92] sm:$0xff]
      %v7289 = vld [vmem:[%s6499 + $0x9a] sm:$0xff]
      %v7290 = vld [vmem:[%s6499 + $0xaa] sm:$0xff]
      %v7291 = vld [vmem:[%s6499 + $0xb2] sm:$0xff]
      %v7292 = vld [vmem:[%s6499 + $0xc2] sm:$0xff]
      %v7293 = vld [vmem:[%s6499 + $0xca] sm:$0xff]
      %v7294 = vld [vmem:[%s6499 + $0xda] sm:$0xff]
      %v7295 = vld [vmem:[%s6499 + $0xe2] sm:$0xff]
      %v7296 = vld [vmem:[%s6499 + $0xf2] sm:$0xff]
      %v7297 = vld [vmem:[%s6499 + $0xfa] sm:$0xff]
      %v7298 = vld [vmem:[%s6499 + $0x10a] sm:$0xff]
      %v7299 = vld [vmem:[%s6499 + $0x112] sm:$0xff]
      %v7300 = vld [vmem:[%s6499 + $0x122] sm:$0xff]
      %v7301 = vld [vmem:[%s6499 + $0x12a] sm:$0xff]
      %v7302 = vld [vmem:[%s6499 + $0x13a] sm:$0xff]
      %v7303 = vld [vmem:[%s6499 + $0x142] sm:$0xff]
      %v7304 = vld [vmem:[%s6499 + $0x152] sm:$0xff]
      %v7305 = vld [vmem:[%s6499 + $0x15a] sm:$0xff]
      %v7306 = vld [vmem:[%s6499 + $0x16a] sm:$0xff]
      %v7307 = vld [vmem:[%s6499 + $0x172] sm:$0xff]
      %v7308 = vld [vmem:[%s6499 + $0x1b2] sm:$0xff]
      %v7309 = vld [vmem:[%s6499 + $0x1ba] sm:$0xff]
      %v7310 = vld [vmem:[%s6499 + $0x1ca] sm:$0xff]
      %v7311 = vld [vmem:[%s6499 + $0x1d2] sm:$0xff]
      %v7312 = vld [vmem:[%s6499 + $0x1e2] sm:$0xff]
      %v7313 = vld [vmem:[%s6499 + $0x1ea] sm:$0xff]
      %v7314 = vld [vmem:[%s6499 + $0x1fa] sm:$0xff]
      %v7315 = vld [vmem:[%s6499 + $0x202] sm:$0xff]
      %v7316 = vld [vmem:[%s6499 + $0x212] sm:$0xff]
      %v7317 = vld [vmem:[%s6499 + $0x21a] sm:$0xff]
      %v7318 = vld [vmem:[%s6499 + $0x22a] sm:$0xff]
      %v7319 = vld [vmem:[%s6499 + $0x232] sm:$0xff]
      %v7320 = vld [vmem:[%s6499 + $0x242] sm:$0xff]
      %v7321 = vld [vmem:[%s6499 + $0x24a] sm:$0xff]
      %v7322 = vld [vmem:[%s6499 + $0x25a] sm:$0xff]
      %v7323 = vld [vmem:[%s6499 + $0x262] sm:$0xff]
      %v7324 = vld [vmem:[%s6499 + $0x272] sm:$0xff]
      %v7325 = vld [vmem:[%s6499 + $0x27a] sm:$0xff]
      %v7326 = vld [vmem:[%s6499 + $0x28a] sm:$0xff]
      %v7327 = vld [vmem:[%s6499 + $0x292] sm:$0xff]
      %v7328 = vld [vmem:[%s6499 + $0x2a2] sm:$0xff]
      %v7329 = vld [vmem:[%s6499 + $0x2aa] sm:$0xff]
      %v7330 = vld [vmem:[%s6499 + $0x2ba] sm:$0xff]
      %v7331 = vld [vmem:[%s6499 + $0x2c2] sm:$0xff]
      %v7332 = vld [vmem:[%s6499 + $0x2d2] sm:$0xff]
      %v7333 = vld [vmem:[%s6499 + $0x2da] sm:$0xff]
      %v7334 = vld [vmem:[%s6499 + $0x2ea] sm:$0xff]
      %v7335 = vld [vmem:[%s6499 + $0x2f2] sm:$0xff]
      %v7336 = vld [vmem:[%s6499 + $0x302] sm:$0xff]
      %v7337 = vld [vmem:[%s6499 + $0x30a] sm:$0xff]
      %v7338 = vld [vmem:[%s6499 + $0x31a] sm:$0xff]
      %v7339 = vld [vmem:[%s6499 + $0x322] sm:$0xff]
      %v7340 = vld [vmem:[%s6499 + $0x362] sm:$0xff]
      %v7341 = vld [vmem:[%s6499 + $0x36a] sm:$0xff]
      %v7342 = vld [vmem:[%s6499 + $0x37a] sm:$0xff]
      %v7343 = vld [vmem:[%s6499 + $0x382] sm:$0xff]
      %v7344 = vld [vmem:[%s6499 + $0x392] sm:$0xff]
      %v7345 = vld [vmem:[%s6499 + $0x39a] sm:$0xff]
      %v7346 = vld [vmem:[%s6499 + $0x3aa] sm:$0xff]
      %v7347 = vld [vmem:[%s6499 + $0x3b2] sm:$0xff]
      %v7348 = vld [vmem:[%s6499 + $0x3c2] sm:$0xff]
      %v7349 = vld [vmem:[%s6499 + $0x3ca] sm:$0xff]
      %v7350 = vld [vmem:[%s6499 + $0x3da] sm:$0xff]
      %v7351 = vld [vmem:[%s6499 + $0x3e2] sm:$0xff]
      %v7352 = vld [vmem:[%s6499 + $0x3f2] sm:$0xff]
      %v7353 = vld [vmem:[%s6499 + $0x3fa] sm:$0xff]
      %v7354 = vld [vmem:[%s6499 + $0x40a] sm:$0xff]
      %v7355 = vld [vmem:[%s6499 + $0x412] sm:$0xff]
      %v7356 = vld [vmem:[%s6499 + $0x422] sm:$0xff]
      %v7357 = vld [vmem:[%s6499 + $0x42a] sm:$0xff]
      %v7358 = vld [vmem:[%s6499 + $0x43a] sm:$0xff]
      %v7359 = vld [vmem:[%s6499 + $0x442] sm:$0xff]
      %v7360 = vld [vmem:[%s6499 + $0x452] sm:$0xff]
      %v7361 = vld [vmem:[%s6499 + $0x45a] sm:$0xff]
      %v7362 = vld [vmem:[%s6499 + $0x46a] sm:$0xff]
      %v7363 = vld [vmem:[%s6499 + $0x472] sm:$0xff]
      %v7364 = vld [vmem:[%s6499 + $0x482] sm:$0xff]
      %v7365 = vld [vmem:[%s6499 + $0x48a] sm:$0xff]
      %v7366 = vld [vmem:[%s6499 + $0x49a] sm:$0xff]
      %v7367 = vld [vmem:[%s6499 + $0x4a2] sm:$0xff]
      %v7368 = vld [vmem:[%s6499 + $0x4b2] sm:$0xff]
      %v7369 = vld [vmem:[%s6499 + $0x4ba] sm:$0xff]
      %v7370 = vld [vmem:[%s6499 + $0x4ca] sm:$0xff]
      %v7371 = vld [vmem:[%s6499 + $0x4d2] sm:$0xff]
      %v7372 = vld [vmem:[%s6499 + $0x512] sm:$0xff]
      %v7373 = vld [vmem:[%s6499 + $0x51a] sm:$0xff]
      %v7374 = vld [vmem:[%s6499 + $0x52a] sm:$0xff]
      %v7375 = vld [vmem:[%s6499 + $0x532] sm:$0xff]
      %v7376 = vld [vmem:[%s6499 + $0x542] sm:$0xff]
      %v7377 = vld [vmem:[%s6499 + $0x54a] sm:$0xff]
      %v7378 = vld [vmem:[%s6499 + $0x55a] sm:$0xff]
      %v7379 = vld [vmem:[%s6499 + $0x562] sm:$0xff]
      %v7380 = vld [vmem:[%s6499 + $0x572] sm:$0xff]
      %v7381 = vld [vmem:[%s6499 + $0x57a] sm:$0xff]
      %v7382 = vld [vmem:[%s6499 + $0x58a] sm:$0xff]
      %v7383 = vld [vmem:[%s6499 + $0x592] sm:$0xff]
      %v7384 = vld [vmem:[%s6499 + $0x5a2] sm:$0xff]
      %v7385 = vld [vmem:[%s6499 + $0x5aa] sm:$0xff]
      %v7386 = vld [vmem:[%s6499 + $0x5ba] sm:$0xff]
      %v7387 = vld [vmem:[%s6499 + $0x5c2] sm:$0xff]
      %v7388 = vld [vmem:[%s6499 + $0x5d2] sm:$0xff]
      %v7389 = vld [vmem:[%s6499 + $0x5da] sm:$0xff]
      %v7390 = vld [vmem:[%s6499 + $0x5ea] sm:$0xff]
      %v7391 = vld [vmem:[%s6499 + $0x5f2] sm:$0xff]
      %v7392 = vld [vmem:[%s6499 + $0x602] sm:$0xff]
      %v7393 = vld [vmem:[%s6499 + $0x60a] sm:$0xff]
      %v7394 = vld [vmem:[%s6499 + $0x61a] sm:$0xff]
      %v7395 = vld [vmem:[%s6499 + $0x622] sm:$0xff]
      %v7396 = vld [vmem:[%s6499 + $0x632] sm:$0xff]
      %v7397 = vld [vmem:[%s6499 + $0x63a] sm:$0xff]
      %v7398 = vld [vmem:[%s6499 + $0x64a] sm:$0xff]
      %v7399 = vld [vmem:[%s6499 + $0x652] sm:$0xff]
      %v7400 = vld [vmem:[%s6499 + $0x662] sm:$0xff]
      %v7401 = vld [vmem:[%s6499 + $0x66a] sm:$0xff]
      %v7402 = vld [vmem:[%s6499 + $0x67a] sm:$0xff]
      %v7403 = vld [vmem:[%s6499 + $0x682] sm:$0xff]
      %v7404 = vlaneseq
      %v7405 = vshrl.u32 %v7404, 7
      %v7406 = vsub.s32 0, %v7405
      %v7407 = vrot.slane %v3822, %v7406
      %v7408 = vmul.f32 %v7276, %v7407
      %v7409 = vmul.f32 %v7277, %v7407
      %v7410 = vmul.f32 %v7278, %v7407
      %v7411 = vmul.f32 %v7279, %v7407
      %v7412 = vmul.f32 %v7280, %v7407
      %v7413 = vmul.f32 %v7281, %v7407
      %v7414 = vmul.f32 %v7282, %v7407
      %v7415 = vmul.f32 %v7283, %v7407
      %v7416 = vmul.f32 %v7284, %v7407
      %v7417 = vmul.f32 %v7285, %v7407
      %v7418 = vmul.f32 %v7286, %v7407
      %v7419 = vmul.f32 %v7287, %v7407
      %v7420 = vmul.f32 %v7288, %v7407
      %v7421 = vmul.f32 %v7289, %v7407
      %v7422 = vmul.f32 %v7290, %v7407
      %v7423 = vmul.f32 %v7291, %v7407
      %v7424 = vmul.f32 %v7292, %v7407
      %v7425 = vmul.f32 %v7293, %v7407
      %v7426 = vmul.f32 %v7294, %v7407
      %v7427 = vmul.f32 %v7295, %v7407
      %v7428 = vmul.f32 %v7296, %v7407
      %v7429 = vmul.f32 %v7297, %v7407
      %v7430 = vmul.f32 %v7298, %v7407
      %v7431 = vmul.f32 %v7299, %v7407
      %v7432 = vmul.f32 %v7300, %v7407
      %v7433 = vmul.f32 %v7301, %v7407
      %v7434 = vmul.f32 %v7302, %v7407
      %v7435 = vmul.f32 %v7303, %v7407
      %v7436 = vmul.f32 %v7304, %v7407
      %v7437 = vmul.f32 %v7305, %v7407
      %v7438 = vmul.f32 %v7306, %v7407
      %v7439 = vmul.f32 %v7307, %v7407
      %v7440 = vmul.f32 %v7308, %v7407
      %v7441 = vmul.f32 %v7309, %v7407
      %v7442 = vmul.f32 %v7310, %v7407
      %v7443 = vmul.f32 %v7311, %v7407
      %v7444 = vmul.f32 %v7312, %v7407
      %v7445 = vmul.f32 %v7313, %v7407
      %v7446 = vmul.f32 %v7314, %v7407
      %v7447 = vmul.f32 %v7315, %v7407
      %v7448 = vmul.f32 %v7316, %v7407
      %v7449 = vmul.f32 %v7317, %v7407
      %v7450 = vmul.f32 %v7318, %v7407
      %v7451 = vmul.f32 %v7319, %v7407
      %v7452 = vmul.f32 %v7320, %v7407
      %v7453 = vmul.f32 %v7321, %v7407
      %v7454 = vmul.f32 %v7322, %v7407
      %v7455 = vmul.f32 %v7323, %v7407
      %v7456 = vmul.f32 %v7324, %v7407
      %v7457 = vmul.f32 %v7325, %v7407
      %v7458 = vmul.f32 %v7326, %v7407
      %v7459 = vmul.f32 %v7327, %v7407
      %v7460 = vmul.f32 %v7328, %v7407
      %v7461 = vmul.f32 %v7329, %v7407
      %v7462 = vmul.f32 %v7330, %v7407
      %v7463 = vmul.f32 %v7331, %v7407
      %v7464 = vmul.f32 %v7332, %v7407
      %v7465 = vmul.f32 %v7333, %v7407
      %v7466 = vmul.f32 %v7334, %v7407
      %v7467 = vmul.f32 %v7335, %v7407
      %v7468 = vmul.f32 %v7336, %v7407
      %v7469 = vmul.f32 %v7337, %v7407
      %v7470 = vmul.f32 %v7338, %v7407
      %v7471 = vmul.f32 %v7339, %v7407
      %v7472 = vmul.f32 %v7340, %v7407
      %v7473 = vmul.f32 %v7341, %v7407
      %v7474 = vmul.f32 %v7342, %v7407
      %v7475 = vmul.f32 %v7343, %v7407
      %v7476 = vmul.f32 %v7344, %v7407
      %v7477 = vmul.f32 %v7345, %v7407
      %v7478 = vmul.f32 %v7346, %v7407
      %v7479 = vmul.f32 %v7347, %v7407
      %v7480 = vmul.f32 %v7348, %v7407
      %v7481 = vmul.f32 %v7349, %v7407
      %v7482 = vmul.f32 %v7350, %v7407
      %v7483 = vmul.f32 %v7351, %v7407
      %v7484 = vmul.f32 %v7352, %v7407
      %v7485 = vmul.f32 %v7353, %v7407
      %v7486 = vmul.f32 %v7354, %v7407
      %v7487 = vmul.f32 %v7355, %v7407
      %v7488 = vmul.f32 %v7356, %v7407
      %v7489 = vmul.f32 %v7357, %v7407
      %v7490 = vmul.f32 %v7358, %v7407
      %v7491 = vmul.f32 %v7359, %v7407
      %v7492 = vmul.f32 %v7360, %v7407
      %v7493 = vmul.f32 %v7361, %v7407
      %v7494 = vmul.f32 %v7362, %v7407
      %v7495 = vmul.f32 %v7363, %v7407
      %v7496 = vmul.f32 %v7364, %v7407
      %v7497 = vmul.f32 %v7365, %v7407
      %v7498 = vmul.f32 %v7366, %v7407
      %v7499 = vmul.f32 %v7367, %v7407
      %v7500 = vmul.f32 %v7368, %v7407
      %v7501 = vmul.f32 %v7369, %v7407
      %v7502 = vmul.f32 %v7370, %v7407
      %v7503 = vmul.f32 %v7371, %v7407
      %v7504 = vmul.f32 %v7372, %v7407
      %v7505 = vmul.f32 %v7373, %v7407
      %v7506 = vmul.f32 %v7374, %v7407
      %v7507 = vmul.f32 %v7375, %v7407
      %v7508 = vmul.f32 %v7376, %v7407
      %v7509 = vmul.f32 %v7377, %v7407
      %v7510 = vmul.f32 %v7378, %v7407
      %v7511 = vmul.f32 %v7379, %v7407
      %v7512 = vmul.f32 %v7380, %v7407
      %v7513 = vmul.f32 %v7381, %v7407
      %v7514 = vmul.f32 %v7382, %v7407
      %v7515 = vmul.f32 %v7383, %v7407
      %v7516 = vmul.f32 %v7384, %v7407
      %v7517 = vmul.f32 %v7385, %v7407
      %v7518 = vmul.f32 %v7386, %v7407
      %v7519 = vmul.f32 %v7387, %v7407
      %v7520 = vmul.f32 %v7388, %v7407
      %v7521 = vmul.f32 %v7389, %v7407
      %v7522 = vmul.f32 %v7390, %v7407
      %v7523 = vmul.f32 %v7391, %v7407
      %v7524 = vmul.f32 %v7392, %v7407
      %v7525 = vmul.f32 %v7393, %v7407
      %v7526 = vmul.f32 %v7394, %v7407
      %v7527 = vmul.f32 %v7395, %v7407
      %v7528 = vmul.f32 %v7396, %v7407
      %v7529 = vmul.f32 %v7397, %v7407
      %v7530 = vmul.f32 %v7398, %v7407
      %v7531 = vmul.f32 %v7399, %v7407
      %v7532 = vmul.f32 %v7400, %v7407
      %v7533 = vmul.f32 %v7401, %v7407
      %v7534 = vmul.f32 %v7402, %v7407
      %v7535 = vmul.f32 %v7403, %v7407
      %v7536 = vadd.f32 %v7148, %v7408
      %v7537 = vadd.f32 %v7149, %v7409
      %v7538 = vadd.f32 %v7150, %v7410
      %v7539 = vadd.f32 %v7151, %v7411
      %v7540 = vadd.f32 %v7152, %v7412
      %v7541 = vadd.f32 %v7153, %v7413
      %v7542 = vadd.f32 %v7154, %v7414
      %v7543 = vadd.f32 %v7155, %v7415
      %v7544 = vadd.f32 %v7156, %v7416
      %v7545 = vadd.f32 %v7157, %v7417
      %v7546 = vadd.f32 %v7158, %v7418
      %v7547 = vadd.f32 %v7159, %v7419
      %v7548 = vadd.f32 %v7160, %v7420
      %v7549 = vadd.f32 %v7161, %v7421
      %v7550 = vadd.f32 %v7162, %v7422
      %v7551 = vadd.f32 %v7163, %v7423
      %v7552 = vadd.f32 %v7164, %v7424
      %v7553 = vadd.f32 %v7165, %v7425
      %v7554 = vadd.f32 %v7166, %v7426
      %v7555 = vadd.f32 %v7167, %v7427
      %v7556 = vadd.f32 %v7168, %v7428
      %v7557 = vadd.f32 %v7169, %v7429
      %v7558 = vadd.f32 %v7170, %v7430
      %v7559 = vadd.f32 %v7171, %v7431
      %v7560 = vadd.f32 %v7172, %v7432
      %v7561 = vadd.f32 %v7173, %v7433
      %v7562 = vadd.f32 %v7174, %v7434
      %v7563 = vadd.f32 %v7175, %v7435
      %v7564 = vadd.f32 %v7176, %v7436
      %v7565 = vadd.f32 %v7177, %v7437
      %v7566 = vadd.f32 %v7178, %v7438
      %v7567 = vadd.f32 %v7179, %v7439
      %v7568 = vadd.f32 %v7180, %v7440
      %v7569 = vadd.f32 %v7181, %v7441
      %v7570 = vadd.f32 %v7182, %v7442
      %v7571 = vadd.f32 %v7183, %v7443
      %v7572 = vadd.f32 %v7184, %v7444
      %v7573 = vadd.f32 %v7185, %v7445
      %v7574 = vadd.f32 %v7186, %v7446
      %v7575 = vadd.f32 %v7187, %v7447
      %v7576 = vadd.f32 %v7188, %v7448
      %v7577 = vadd.f32 %v7189, %v7449
      %v7578 = vadd.f32 %v7190, %v7450
      %v7579 = vadd.f32 %v7191, %v7451
      %v7580 = vadd.f32 %v7192, %v7452
      %v7581 = vadd.f32 %v7193, %v7453
      %v7582 = vadd.f32 %v7194, %v7454
      %v7583 = vadd.f32 %v7195, %v7455
      %v7584 = vadd.f32 %v7196, %v7456
      %v7585 = vadd.f32 %v7197, %v7457
      %v7586 = vadd.f32 %v7198, %v7458
      %v7587 = vadd.f32 %v7199, %v7459
      %v7588 = vadd.f32 %v7200, %v7460
      %v7589 = vadd.f32 %v7201, %v7461
      %v7590 = vadd.f32 %v7202, %v7462
      %v7591 = vadd.f32 %v7203, %v7463
      %v7592 = vadd.f32 %v7204, %v7464
      %v7593 = vadd.f32 %v7205, %v7465
      %v7594 = vadd.f32 %v7206, %v7466
      %v7595 = vadd.f32 %v7207, %v7467
      %v7596 = vadd.f32 %v7208, %v7468
      %v7597 = vadd.f32 %v7209, %v7469
      %v7598 = vadd.f32 %v7210, %v7470
      %v7599 = vadd.f32 %v7211, %v7471
      %v7600 = vadd.f32 %v7212, %v7472
      %v7601 = vadd.f32 %v7213, %v7473
      %v7602 = vadd.f32 %v7214, %v7474
      %v7603 = vadd.f32 %v7215, %v7475
      %v7604 = vadd.f32 %v7216, %v7476
      %v7605 = vadd.f32 %v7217, %v7477
      %v7606 = vadd.f32 %v7218, %v7478
      %v7607 = vadd.f32 %v7219, %v7479
      %v7608 = vadd.f32 %v7220, %v7480
      %v7609 = vadd.f32 %v7221, %v7481
      %v7610 = vadd.f32 %v7222, %v7482
      %v7611 = vadd.f32 %v7223, %v7483
      %v7612 = vadd.f32 %v7224, %v7484
      %v7613 = vadd.f32 %v7225, %v7485
      %v7614 = vadd.f32 %v7226, %v7486
      %v7615 = vadd.f32 %v7227, %v7487
      %v7616 = vadd.f32 %v7228, %v7488
      %v7617 = vadd.f32 %v7229, %v7489
      %v7618 = vadd.f32 %v7230, %v7490
      %v7619 = vadd.f32 %v7231, %v7491
      %v7620 = vadd.f32 %v7232, %v7492
      %v7621 = vadd.f32 %v7233, %v7493
      %v7622 = vadd.f32 %v7234, %v7494
      %v7623 = vadd.f32 %v7235, %v7495
      %v7624 = vadd.f32 %v7236, %v7496
      %v7625 = vadd.f32 %v7237, %v7497
      %v7626 = vadd.f32 %v7238, %v7498
      %v7627 = vadd.f32 %v7239, %v7499
      %v7628 = vadd.f32 %v7240, %v7500
      %v7629 = vadd.f32 %v7241, %v7501
      %v7630 = vadd.f32 %v7242, %v7502
      %v7631 = vadd.f32 %v7243, %v7503
      %v7632 = vadd.f32 %v7244, %v7504
      %v7633 = vadd.f32 %v7245, %v7505
      %v7634 = vadd.f32 %v7246, %v7506
      %v7635 = vadd.f32 %v7247, %v7507
      %v7636 = vadd.f32 %v7248, %v7508
      %v7637 = vadd.f32 %v7249, %v7509
      %v7638 = vadd.f32 %v7250, %v7510
      %v7639 = vadd.f32 %v7251, %v7511
      %v7640 = vadd.f32 %v7252, %v7512
      %v7641 = vadd.f32 %v7253, %v7513
      %v7642 = vadd.f32 %v7254, %v7514
      %v7643 = vadd.f32 %v7255, %v7515
      %v7644 = vadd.f32 %v7256, %v7516
      %v7645 = vadd.f32 %v7257, %v7517
      %v7646 = vadd.f32 %v7258, %v7518
      %v7647 = vadd.f32 %v7259, %v7519
      %v7648 = vadd.f32 %v7260, %v7520
      %v7649 = vadd.f32 %v7261, %v7521
      %v7650 = vadd.f32 %v7262, %v7522
      %v7651 = vadd.f32 %v7263, %v7523
      %v7652 = vadd.f32 %v7264, %v7524
      %v7653 = vadd.f32 %v7265, %v7525
      %v7654 = vadd.f32 %v7266, %v7526
      %v7655 = vadd.f32 %v7267, %v7527
      %v7656 = vadd.f32 %v7268, %v7528
      %v7657 = vadd.f32 %v7269, %v7529
      %v7658 = vadd.f32 %v7270, %v7530
      %v7659 = vadd.f32 %v7271, %v7531
      %v7660 = vadd.f32 %v7272, %v7532
      %v7661 = vadd.f32 %v7273, %v7533
      %v7662 = vadd.f32 %v7274, %v7534
      %v7663 = vadd.f32 %v7275, %v7535
      %v7665 = vlaneseq
      %v7666 = vshrl.u32 %v7665, 7
      %v7667 = vsub.s32 0, %v7666
      %v7668 = vrot.slane %v3823, %v7667
      %v7670 = vadd.f32 %v7536, %v7668
      %v7671 = vadd.f32 %v7537, %v7668
      %v7672 = vadd.f32 %v7538, %v7668
      %v7673 = vadd.f32 %v7539, %v7668
      %v7674 = vadd.f32 %v7540, %v7668
      %v7675 = vadd.f32 %v7541, %v7668
      %v7676 = vadd.f32 %v7542, %v7668
      %v7677 = vadd.f32 %v7543, %v7668
      %v7678 = vadd.f32 %v7544, %v7668
      %v7679 = vadd.f32 %v7545, %v7668
      %v7680 = vadd.f32 %v7546, %v7668
      %v7681 = vadd.f32 %v7547, %v7668
      %v7682 = vadd.f32 %v7548, %v7668
      %v7683 = vadd.f32 %v7549, %v7668
      %v7684 = vadd.f32 %v7550, %v7668
      %v7685 = vadd.f32 %v7551, %v7668
      %v7686 = vadd.f32 %v7552, %v7668
      %v7687 = vadd.f32 %v7553, %v7668
      %v7688 = vadd.f32 %v7554, %v7668
      %v7689 = vadd.f32 %v7555, %v7668
      %v7690 = vadd.f32 %v7556, %v7668
      %v7691 = vadd.f32 %v7557, %v7668
      %v7692 = vadd.f32 %v7558, %v7668
      %v7693 = vadd.f32 %v7559, %v7668
      %v7694 = vadd.f32 %v7560, %v7668
      %v7695 = vadd.f32 %v7561, %v7668
      %v7696 = vadd.f32 %v7562, %v7668
      %v7697 = vadd.f32 %v7563, %v7668
      %v7698 = vadd.f32 %v7564, %v7668
      %v7699 = vadd.f32 %v7565, %v7668
      %v7700 = vadd.f32 %v7566, %v7668
      %v7701 = vadd.f32 %v7567, %v7668
      %v7702 = vadd.f32 %v7568, %v7668
      %v7703 = vadd.f32 %v7569, %v7668
      %v7704 = vadd.f32 %v7570, %v7668
      %v7705 = vadd.f32 %v7571, %v7668
      %v7706 = vadd.f32 %v7572, %v7668
      %v7707 = vadd.f32 %v7573, %v7668
      %v7708 = vadd.f32 %v7574, %v7668
      %v7709 = vadd.f32 %v7575, %v7668
      %v7710 = vadd.f32 %v7576, %v7668
      %v7711 = vadd.f32 %v7577, %v7668
      %v7712 = vadd.f32 %v7578, %v7668
      %v7713 = vadd.f32 %v7579, %v7668
      %v7714 = vadd.f32 %v7580, %v7668
      %v7715 = vadd.f32 %v7581, %v7668
      %v7716 = vadd.f32 %v7582, %v7668
      %v7717 = vadd.f32 %v7583, %v7668
      %v7718 = vadd.f32 %v7584, %v7668
      %v7719 = vadd.f32 %v7585, %v7668
      %v7720 = vadd.f32 %v7586, %v7668
      %v7721 = vadd.f32 %v7587, %v7668
      %v7722 = vadd.f32 %v7588, %v7668
      %v7723 = vadd.f32 %v7589, %v7668
      %v7724 = vadd.f32 %v7590, %v7668
      %v7725 = vadd.f32 %v7591, %v7668
      %v7726 = vadd.f32 %v7592, %v7668
      %v7727 = vadd.f32 %v7593, %v7668
      %v7728 = vadd.f32 %v7594, %v7668
      %v7729 = vadd.f32 %v7595, %v7668
      %v7730 = vadd.f32 %v7596, %v7668
      %v7731 = vadd.f32 %v7597, %v7668
      %v7732 = vadd.f32 %v7598, %v7668
      %v7733 = vadd.f32 %v7599, %v7668
      %v7734 = vadd.f32 %v7600, %v7668
      %v7735 = vadd.f32 %v7601, %v7668
      %v7736 = vadd.f32 %v7602, %v7668
      %v7737 = vadd.f32 %v7603, %v7668
      %v7738 = vadd.f32 %v7604, %v7668
      %v7739 = vadd.f32 %v7605, %v7668
      %v7740 = vadd.f32 %v7606, %v7668
      %v7741 = vadd.f32 %v7607, %v7668
      %v7742 = vadd.f32 %v7608, %v7668
      %v7743 = vadd.f32 %v7609, %v7668
      %v7744 = vadd.f32 %v7610, %v7668
      %v7745 = vadd.f32 %v7611, %v7668
      %v7746 = vadd.f32 %v7612, %v7668
      %v7747 = vadd.f32 %v7613, %v7668
      %v7748 = vadd.f32 %v7614, %v7668
      %v7749 = vadd.f32 %v7615, %v7668
      %v7750 = vadd.f32 %v7616, %v7668
      %v7751 = vadd.f32 %v7617, %v7668
      %v7752 = vadd.f32 %v7618, %v7668
      %v7753 = vadd.f32 %v7619, %v7668
      %v7754 = vadd.f32 %v7620, %v7668
      %v7755 = vadd.f32 %v7621, %v7668
      %v7756 = vadd.f32 %v7622, %v7668
      %v7757 = vadd.f32 %v7623, %v7668
      %v7758 = vadd.f32 %v7624, %v7668
      %v7759 = vadd.f32 %v7625, %v7668
      %v7760 = vadd.f32 %v7626, %v7668
      %v7761 = vadd.f32 %v7627, %v7668
      %v7762 = vadd.f32 %v7628, %v7668
      %v7763 = vadd.f32 %v7629, %v7668
      %v7764 = vadd.f32 %v7630, %v7668
      %v7765 = vadd.f32 %v7631, %v7668
      %v7766 = vadd.f32 %v7632, %v7668
      %v7767 = vadd.f32 %v7633, %v7668
      %v7768 = vadd.f32 %v7634, %v7668
      %v7769 = vadd.f32 %v7635, %v7668
      %v7770 = vadd.f32 %v7636, %v7668
      %v7771 = vadd.f32 %v7637, %v7668
      %v7772 = vadd.f32 %v7638, %v7668
      %v7773 = vadd.f32 %v7639, %v7668
      %v7774 = vadd.f32 %v7640, %v7668
      %v7775 = vadd.f32 %v7641, %v7668
      %v7776 = vadd.f32 %v7642, %v7668
      %v7777 = vadd.f32 %v7643, %v7668
      %v7778 = vadd.f32 %v7644, %v7668
      %v7779 = vadd.f32 %v7645, %v7668
      %v7780 = vadd.f32 %v7646, %v7668
      %v7781 = vadd.f32 %v7647, %v7668
      %v7782 = vadd.f32 %v7648, %v7668
      %v7783 = vadd.f32 %v7649, %v7668
      %v7784 = vadd.f32 %v7650, %v7668
      %v7785 = vadd.f32 %v7651, %v7668
      %v7786 = vadd.f32 %v7652, %v7668
      %v7787 = vadd.f32 %v7653, %v7668
      %v7788 = vadd.f32 %v7654, %v7668
      %v7789 = vadd.f32 %v7655, %v7668
      %v7790 = vadd.f32 %v7656, %v7668
      %v7791 = vadd.f32 %v7657, %v7668
      %v7792 = vadd.f32 %v7658, %v7668
      %v7793 = vadd.f32 %v7659, %v7668
      %v7794 = vadd.f32 %v7660, %v7668
      %v7795 = vadd.f32 %v7661, %v7668
      %v7796 = vadd.f32 %v7662, %v7668
      %v7797 = vadd.f32 %v7663, %v7668
      %v7798 = vmax.f32 %v7670, 0.0
      %v7799 = vmax.f32 %v7671, 0.0
      %v7800 = vmax.f32 %v7672, 0.0
      %v7801 = vmax.f32 %v7673, 0.0
      %v7802 = vmax.f32 %v7674, 0.0
      %v7803 = vmax.f32 %v7675, 0.0
      %v7804 = vmax.f32 %v7676, 0.0
      %v7805 = vmax.f32 %v7677, 0.0
      %v7806 = vmax.f32 %v7678, 0.0
      %v7807 = vmax.f32 %v7679, 0.0
      %v7808 = vmax.f32 %v7680, 0.0
      %v7809 = vmax.f32 %v7681, 0.0
      %v7810 = vmax.f32 %v7682, 0.0
      %v7811 = vmax.f32 %v7683, 0.0
      %v7812 = vmax.f32 %v7684, 0.0
      %v7813 = vmax.f32 %v7685, 0.0
      %v7814 = vmax.f32 %v7686, 0.0
      %v7815 = vmax.f32 %v7687, 0.0
      %v7816 = vmax.f32 %v7688, 0.0
      %v7817 = vmax.f32 %v7689, 0.0
      %v7818 = vmax.f32 %v7690, 0.0
      %v7819 = vmax.f32 %v7691, 0.0
      %v7820 = vmax.f32 %v7692, 0.0
      %v7821 = vmax.f32 %v7693, 0.0
      %v7822 = vmax.f32 %v7694, 0.0
      %v7823 = vmax.f32 %v7695, 0.0
      %v7824 = vmax.f32 %v7696, 0.0
      %v7825 = vmax.f32 %v7697, 0.0
      %v7826 = vmax.f32 %v7698, 0.0
      %v7827 = vmax.f32 %v7699, 0.0
      %v7828 = vmax.f32 %v7700, 0.0
      %v7829 = vmax.f32 %v7701, 0.0
      %v7830 = vmax.f32 %v7702, 0.0
      %v7831 = vmax.f32 %v7703, 0.0
      %v7832 = vmax.f32 %v7704, 0.0
      %v7833 = vmax.f32 %v7705, 0.0
      %v7834 = vmax.f32 %v7706, 0.0
      %v7835 = vmax.f32 %v7707, 0.0
      %v7836 = vmax.f32 %v7708, 0.0
      %v7837 = vmax.f32 %v7709, 0.0
      %v7838 = vmax.f32 %v7710, 0.0
      %v7839 = vmax.f32 %v7711, 0.0
      %v7840 = vmax.f32 %v7712, 0.0
      %v7841 = vmax.f32 %v7713, 0.0
      %v7842 = vmax.f32 %v7714, 0.0
      %v7843 = vmax.f32 %v7715, 0.0
      %v7844 = vmax.f32 %v7716, 0.0
      %v7845 = vmax.f32 %v7717, 0.0
      %v7846 = vmax.f32 %v7718, 0.0
      %v7847 = vmax.f32 %v7719, 0.0
      %v7848 = vmax.f32 %v7720, 0.0
      %v7849 = vmax.f32 %v7721, 0.0
      %v7850 = vmax.f32 %v7722, 0.0
      %v7851 = vmax.f32 %v7723, 0.0
      %v7852 = vmax.f32 %v7724, 0.0
      %v7853 = vmax.f32 %v7725, 0.0
      %v7854 = vmax.f32 %v7726, 0.0
      %v7855 = vmax.f32 %v7727, 0.0
      %v7856 = vmax.f32 %v7728, 0.0
      %v7857 = vmax.f32 %v7729, 0.0
      %v7858 = vmax.f32 %v7730, 0.0
      %v7859 = vmax.f32 %v7731, 0.0
      %v7860 = vmax.f32 %v7732, 0.0
      %v7861 = vmax.f32 %v7733, 0.0
      %v7862 = vmax.f32 %v7734, 0.0
      %v7863 = vmax.f32 %v7735, 0.0
      %v7864 = vmax.f32 %v7736, 0.0
      %v7865 = vmax.f32 %v7737, 0.0
      %v7866 = vmax.f32 %v7738, 0.0
      %v7867 = vmax.f32 %v7739, 0.0
      %v7868 = vmax.f32 %v7740, 0.0
      %v7869 = vmax.f32 %v7741, 0.0
      %v7870 = vmax.f32 %v7742, 0.0
      %v7871 = vmax.f32 %v7743, 0.0
      %v7872 = vmax.f32 %v7744, 0.0
      %v7873 = vmax.f32 %v7745, 0.0
      %v7874 = vmax.f32 %v7746, 0.0
      %v7875 = vmax.f32 %v7747, 0.0
      %v7876 = vmax.f32 %v7748, 0.0
      %v7877 = vmax.f32 %v7749, 0.0
      %v7878 = vmax.f32 %v7750, 0.0
      %v7879 = vmax.f32 %v7751, 0.0
      %v7880 = vmax.f32 %v7752, 0.0
      %v7881 = vmax.f32 %v7753, 0.0
      %v7882 = vmax.f32 %v7754, 0.0
      %v7883 = vmax.f32 %v7755, 0.0
      %v7884 = vmax.f32 %v7756, 0.0
      %v7885 = vmax.f32 %v7757, 0.0
      %v7886 = vmax.f32 %v7758, 0.0
      %v7887 = vmax.f32 %v7759, 0.0
      %v7888 = vmax.f32 %v7760, 0.0
      %v7889 = vmax.f32 %v7761, 0.0
      %v7890 = vmax.f32 %v7762, 0.0
      %v7891 = vmax.f32 %v7763, 0.0
      %v7892 = vmax.f32 %v7764, 0.0
      %v7893 = vmax.f32 %v7765, 0.0
      %v7894 = vmax.f32 %v7766, 0.0
      %v7895 = vmax.f32 %v7767, 0.0
      %v7896 = vmax.f32 %v7768, 0.0
      %v7897 = vmax.f32 %v7769, 0.0
      %v7898 = vmax.f32 %v7770, 0.0
      %v7899 = vmax.f32 %v7771, 0.0
      %v7900 = vmax.f32 %v7772, 0.0
      %v7901 = vmax.f32 %v7773, 0.0
      %v7902 = vmax.f32 %v7774, 0.0
      %v7903 = vmax.f32 %v7775, 0.0
      %v7904 = vmax.f32 %v7776, 0.0
      %v7905 = vmax.f32 %v7777, 0.0
      %v7906 = vmax.f32 %v7778, 0.0
      %v7907 = vmax.f32 %v7779, 0.0
      %v7908 = vmax.f32 %v7780, 0.0
      %v7909 = vmax.f32 %v7781, 0.0
      %v7910 = vmax.f32 %v7782, 0.0
      %v7911 = vmax.f32 %v7783, 0.0
      %v7912 = vmax.f32 %v7784, 0.0
      %v7913 = vmax.f32 %v7785, 0.0
      %v7914 = vmax.f32 %v7786, 0.0
      %v7915 = vmax.f32 %v7787, 0.0
      %v7916 = vmax.f32 %v7788, 0.0
      %v7917 = vmax.f32 %v7789, 0.0
      %v7918 = vmax.f32 %v7790, 0.0
      %v7919 = vmax.f32 %v7791, 0.0
      %v7920 = vmax.f32 %v7792, 0.0
      %v7921 = vmax.f32 %v7793, 0.0
      %v7922 = vmax.f32 %v7794, 0.0
      %v7923 = vmax.f32 %v7795, 0.0
      %v7924 = vmax.f32 %v7796, 0.0
      %v7925 = vmax.f32 %v7797, 0.0
      %v7926 = vld [vmem:[%s7] sm:$0xf]
      %v7927 = vlaneseq
      %v7928 = vshrl.u32 %v7927, 7
      %v7929 = vsub.s32 0, %v7928
      %v7930 = vrot.slane %v7926, %v7929
      %v7931 = vmul.f32 %v473, %v7930
      %v7932 = vmul.f32 %v478, %v7930
      %v7933 = vmul.f32 %v483, %v7930
      %v7934 = vmul.f32 %v488, %v7930
      %v7935 = vmul.f32 %v493, %v7930
      %v7936 = vmul.f32 %v498, %v7930
      %v7937 = vmul.f32 %v503, %v7930
      %v7938 = vmul.f32 %v508, %v7930
      %v7939 = vmul.f32 %v513, %v7930
      %v7940 = vmul.f32 %v518, %v7930
      %v7941 = vmul.f32 %v523, %v7930
      %v7942 = vmul.f32 %v528, %v7930
      %v7943 = vmul.f32 %v533, %v7930
      %v7944 = vmul.f32 %v538, %v7930
      %v7945 = vmul.f32 %v543, %v7930
      %v7946 = vmul.f32 %v548, %v7930
      %v7947 = vmul.f32 %v553, %v7930
      %v7948 = vmul.f32 %v558, %v7930
      %v7949 = vmul.f32 %v563, %v7930
      %v7950 = vmul.f32 %v568, %v7930
      %v7951 = vmul.f32 %v573, %v7930
      %v7952 = vmul.f32 %v578, %v7930
      %v7953 = vmul.f32 %v583, %v7930
      %v7954 = vmul.f32 %v588, %v7930
      %v7955 = vmul.f32 %v593, %v7930
      %v7956 = vmul.f32 %v598, %v7930
      %v7957 = vmul.f32 %v603, %v7930
      %v7958 = vmul.f32 %v608, %v7930
      %v7959 = vmul.f32 %v613, %v7930
      %v7960 = vmul.f32 %v618, %v7930
      %v7961 = vmul.f32 %v623, %v7930
      %v7962 = vmul.f32 %v628, %v7930
      %v7963 = vmul.f32 %v633, %v7930
      %v7964 = vmul.f32 %v638, %v7930
      %v7965 = vmul.f32 %v643, %v7930
      %v7966 = vmul.f32 %v648, %v7930
      %v7967 = vmul.f32 %v653, %v7930
      %v7968 = vmul.f32 %v658, %v7930
      %v7969 = vmul.f32 %v663, %v7930
      %v7970 = vmul.f32 %v668, %v7930
      %v7971 = vmul.f32 %v673, %v7930
      %v7972 = vmul.f32 %v678, %v7930
      %v7973 = vmul.f32 %v683, %v7930
      %v7974 = vmul.f32 %v688, %v7930
      %v7975 = vmul.f32 %v693, %v7930
      %v7976 = vmul.f32 %v698, %v7930
      %v7977 = vmul.f32 %v703, %v7930
      %v7978 = vmul.f32 %v708, %v7930
      %v7979 = vmul.f32 %v713, %v7930
      %v7980 = vmul.f32 %v718, %v7930
      %v7981 = vmul.f32 %v723, %v7930
      %v7982 = vmul.f32 %v728, %v7930
      %v7983 = vmul.f32 %v733, %v7930
      %v7984 = vmul.f32 %v738, %v7930
      %v7985 = vmul.f32 %v743, %v7930
      %v7986 = vmul.f32 %v748, %v7930
      %v7987 = vmul.f32 %v753, %v7930
      %v7988 = vmul.f32 %v758, %v7930
      %v7989 = vmul.f32 %v763, %v7930
      %v7990 = vmul.f32 %v768, %v7930
      %v7991 = vmul.f32 %v773, %v7930
      %v7992 = vmul.f32 %v778, %v7930
      %v7993 = vmul.f32 %v783, %v7930
      %v7994 = vmul.f32 %v788, %v7930
      %v7995 = vmul.f32 %v793, %v7930
      %v7996 = vmul.f32 %v798, %v7930
      %v7997 = vmul.f32 %v803, %v7930
      %v7998 = vmul.f32 %v808, %v7930
      %v7999 = vmul.f32 %v813, %v7930
      %v8000 = vmul.f32 %v818, %v7930
      %v8001 = vmul.f32 %v823, %v7930
      %v8002 = vmul.f32 %v828, %v7930
      %v8003 = vmul.f32 %v833, %v7930
      %v8004 = vmul.f32 %v838, %v7930
      %v8005 = vmul.f32 %v843, %v7930
      %v8006 = vmul.f32 %v848, %v7930
      %v8007 = vmul.f32 %v853, %v7930
      %v8008 = vmul.f32 %v858, %v7930
      %v8009 = vmul.f32 %v863, %v7930
      %v8010 = vmul.f32 %v868, %v7930
      %v8011 = vmul.f32 %v873, %v7930
      %v8012 = vmul.f32 %v878, %v7930
      %v8013 = vmul.f32 %v883, %v7930
      %v8014 = vmul.f32 %v888, %v7930
      %v8015 = vmul.f32 %v893, %v7930
      %v8016 = vmul.f32 %v898, %v7930
      %v8017 = vmul.f32 %v903, %v7930
      %v8018 = vmul.f32 %v908, %v7930
      %v8019 = vmul.f32 %v913, %v7930
      %v8020 = vmul.f32 %v918, %v7930
      %v8021 = vmul.f32 %v923, %v7930
      %v8022 = vmul.f32 %v928, %v7930
      %v8023 = vmul.f32 %v933, %v7930
      %v8024 = vmul.f32 %v938, %v7930
      %v8025 = vmul.f32 %v943, %v7930
      %v8026 = vmul.f32 %v948, %v7930
      %v8027 = vmul.f32 %v953, %v7930
      %v8028 = vmul.f32 %v958, %v7930
      %v8029 = vmul.f32 %v963, %v7930
      %v8030 = vmul.f32 %v968, %v7930
      %v8031 = vmul.f32 %v973, %v7930
      %v8032 = vmul.f32 %v978, %v7930
      %v8033 = vmul.f32 %v983, %v7930
      %v8034 = vmul.f32 %v988, %v7930
      %v8035 = vmul.f32 %v993, %v7930
      %v8036 = vmul.f32 %v998, %v7930
      %v8037 = vmul.f32 %v1003, %v7930
      %v8038 = vmul.f32 %v1008, %v7930
      %v8039 = vmul.f32 %v1013, %v7930
      %v8040 = vmul.f32 %v1018, %v7930
      %v8041 = vmul.f32 %v1023, %v7930
      %v8042 = vmul.f32 %v1028, %v7930
      %v8043 = vmul.f32 %v1033, %v7930
      %v8044 = vmul.f32 %v1038, %v7930
      %v8045 = vmul.f32 %v1043, %v7930
      %v8046 = vmul.f32 %v1048, %v7930
      %v8047 = vmul.f32 %v1053, %v7930
      %v8048 = vmul.f32 %v1058, %v7930
      %v8049 = vmul.f32 %v1063, %v7930
      %v8050 = vmul.f32 %v1068, %v7930
      %v8051 = vmul.f32 %v1073, %v7930
      %v8052 = vmul.f32 %v1078, %v7930
      %v8053 = vmul.f32 %v1083, %v7930
      %v8054 = vmul.f32 %v1088, %v7930
      %v8055 = vmul.f32 %v1093, %v7930
      %v8056 = vmul.f32 %v1098, %v7930
      %v8057 = vmul.f32 %v1103, %v7930
      %v8058 = vmul.f32 %v1108, %v7930
      %v8059 = vlaneseq
      %v8060 = vshrl.u32 %v8059, 7
      %v8061 = vsub.s32 1, %v8060
      %v8062 = vrot.slane %v7926, %v8061
      %v8063 = vmul.f32 %v1244, %v8062
      %v8064 = vmul.f32 %v1248, %v8062
      %v8065 = vmul.f32 %v1252, %v8062
      %v8066 = vmul.f32 %v1256, %v8062
      %v8067 = vmul.f32 %v1260, %v8062
      %v8068 = vmul.f32 %v1264, %v8062
      %v8069 = vmul.f32 %v1268, %v8062
      %v8070 = vmul.f32 %v1272, %v8062
      %v8071 = vmul.f32 %v1276, %v8062
      %v8072 = vmul.f32 %v1280, %v8062
      %v8073 = vmul.f32 %v1284, %v8062
      %v8074 = vmul.f32 %v1288, %v8062
      %v8075 = vmul.f32 %v1292, %v8062
      %v8076 = vmul.f32 %v1296, %v8062
      %v8077 = vmul.f32 %v1300, %v8062
      %v8078 = vmul.f32 %v1304, %v8062
      %v8079 = vmul.f32 %v1308, %v8062
      %v8080 = vmul.f32 %v1312, %v8062
      %v8081 = vmul.f32 %v1316, %v8062
      %v8082 = vmul.f32 %v1320, %v8062
      %v8083 = vmul.f32 %v1324, %v8062
      %v8084 = vmul.f32 %v1328, %v8062
      %v8085 = vmul.f32 %v1332, %v8062
      %v8086 = vmul.f32 %v1336, %v8062
      %v8087 = vmul.f32 %v1340, %v8062
      %v8088 = vmul.f32 %v1344, %v8062
      %v8089 = vmul.f32 %v1348, %v8062
      %v8090 = vmul.f32 %v1352, %v8062
      %v8091 = vmul.f32 %v1356, %v8062
      %v8092 = vmul.f32 %v1360, %v8062
      %v8093 = vmul.f32 %v1364, %v8062
      %v8094 = vmul.f32 %v1368, %v8062
      %v8095 = vmul.f32 %v1372, %v8062
      %v8096 = vmul.f32 %v1376, %v8062
      %v8097 = vmul.f32 %v1380, %v8062
      %v8098 = vmul.f32 %v1384, %v8062
      %v8099 = vmul.f32 %v1388, %v8062
      %v8100 = vmul.f32 %v1392, %v8062
      %v8101 = vmul.f32 %v1396, %v8062
      %v8102 = vmul.f32 %v1400, %v8062
      %v8103 = vmul.f32 %v1404, %v8062
      %v8104 = vmul.f32 %v1408, %v8062
      %v8105 = vmul.f32 %v1412, %v8062
      %v8106 = vmul.f32 %v1416, %v8062
      %v8107 = vmul.f32 %v1420, %v8062
      %v8108 = vmul.f32 %v1424, %v8062
      %v8109 = vmul.f32 %v1428, %v8062
      %v8110 = vmul.f32 %v1432, %v8062
      %v8111 = vmul.f32 %v1436, %v8062
      %v8112 = vmul.f32 %v1440, %v8062
      %v8113 = vmul.f32 %v1444, %v8062
      %v8114 = vmul.f32 %v1448, %v8062
      %v8115 = vmul.f32 %v1452, %v8062
      %v8116 = vmul.f32 %v1456, %v8062
      %v8117 = vmul.f32 %v1460, %v8062
      %v8118 = vmul.f32 %v1464, %v8062
      %v8119 = vmul.f32 %v1468, %v8062
      %v8120 = vmul.f32 %v1472, %v8062
      %v8121 = vmul.f32 %v1476, %v8062
      %v8122 = vmul.f32 %v1480, %v8062
      %v8123 = vmul.f32 %v1484, %v8062
      %v8124 = vmul.f32 %v1488, %v8062
      %v8125 = vmul.f32 %v1492, %v8062
      %v8126 = vmul.f32 %v1496, %v8062
      %v8127 = vmul.f32 %v1500, %v8062
      %v8128 = vmul.f32 %v1504, %v8062
      %v8129 = vmul.f32 %v1508, %v8062
      %v8130 = vmul.f32 %v1512, %v8062
      %v8131 = vmul.f32 %v1516, %v8062
      %v8132 = vmul.f32 %v1520, %v8062
      %v8133 = vmul.f32 %v1524, %v8062
      %v8134 = vmul.f32 %v1528, %v8062
      %v8135 = vmul.f32 %v1532, %v8062
      %v8136 = vmul.f32 %v1536, %v8062
      %v8137 = vmul.f32 %v1540, %v8062
      %v8138 = vmul.f32 %v1544, %v8062
      %v8139 = vmul.f32 %v1548, %v8062
      %v8140 = vmul.f32 %v1552, %v8062
      %v8141 = vmul.f32 %v1556, %v8062
      %v8142 = vmul.f32 %v1560, %v8062
      %v8143 = vmul.f32 %v1564, %v8062
      %v8144 = vmul.f32 %v1568, %v8062
      %v8145 = vmul.f32 %v1572, %v8062
      %v8146 = vmul.f32 %v1576, %v8062
      %v8147 = vmul.f32 %v1580, %v8062
      %v8148 = vmul.f32 %v1584, %v8062
      %v8149 = vmul.f32 %v1588, %v8062
      %v8150 = vmul.f32 %v1592, %v8062
      %v8151 = vmul.f32 %v1596, %v8062
      %v8152 = vmul.f32 %v1600, %v8062
      %v8153 = vmul.f32 %v1604, %v8062
      %v8154 = vmul.f32 %v1608, %v8062
      %v8155 = vmul.f32 %v1612, %v8062
      %v8156 = vmul.f32 %v1616, %v8062
      %v8157 = vmul.f32 %v1620, %v8062
      %v8158 = vmul.f32 %v1624, %v8062
      %v8159 = vmul.f32 %v1628, %v8062
      %v8160 = vmul.f32 %v1632, %v8062
      %v8161 = vmul.f32 %v1636, %v8062
      %v8162 = vmul.f32 %v1640, %v8062
      %v8163 = vmul.f32 %v1644, %v8062
      %v8164 = vmul.f32 %v1648, %v8062
      %v8165 = vmul.f32 %v1652, %v8062
      %v8166 = vmul.f32 %v1656, %v8062
      %v8167 = vmul.f32 %v1660, %v8062
      %v8168 = vmul.f32 %v1664, %v8062
      %v8169 = vmul.f32 %v1668, %v8062
      %v8170 = vmul.f32 %v1672, %v8062
      %v8171 = vmul.f32 %v1676, %v8062
      %v8172 = vmul.f32 %v1680, %v8062
      %v8173 = vmul.f32 %v1684, %v8062
      %v8174 = vmul.f32 %v1688, %v8062
      %v8175 = vmul.f32 %v1692, %v8062
      %v8176 = vmul.f32 %v1696, %v8062
      %v8177 = vmul.f32 %v1700, %v8062
      %v8178 = vmul.f32 %v1704, %v8062
      %v8179 = vmul.f32 %v1708, %v8062
      %v8180 = vmul.f32 %v1712, %v8062
      %v8181 = vmul.f32 %v1716, %v8062
      %v8182 = vmul.f32 %v1720, %v8062
      %v8183 = vmul.f32 %v1724, %v8062
      %v8184 = vmul.f32 %v1728, %v8062
      %v8185 = vmul.f32 %v1732, %v8062
      %v8186 = vmul.f32 %v1736, %v8062
      %v8187 = vmul.f32 %v1740, %v8062
      %v8188 = vmul.f32 %v1744, %v8062
      %v8189 = vmul.f32 %v1748, %v8062
      %v8190 = vmul.f32 %v1752, %v8062
      %v8191 = vadd.f32 %v7931, %v8063
      %v8192 = vadd.f32 %v7932, %v8064
      %v8193 = vadd.f32 %v7933, %v8065
      %v8194 = vadd.f32 %v7934, %v8066
      %v8195 = vadd.f32 %v7935, %v8067
      %v8196 = vadd.f32 %v7936, %v8068
      %v8197 = vadd.f32 %v7937, %v8069
      %v8198 = vadd.f32 %v7938, %v8070
      %v8199 = vadd.f32 %v7939, %v8071
      %v8200 = vadd.f32 %v7940, %v8072
      %v8201 = vadd.f32 %v7941, %v8073
      %v8202 = vadd.f32 %v7942, %v8074
      %v8203 = vadd.f32 %v7943, %v8075
      %v8204 = vadd.f32 %v7944, %v8076
      %v8205 = vadd.f32 %v7945, %v8077
      %v8206 = vadd.f32 %v7946, %v8078
      %v8207 = vadd.f32 %v7947, %v8079
      %v8208 = vadd.f32 %v7948, %v8080
      %v8209 = vadd.f32 %v7949, %v8081
      %v8210 = vadd.f32 %v7950, %v8082
      %v8211 = vadd.f32 %v7951, %v8083
      %v8212 = vadd.f32 %v7952, %v8084
      %v8213 = vadd.f32 %v7953, %v8085
      %v8214 = vadd.f32 %v7954, %v8086
      %v8215 = vadd.f32 %v7955, %v8087
      %v8216 = vadd.f32 %v7956, %v8088
      %v8217 = vadd.f32 %v7957, %v8089
      %v8218 = vadd.f32 %v7958, %v8090
      %v8219 = vadd.f32 %v7959, %v8091
      %v8220 = vadd.f32 %v7960, %v8092
      %v8221 = vadd.f32 %v7961, %v8093
      %v8222 = vadd.f32 %v7962, %v8094
      %v8223 = vadd.f32 %v7963, %v8095
      %v8224 = vadd.f32 %v7964, %v8096
      %v8225 = vadd.f32 %v7965, %v8097
      %v8226 = vadd.f32 %v7966, %v8098
      %v8227 = vadd.f32 %v7967, %v8099
      %v8228 = vadd.f32 %v7968, %v8100
      %v8229 = vadd.f32 %v7969, %v8101
      %v8230 = vadd.f32 %v7970, %v8102
      %v8231 = vadd.f32 %v7971, %v8103
      %v8232 = vadd.f32 %v7972, %v8104
      %v8233 = vadd.f32 %v7973, %v8105
      %v8234 = vadd.f32 %v7974, %v8106
      %v8235 = vadd.f32 %v7975, %v8107
      %v8236 = vadd.f32 %v7976, %v8108
      %v8237 = vadd.f32 %v7977, %v8109
      %v8238 = vadd.f32 %v7978, %v8110
      %v8239 = vadd.f32 %v7979, %v8111
      %v8240 = vadd.f32 %v7980, %v8112
      %v8241 = vadd.f32 %v7981, %v8113
      %v8242 = vadd.f32 %v7982, %v8114
      %v8243 = vadd.f32 %v7983, %v8115
      %v8244 = vadd.f32 %v7984, %v8116
      %v8245 = vadd.f32 %v7985, %v8117
      %v8246 = vadd.f32 %v7986, %v8118
      %v8247 = vadd.f32 %v7987, %v8119
      %v8248 = vadd.f32 %v7988, %v8120
      %v8249 = vadd.f32 %v7989, %v8121
      %v8250 = vadd.f32 %v7990, %v8122
      %v8251 = vadd.f32 %v7991, %v8123
      %v8252 = vadd.f32 %v7992, %v8124
      %v8253 = vadd.f32 %v7993, %v8125
      %v8254 = vadd.f32 %v7994, %v8126
      %v8255 = vadd.f32 %v7995, %v8127
      %v8256 = vadd.f32 %v7996, %v8128
      %v8257 = vadd.f32 %v7997, %v8129
      %v8258 = vadd.f32 %v7998, %v8130
      %v8259 = vadd.f32 %v7999, %v8131
      %v8260 = vadd.f32 %v8000, %v8132
      %v8261 = vadd.f32 %v8001, %v8133
      %v8262 = vadd.f32 %v8002, %v8134
      %v8263 = vadd.f32 %v8003, %v8135
      %v8264 = vadd.f32 %v8004, %v8136
      %v8265 = vadd.f32 %v8005, %v8137
      %v8266 = vadd.f32 %v8006, %v8138
      %v8267 = vadd.f32 %v8007, %v8139
      %v8268 = vadd.f32 %v8008, %v8140
      %v8269 = vadd.f32 %v8009, %v8141
      %v8270 = vadd.f32 %v8010, %v8142
      %v8271 = vadd.f32 %v8011, %v8143
      %v8272 = vadd.f32 %v8012, %v8144
      %v8273 = vadd.f32 %v8013, %v8145
      %v8274 = vadd.f32 %v8014, %v8146
      %v8275 = vadd.f32 %v8015, %v8147
      %v8276 = vadd.f32 %v8016, %v8148
      %v8277 = vadd.f32 %v8017, %v8149
      %v8278 = vadd.f32 %v8018, %v8150
      %v8279 = vadd.f32 %v8019, %v8151
      %v8280 = vadd.f32 %v8020, %v8152
      %v8281 = vadd.f32 %v8021, %v8153
      %v8282 = vadd.f32 %v8022, %v8154
      %v8283 = vadd.f32 %v8023, %v8155
      %v8284 = vadd.f32 %v8024, %v8156
      %v8285 = vadd.f32 %v8025, %v8157
      %v8286 = vadd.f32 %v8026, %v8158
      %v8287 = vadd.f32 %v8027, %v8159
      %v8288 = vadd.f32 %v8028, %v8160
      %v8289 = vadd.f32 %v8029, %v8161
      %v8290 = vadd.f32 %v8030, %v8162
      %v8291 = vadd.f32 %v8031, %v8163
      %v8292 = vadd.f32 %v8032, %v8164
      %v8293 = vadd.f32 %v8033, %v8165
      %v8294 = vadd.f32 %v8034, %v8166
      %v8295 = vadd.f32 %v8035, %v8167
      %v8296 = vadd.f32 %v8036, %v8168
      %v8297 = vadd.f32 %v8037, %v8169
      %v8298 = vadd.f32 %v8038, %v8170
      %v8299 = vadd.f32 %v8039, %v8171
      %v8300 = vadd.f32 %v8040, %v8172
      %v8301 = vadd.f32 %v8041, %v8173
      %v8302 = vadd.f32 %v8042, %v8174
      %v8303 = vadd.f32 %v8043, %v8175
      %v8304 = vadd.f32 %v8044, %v8176
      %v8305 = vadd.f32 %v8045, %v8177
      %v8306 = vadd.f32 %v8046, %v8178
      %v8307 = vadd.f32 %v8047, %v8179
      %v8308 = vadd.f32 %v8048, %v8180
      %v8309 = vadd.f32 %v8049, %v8181
      %v8310 = vadd.f32 %v8050, %v8182
      %v8311 = vadd.f32 %v8051, %v8183
      %v8312 = vadd.f32 %v8052, %v8184
      %v8313 = vadd.f32 %v8053, %v8185
      %v8314 = vadd.f32 %v8054, %v8186
      %v8315 = vadd.f32 %v8055, %v8187
      %v8316 = vadd.f32 %v8056, %v8188
      %v8317 = vadd.f32 %v8057, %v8189
      %v8318 = vadd.f32 %v8058, %v8190
      %v8319 = vlaneseq
      %v8320 = vshrl.u32 %v8319, 7
      %v8321 = vsub.s32 2, %v8320
      %v8322 = vrot.slane %v7926, %v8321
      %v8323 = vmul.f32 %v2016, %v8322
      %v8324 = vmul.f32 %v2020, %v8322
      %v8325 = vmul.f32 %v2024, %v8322
      %v8326 = vmul.f32 %v2028, %v8322
      %v8327 = vmul.f32 %v2032, %v8322
      %v8328 = vmul.f32 %v2036, %v8322
      %v8329 = vmul.f32 %v2040, %v8322
      %v8330 = vmul.f32 %v2044, %v8322
      %v8331 = vmul.f32 %v2048, %v8322
      %v8332 = vmul.f32 %v2052, %v8322
      %v8333 = vmul.f32 %v2056, %v8322
      %v8334 = vmul.f32 %v2060, %v8322
      %v8335 = vmul.f32 %v2064, %v8322
      %v8336 = vmul.f32 %v2068, %v8322
      %v8337 = vmul.f32 %v2072, %v8322
      %v8338 = vmul.f32 %v2076, %v8322
      %v8339 = vmul.f32 %v2080, %v8322
      %v8340 = vmul.f32 %v2084, %v8322
      %v8341 = vmul.f32 %v2088, %v8322
      %v8342 = vmul.f32 %v2092, %v8322
      %v8343 = vmul.f32 %v2096, %v8322
      %v8344 = vmul.f32 %v2100, %v8322
      %v8345 = vmul.f32 %v2104, %v8322
      %v8346 = vmul.f32 %v2108, %v8322
      %v8347 = vmul.f32 %v2112, %v8322
      %v8348 = vmul.f32 %v2116, %v8322
      %v8349 = vmul.f32 %v2120, %v8322
      %v8350 = vmul.f32 %v2124, %v8322
      %v8351 = vmul.f32 %v2128, %v8322
      %v8352 = vmul.f32 %v2132, %v8322
      %v8353 = vmul.f32 %v2136, %v8322
      %v8354 = vmul.f32 %v2140, %v8322
      %v8355 = vmul.f32 %v2144, %v8322
      %v8356 = vmul.f32 %v2148, %v8322
      %v8357 = vmul.f32 %v2152, %v8322
      %v8358 = vmul.f32 %v2156, %v8322
      %v8359 = vmul.f32 %v2160, %v8322
      %v8360 = vmul.f32 %v2164, %v8322
      %v8361 = vmul.f32 %v2168, %v8322
      %v8362 = vmul.f32 %v2172, %v8322
      %v8363 = vmul.f32 %v2176, %v8322
      %v8364 = vmul.f32 %v2180, %v8322
      %v8365 = vmul.f32 %v2184, %v8322
      %v8366 = vmul.f32 %v2188, %v8322
      %v8367 = vmul.f32 %v2192, %v8322
      %v8368 = vmul.f32 %v2196, %v8322
      %v8369 = vmul.f32 %v2200, %v8322
      %v8370 = vmul.f32 %v2204, %v8322
      %v8371 = vmul.f32 %v2208, %v8322
      %v8372 = vmul.f32 %v2212, %v8322
      %v8373 = vmul.f32 %v2216, %v8322
      %v8374 = vmul.f32 %v2220, %v8322
      %v8375 = vmul.f32 %v2224, %v8322
      %v8376 = vmul.f32 %v2228, %v8322
      %v8377 = vmul.f32 %v2232, %v8322
      %v8378 = vmul.f32 %v2236, %v8322
      %v8379 = vmul.f32 %v2240, %v8322
      %v8380 = vmul.f32 %v2244, %v8322
      %v8381 = vmul.f32 %v2248, %v8322
      %v8382 = vmul.f32 %v2252, %v8322
      %v8383 = vmul.f32 %v2256, %v8322
      %v8384 = vmul.f32 %v2260, %v8322
      %v8385 = vmul.f32 %v2264, %v8322
      %v8386 = vmul.f32 %v2268, %v8322
      %v8387 = vmul.f32 %v2272, %v8322
      %v8388 = vmul.f32 %v2276, %v8322
      %v8389 = vmul.f32 %v2280, %v8322
      %v8390 = vmul.f32 %v2284, %v8322
      %v8391 = vmul.f32 %v2288, %v8322
      %v8392 = vmul.f32 %v2292, %v8322
      %v8393 = vmul.f32 %v2296, %v8322
      %v8394 = vmul.f32 %v2300, %v8322
      %v8395 = vmul.f32 %v2304, %v8322
      %v8396 = vmul.f32 %v2308, %v8322
      %v8397 = vmul.f32 %v2312, %v8322
      %v8398 = vmul.f32 %v2316, %v8322
      %v8399 = vmul.f32 %v2320, %v8322
      %v8400 = vmul.f32 %v2324, %v8322
      %v8401 = vmul.f32 %v2328, %v8322
      %v8402 = vmul.f32 %v2332, %v8322
      %v8403 = vmul.f32 %v2336, %v8322
      %v8404 = vmul.f32 %v2340, %v8322
      %v8405 = vmul.f32 %v2344, %v8322
      %v8406 = vmul.f32 %v2348, %v8322
      %v8407 = vmul.f32 %v2352, %v8322
      %v8408 = vmul.f32 %v2356, %v8322
      %v8409 = vmul.f32 %v2360, %v8322
      %v8410 = vmul.f32 %v2364, %v8322
      %v8411 = vmul.f32 %v2368, %v8322
      %v8412 = vmul.f32 %v2372, %v8322
      %v8413 = vmul.f32 %v2376, %v8322
      %v8414 = vmul.f32 %v2380, %v8322
      %v8415 = vmul.f32 %v2384, %v8322
      %v8416 = vmul.f32 %v2388, %v8322
      %v8417 = vmul.f32 %v2392, %v8322
      %v8418 = vmul.f32 %v2396, %v8322
      %v8419 = vmul.f32 %v2400, %v8322
      %v8420 = vmul.f32 %v2404, %v8322
      %v8421 = vmul.f32 %v2408, %v8322
      %v8422 = vmul.f32 %v2412, %v8322
      %v8423 = vmul.f32 %v2416, %v8322
      %v8424 = vmul.f32 %v2420, %v8322
      %v8425 = vmul.f32 %v2424, %v8322
      %v8426 = vmul.f32 %v2428, %v8322
      %v8427 = vmul.f32 %v2432, %v8322
      %v8428 = vmul.f32 %v2436, %v8322
      %v8429 = vmul.f32 %v2440, %v8322
      %v8430 = vmul.f32 %v2444, %v8322
      %v8431 = vmul.f32 %v2448, %v8322
      %v8432 = vmul.f32 %v2452, %v8322
      %v8433 = vmul.f32 %v2456, %v8322
      %v8434 = vmul.f32 %v2460, %v8322
      %v8435 = vmul.f32 %v2464, %v8322
      %v8436 = vmul.f32 %v2468, %v8322
      %v8437 = vmul.f32 %v2472, %v8322
      %v8438 = vmul.f32 %v2476, %v8322
      %v8439 = vmul.f32 %v2480, %v8322
      %v8440 = vmul.f32 %v2484, %v8322
      %v8441 = vmul.f32 %v2488, %v8322
      %v8442 = vmul.f32 %v2492, %v8322
      %v8443 = vmul.f32 %v2496, %v8322
      %v8444 = vmul.f32 %v2500, %v8322
      %v8445 = vmul.f32 %v2504, %v8322
      %v8446 = vmul.f32 %v2508, %v8322
      %v8447 = vmul.f32 %v2512, %v8322
      %v8448 = vmul.f32 %v2516, %v8322
      %v8449 = vmul.f32 %v2520, %v8322
      %v8450 = vmul.f32 %v2524, %v8322
      %v8451 = vadd.f32 %v8191, %v8323
      %v8452 = vadd.f32 %v8192, %v8324
      %v8453 = vadd.f32 %v8193, %v8325
      %v8454 = vadd.f32 %v8194, %v8326
      %v8455 = vadd.f32 %v8195, %v8327
      %v8456 = vadd.f32 %v8196, %v8328
      %v8457 = vadd.f32 %v8197, %v8329
      %v8458 = vadd.f32 %v8198, %v8330
      %v8459 = vadd.f32 %v8199, %v8331
      %v8460 = vadd.f32 %v8200, %v8332
      %v8461 = vadd.f32 %v8201, %v8333
      %v8462 = vadd.f32 %v8202, %v8334
      %v8463 = vadd.f32 %v8203, %v8335
      %v8464 = vadd.f32 %v8204, %v8336
      %v8465 = vadd.f32 %v8205, %v8337
      %v8466 = vadd.f32 %v8206, %v8338
      %v8467 = vadd.f32 %v8207, %v8339
      %v8468 = vadd.f32 %v8208, %v8340
      %v8469 = vadd.f32 %v8209, %v8341
      %v8470 = vadd.f32 %v8210, %v8342
      %v8471 = vadd.f32 %v8211, %v8343
      %v8472 = vadd.f32 %v8212, %v8344
      %v8473 = vadd.f32 %v8213, %v8345
      %v8474 = vadd.f32 %v8214, %v8346
      %v8475 = vadd.f32 %v8215, %v8347
      %v8476 = vadd.f32 %v8216, %v8348
      %v8477 = vadd.f32 %v8217, %v8349
      %v8478 = vadd.f32 %v8218, %v8350
      %v8479 = vadd.f32 %v8219, %v8351
      %v8480 = vadd.f32 %v8220, %v8352
      %v8481 = vadd.f32 %v8221, %v8353
      %v8482 = vadd.f32 %v8222, %v8354
      %v8483 = vadd.f32 %v8223, %v8355
      %v8484 = vadd.f32 %v8224, %v8356
      %v8485 = vadd.f32 %v8225, %v8357
      %v8486 = vadd.f32 %v8226, %v8358
      %v8487 = vadd.f32 %v8227, %v8359
      %v8488 = vadd.f32 %v8228, %v8360
      %v8489 = vadd.f32 %v8229, %v8361
      %v8490 = vadd.f32 %v8230, %v8362
      %v8491 = vadd.f32 %v8231, %v8363
      %v8492 = vadd.f32 %v8232, %v8364
      %v8493 = vadd.f32 %v8233, %v8365
      %v8494 = vadd.f32 %v8234, %v8366
      %v8495 = vadd.f32 %v8235, %v8367
      %v8496 = vadd.f32 %v8236, %v8368
      %v8497 = vadd.f32 %v8237, %v8369
      %v8498 = vadd.f32 %v8238, %v8370
      %v8499 = vadd.f32 %v8239, %v8371
      %v8500 = vadd.f32 %v8240, %v8372
      %v8501 = vadd.f32 %v8241, %v8373
      %v8502 = vadd.f32 %v8242, %v8374
      %v8503 = vadd.f32 %v8243, %v8375
      %v8504 = vadd.f32 %v8244, %v8376
      %v8505 = vadd.f32 %v8245, %v8377
      %v8506 = vadd.f32 %v8246, %v8378
      %v8507 = vadd.f32 %v8247, %v8379
      %v8508 = vadd.f32 %v8248, %v8380
      %v8509 = vadd.f32 %v8249, %v8381
      %v8510 = vadd.f32 %v8250, %v8382
      %v8511 = vadd.f32 %v8251, %v8383
      %v8512 = vadd.f32 %v8252, %v8384
      %v8513 = vadd.f32 %v8253, %v8385
      %v8514 = vadd.f32 %v8254, %v8386
      %v8515 = vadd.f32 %v8255, %v8387
      %v8516 = vadd.f32 %v8256, %v8388
      %v8517 = vadd.f32 %v8257, %v8389
      %v8518 = vadd.f32 %v8258, %v8390
      %v8519 = vadd.f32 %v8259, %v8391
      %v8520 = vadd.f32 %v8260, %v8392
      %v8521 = vadd.f32 %v8261, %v8393
      %v8522 = vadd.f32 %v8262, %v8394
      %v8523 = vadd.f32 %v8263, %v8395
      %v8524 = vadd.f32 %v8264, %v8396
      %v8525 = vadd.f32 %v8265, %v8397
      %v8526 = vadd.f32 %v8266, %v8398
      %v8527 = vadd.f32 %v8267, %v8399
      %v8528 = vadd.f32 %v8268, %v8400
      %v8529 = vadd.f32 %v8269, %v8401
      %v8530 = vadd.f32 %v8270, %v8402
      %v8531 = vadd.f32 %v8271, %v8403
      %v8532 = vadd.f32 %v8272, %v8404
      %v8533 = vadd.f32 %v8273, %v8405
      %v8534 = vadd.f32 %v8274, %v8406
      %v8535 = vadd.f32 %v8275, %v8407
      %v8536 = vadd.f32 %v8276, %v8408
      %v8537 = vadd.f32 %v8277, %v8409
      %v8538 = vadd.f32 %v8278, %v8410
      %v8539 = vadd.f32 %v8279, %v8411
      %v8540 = vadd.f32 %v8280, %v8412
      %v8541 = vadd.f32 %v8281, %v8413
      %v8542 = vadd.f32 %v8282, %v8414
      %v8543 = vadd.f32 %v8283, %v8415
      %v8544 = vadd.f32 %v8284, %v8416
      %v8545 = vadd.f32 %v8285, %v8417
      %v8546 = vadd.f32 %v8286, %v8418
      %v8547 = vadd.f32 %v8287, %v8419
      %v8548 = vadd.f32 %v8288, %v8420
      %v8549 = vadd.f32 %v8289, %v8421
      %v8550 = vadd.f32 %v8290, %v8422
      %v8551 = vadd.f32 %v8291, %v8423
      %v8552 = vadd.f32 %v8292, %v8424
      %v8553 = vadd.f32 %v8293, %v8425
      %v8554 = vadd.f32 %v8294, %v8426
      %v8555 = vadd.f32 %v8295, %v8427
      %v8556 = vadd.f32 %v8296, %v8428
      %v8557 = vadd.f32 %v8297, %v8429
      %v8558 = vadd.f32 %v8298, %v8430
      %v8559 = vadd.f32 %v8299, %v8431
      %v8560 = vadd.f32 %v8300, %v8432
      %v8561 = vadd.f32 %v8301, %v8433
      %v8562 = vadd.f32 %v8302, %v8434
      %v8563 = vadd.f32 %v8303, %v8435
      %v8564 = vadd.f32 %v8304, %v8436
      %v8565 = vadd.f32 %v8305, %v8437
      %v8566 = vadd.f32 %v8306, %v8438
      %v8567 = vadd.f32 %v8307, %v8439
      %v8568 = vadd.f32 %v8308, %v8440
      %v8569 = vadd.f32 %v8309, %v8441
      %v8570 = vadd.f32 %v8310, %v8442
      %v8571 = vadd.f32 %v8311, %v8443
      %v8572 = vadd.f32 %v8312, %v8444
      %v8573 = vadd.f32 %v8313, %v8445
      %v8574 = vadd.f32 %v8314, %v8446
      %v8575 = vadd.f32 %v8315, %v8447
      %v8576 = vadd.f32 %v8316, %v8448
      %v8577 = vadd.f32 %v8317, %v8449
      %v8578 = vadd.f32 %v8318, %v8450
      %v8579 = vlaneseq
      %v8580 = vshrl.u32 %v8579, 7
      %v8581 = vsub.s32 3, %v8580
      %v8582 = vrot.slane %v7926, %v8581
      %v8583 = vmul.f32 %v2788, %v8582
      %v8584 = vmul.f32 %v2792, %v8582
      %v8585 = vmul.f32 %v2796, %v8582
      %v8586 = vmul.f32 %v2800, %v8582
      %v8587 = vmul.f32 %v2804, %v8582
      %v8588 = vmul.f32 %v2808, %v8582
      %v8589 = vmul.f32 %v2812, %v8582
      %v8590 = vmul.f32 %v2816, %v8582
      %v8591 = vmul.f32 %v2820, %v8582
      %v8592 = vmul.f32 %v2824, %v8582
      %v8593 = vmul.f32 %v2828, %v8582
      %v8594 = vmul.f32 %v2832, %v8582
      %v8595 = vmul.f32 %v2836, %v8582
      %v8596 = vmul.f32 %v2840, %v8582
      %v8597 = vmul.f32 %v2844, %v8582
      %v8598 = vmul.f32 %v2848, %v8582
      %v8599 = vmul.f32 %v2852, %v8582
      %v8600 = vmul.f32 %v2856, %v8582
      %v8601 = vmul.f32 %v2860, %v8582
      %v8602 = vmul.f32 %v2864, %v8582
      %v8603 = vmul.f32 %v2868, %v8582
      %v8604 = vmul.f32 %v2872, %v8582
      %v8605 = vmul.f32 %v2876, %v8582
      %v8606 = vmul.f32 %v2880, %v8582
      %v8607 = vmul.f32 %v2884, %v8582
      %v8608 = vmul.f32 %v2888, %v8582
      %v8609 = vmul.f32 %v2892, %v8582
      %v8610 = vmul.f32 %v2896, %v8582
      %v8611 = vmul.f32 %v2900, %v8582
      %v8612 = vmul.f32 %v2904, %v8582
      %v8613 = vmul.f32 %v2908, %v8582
      %v8614 = vmul.f32 %v2912, %v8582
      %v8615 = vmul.f32 %v2916, %v8582
      %v8616 = vmul.f32 %v2920, %v8582
      %v8617 = vmul.f32 %v2924, %v8582
      %v8618 = vmul.f32 %v2928, %v8582
      %v8619 = vmul.f32 %v2932, %v8582
      %v8620 = vmul.f32 %v2936, %v8582
      %v8621 = vmul.f32 %v2940, %v8582
      %v8622 = vmul.f32 %v2944, %v8582
      %v8623 = vmul.f32 %v2948, %v8582
      %v8624 = vmul.f32 %v2952, %v8582
      %v8625 = vmul.f32 %v2956, %v8582
      %v8626 = vmul.f32 %v2960, %v8582
      %v8627 = vmul.f32 %v2964, %v8582
      %v8628 = vmul.f32 %v2968, %v8582
      %v8629 = vmul.f32 %v2972, %v8582
      %v8630 = vmul.f32 %v2976, %v8582
      %v8631 = vmul.f32 %v2980, %v8582
      %v8632 = vmul.f32 %v2984, %v8582
      %v8633 = vmul.f32 %v2988, %v8582
      %v8634 = vmul.f32 %v2992, %v8582
      %v8635 = vmul.f32 %v2996, %v8582
      %v8636 = vmul.f32 %v3000, %v8582
      %v8637 = vmul.f32 %v3004, %v8582
      %v8638 = vmul.f32 %v3008, %v8582
      %v8639 = vmul.f32 %v3012, %v8582
      %v8640 = vmul.f32 %v3016, %v8582
      %v8641 = vmul.f32 %v3020, %v8582
      %v8642 = vmul.f32 %v3024, %v8582
      %v8643 = vmul.f32 %v3028, %v8582
      %v8644 = vmul.f32 %v3032, %v8582
      %v8645 = vmul.f32 %v3036, %v8582
      %v8646 = vmul.f32 %v3040, %v8582
      %v8647 = vmul.f32 %v3044, %v8582
      %v8648 = vmul.f32 %v3048, %v8582
      %v8649 = vmul.f32 %v3052, %v8582
      %v8650 = vmul.f32 %v3056, %v8582
      %v8651 = vmul.f32 %v3060, %v8582
      %v8652 = vmul.f32 %v3064, %v8582
      %v8653 = vmul.f32 %v3068, %v8582
      %v8654 = vmul.f32 %v3072, %v8582
      %v8655 = vmul.f32 %v3076, %v8582
      %v8656 = vmul.f32 %v3080, %v8582
      %v8657 = vmul.f32 %v3084, %v8582
      %v8658 = vmul.f32 %v3088, %v8582
      %v8659 = vmul.f32 %v3092, %v8582
      %v8660 = vmul.f32 %v3096, %v8582
      %v8661 = vmul.f32 %v3100, %v8582
      %v8662 = vmul.f32 %v3104, %v8582
      %v8663 = vmul.f32 %v3108, %v8582
      %v8664 = vmul.f32 %v3112, %v8582
      %v8665 = vmul.f32 %v3116, %v8582
      %v8666 = vmul.f32 %v3120, %v8582
      %v8667 = vmul.f32 %v3124, %v8582
      %v8668 = vmul.f32 %v3128, %v8582
      %v8669 = vmul.f32 %v3132, %v8582
      %v8670 = vmul.f32 %v3136, %v8582
      %v8671 = vmul.f32 %v3140, %v8582
      %v8672 = vmul.f32 %v3144, %v8582
      %v8673 = vmul.f32 %v3148, %v8582
      %v8674 = vmul.f32 %v3152, %v8582
      %v8675 = vmul.f32 %v3156, %v8582
      %v8676 = vmul.f32 %v3160, %v8582
      %v8677 = vmul.f32 %v3164, %v8582
      %v8678 = vmul.f32 %v3168, %v8582
      %v8679 = vmul.f32 %v3172, %v8582
      %v8680 = vmul.f32 %v3176, %v8582
      %v8681 = vmul.f32 %v3180, %v8582
      %v8682 = vmul.f32 %v3184, %v8582
      %v8683 = vmul.f32 %v3188, %v8582
      %v8684 = vmul.f32 %v3192, %v8582
      %v8685 = vmul.f32 %v3196, %v8582
      %v8686 = vmul.f32 %v3200, %v8582
      %v8687 = vmul.f32 %v3204, %v8582
      %v8688 = vmul.f32 %v3208, %v8582
      %v8689 = vmul.f32 %v3212, %v8582
      %v8690 = vmul.f32 %v3216, %v8582
      %v8691 = vmul.f32 %v3220, %v8582
      %v8692 = vmul.f32 %v3224, %v8582
      %v8693 = vmul.f32 %v3228, %v8582
      %v8694 = vmul.f32 %v3232, %v8582
      %v8695 = vmul.f32 %v3236, %v8582
      %v8696 = vmul.f32 %v3240, %v8582
      %v8697 = vmul.f32 %v3244, %v8582
      %v8698 = vmul.f32 %v3248, %v8582
      %v8699 = vmul.f32 %v3252, %v8582
      %v8700 = vmul.f32 %v3256, %v8582
      %v8701 = vmul.f32 %v3260, %v8582
      %v8702 = vmul.f32 %v3264, %v8582
      %v8703 = vmul.f32 %v3268, %v8582
      %v8704 = vmul.f32 %v3272, %v8582
      %v8705 = vmul.f32 %v3276, %v8582
      %v8706 = vmul.f32 %v3280, %v8582
      %v8707 = vmul.f32 %v3284, %v8582
      %v8708 = vmul.f32 %v3288, %v8582
      %v8709 = vmul.f32 %v3292, %v8582
      %v8710 = vmul.f32 %v3296, %v8582
      %v8711 = vadd.f32 %v8451, %v8583
      %v8712 = vadd.f32 %v8452, %v8584
      %v8713 = vadd.f32 %v8453, %v8585
      %v8714 = vadd.f32 %v8454, %v8586
      %v8715 = vadd.f32 %v8455, %v8587
      %v8716 = vadd.f32 %v8456, %v8588
      %v8717 = vadd.f32 %v8457, %v8589
      %v8718 = vadd.f32 %v8458, %v8590
      %v8719 = vadd.f32 %v8459, %v8591
      %v8720 = vadd.f32 %v8460, %v8592
      %v8721 = vadd.f32 %v8461, %v8593
      %v8722 = vadd.f32 %v8462, %v8594
      %v8723 = vadd.f32 %v8463, %v8595
      %v8724 = vadd.f32 %v8464, %v8596
      %v8725 = vadd.f32 %v8465, %v8597
      %v8726 = vadd.f32 %v8466, %v8598
      %v8727 = vadd.f32 %v8467, %v8599
      %v8728 = vadd.f32 %v8468, %v8600
      %v8729 = vadd.f32 %v8469, %v8601
      %v8730 = vadd.f32 %v8470, %v8602
      %v8731 = vadd.f32 %v8471, %v8603
      %v8732 = vadd.f32 %v8472, %v8604
      %v8733 = vadd.f32 %v8473, %v8605
      %v8734 = vadd.f32 %v8474, %v8606
      %v8735 = vadd.f32 %v8475, %v8607
      %v8736 = vadd.f32 %v8476, %v8608
      %v8737 = vadd.f32 %v8477, %v8609
      %v8738 = vadd.f32 %v8478, %v8610
      %v8739 = vadd.f32 %v8479, %v8611
      %v8740 = vadd.f32 %v8480, %v8612
      %v8741 = vadd.f32 %v8481, %v8613
      %v8742 = vadd.f32 %v8482, %v8614
      %v8743 = vadd.f32 %v8483, %v8615
      %v8744 = vadd.f32 %v8484, %v8616
      %v8745 = vadd.f32 %v8485, %v8617
      %v8746 = vadd.f32 %v8486, %v8618
      %v8747 = vadd.f32 %v8487, %v8619
      %v8748 = vadd.f32 %v8488, %v8620
      %v8749 = vadd.f32 %v8489, %v8621
      %v8750 = vadd.f32 %v8490, %v8622
      %v8751 = vadd.f32 %v8491, %v8623
      %v8752 = vadd.f32 %v8492, %v8624
      %v8753 = vadd.f32 %v8493, %v8625
      %v8754 = vadd.f32 %v8494, %v8626
      %v8755 = vadd.f32 %v8495, %v8627
      %v8756 = vadd.f32 %v8496, %v8628
      %v8757 = vadd.f32 %v8497, %v8629
      %v8758 = vadd.f32 %v8498, %v8630
      %v8759 = vadd.f32 %v8499, %v8631
      %v8760 = vadd.f32 %v8500, %v8632
      %v8761 = vadd.f32 %v8501, %v8633
      %v8762 = vadd.f32 %v8502, %v8634
      %v8763 = vadd.f32 %v8503, %v8635
      %v8764 = vadd.f32 %v8504, %v8636
      %v8765 = vadd.f32 %v8505, %v8637
      %v8766 = vadd.f32 %v8506, %v8638
      %v8767 = vadd.f32 %v8507, %v8639
      %v8768 = vadd.f32 %v8508, %v8640
      %v8769 = vadd.f32 %v8509, %v8641
      %v8770 = vadd.f32 %v8510, %v8642
      %v8771 = vadd.f32 %v8511, %v8643
      %v8772 = vadd.f32 %v8512, %v8644
      %v8773 = vadd.f32 %v8513, %v8645
      %v8774 = vadd.f32 %v8514, %v8646
      %v8775 = vadd.f32 %v8515, %v8647
      %v8776 = vadd.f32 %v8516, %v8648
      %v8777 = vadd.f32 %v8517, %v8649
      %v8778 = vadd.f32 %v8518, %v8650
      %v8779 = vadd.f32 %v8519, %v8651
      %v8780 = vadd.f32 %v8520, %v8652
      %v8781 = vadd.f32 %v8521, %v8653
      %v8782 = vadd.f32 %v8522, %v8654
      %v8783 = vadd.f32 %v8523, %v8655
      %v8784 = vadd.f32 %v8524, %v8656
      %v8785 = vadd.f32 %v8525, %v8657
      %v8786 = vadd.f32 %v8526, %v8658
      %v8787 = vadd.f32 %v8527, %v8659
      %v8788 = vadd.f32 %v8528, %v8660
      %v8789 = vadd.f32 %v8529, %v8661
      %v8790 = vadd.f32 %v8530, %v8662
      %v8791 = vadd.f32 %v8531, %v8663
      %v8792 = vadd.f32 %v8532, %v8664
      %v8793 = vadd.f32 %v8533, %v8665
      %v8794 = vadd.f32 %v8534, %v8666
      %v8795 = vadd.f32 %v8535, %v8667
      %v8796 = vadd.f32 %v8536, %v8668
      %v8797 = vadd.f32 %v8537, %v8669
      %v8798 = vadd.f32 %v8538, %v8670
      %v8799 = vadd.f32 %v8539, %v8671
      %v8800 = vadd.f32 %v8540, %v8672
      %v8801 = vadd.f32 %v8541, %v8673
      %v8802 = vadd.f32 %v8542, %v8674
      %v8803 = vadd.f32 %v8543, %v8675
      %v8804 = vadd.f32 %v8544, %v8676
      %v8805 = vadd.f32 %v8545, %v8677
      %v8806 = vadd.f32 %v8546, %v8678
      %v8807 = vadd.f32 %v8547, %v8679
      %v8808 = vadd.f32 %v8548, %v8680
      %v8809 = vadd.f32 %v8549, %v8681
      %v8810 = vadd.f32 %v8550, %v8682
      %v8811 = vadd.f32 %v8551, %v8683
      %v8812 = vadd.f32 %v8552, %v8684
      %v8813 = vadd.f32 %v8553, %v8685
      %v8814 = vadd.f32 %v8554, %v8686
      %v8815 = vadd.f32 %v8555, %v8687
      %v8816 = vadd.f32 %v8556, %v8688
      %v8817 = vadd.f32 %v8557, %v8689
      %v8818 = vadd.f32 %v8558, %v8690
      %v8819 = vadd.f32 %v8559, %v8691
      %v8820 = vadd.f32 %v8560, %v8692
      %v8821 = vadd.f32 %v8561, %v8693
      %v8822 = vadd.f32 %v8562, %v8694
      %v8823 = vadd.f32 %v8563, %v8695
      %v8824 = vadd.f32 %v8564, %v8696
      %v8825 = vadd.f32 %v8565, %v8697
      %v8826 = vadd.f32 %v8566, %v8698
      %v8827 = vadd.f32 %v8567, %v8699
      %v8828 = vadd.f32 %v8568, %v8700
      %v8829 = vadd.f32 %v8569, %v8701
      %v8830 = vadd.f32 %v8570, %v8702
      %v8831 = vadd.f32 %v8571, %v8703
      %v8832 = vadd.f32 %v8572, %v8704
      %v8833 = vadd.f32 %v8573, %v8705
      %v8834 = vadd.f32 %v8574, %v8706
      %v8835 = vadd.f32 %v8575, %v8707
      %v8836 = vadd.f32 %v8576, %v8708
      %v8837 = vadd.f32 %v8577, %v8709
      %v8838 = vadd.f32 %v8578, %v8710
      %v8839 = vld [vmem:[%s8] sm:$0x1]
      %v8841 = vlaneseq
      %v8842 = vshrl.u32 %v8841, 7
      %v8843 = vsub.s32 0, %v8842
      %v8844 = vrot.slane %v8839, %v8843
      %v8846 = vadd.f32 %v8711, %v8844
      %v8847 = vadd.f32 %v8712, %v8844
      %v8848 = vadd.f32 %v8713, %v8844
      %v8849 = vadd.f32 %v8714, %v8844
      %v8850 = vadd.f32 %v8715, %v8844
      %v8851 = vadd.f32 %v8716, %v8844
      %v8852 = vadd.f32 %v8717, %v8844
      %v8853 = vadd.f32 %v8718, %v8844
      %v8854 = vadd.f32 %v8719, %v8844
      %v8855 = vadd.f32 %v8720, %v8844
      %v8856 = vadd.f32 %v8721, %v8844
      %v8857 = vadd.f32 %v8722, %v8844
      %v8858 = vadd.f32 %v8723, %v8844
      %v8859 = vadd.f32 %v8724, %v8844
      %v8860 = vadd.f32 %v8725, %v8844
      %v8861 = vadd.f32 %v8726, %v8844
      %v8862 = vadd.f32 %v8727, %v8844
      %v8863 = vadd.f32 %v8728, %v8844
      %v8864 = vadd.f32 %v8729, %v8844
      %v8865 = vadd.f32 %v8730, %v8844
      %v8866 = vadd.f32 %v8731, %v8844
      %v8867 = vadd.f32 %v8732, %v8844
      %v8868 = vadd.f32 %v8733, %v8844
      %v8869 = vadd.f32 %v8734, %v8844
      %v8870 = vadd.f32 %v8735, %v8844
      %v8871 = vadd.f32 %v8736, %v8844
      %v8872 = vadd.f32 %v8737, %v8844
      %v8873 = vadd.f32 %v8738, %v8844
      %v8874 = vadd.f32 %v8739, %v8844
      %v8875 = vadd.f32 %v8740, %v8844
      %v8876 = vadd.f32 %v8741, %v8844
      %v8877 = vadd.f32 %v8742, %v8844
      %v8878 = vadd.f32 %v8743, %v8844
      %v8879 = vadd.f32 %v8744, %v8844
      %v8880 = vadd.f32 %v8745, %v8844
      %v8881 = vadd.f32 %v8746, %v8844
      %v8882 = vadd.f32 %v8747, %v8844
      %v8883 = vadd.f32 %v8748, %v8844
      %v8884 = vadd.f32 %v8749, %v8844
      %v8885 = vadd.f32 %v8750, %v8844
      %v8886 = vadd.f32 %v8751, %v8844
      %v8887 = vadd.f32 %v8752, %v8844
      %v8888 = vadd.f32 %v8753, %v8844
      %v8889 = vadd.f32 %v8754, %v8844
      %v8890 = vadd.f32 %v8755, %v8844
      %v8891 = vadd.f32 %v8756, %v8844
      %v8892 = vadd.f32 %v8757, %v8844
      %v8893 = vadd.f32 %v8758, %v8844
      %v8894 = vadd.f32 %v8759, %v8844
      %v8895 = vadd.f32 %v8760, %v8844
      %v8896 = vadd.f32 %v8761, %v8844
      %v8897 = vadd.f32 %v8762, %v8844
      %v8898 = vadd.f32 %v8763, %v8844
      %v8899 = vadd.f32 %v8764, %v8844
      %v8900 = vadd.f32 %v8765, %v8844
      %v8901 = vadd.f32 %v8766, %v8844
      %v8902 = vadd.f32 %v8767, %v8844
      %v8903 = vadd.f32 %v8768, %v8844
      %v8904 = vadd.f32 %v8769, %v8844
      %v8905 = vadd.f32 %v8770, %v8844
      %v8906 = vadd.f32 %v8771, %v8844
      %v8907 = vadd.f32 %v8772, %v8844
      %v8908 = vadd.f32 %v8773, %v8844
      %v8909 = vadd.f32 %v8774, %v8844
      %v8910 = vadd.f32 %v8775, %v8844
      %v8911 = vadd.f32 %v8776, %v8844
      %v8912 = vadd.f32 %v8777, %v8844
      %v8913 = vadd.f32 %v8778, %v8844
      %v8914 = vadd.f32 %v8779, %v8844
      %v8915 = vadd.f32 %v8780, %v8844
      %v8916 = vadd.f32 %v8781, %v8844
      %v8917 = vadd.f32 %v8782, %v8844
      %v8918 = vadd.f32 %v8783, %v8844
      %v8919 = vadd.f32 %v8784, %v8844
      %v8920 = vadd.f32 %v8785, %v8844
      %v8921 = vadd.f32 %v8786, %v8844
      %v8922 = vadd.f32 %v8787, %v8844
      %v8923 = vadd.f32 %v8788, %v8844
      %v8924 = vadd.f32 %v8789, %v8844
      %v8925 = vadd.f32 %v8790, %v8844
      %v8926 = vadd.f32 %v8791, %v8844
      %v8927 = vadd.f32 %v8792, %v8844
      %v8928 = vadd.f32 %v8793, %v8844
      %v8929 = vadd.f32 %v8794, %v8844
      %v8930 = vadd.f32 %v8795, %v8844
      %v8931 = vadd.f32 %v8796, %v8844
      %v8932 = vadd.f32 %v8797, %v8844
      %v8933 = vadd.f32 %v8798, %v8844
      %v8934 = vadd.f32 %v8799, %v8844
      %v8935 = vadd.f32 %v8800, %v8844
      %v8936 = vadd.f32 %v8801, %v8844
      %v8937 = vadd.f32 %v8802, %v8844
      %v8938 = vadd.f32 %v8803, %v8844
      %v8939 = vadd.f32 %v8804, %v8844
      %v8940 = vadd.f32 %v8805, %v8844
      %v8941 = vadd.f32 %v8806, %v8844
      %v8942 = vadd.f32 %v8807, %v8844
      %v8943 = vadd.f32 %v8808, %v8844
      %v8944 = vadd.f32 %v8809, %v8844
      %v8945 = vadd.f32 %v8810, %v8844
      %v8946 = vadd.f32 %v8811, %v8844
      %v8947 = vadd.f32 %v8812, %v8844
      %v8948 = vadd.f32 %v8813, %v8844
      %v8949 = vadd.f32 %v8814, %v8844
      %v8950 = vadd.f32 %v8815, %v8844
      %v8951 = vadd.f32 %v8816, %v8844
      %v8952 = vadd.f32 %v8817, %v8844
      %v8953 = vadd.f32 %v8818, %v8844
      %v8954 = vadd.f32 %v8819, %v8844
      %v8955 = vadd.f32 %v8820, %v8844
      %v8956 = vadd.f32 %v8821, %v8844
      %v8957 = vadd.f32 %v8822, %v8844
      %v8958 = vadd.f32 %v8823, %v8844
      %v8959 = vadd.f32 %v8824, %v8844
      %v8960 = vadd.f32 %v8825, %v8844
      %v8961 = vadd.f32 %v8826, %v8844
      %v8962 = vadd.f32 %v8827, %v8844
      %v8963 = vadd.f32 %v8828, %v8844
      %v8964 = vadd.f32 %v8829, %v8844
      %v8965 = vadd.f32 %v8830, %v8844
      %v8966 = vadd.f32 %v8831, %v8844
      %v8967 = vadd.f32 %v8832, %v8844
      %v8968 = vadd.f32 %v8833, %v8844
      %v8969 = vadd.f32 %v8834, %v8844
      %v8970 = vadd.f32 %v8835, %v8844
      %v8971 = vadd.f32 %v8836, %v8844
      %v8972 = vadd.f32 %v8837, %v8844
      %v8973 = vadd.f32 %v8838, %v8844
      %v8974 = vld [vmem:[%s5] sm:$0xff]
      %v8975 = vld [vmem:[%s5 + $0x8] sm:$0xff]
      %v8976 = vld [vmem:[%s6] sm:$0x1]
      %v8978 = vlaneseq
      %v8979 = vshrl.u32 %v8978, 7
      %v8980 = vsub.s32 0, %v8979
      %v8981 = vrot.slane %v8976, %v8980
      %v8984 = vsel %vm3824, %v7798, 0
      %v8987 = vsel %vm3824, %v7799, 0
      %v8990 = vsel %vm3824, %v7800, 0
      %v8993 = vsel %vm3824, %v7801, 0
      %v8996 = vsel %vm3824, %v7802, 0
      %v8999 = vsel %vm3824, %v7803, 0
      %v9002 = vsel %vm3824, %v7804, 0
      %v9005 = vsel %vm3824, %v7805, 0
      %v9008 = vsel %vm3824, %v7806, 0
      %v9011 = vsel %vm3824, %v7807, 0
      %v9014 = vsel %vm3824, %v7808, 0
      %v9017 = vsel %vm3824, %v7809, 0
      %v9020 = vsel %vm3824, %v7810, 0
      %v9023 = vsel %vm3824, %v7811, 0
      %v9026 = vsel %vm3824, %v7812, 0
      %v9029 = vsel %vm3824, %v7813, 0
      %v9032 = vsel %vm3824, %v7814, 0
      %v9035 = vsel %vm3824, %v7815, 0
      %v9038 = vsel %vm3824, %v7816, 0
      %v9041 = vsel %vm3824, %v7817, 0
      %v9044 = vsel %vm3824, %v7818, 0
      %v9047 = vsel %vm3824, %v7819, 0
      %v9050 = vsel %vm3824, %v7820, 0
      %v9053 = vsel %vm3824, %v7821, 0
      %v9056 = vsel %vm3824, %v7822, 0
      %v9059 = vsel %vm3824, %v7823, 0
      %v9062 = vsel %vm3824, %v7824, 0
      %v9065 = vsel %vm3824, %v7825, 0
      %v9068 = vsel %vm3824, %v7826, 0
      %v9071 = vsel %vm3824, %v7827, 0
      %v9074 = vsel %vm3824, %v7828, 0
      %v9077 = vsel %vm3824, %v7829, 0
      %v9080 = vsel %vm3824, %v7830, 0
      %v9083 = vsel %vm3824, %v7831, 0
      %v9086 = vsel %vm3824, %v7832, 0
      %v9089 = vsel %vm3824, %v7833, 0
      %v9092 = vsel %vm3824, %v7834, 0
      %v9095 = vsel %vm3824, %v7835, 0
      %v9098 = vsel %vm3824, %v7836, 0
      %v9101 = vsel %vm3824, %v7837, 0
      %v9104 = vsel %vm3824, %v7838, 0
      %v9107 = vsel %vm3824, %v7839, 0
      %v9110 = vsel %vm3824, %v7840, 0
      %v9113 = vsel %vm3824, %v7841, 0
      %v9116 = vsel %vm3824, %v7842, 0
      %v9119 = vsel %vm3824, %v7843, 0
      %v9122 = vsel %vm3824, %v7844, 0
      %v9125 = vsel %vm3824, %v7845, 0
      %v9128 = vsel %vm3824, %v7846, 0
      %v9131 = vsel %vm3824, %v7847, 0
      %v9134 = vsel %vm3824, %v7848, 0
      %v9137 = vsel %vm3824, %v7849, 0
      %v9140 = vsel %vm3824, %v7850, 0
      %v9143 = vsel %vm3824, %v7851, 0
      %v9146 = vsel %vm3824, %v7852, 0
      %v9149 = vsel %vm3824, %v7853, 0
      %v9152 = vsel %vm3824, %v7854, 0
      %v9155 = vsel %vm3824, %v7855, 0
      %v9158 = vsel %vm3824, %v7856, 0
      %v9161 = vsel %vm3824, %v7857, 0
      %v9164 = vsel %vm3824, %v7858, 0
      %v9167 = vsel %vm3824, %v7859, 0
      %v9170 = vsel %vm3824, %v7860, 0
      %v9173 = vsel %vm3824, %v7861, 0
      %v9176 = vsel %vm3824, %v7862, 0
      %v9179 = vsel %vm3824, %v7863, 0
      %v9182 = vsel %vm3824, %v7864, 0
      %v9185 = vsel %vm3824, %v7865, 0
      %v9188 = vsel %vm3824, %v7866, 0
      %v9191 = vsel %vm3824, %v7867, 0
      %v9194 = vsel %vm3824, %v7868, 0
      %v9197 = vsel %vm3824, %v7869, 0
      %v9200 = vsel %vm3824, %v7870, 0
      %v9203 = vsel %vm3824, %v7871, 0
      %v9206 = vsel %vm3824, %v7872, 0
      %v9209 = vsel %vm3824, %v7873, 0
      %v9212 = vsel %vm3824, %v7874, 0
      %v9215 = vsel %vm3824, %v7875, 0
      %v9218 = vsel %vm3824, %v7876, 0
      %v9221 = vsel %vm3824, %v7877, 0
      %v9224 = vsel %vm3824, %v7878, 0
      %v9227 = vsel %vm3824, %v7879, 0
      %v9230 = vsel %vm3824, %v7880, 0
      %v9233 = vsel %vm3824, %v7881, 0
      %v9236 = vsel %vm3824, %v7882, 0
      %v9239 = vsel %vm3824, %v7883, 0
      %v9242 = vsel %vm3824, %v7884, 0
      %v9245 = vsel %vm3824, %v7885, 0
      %v9248 = vsel %vm3824, %v7886, 0
      %v9251 = vsel %vm3824, %v7887, 0
      %v9254 = vsel %vm3824, %v7888, 0
      %v9257 = vsel %vm3824, %v7889, 0
      %v9260 = vsel %vm3824, %v7890, 0
      %v9263 = vsel %vm3824, %v7891, 0
      %v9266 = vsel %vm3824, %v7892, 0
      %v9269 = vsel %vm3824, %v7893, 0
      %v9272 = vsel %vm3824, %v7894, 0
      %v9275 = vsel %vm3824, %v7895, 0
      %v9278 = vsel %vm3824, %v7896, 0
      %v9281 = vsel %vm3824, %v7897, 0
      %v9284 = vsel %vm3824, %v7898, 0
      %v9287 = vsel %vm3824, %v7899, 0
      %v9290 = vsel %vm3824, %v7900, 0
      %v9293 = vsel %vm3824, %v7901, 0
      %v9296 = vsel %vm3824, %v7902, 0
      %v9299 = vsel %vm3824, %v7903, 0
      %v9302 = vsel %vm3824, %v7904, 0
      %v9305 = vsel %vm3824, %v7905, 0
      %v9308 = vsel %vm3824, %v7906, 0
      %v9311 = vsel %vm3824, %v7907, 0
      %v9314 = vsel %vm3824, %v7908, 0
      %v9317 = vsel %vm3824, %v7909, 0
      %v9320 = vsel %vm3824, %v7910, 0
      %v9323 = vsel %vm3824, %v7911, 0
      %v9326 = vsel %vm3824, %v7912, 0
      %v9329 = vsel %vm3824, %v7913, 0
      %v9332 = vsel %vm3824, %v7914, 0
      %v9335 = vsel %vm3824, %v7915, 0
      %v9338 = vsel %vm3824, %v7916, 0
      %v9341 = vsel %vm3824, %v7917, 0
      %v9344 = vsel %vm3824, %v7918, 0
      %v9347 = vsel %vm3824, %v7919, 0
      %v9350 = vsel %vm3824, %v7920, 0
      %v9353 = vsel %vm3824, %v7921, 0
      %v9356 = vsel %vm3824, %v7922, 0
      %v9359 = vsel %vm3824, %v7923, 0
      %v9362 = vsel %vm3824, %v7924, 0
      %v9365 = vsel %vm3824, %v7925, 0
      %9367 = vmatprep.subr.mxu0 0.0
      %9368 = vmatpush1.msra.mxu0 0.0
      %9369 = vmatprep.subr.mxu0 0.0
      %9370 = vmatpush1.msra.mxu0 0.0
      %9371 = vmatprep.subr.mxu0 0.0
      %9372 = vmatpush1.msra.mxu0 0.0
      %9373 = vmatprep.subr.mxu0 0.0
      %9374 = vmatpush1.msra.mxu0 0.0
      %9375 = vmatprep.subr.mxu0 0.0
      %9376 = vmatpush1.msra.mxu0 0.0
      %9377 = vmatprep.subr.mxu0 0.0
      %9378 = vmatpush1.msra.mxu0 0.0
      %9379 = vmatprep.subr.mxu0 0.0
      %9380 = vmatpush1.msra.mxu0 0.0
      %9381 = vmatprep.subr.mxu0 0.0
      %9382 = vmatpush1.msra.mxu0 0.0
      %9383 = vmatprep.subr.mxu0 0.0
      %9384 = vmatpush1.msra.mxu0 0.0
      %9385 = vmatprep.subr.mxu0 0.0
      %9386 = vmatpush1.msra.mxu0 0.0
      %9387 = vmatprep.subr.mxu0 0.0
      %9388 = vmatpush1.msra.mxu0 0.0
      %9389 = vmatprep.subr.mxu0 0.0
      %9390 = vmatpush1.msra.mxu0 0.0
      %9391 = vmatprep.subr.mxu0 0.0
      %9392 = vmatpush1.msra.mxu0 0.0
      %9393 = vmatprep.subr.mxu0 0.0
      %9394 = vmatpush1.msra.mxu0 0.0
      %9395 = vmatprep.subr.mxu0 0.0
      %9396 = vmatpush1.msra.mxu0 %v8975
      %9397 = vmatprep.subr.mxu0 0.0
      %9398 = vmatpush1.msra.mxu0 %v8974
      %9399 = vmatprep.subr.mxu0 0.0
      %9400 = vmatpush2.msra.mxu0 0.0
      %9401 = vmatprep.subr.mxu0 0.0
      %9402 = vmatpush2.msra.mxu0 0.0
      %9403 = vmatprep.subr.mxu0 0.0
      %9404 = vmatpush2.msra.mxu0 0.0
      %9405 = vmatprep.subr.mxu0 0.0
      %9406 = vmatpush2.msra.mxu0 0.0
      %9407 = vmatprep.subr.mxu0 0.0
      %9408 = vmatpush2.msra.mxu0 0.0
      %9409 = vmatprep.subr.mxu0 0.0
      %9410 = vmatpush2.msra.mxu0 0.0
      %9411 = vmatprep.subr.mxu0 0.0
      %9412 = vmatpush2.msra.mxu0 0.0
      %9413 = vmatprep.subr.mxu0 0.0
      %9414 = vmatpush2.msra.mxu0 0.0
      %9415 = vmatprep.subr.mxu0 0.0
      %9416 = vmatpush2.msra.mxu0 0.0
      %9417 = vmatprep.subr.mxu0 0.0
      %9418 = vmatpush2.msra.mxu0 0.0
      %9419 = vmatprep.subr.mxu0 0.0
      %9420 = vmatpush2.msra.mxu0 0.0
      %9421 = vmatprep.subr.mxu0 0.0
      %9422 = vmatpush2.msra.mxu0 0.0
      %9423 = vmatprep.subr.mxu0 0.0
      %9424 = vmatpush2.msra.mxu0 0.0
      %9425 = vmatprep.subr.mxu0 0.0
      %9426 = vmatpush2.msra.mxu0 0.0
      %9427 = vmatprep.subr.mxu0 0.0
      %9428 = vmatpush2.msra.mxu0 0.0
      %9429 = vmatprep.subr.mxu0 0.0
      %9430 = vmatpush2.msra.mxu0 0.0
      %9431 = vmatprep.mubr.f32.mxu0 0.0
      %9432 = vmatmul.mubr.f32.gmra.mxu0 %v8984
      %v9433 = vpop.f32.mrf.mxu0
      %v9434 = vadd.f32 %v8981, %v9433
      %v9435 = vpop.f32.mrf.mxu0
      %9436 = vmatprep.mubr.f32.mxu0 0.0
      %9437 = vmatmul.mubr.f32.gmra.mxu0 %v8987
      %v9438 = vpop.f32.mrf.mxu0
      %v9439 = vadd.f32 %v8981, %v9438
      %v9440 = vpop.f32.mrf.mxu0
      %9441 = vmatprep.mubr.f32.mxu0 0.0
      %9442 = vmatmul.mubr.f32.gmra.mxu0 %v8990
      %v9443 = vpop.f32.mrf.mxu0
      %v9444 = vadd.f32 %v8981, %v9443
      %v9445 = vpop.f32.mrf.mxu0
      %9446 = vmatprep.mubr.f32.mxu0 0.0
      %9447 = vmatmul.mubr.f32.gmra.mxu0 %v8993
      %v9448 = vpop.f32.mrf.mxu0
      %v9449 = vadd.f32 %v8981, %v9448
      %v9450 = vpop.f32.mrf.mxu0
      %9451 = vmatprep.mubr.f32.mxu0 0.0
      %9452 = vmatmul.mubr.f32.gmra.mxu0 %v8996
      %v9453 = vpop.f32.mrf.mxu0
      %v9454 = vadd.f32 %v8981, %v9453
      %v9455 = vpop.f32.mrf.mxu0
      %9456 = vmatprep.mubr.f32.mxu0 0.0
      %9457 = vmatmul.mubr.f32.gmra.mxu0 %v8999
      %v9458 = vpop.f32.mrf.mxu0
      %v9459 = vadd.f32 %v8981, %v9458
      %v9460 = vpop.f32.mrf.mxu0
      %9461 = vmatprep.mubr.f32.mxu0 0.0
      %9462 = vmatmul.mubr.f32.gmra.mxu0 %v9002
      %v9463 = vpop.f32.mrf.mxu0
      %v9464 = vadd.f32 %v8981, %v9463
      %v9465 = vpop.f32.mrf.mxu0
      %9466 = vmatprep.mubr.f32.mxu0 0.0
      %9467 = vmatmul.mubr.f32.gmra.mxu0 %v9005
      %v9468 = vpop.f32.mrf.mxu0
      %v9469 = vadd.f32 %v8981, %v9468
      %v9470 = vpop.f32.mrf.mxu0
      %9471 = vmatprep.mubr.f32.mxu0 0.0
      %9472 = vmatmul.mubr.f32.gmra.mxu0 %v9008
      %v9473 = vpop.f32.mrf.mxu0
      %v9474 = vadd.f32 %v8981, %v9473
      %v9475 = vpop.f32.mrf.mxu0
      %9476 = vmatprep.mubr.f32.mxu0 0.0
      %9477 = vmatmul.mubr.f32.gmra.mxu0 %v9011
      %v9478 = vpop.f32.mrf.mxu0
      %v9479 = vadd.f32 %v8981, %v9478
      %v9480 = vpop.f32.mrf.mxu0
      %9481 = vmatprep.mubr.f32.mxu0 0.0
      %9482 = vmatmul.mubr.f32.gmra.mxu0 %v9014
      %v9483 = vpop.f32.mrf.mxu0
      %v9484 = vadd.f32 %v8981, %v9483
      %v9485 = vpop.f32.mrf.mxu0
      %9486 = vmatprep.mubr.f32.mxu0 0.0
      %9487 = vmatmul.mubr.f32.gmra.mxu0 %v9017
      %v9488 = vpop.f32.mrf.mxu0
      %v9489 = vadd.f32 %v8981, %v9488
      %v9490 = vpop.f32.mrf.mxu0
      %9491 = vmatprep.mubr.f32.mxu0 0.0
      %9492 = vmatmul.mubr.f32.gmra.mxu0 %v9020
      %v9493 = vpop.f32.mrf.mxu0
      %v9494 = vadd.f32 %v8981, %v9493
      %v9495 = vpop.f32.mrf.mxu0
      %9496 = vmatprep.mubr.f32.mxu0 0.0
      %9497 = vmatmul.mubr.f32.gmra.mxu0 %v9023
      %v9498 = vpop.f32.mrf.mxu0
      %v9499 = vadd.f32 %v8981, %v9498
      %v9500 = vpop.f32.mrf.mxu0
      %9501 = vmatprep.mubr.f32.mxu0 0.0
      %9502 = vmatmul.mubr.f32.gmra.mxu0 %v9026
      %v9503 = vpop.f32.mrf.mxu0
      %v9504 = vadd.f32 %v8981, %v9503
      %v9505 = vpop.f32.mrf.mxu0
      %9506 = vmatprep.mubr.f32.mxu0 0.0
      %9507 = vmatmul.mubr.f32.gmra.mxu0 %v9029
      %v9508 = vpop.f32.mrf.mxu0
      %v9509 = vadd.f32 %v8981, %v9508
      %v9510 = vpop.f32.mrf.mxu0
      %9511 = vmatprep.mubr.f32.mxu0 0.0
      %9512 = vmatmul.mubr.f32.gmra.mxu0 %v9032
      %v9513 = vpop.f32.mrf.mxu0
      %v9514 = vadd.f32 %v8981, %v9513
      %v9515 = vpop.f32.mrf.mxu0
      %9516 = vmatprep.mubr.f32.mxu0 0.0
      %9517 = vmatmul.mubr.f32.gmra.mxu0 %v9035
      %v9518 = vpop.f32.mrf.mxu0
      %v9519 = vadd.f32 %v8981, %v9518
      %v9520 = vpop.f32.mrf.mxu0
      %9521 = vmatprep.mubr.f32.mxu0 0.0
      %9522 = vmatmul.mubr.f32.gmra.mxu0 %v9038
      %v9523 = vpop.f32.mrf.mxu0
      %v9524 = vadd.f32 %v8981, %v9523
      %v9525 = vpop.f32.mrf.mxu0
      %9526 = vmatprep.mubr.f32.mxu0 0.0
      %9527 = vmatmul.mubr.f32.gmra.mxu0 %v9041
      %v9528 = vpop.f32.mrf.mxu0
      %v9529 = vadd.f32 %v8981, %v9528
      %v9530 = vpop.f32.mrf.mxu0
      %9531 = vmatprep.mubr.f32.mxu0 0.0
      %9532 = vmatmul.mubr.f32.gmra.mxu0 %v9044
      %v9533 = vpop.f32.mrf.mxu0
      %v9534 = vadd.f32 %v8981, %v9533
      %v9535 = vpop.f32.mrf.mxu0
      %9536 = vmatprep.mubr.f32.mxu0 0.0
      %9537 = vmatmul.mubr.f32.gmra.mxu0 %v9047
      %v9538 = vpop.f32.mrf.mxu0
      %v9539 = vadd.f32 %v8981, %v9538
      %v9540 = vpop.f32.mrf.mxu0
      %9541 = vmatprep.mubr.f32.mxu0 0.0
      %9542 = vmatmul.mubr.f32.gmra.mxu0 %v9050
      %v9543 = vpop.f32.mrf.mxu0
      %v9544 = vadd.f32 %v8981, %v9543
      %v9545 = vpop.f32.mrf.mxu0
      %9546 = vmatprep.mubr.f32.mxu0 0.0
      %9547 = vmatmul.mubr.f32.gmra.mxu0 %v9053
      %v9548 = vpop.f32.mrf.mxu0
      %v9549 = vadd.f32 %v8981, %v9548
      %v9550 = vpop.f32.mrf.mxu0
      %9551 = vmatprep.mubr.f32.mxu0 0.0
      %9552 = vmatmul.mubr.f32.gmra.mxu0 %v9056
      %v9553 = vpop.f32.mrf.mxu0
      %v9554 = vadd.f32 %v8981, %v9553
      %v9555 = vpop.f32.mrf.mxu0
      %9556 = vmatprep.mubr.f32.mxu0 0.0
      %9557 = vmatmul.mubr.f32.gmra.mxu0 %v9059
      %v9558 = vpop.f32.mrf.mxu0
      %v9559 = vadd.f32 %v8981, %v9558
      %v9560 = vpop.f32.mrf.mxu0
      %9561 = vmatprep.mubr.f32.mxu0 0.0
      %9562 = vmatmul.mubr.f32.gmra.mxu0 %v9062
      %v9563 = vpop.f32.mrf.mxu0
      %v9564 = vadd.f32 %v8981, %v9563
      %v9565 = vpop.f32.mrf.mxu0
      %9566 = vmatprep.mubr.f32.mxu0 0.0
      %9567 = vmatmul.mubr.f32.gmra.mxu0 %v9065
      %v9568 = vpop.f32.mrf.mxu0
      %v9569 = vadd.f32 %v8981, %v9568
      %v9570 = vpop.f32.mrf.mxu0
      %9571 = vmatprep.mubr.f32.mxu0 0.0
      %9572 = vmatmul.mubr.f32.gmra.mxu0 %v9068
      %v9573 = vpop.f32.mrf.mxu0
      %v9574 = vadd.f32 %v8981, %v9573
      %v9575 = vpop.f32.mrf.mxu0
      %9576 = vmatprep.mubr.f32.mxu0 0.0
      %9577 = vmatmul.mubr.f32.gmra.mxu0 %v9071
      %v9578 = vpop.f32.mrf.mxu0
      %v9579 = vadd.f32 %v8981, %v9578
      %v9580 = vpop.f32.mrf.mxu0
      %9581 = vmatprep.mubr.f32.mxu0 0.0
      %9582 = vmatmul.mubr.f32.gmra.mxu0 %v9074
      %v9583 = vpop.f32.mrf.mxu0
      %v9584 = vadd.f32 %v8981, %v9583
      %v9585 = vpop.f32.mrf.mxu0
      %9586 = vmatprep.mubr.f32.mxu0 0.0
      %9587 = vmatmul.mubr.f32.gmra.mxu0 %v9077
      %v9588 = vpop.f32.mrf.mxu0
      %v9589 = vadd.f32 %v8981, %v9588
      %v9590 = vpop.f32.mrf.mxu0
      %9591 = vmatprep.mubr.f32.mxu0 0.0
      %9592 = vmatmul.mubr.f32.gmra.mxu0 %v9080
      %v9593 = vpop.f32.mrf.mxu0
      %v9594 = vadd.f32 %v8981, %v9593
      %v9595 = vpop.f32.mrf.mxu0
      %9596 = vmatprep.mubr.f32.mxu0 0.0
      %9597 = vmatmul.mubr.f32.gmra.mxu0 %v9083
      %v9598 = vpop.f32.mrf.mxu0
      %v9599 = vadd.f32 %v8981, %v9598
      %v9600 = vpop.f32.mrf.mxu0
      %9601 = vmatprep.mubr.f32.mxu0 0.0
      %9602 = vmatmul.mubr.f32.gmra.mxu0 %v9086
      %v9603 = vpop.f32.mrf.mxu0
      %v9604 = vadd.f32 %v8981, %v9603
      %v9605 = vpop.f32.mrf.mxu0
      %9606 = vmatprep.mubr.f32.mxu0 0.0
      %9607 = vmatmul.mubr.f32.gmra.mxu0 %v9089
      %v9608 = vpop.f32.mrf.mxu0
      %v9609 = vadd.f32 %v8981, %v9608
      %v9610 = vpop.f32.mrf.mxu0
      %9611 = vmatprep.mubr.f32.mxu0 0.0
      %9612 = vmatmul.mubr.f32.gmra.mxu0 %v9092
      %v9613 = vpop.f32.mrf.mxu0
      %v9614 = vadd.f32 %v8981, %v9613
      %v9615 = vpop.f32.mrf.mxu0
      %9616 = vmatprep.mubr.f32.mxu0 0.0
      %9617 = vmatmul.mubr.f32.gmra.mxu0 %v9095
      %v9618 = vpop.f32.mrf.mxu0
      %v9619 = vadd.f32 %v8981, %v9618
      %v9620 = vpop.f32.mrf.mxu0
      %9621 = vmatprep.mubr.f32.mxu0 0.0
      %9622 = vmatmul.mubr.f32.gmra.mxu0 %v9098
      %v9623 = vpop.f32.mrf.mxu0
      %v9624 = vadd.f32 %v8981, %v9623
      %v9625 = vpop.f32.mrf.mxu0
      %9626 = vmatprep.mubr.f32.mxu0 0.0
      %9627 = vmatmul.mubr.f32.gmra.mxu0 %v9101
      %v9628 = vpop.f32.mrf.mxu0
      %v9629 = vadd.f32 %v8981, %v9628
      %v9630 = vpop.f32.mrf.mxu0
      %9631 = vmatprep.mubr.f32.mxu0 0.0
      %9632 = vmatmul.mubr.f32.gmra.mxu0 %v9104
      %v9633 = vpop.f32.mrf.mxu0
      %v9634 = vadd.f32 %v8981, %v9633
      %v9635 = vpop.f32.mrf.mxu0
      %9636 = vmatprep.mubr.f32.mxu0 0.0
      %9637 = vmatmul.mubr.f32.gmra.mxu0 %v9107
      %v9638 = vpop.f32.mrf.mxu0
      %v9639 = vadd.f32 %v8981, %v9638
      %v9640 = vpop.f32.mrf.mxu0
      %9641 = vmatprep.mubr.f32.mxu0 0.0
      %9642 = vmatmul.mubr.f32.gmra.mxu0 %v9110
      %v9643 = vpop.f32.mrf.mxu0
      %v9644 = vadd.f32 %v8981, %v9643
      %v9645 = vpop.f32.mrf.mxu0
      %9646 = vmatprep.mubr.f32.mxu0 0.0
      %9647 = vmatmul.mubr.f32.gmra.mxu0 %v9113
      %v9648 = vpop.f32.mrf.mxu0
      %v9649 = vadd.f32 %v8981, %v9648
      %v9650 = vpop.f32.mrf.mxu0
      %9651 = vmatprep.mubr.f32.mxu0 0.0
      %9652 = vmatmul.mubr.f32.gmra.mxu0 %v9116
      %v9653 = vpop.f32.mrf.mxu0
      %v9654 = vadd.f32 %v8981, %v9653
      %v9655 = vpop.f32.mrf.mxu0
      %9656 = vmatprep.mubr.f32.mxu0 0.0
      %9657 = vmatmul.mubr.f32.gmra.mxu0 %v9119
      %v9658 = vpop.f32.mrf.mxu0
      %v9659 = vadd.f32 %v8981, %v9658
      %v9660 = vpop.f32.mrf.mxu0
      %9661 = vmatprep.mubr.f32.mxu0 0.0
      %9662 = vmatmul.mubr.f32.gmra.mxu0 %v9122
      %v9663 = vpop.f32.mrf.mxu0
      %v9664 = vadd.f32 %v8981, %v9663
      %v9665 = vpop.f32.mrf.mxu0
      %9666 = vmatprep.mubr.f32.mxu0 0.0
      %9667 = vmatmul.mubr.f32.gmra.mxu0 %v9125
      %v9668 = vpop.f32.mrf.mxu0
      %v9669 = vadd.f32 %v8981, %v9668
      %v9670 = vpop.f32.mrf.mxu0
      %9671 = vmatprep.mubr.f32.mxu0 0.0
      %9672 = vmatmul.mubr.f32.gmra.mxu0 %v9128
      %v9673 = vpop.f32.mrf.mxu0
      %v9674 = vadd.f32 %v8981, %v9673
      %v9675 = vpop.f32.mrf.mxu0
      %9676 = vmatprep.mubr.f32.mxu0 0.0
      %9677 = vmatmul.mubr.f32.gmra.mxu0 %v9131
      %v9678 = vpop.f32.mrf.mxu0
      %v9679 = vadd.f32 %v8981, %v9678
      %v9680 = vpop.f32.mrf.mxu0
      %9681 = vmatprep.mubr.f32.mxu0 0.0
      %9682 = vmatmul.mubr.f32.gmra.mxu0 %v9134
      %v9683 = vpop.f32.mrf.mxu0
      %v9684 = vadd.f32 %v8981, %v9683
      %v9685 = vpop.f32.mrf.mxu0
      %9686 = vmatprep.mubr.f32.mxu0 0.0
      %9687 = vmatmul.mubr.f32.gmra.mxu0 %v9137
      %v9688 = vpop.f32.mrf.mxu0
      %v9689 = vadd.f32 %v8981, %v9688
      %v9690 = vpop.f32.mrf.mxu0
      %9691 = vmatprep.mubr.f32.mxu0 0.0
      %9692 = vmatmul.mubr.f32.gmra.mxu0 %v9140
      %v9693 = vpop.f32.mrf.mxu0
      %v9694 = vadd.f32 %v8981, %v9693
      %v9695 = vpop.f32.mrf.mxu0
      %9696 = vmatprep.mubr.f32.mxu0 0.0
      %9697 = vmatmul.mubr.f32.gmra.mxu0 %v9143
      %v9698 = vpop.f32.mrf.mxu0
      %v9699 = vadd.f32 %v8981, %v9698
      %v9700 = vpop.f32.mrf.mxu0
      %9701 = vmatprep.mubr.f32.mxu0 0.0
      %9702 = vmatmul.mubr.f32.gmra.mxu0 %v9146
      %v9703 = vpop.f32.mrf.mxu0
      %v9704 = vadd.f32 %v8981, %v9703
      %v9705 = vpop.f32.mrf.mxu0
      %9706 = vmatprep.mubr.f32.mxu0 0.0
      %9707 = vmatmul.mubr.f32.gmra.mxu0 %v9149
      %v9708 = vpop.f32.mrf.mxu0
      %v9709 = vadd.f32 %v8981, %v9708
      %v9710 = vpop.f32.mrf.mxu0
      %9711 = vmatprep.mubr.f32.mxu0 0.0
      %9712 = vmatmul.mubr.f32.gmra.mxu0 %v9152
      %v9713 = vpop.f32.mrf.mxu0
      %v9714 = vadd.f32 %v8981, %v9713
      %v9715 = vpop.f32.mrf.mxu0
      %9716 = vmatprep.mubr.f32.mxu0 0.0
      %9717 = vmatmul.mubr.f32.gmra.mxu0 %v9155
      %v9718 = vpop.f32.mrf.mxu0
      %v9719 = vadd.f32 %v8981, %v9718
      %v9720 = vpop.f32.mrf.mxu0
      %9721 = vmatprep.mubr.f32.mxu0 0.0
      %9722 = vmatmul.mubr.f32.gmra.mxu0 %v9158
      %v9723 = vpop.f32.mrf.mxu0
      %v9724 = vadd.f32 %v8981, %v9723
      %v9725 = vpop.f32.mrf.mxu0
      %9726 = vmatprep.mubr.f32.mxu0 0.0
      %9727 = vmatmul.mubr.f32.gmra.mxu0 %v9161
      %v9728 = vpop.f32.mrf.mxu0
      %v9729 = vadd.f32 %v8981, %v9728
      %v9730 = vpop.f32.mrf.mxu0
      %9731 = vmatprep.mubr.f32.mxu0 0.0
      %9732 = vmatmul.mubr.f32.gmra.mxu0 %v9164
      %v9733 = vpop.f32.mrf.mxu0
      %v9734 = vadd.f32 %v8981, %v9733
      %v9735 = vpop.f32.mrf.mxu0
      %9736 = vmatprep.mubr.f32.mxu0 0.0
      %9737 = vmatmul.mubr.f32.gmra.mxu0 %v9167
      %v9738 = vpop.f32.mrf.mxu0
      %v9739 = vadd.f32 %v8981, %v9738
      %v9740 = vpop.f32.mrf.mxu0
      %9741 = vmatprep.mubr.f32.mxu0 0.0
      %9742 = vmatmul.mubr.f32.gmra.mxu0 %v9170
      %v9743 = vpop.f32.mrf.mxu0
      %v9744 = vadd.f32 %v8981, %v9743
      %v9745 = vpop.f32.mrf.mxu0
      %9746 = vmatprep.mubr.f32.mxu0 0.0
      %9747 = vmatmul.mubr.f32.gmra.mxu0 %v9173
      %v9748 = vpop.f32.mrf.mxu0
      %v9749 = vadd.f32 %v8981, %v9748
      %v9750 = vpop.f32.mrf.mxu0
      %9751 = vmatprep.mubr.f32.mxu0 0.0
      %9752 = vmatmul.mubr.f32.gmra.mxu0 %v9176
      %v9753 = vpop.f32.mrf.mxu0
      %v9754 = vadd.f32 %v8981, %v9753
      %v9755 = vpop.f32.mrf.mxu0
      %9756 = vmatprep.mubr.f32.mxu0 0.0
      %9757 = vmatmul.mubr.f32.gmra.mxu0 %v9179
      %v9758 = vpop.f32.mrf.mxu0
      %v9759 = vadd.f32 %v8981, %v9758
      %v9760 = vpop.f32.mrf.mxu0
      %9761 = vmatprep.mubr.f32.mxu0 0.0
      %9762 = vmatmul.mubr.f32.gmra.mxu0 %v9182
      %v9763 = vpop.f32.mrf.mxu0
      %v9764 = vadd.f32 %v8981, %v9763
      %v9765 = vpop.f32.mrf.mxu0
      %9766 = vmatprep.mubr.f32.mxu0 0.0
      %9767 = vmatmul.mubr.f32.gmra.mxu0 %v9185
      %v9768 = vpop.f32.mrf.mxu0
      %v9769 = vadd.f32 %v8981, %v9768
      %v9770 = vpop.f32.mrf.mxu0
      %9771 = vmatprep.mubr.f32.mxu0 0.0
      %9772 = vmatmul.mubr.f32.gmra.mxu0 %v9188
      %v9773 = vpop.f32.mrf.mxu0
      %v9774 = vadd.f32 %v8981, %v9773
      %v9775 = vpop.f32.mrf.mxu0
      %9776 = vmatprep.mubr.f32.mxu0 0.0
      %9777 = vmatmul.mubr.f32.gmra.mxu0 %v9191
      %v9778 = vpop.f32.mrf.mxu0
      %v9779 = vadd.f32 %v8981, %v9778
      %v9780 = vpop.f32.mrf.mxu0
      %9781 = vmatprep.mubr.f32.mxu0 0.0
      %9782 = vmatmul.mubr.f32.gmra.mxu0 %v9194
      %v9783 = vpop.f32.mrf.mxu0
      %v9784 = vadd.f32 %v8981, %v9783
      %v9785 = vpop.f32.mrf.mxu0
      %9786 = vmatprep.mubr.f32.mxu0 0.0
      %9787 = vmatmul.mubr.f32.gmra.mxu0 %v9197
      %v9788 = vpop.f32.mrf.mxu0
      %v9789 = vadd.f32 %v8981, %v9788
      %v9790 = vpop.f32.mrf.mxu0
      %9791 = vmatprep.mubr.f32.mxu0 0.0
      %9792 = vmatmul.mubr.f32.gmra.mxu0 %v9200
      %v9793 = vpop.f32.mrf.mxu0
      %v9794 = vadd.f32 %v8981, %v9793
      %v9795 = vpop.f32.mrf.mxu0
      %9796 = vmatprep.mubr.f32.mxu0 0.0
      %9797 = vmatmul.mubr.f32.gmra.mxu0 %v9203
      %v9798 = vpop.f32.mrf.mxu0
      %v9799 = vadd.f32 %v8981, %v9798
      %v9800 = vpop.f32.mrf.mxu0
      %9801 = vmatprep.mubr.f32.mxu0 0.0
      %9802 = vmatmul.mubr.f32.gmra.mxu0 %v9206
      %v9803 = vpop.f32.mrf.mxu0
      %v9804 = vadd.f32 %v8981, %v9803
      %v9805 = vpop.f32.mrf.mxu0
      %9806 = vmatprep.mubr.f32.mxu0 0.0
      %9807 = vmatmul.mubr.f32.gmra.mxu0 %v9209
      %v9808 = vpop.f32.mrf.mxu0
      %v9809 = vadd.f32 %v8981, %v9808
      %v9810 = vpop.f32.mrf.mxu0
      %9811 = vmatprep.mubr.f32.mxu0 0.0
      %9812 = vmatmul.mubr.f32.gmra.mxu0 %v9212
      %v9813 = vpop.f32.mrf.mxu0
      %v9814 = vadd.f32 %v8981, %v9813
      %v9815 = vpop.f32.mrf.mxu0
      %9816 = vmatprep.mubr.f32.mxu0 0.0
      %9817 = vmatmul.mubr.f32.gmra.mxu0 %v9215
      %v9818 = vpop.f32.mrf.mxu0
      %v9819 = vadd.f32 %v8981, %v9818
      %v9820 = vpop.f32.mrf.mxu0
      %9821 = vmatprep.mubr.f32.mxu0 0.0
      %9822 = vmatmul.mubr.f32.gmra.mxu0 %v9218
      %v9823 = vpop.f32.mrf.mxu0
      %v9824 = vadd.f32 %v8981, %v9823
      %v9825 = vpop.f32.mrf.mxu0
      %9826 = vmatprep.mubr.f32.mxu0 0.0
      %9827 = vmatmul.mubr.f32.gmra.mxu0 %v9221
      %v9828 = vpop.f32.mrf.mxu0
      %v9829 = vadd.f32 %v8981, %v9828
      %v9830 = vpop.f32.mrf.mxu0
      %9831 = vmatprep.mubr.f32.mxu0 0.0
      %9832 = vmatmul.mubr.f32.gmra.mxu0 %v9224
      %v9833 = vpop.f32.mrf.mxu0
      %v9834 = vadd.f32 %v8981, %v9833
      %v9835 = vpop.f32.mrf.mxu0
      %9836 = vmatprep.mubr.f32.mxu0 0.0
      %9837 = vmatmul.mubr.f32.gmra.mxu0 %v9227
      %v9838 = vpop.f32.mrf.mxu0
      %v9839 = vadd.f32 %v8981, %v9838
      %v9840 = vpop.f32.mrf.mxu0
      %9841 = vmatprep.mubr.f32.mxu0 0.0
      %9842 = vmatmul.mubr.f32.gmra.mxu0 %v9230
      %v9843 = vpop.f32.mrf.mxu0
      %v9844 = vadd.f32 %v8981, %v9843
      %v9845 = vpop.f32.mrf.mxu0
      %9846 = vmatprep.mubr.f32.mxu0 0.0
      %9847 = vmatmul.mubr.f32.gmra.mxu0 %v9233
      %v9848 = vpop.f32.mrf.mxu0
      %v9849 = vadd.f32 %v8981, %v9848
      %v9850 = vpop.f32.mrf.mxu0
      %9851 = vmatprep.mubr.f32.mxu0 0.0
      %9852 = vmatmul.mubr.f32.gmra.mxu0 %v9236
      %v9853 = vpop.f32.mrf.mxu0
      %v9854 = vadd.f32 %v8981, %v9853
      %v9855 = vpop.f32.mrf.mxu0
      %9856 = vmatprep.mubr.f32.mxu0 0.0
      %9857 = vmatmul.mubr.f32.gmra.mxu0 %v9239
      %v9858 = vpop.f32.mrf.mxu0
      %v9859 = vadd.f32 %v8981, %v9858
      %v9860 = vpop.f32.mrf.mxu0
      %9861 = vmatprep.mubr.f32.mxu0 0.0
      %9862 = vmatmul.mubr.f32.gmra.mxu0 %v9242
      %v9863 = vpop.f32.mrf.mxu0
      %v9864 = vadd.f32 %v8981, %v9863
      %v9865 = vpop.f32.mrf.mxu0
      %9866 = vmatprep.mubr.f32.mxu0 0.0
      %9867 = vmatmul.mubr.f32.gmra.mxu0 %v9245
      %v9868 = vpop.f32.mrf.mxu0
      %v9869 = vadd.f32 %v8981, %v9868
      %v9870 = vpop.f32.mrf.mxu0
      %9871 = vmatprep.mubr.f32.mxu0 0.0
      %9872 = vmatmul.mubr.f32.gmra.mxu0 %v9248
      %v9873 = vpop.f32.mrf.mxu0
      %v9874 = vadd.f32 %v8981, %v9873
      %v9875 = vpop.f32.mrf.mxu0
      %9876 = vmatprep.mubr.f32.mxu0 0.0
      %9877 = vmatmul.mubr.f32.gmra.mxu0 %v9251
      %v9878 = vpop.f32.mrf.mxu0
      %v9879 = vadd.f32 %v8981, %v9878
      %v9880 = vpop.f32.mrf.mxu0
      %9881 = vmatprep.mubr.f32.mxu0 0.0
      %9882 = vmatmul.mubr.f32.gmra.mxu0 %v9254
      %v9883 = vpop.f32.mrf.mxu0
      %v9884 = vadd.f32 %v8981, %v9883
      %v9885 = vpop.f32.mrf.mxu0
      %9886 = vmatprep.mubr.f32.mxu0 0.0
      %9887 = vmatmul.mubr.f32.gmra.mxu0 %v9257
      %v9888 = vpop.f32.mrf.mxu0
      %v9889 = vadd.f32 %v8981, %v9888
      %v9890 = vpop.f32.mrf.mxu0
      %9891 = vmatprep.mubr.f32.mxu0 0.0
      %9892 = vmatmul.mubr.f32.gmra.mxu0 %v9260
      %v9893 = vpop.f32.mrf.mxu0
      %v9894 = vadd.f32 %v8981, %v9893
      %v9895 = vpop.f32.mrf.mxu0
      %9896 = vmatprep.mubr.f32.mxu0 0.0
      %9897 = vmatmul.mubr.f32.gmra.mxu0 %v9263
      %v9898 = vpop.f32.mrf.mxu0
      %v9899 = vadd.f32 %v8981, %v9898
      %v9900 = vpop.f32.mrf.mxu0
      %9901 = vmatprep.mubr.f32.mxu0 0.0
      %9902 = vmatmul.mubr.f32.gmra.mxu0 %v9266
      %v9903 = vpop.f32.mrf.mxu0
      %v9904 = vadd.f32 %v8981, %v9903
      %v9905 = vpop.f32.mrf.mxu0
      %9906 = vmatprep.mubr.f32.mxu0 0.0
      %9907 = vmatmul.mubr.f32.gmra.mxu0 %v9269
      %v9908 = vpop.f32.mrf.mxu0
      %v9909 = vadd.f32 %v8981, %v9908
      %v9910 = vpop.f32.mrf.mxu0
      %9911 = vmatprep.mubr.f32.mxu0 0.0
      %9912 = vmatmul.mubr.f32.gmra.mxu0 %v9272
      %v9913 = vpop.f32.mrf.mxu0
      %v9914 = vadd.f32 %v8981, %v9913
      %v9915 = vpop.f32.mrf.mxu0
      %9916 = vmatprep.mubr.f32.mxu0 0.0
      %9917 = vmatmul.mubr.f32.gmra.mxu0 %v9275
      %v9918 = vpop.f32.mrf.mxu0
      %v9919 = vadd.f32 %v8981, %v9918
      %v9920 = vpop.f32.mrf.mxu0
      %9921 = vmatprep.mubr.f32.mxu0 0.0
      %9922 = vmatmul.mubr.f32.gmra.mxu0 %v9278
      %v9923 = vpop.f32.mrf.mxu0
      %v9924 = vadd.f32 %v8981, %v9923
      %v9925 = vpop.f32.mrf.mxu0
      %9926 = vmatprep.mubr.f32.mxu0 0.0
      %9927 = vmatmul.mubr.f32.gmra.mxu0 %v9281
      %v9928 = vpop.f32.mrf.mxu0
      %v9929 = vadd.f32 %v8981, %v9928
      %v9930 = vpop.f32.mrf.mxu0
      %9931 = vmatprep.mubr.f32.mxu0 0.0
      %9932 = vmatmul.mubr.f32.gmra.mxu0 %v9284
      %v9933 = vpop.f32.mrf.mxu0
      %v9934 = vadd.f32 %v8981, %v9933
      %v9935 = vpop.f32.mrf.mxu0
      %9936 = vmatprep.mubr.f32.mxu0 0.0
      %9937 = vmatmul.mubr.f32.gmra.mxu0 %v9287
      %v9938 = vpop.f32.mrf.mxu0
      %v9939 = vadd.f32 %v8981, %v9938
      %v9940 = vpop.f32.mrf.mxu0
      %9941 = vmatprep.mubr.f32.mxu0 0.0
      %9942 = vmatmul.mubr.f32.gmra.mxu0 %v9290
      %v9943 = vpop.f32.mrf.mxu0
      %v9944 = vadd.f32 %v8981, %v9943
      %v9945 = vpop.f32.mrf.mxu0
      %9946 = vmatprep.mubr.f32.mxu0 0.0
      %9947 = vmatmul.mubr.f32.gmra.mxu0 %v9293
      %v9948 = vpop.f32.mrf.mxu0
      %v9949 = vadd.f32 %v8981, %v9948
      %v9950 = vpop.f32.mrf.mxu0
      %9951 = vmatprep.mubr.f32.mxu0 0.0
      %9952 = vmatmul.mubr.f32.gmra.mxu0 %v9296
      %v9953 = vpop.f32.mrf.mxu0
      %v9954 = vadd.f32 %v8981, %v9953
      %v9955 = vpop.f32.mrf.mxu0
      %9956 = vmatprep.mubr.f32.mxu0 0.0
      %9957 = vmatmul.mubr.f32.gmra.mxu0 %v9299
      %v9958 = vpop.f32.mrf.mxu0
      %v9959 = vadd.f32 %v8981, %v9958
      %v9960 = vpop.f32.mrf.mxu0
      %9961 = vmatprep.mubr.f32.mxu0 0.0
      %9962 = vmatmul.mubr.f32.gmra.mxu0 %v9302
      %v9963 = vpop.f32.mrf.mxu0
      %v9964 = vadd.f32 %v8981, %v9963
      %v9965 = vpop.f32.mrf.mxu0
      %9966 = vmatprep.mubr.f32.mxu0 0.0
      %9967 = vmatmul.mubr.f32.gmra.mxu0 %v9305
      %v9968 = vpop.f32.mrf.mxu0
      %v9969 = vadd.f32 %v8981, %v9968
      %v9970 = vpop.f32.mrf.mxu0
      %9971 = vmatprep.mubr.f32.mxu0 0.0
      %9972 = vmatmul.mubr.f32.gmra.mxu0 %v9308
      %v9973 = vpop.f32.mrf.mxu0
      %v9974 = vadd.f32 %v8981, %v9973
      %v9975 = vpop.f32.mrf.mxu0
      %9976 = vmatprep.mubr.f32.mxu0 0.0
      %9977 = vmatmul.mubr.f32.gmra.mxu0 %v9311
      %v9978 = vpop.f32.mrf.mxu0
      %v9979 = vadd.f32 %v8981, %v9978
      %v9980 = vpop.f32.mrf.mxu0
      %9981 = vmatprep.mubr.f32.mxu0 0.0
      %9982 = vmatmul.mubr.f32.gmra.mxu0 %v9314
      %v9983 = vpop.f32.mrf.mxu0
      %v9984 = vadd.f32 %v8981, %v9983
      %v9985 = vpop.f32.mrf.mxu0
      %9986 = vmatprep.mubr.f32.mxu0 0.0
      %9987 = vmatmul.mubr.f32.gmra.mxu0 %v9317
      %v9988 = vpop.f32.mrf.mxu0
      %v9989 = vadd.f32 %v8981, %v9988
      %v9990 = vpop.f32.mrf.mxu0
      %9991 = vmatprep.mubr.f32.mxu0 0.0
      %9992 = vmatmul.mubr.f32.gmra.mxu0 %v9320
      %v9993 = vpop.f32.mrf.mxu0
      %v9994 = vadd.f32 %v8981, %v9993
      %v9995 = vpop.f32.mrf.mxu0
      %9996 = vmatprep.mubr.f32.mxu0 0.0
      %9997 = vmatmul.mubr.f32.gmra.mxu0 %v9323
      %v9998 = vpop.f32.mrf.mxu0
      %v9999 = vadd.f32 %v8981, %v9998
      %v10000 = vpop.f32.mrf.mxu0
      %10001 = vmatprep.mubr.f32.mxu0 0.0
      %10002 = vmatmul.mubr.f32.gmra.mxu0 %v9326
      %v10003 = vpop.f32.mrf.mxu0
      %v10004 = vadd.f32 %v8981, %v10003
      %v10005 = vpop.f32.mrf.mxu0
      %10006 = vmatprep.mubr.f32.mxu0 0.0
      %10007 = vmatmul.mubr.f32.gmra.mxu0 %v9329
      %v10008 = vpop.f32.mrf.mxu0
      %v10009 = vadd.f32 %v8981, %v10008
      %v10010 = vpop.f32.mrf.mxu0
      %10011 = vmatprep.mubr.f32.mxu0 0.0
      %10012 = vmatmul.mubr.f32.gmra.mxu0 %v9332
      %v10013 = vpop.f32.mrf.mxu0
      %v10014 = vadd.f32 %v8981, %v10013
      %v10015 = vpop.f32.mrf.mxu0
      %10016 = vmatprep.mubr.f32.mxu0 0.0
      %10017 = vmatmul.mubr.f32.gmra.mxu0 %v9335
      %v10018 = vpop.f32.mrf.mxu0
      %v10019 = vadd.f32 %v8981, %v10018
      %v10020 = vpop.f32.mrf.mxu0
      %10021 = vmatprep.mubr.f32.mxu0 0.0
      %10022 = vmatmul.mubr.f32.gmra.mxu0 %v9338
      %v10023 = vpop.f32.mrf.mxu0
      %v10024 = vadd.f32 %v8981, %v10023
      %v10025 = vpop.f32.mrf.mxu0
      %10026 = vmatprep.mubr.f32.mxu0 0.0
      %10027 = vmatmul.mubr.f32.gmra.mxu0 %v9341
      %v10028 = vpop.f32.mrf.mxu0
      %v10029 = vadd.f32 %v8981, %v10028
      %v10030 = vpop.f32.mrf.mxu0
      %10031 = vmatprep.mubr.f32.mxu0 0.0
      %10032 = vmatmul.mubr.f32.gmra.mxu0 %v9344
      %v10033 = vpop.f32.mrf.mxu0
      %v10034 = vadd.f32 %v8981, %v10033
      %v10035 = vpop.f32.mrf.mxu0
      %10036 = vmatprep.mubr.f32.mxu0 0.0
      %10037 = vmatmul.mubr.f32.gmra.mxu0 %v9347
      %v10038 = vpop.f32.mrf.mxu0
      %v10039 = vadd.f32 %v8981, %v10038
      %v10040 = vpop.f32.mrf.mxu0
      %10041 = vmatprep.mubr.f32.mxu0 0.0
      %10042 = vmatmul.mubr.f32.gmra.mxu0 %v9350
      %v10043 = vpop.f32.mrf.mxu0
      %v10044 = vadd.f32 %v8981, %v10043
      %v10045 = vpop.f32.mrf.mxu0
      %10046 = vmatprep.mubr.f32.mxu0 0.0
      %10047 = vmatmul.mubr.f32.gmra.mxu0 %v9353
      %v10048 = vpop.f32.mrf.mxu0
      %v10049 = vadd.f32 %v8981, %v10048
      %v10050 = vpop.f32.mrf.mxu0
      %10051 = vmatprep.mubr.f32.mxu0 0.0
      %10052 = vmatmul.mubr.f32.gmra.mxu0 %v9356
      %v10053 = vpop.f32.mrf.mxu0
      %v10054 = vadd.f32 %v8981, %v10053
      %v10055 = vpop.f32.mrf.mxu0
      %10056 = vmatprep.mubr.f32.mxu0 0.0
      %10057 = vmatmul.mubr.f32.gmra.mxu0 %v9359
      %v10058 = vpop.f32.mrf.mxu0
      %v10059 = vadd.f32 %v8981, %v10058
      %v10060 = vpop.f32.mrf.mxu0
      %10061 = vmatprep.mubr.f32.mxu0 0.0
      %10062 = vmatmul.mubr.f32.gmra.mxu0 %v9362
      %v10063 = vpop.f32.mrf.mxu0
      %v10064 = vadd.f32 %v8981, %v10063
      %v10065 = vpop.f32.mrf.mxu0
      %10066 = vmatprep.mubr.f32.mxu0 0.0
      %10067 = vmatmul.mubr.f32.gmra.mxu0 %v9365
      %v10068 = vpop.f32.mrf.mxu0
      %v10069 = vadd.f32 %v8981, %v10068
      %v10070 = vpop.f32.mrf.mxu0
      %10071 = vdwg.mxu0
      %v10072 = vadd.f32 %v9434, %v8846
      %v10073 = vadd.f32 %v9439, %v8847
      %v10074 = vadd.f32 %v9444, %v8848
      %v10075 = vadd.f32 %v9449, %v8849
      %v10076 = vadd.f32 %v9454, %v8850
      %v10077 = vadd.f32 %v9459, %v8851
      %v10078 = vadd.f32 %v9464, %v8852
      %v10079 = vadd.f32 %v9469, %v8853
      %v10080 = vadd.f32 %v9474, %v8854
      %v10081 = vadd.f32 %v9479, %v8855
      %v10082 = vadd.f32 %v9484, %v8856
      %v10083 = vadd.f32 %v9489, %v8857
      %v10084 = vadd.f32 %v9494, %v8858
      %v10085 = vadd.f32 %v9499, %v8859
      %v10086 = vadd.f32 %v9504, %v8860
      %v10087 = vadd.f32 %v9509, %v8861
      %v10088 = vadd.f32 %v9514, %v8862
      %v10089 = vadd.f32 %v9519, %v8863
      %v10090 = vadd.f32 %v9524, %v8864
      %v10091 = vadd.f32 %v9529, %v8865
      %v10092 = vadd.f32 %v9534, %v8866
      %v10093 = vadd.f32 %v9539, %v8867
      %v10094 = vadd.f32 %v9544, %v8868
      %v10095 = vadd.f32 %v9549, %v8869
      %v10096 = vadd.f32 %v9554, %v8870
      %v10097 = vadd.f32 %v9559, %v8871
      %v10098 = vadd.f32 %v9564, %v8872
      %v10099 = vadd.f32 %v9569, %v8873
      %v10100 = vadd.f32 %v9574, %v8874
      %v10101 = vadd.f32 %v9579, %v8875
      %v10102 = vadd.f32 %v9584, %v8876
      %v10103 = vadd.f32 %v9589, %v8877
      %v10104 = vadd.f32 %v9594, %v8878
      %v10105 = vadd.f32 %v9599, %v8879
      %v10106 = vadd.f32 %v9604, %v8880
      %v10107 = vadd.f32 %v9609, %v8881
      %v10108 = vadd.f32 %v9614, %v8882
      %v10109 = vadd.f32 %v9619, %v8883
      %v10110 = vadd.f32 %v9624, %v8884
      %v10111 = vadd.f32 %v9629, %v8885
      %v10112 = vadd.f32 %v9634, %v8886
      %v10113 = vadd.f32 %v9639, %v8887
      %v10114 = vadd.f32 %v9644, %v8888
      %v10115 = vadd.f32 %v9649, %v8889
      %v10116 = vadd.f32 %v9654, %v8890
      %v10117 = vadd.f32 %v9659, %v8891
      %v10118 = vadd.f32 %v9664, %v8892
      %v10119 = vadd.f32 %v9669, %v8893
      %v10120 = vadd.f32 %v9674, %v8894
      %v10121 = vadd.f32 %v9679, %v8895
      %v10122 = vadd.f32 %v9684, %v8896
      %v10123 = vadd.f32 %v9689, %v8897
      %v10124 = vadd.f32 %v9694, %v8898
      %v10125 = vadd.f32 %v9699, %v8899
      %v10126 = vadd.f32 %v9704, %v8900
      %v10127 = vadd.f32 %v9709, %v8901
      %v10128 = vadd.f32 %v9714, %v8902
      %v10129 = vadd.f32 %v9719, %v8903
      %v10130 = vadd.f32 %v9724, %v8904
      %v10131 = vadd.f32 %v9729, %v8905
      %v10132 = vadd.f32 %v9734, %v8906
      %v10133 = vadd.f32 %v9739, %v8907
      %v10134 = vadd.f32 %v9744, %v8908
      %v10135 = vadd.f32 %v9749, %v8909
      %v10136 = vadd.f32 %v9754, %v8910
      %v10137 = vadd.f32 %v9759, %v8911
      %v10138 = vadd.f32 %v9764, %v8912
      %v10139 = vadd.f32 %v9769, %v8913
      %v10140 = vadd.f32 %v9774, %v8914
      %v10141 = vadd.f32 %v9779, %v8915
      %v10142 = vadd.f32 %v9784, %v8916
      %v10143 = vadd.f32 %v9789, %v8917
      %v10144 = vadd.f32 %v9794, %v8918
      %v10145 = vadd.f32 %v9799, %v8919
      %v10146 = vadd.f32 %v9804, %v8920
      %v10147 = vadd.f32 %v9809, %v8921
      %v10148 = vadd.f32 %v9814, %v8922
      %v10149 = vadd.f32 %v9819, %v8923
      %v10150 = vadd.f32 %v9824, %v8924
      %v10151 = vadd.f32 %v9829, %v8925
      %v10152 = vadd.f32 %v9834, %v8926
      %v10153 = vadd.f32 %v9839, %v8927
      %v10154 = vadd.f32 %v9844, %v8928
      %v10155 = vadd.f32 %v9849, %v8929
      %v10156 = vadd.f32 %v9854, %v8930
      %v10157 = vadd.f32 %v9859, %v8931
      %v10158 = vadd.f32 %v9864, %v8932
      %v10159 = vadd.f32 %v9869, %v8933
      %v10160 = vadd.f32 %v9874, %v8934
      %v10161 = vadd.f32 %v9879, %v8935
      %v10162 = vadd.f32 %v9884, %v8936
      %v10163 = vadd.f32 %v9889, %v8937
      %v10164 = vadd.f32 %v9894, %v8938
      %v10165 = vadd.f32 %v9899, %v8939
      %v10166 = vadd.f32 %v9904, %v8940
      %v10167 = vadd.f32 %v9909, %v8941
      %v10168 = vadd.f32 %v9914, %v8942
      %v10169 = vadd.f32 %v9919, %v8943
      %v10170 = vadd.f32 %v9924, %v8944
      %v10171 = vadd.f32 %v9929, %v8945
      %v10172 = vadd.f32 %v9934, %v8946
      %v10173 = vadd.f32 %v9939, %v8947
      %v10174 = vadd.f32 %v9944, %v8948
      %v10175 = vadd.f32 %v9949, %v8949
      %v10176 = vadd.f32 %v9954, %v8950
      %v10177 = vadd.f32 %v9959, %v8951
      %v10178 = vadd.f32 %v9964, %v8952
      %v10179 = vadd.f32 %v9969, %v8953
      %v10180 = vadd.f32 %v9974, %v8954
      %v10181 = vadd.f32 %v9979, %v8955
      %v10182 = vadd.f32 %v9984, %v8956
      %v10183 = vadd.f32 %v9989, %v8957
      %v10184 = vadd.f32 %v9994, %v8958
      %v10185 = vadd.f32 %v9999, %v8959
      %v10186 = vadd.f32 %v10004, %v8960
      %v10187 = vadd.f32 %v10009, %v8961
      %v10188 = vadd.f32 %v10014, %v8962
      %v10189 = vadd.f32 %v10019, %v8963
      %v10190 = vadd.f32 %v10024, %v8964
      %v10191 = vadd.f32 %v10029, %v8965
      %v10192 = vadd.f32 %v10034, %v8966
      %v10193 = vadd.f32 %v10039, %v8967
      %v10194 = vadd.f32 %v10044, %v8968
      %v10195 = vadd.f32 %v10049, %v8969
      %v10196 = vadd.f32 %v10054, %v8970
      %v10197 = vadd.f32 %v10059, %v8971
      %v10198 = vadd.f32 %v10064, %v8972
      %v10199 = vadd.f32 %v10069, %v8973
      %vm10200 = vcmask 64512
      %10201 = vst.msk [vmem:[%s339] sm:$0xff] %vm10200, %v10072
      %10202 = vst.msk [vmem:[%s339 + $0x8] sm:$0xff] %vm10200, %v10073
      %10203 = vst.msk [vmem:[%s339 + $0x10] sm:$0xff] %vm10200, %v10074
      %10204 = vst.msk [vmem:[%s339 + $0x18] sm:$0xff] %vm10200, %v10075
      %10205 = vst.msk [vmem:[%s339 + $0x20] sm:$0xff] %vm10200, %v10076
      %10206 = vst.msk [vmem:[%s339 + $0x28] sm:$0xff] %vm10200, %v10077
      %10207 = vst.msk [vmem:[%s339 + $0x30] sm:$0xff] %vm10200, %v10078
      %10208 = vst.msk [vmem:[%s339 + $0x38] sm:$0xff] %vm10200, %v10079
      %10209 = vst.msk [vmem:[%s339 + $0x40] sm:$0xff] %vm10200, %v10080
      %10210 = vst.msk [vmem:[%s339 + $0x48] sm:$0xff] %vm10200, %v10081
      %10211 = vst.msk [vmem:[%s339 + $0x50] sm:$0xff] %vm10200, %v10082
      %10212 = vst.msk [vmem:[%s339 + $0x58] sm:$0xff] %vm10200, %v10083
      %10213 = vst.msk [vmem:[%s339 + $0x60] sm:$0xff] %vm10200, %v10084
      %10214 = vst.msk [vmem:[%s339 + $0x68] sm:$0xff] %vm10200, %v10085
      %10215 = vst.msk [vmem:[%s339 + $0x70] sm:$0xff] %vm10200, %v10086
      %10216 = vst.msk [vmem:[%s339 + $0x78] sm:$0xff] %vm10200, %v10087
      %10217 = vst.msk [vmem:[%s339 + $0x80] sm:$0xff] %vm10200, %v10088
      %10218 = vst.msk [vmem:[%s339 + $0x88] sm:$0xff] %vm10200, %v10089
      %10219 = vst.msk [vmem:[%s339 + $0x90] sm:$0xff] %vm10200, %v10090
      %10220 = vst.msk [vmem:[%s339 + $0x98] sm:$0xff] %vm10200, %v10091
      %10221 = vst.msk [vmem:[%s339 + $0xa0] sm:$0xff] %vm10200, %v10092
      %10222 = vst.msk [vmem:[%s339 + $0xa8] sm:$0xff] %vm10200, %v10093
      %10223 = vst.msk [vmem:[%s339 + $0xb0] sm:$0xff] %vm10200, %v10094
      %10224 = vst.msk [vmem:[%s339 + $0xb8] sm:$0xff] %vm10200, %v10095
      %10225 = vst.msk [vmem:[%s339 + $0xc0] sm:$0xff] %vm10200, %v10096
      %10226 = vst.msk [vmem:[%s339 + $0xc8] sm:$0xff] %vm10200, %v10097
      %10227 = vst.msk [vmem:[%s339 + $0xd0] sm:$0xff] %vm10200, %v10098
      %10228 = vst.msk [vmem:[%s339 + $0xd8] sm:$0xff] %vm10200, %v10099
      %10229 = vst.msk [vmem:[%s339 + $0xe0] sm:$0xff] %vm10200, %v10100
      %10230 = vst.msk [vmem:[%s339 + $0xe8] sm:$0xff] %vm10200, %v10101
      %10231 = vst.msk [vmem:[%s339 + $0xf0] sm:$0xff] %vm10200, %v10102
      %10232 = vst.msk [vmem:[%s339 + $0xf8] sm:$0xff] %vm10200, %v10103
      %10233 = vst.msk [vmem:[%s339 + $0x100] sm:$0xff] %vm10200, %v10104
      %10234 = vst.msk [vmem:[%s339 + $0x108] sm:$0xff] %vm10200, %v10105
      %10235 = vst.msk [vmem:[%s339 + $0x110] sm:$0xff] %vm10200, %v10106
      %10236 = vst.msk [vmem:[%s339 + $0x118] sm:$0xff] %vm10200, %v10107
      %10237 = vst.msk [vmem:[%s339 + $0x120] sm:$0xff] %vm10200, %v10108
      %10238 = vst.msk [vmem:[%s339 + $0x128] sm:$0xff] %vm10200, %v10109
      %10239 = vst.msk [vmem:[%s339 + $0x130] sm:$0xff] %vm10200, %v10110
      %10240 = vst.msk [vmem:[%s339 + $0x138] sm:$0xff] %vm10200, %v10111
      %10241 = vst.msk [vmem:[%s339 + $0x140] sm:$0xff] %vm10200, %v10112
      %10242 = vst.msk [vmem:[%s339 + $0x148] sm:$0xff] %vm10200, %v10113
      %10243 = vst.msk [vmem:[%s339 + $0x150] sm:$0xff] %vm10200, %v10114
      %10244 = vst.msk [vmem:[%s339 + $0x158] sm:$0xff] %vm10200, %v10115
      %10245 = vst.msk [vmem:[%s339 + $0x160] sm:$0xff] %vm10200, %v10116
      %10246 = vst.msk [vmem:[%s339 + $0x168] sm:$0xff] %vm10200, %v10117
      %10247 = vst.msk [vmem:[%s339 + $0x170] sm:$0xff] %vm10200, %v10118
      %10248 = vst.msk [vmem:[%s339 + $0x178] sm:$0xff] %vm10200, %v10119
      %10249 = vst.msk [vmem:[%s339 + $0x180] sm:$0xff] %vm10200, %v10120
      %10250 = vst.msk [vmem:[%s339 + $0x188] sm:$0xff] %vm10200, %v10121
      %10251 = vst.msk [vmem:[%s339 + $0x190] sm:$0xff] %vm10200, %v10122
      %10252 = vst.msk [vmem:[%s339 + $0x198] sm:$0xff] %vm10200, %v10123
      %10253 = vst.msk [vmem:[%s339 + $0x1a0] sm:$0xff] %vm10200, %v10124
      %10254 = vst.msk [vmem:[%s339 + $0x1a8] sm:$0xff] %vm10200, %v10125
      %10255 = vst.msk [vmem:[%s339 + $0x1b0] sm:$0xff] %vm10200, %v10126
      %10256 = vst.msk [vmem:[%s339 + $0x1b8] sm:$0xff] %vm10200, %v10127
      %10257 = vst.msk [vmem:[%s339 + $0x1c0] sm:$0xff] %vm10200, %v10128
      %10258 = vst.msk [vmem:[%s339 + $0x1c8] sm:$0xff] %vm10200, %v10129
      %10259 = vst.msk [vmem:[%s339 + $0x1d0] sm:$0xff] %vm10200, %v10130
      %10260 = vst.msk [vmem:[%s339 + $0x1d8] sm:$0xff] %vm10200, %v10131
      %10261 = vst.msk [vmem:[%s339 + $0x1e0] sm:$0xff] %vm10200, %v10132
      %10262 = vst.msk [vmem:[%s339 + $0x1e8] sm:$0xff] %vm10200, %v10133
      %10263 = vst.msk [vmem:[%s339 + $0x1f0] sm:$0xff] %vm10200, %v10134
      %10264 = vst.msk [vmem:[%s339 + $0x1f8] sm:$0xff] %vm10200, %v10135
      %10265 = vst.msk [vmem:[%s339 + $0x200] sm:$0xff] %vm10200, %v10136
      %10266 = vst.msk [vmem:[%s339 + $0x208] sm:$0xff] %vm10200, %v10137
      %10267 = vst.msk [vmem:[%s339 + $0x210] sm:$0xff] %vm10200, %v10138
      %10268 = vst.msk [vmem:[%s339 + $0x218] sm:$0xff] %vm10200, %v10139
      %10269 = vst.msk [vmem:[%s339 + $0x220] sm:$0xff] %vm10200, %v10140
      %10270 = vst.msk [vmem:[%s339 + $0x228] sm:$0xff] %vm10200, %v10141
      %10271 = vst.msk [vmem:[%s339 + $0x230] sm:$0xff] %vm10200, %v10142
      %10272 = vst.msk [vmem:[%s339 + $0x238] sm:$0xff] %vm10200, %v10143
      %10273 = vst.msk [vmem:[%s339 + $0x240] sm:$0xff] %vm10200, %v10144
      %10274 = vst.msk [vmem:[%s339 + $0x248] sm:$0xff] %vm10200, %v10145
      %10275 = vst.msk [vmem:[%s339 + $0x250] sm:$0xff] %vm10200, %v10146
      %10276 = vst.msk [vmem:[%s339 + $0x258] sm:$0xff] %vm10200, %v10147
      %10277 = vst.msk [vmem:[%s339 + $0x260] sm:$0xff] %vm10200, %v10148
      %10278 = vst.msk [vmem:[%s339 + $0x268] sm:$0xff] %vm10200, %v10149
      %10279 = vst.msk [vmem:[%s339 + $0x270] sm:$0xff] %vm10200, %v10150
      %10280 = vst.msk [vmem:[%s339 + $0x278] sm:$0xff] %vm10200, %v10151
      %10281 = vst.msk [vmem:[%s339 + $0x280] sm:$0xff] %vm10200, %v10152
      %10282 = vst.msk [vmem:[%s339 + $0x288] sm:$0xff] %vm10200, %v10153
      %10283 = vst.msk [vmem:[%s339 + $0x290] sm:$0xff] %vm10200, %v10154
      %10284 = vst.msk [vmem:[%s339 + $0x298] sm:$0xff] %vm10200, %v10155
      %10285 = vst.msk [vmem:[%s339 + $0x2a0] sm:$0xff] %vm10200, %v10156
      %10286 = vst.msk [vmem:[%s339 + $0x2a8] sm:$0xff] %vm10200, %v10157
      %10287 = vst.msk [vmem:[%s339 + $0x2b0] sm:$0xff] %vm10200, %v10158
      %10288 = vst.msk [vmem:[%s339 + $0x2b8] sm:$0xff] %vm10200, %v10159
      %10289 = vst.msk [vmem:[%s339 + $0x2c0] sm:$0xff] %vm10200, %v10160
      %10290 = vst.msk [vmem:[%s339 + $0x2c8] sm:$0xff] %vm10200, %v10161
      %10291 = vst.msk [vmem:[%s339 + $0x2d0] sm:$0xff] %vm10200, %v10162
      %10292 = vst.msk [vmem:[%s339 + $0x2d8] sm:$0xff] %vm10200, %v10163
      %10293 = vst.msk [vmem:[%s339 + $0x2e0] sm:$0xff] %vm10200, %v10164
      %10294 = vst.msk [vmem:[%s339 + $0x2e8] sm:$0xff] %vm10200, %v10165
      %10295 = vst.msk [vmem:[%s339 + $0x2f0] sm:$0xff] %vm10200, %v10166
      %10296 = vst.msk [vmem:[%s339 + $0x2f8] sm:$0xff] %vm10200, %v10167
      %10297 = vst.msk [vmem:[%s339 + $0x300] sm:$0xff] %vm10200, %v10168
      %10298 = vst.msk [vmem:[%s339 + $0x308] sm:$0xff] %vm10200, %v10169
      %10299 = vst.msk [vmem:[%s339 + $0x310] sm:$0xff] %vm10200, %v10170
      %10300 = vst.msk [vmem:[%s339 + $0x318] sm:$0xff] %vm10200, %v10171
      %10301 = vst.msk [vmem:[%s339 + $0x320] sm:$0xff] %vm10200, %v10172
      %10302 = vst.msk [vmem:[%s339 + $0x328] sm:$0xff] %vm10200, %v10173
      %10303 = vst.msk [vmem:[%s339 + $0x330] sm:$0xff] %vm10200, %v10174
      %10304 = vst.msk [vmem:[%s339 + $0x338] sm:$0xff] %vm10200, %v10175
      %10305 = vst.msk [vmem:[%s339 + $0x340] sm:$0xff] %vm10200, %v10176
      %10306 = vst.msk [vmem:[%s339 + $0x348] sm:$0xff] %vm10200, %v10177
      %10307 = vst.msk [vmem:[%s339 + $0x350] sm:$0xff] %vm10200, %v10178
      %10308 = vst.msk [vmem:[%s339 + $0x358] sm:$0xff] %vm10200, %v10179
      %10309 = vst.msk [vmem:[%s339 + $0x360] sm:$0xff] %vm10200, %v10180
      %10310 = vst.msk [vmem:[%s339 + $0x368] sm:$0xff] %vm10200, %v10181
      %10311 = vst.msk [vmem:[%s339 + $0x370] sm:$0xff] %vm10200, %v10182
      %10312 = vst.msk [vmem:[%s339 + $0x378] sm:$0xff] %vm10200, %v10183
      %10313 = vst.msk [vmem:[%s339 + $0x380] sm:$0xff] %vm10200, %v10184
      %10314 = vst.msk [vmem:[%s339 + $0x388] sm:$0xff] %vm10200, %v10185
      %10315 = vst.msk [vmem:[%s339 + $0x390] sm:$0xff] %vm10200, %v10186
      %10316 = vst.msk [vmem:[%s339 + $0x398] sm:$0xff] %vm10200, %v10187
      %10317 = vst.msk [vmem:[%s339 + $0x3a0] sm:$0xff] %vm10200, %v10188
      %10318 = vst.msk [vmem:[%s339 + $0x3a8] sm:$0xff] %vm10200, %v10189
      %10319 = vst.msk [vmem:[%s339 + $0x3b0] sm:$0xff] %vm10200, %v10190
      %10320 = vst.msk [vmem:[%s339 + $0x3b8] sm:$0xff] %vm10200, %v10191
      %10321 = vst.msk [vmem:[%s339 + $0x3c0] sm:$0xff] %vm10200, %v10192
      %10322 = vst.msk [vmem:[%s339 + $0x3c8] sm:$0xff] %vm10200, %v10193
      %10323 = vst.msk [vmem:[%s339 + $0x3d0] sm:$0xff] %vm10200, %v10194
      %10324 = vst.msk [vmem:[%s339 + $0x3d8] sm:$0xff] %vm10200, %v10195
      %10325 = vst.msk [vmem:[%s339 + $0x3e0] sm:$0xff] %vm10200, %v10196
      %10326 = vst.msk [vmem:[%s339 + $0x3e8] sm:$0xff] %vm10200, %v10197
      %10327 = vst.msk [vmem:[%s339 + $0x3f0] sm:$0xff] %vm10200, %v10198
      %10328 = vst.msk [vmem:[%s339 + $0x3f8] sm:$0xff] %vm10200, %v10199
      %s10329 = smul.u32 4, %s20
      %p10330 = scmp.lt.s32.totalorder %s10329, 7
      %s10331 = scalar_select %p10330, %s10329, 7
      %s10332 = smul.addr %s10331, 32
      %s10333 = smul.addr %s10332, 8
      %s10334 = scalar_lea.vmem %s9, %s10333
      // Predicated region
      $region57: #{tpu_custom_call.1} parent=55 // pred_check
        %p10335 = pneg %p232
      $region58: #{tpu_custom_call.1} parent=55 // pred_check_branch
        %10337 = sbr.rel (%p10335) target = $region60
      $region59: #{tpu_custom_call.1} parent=55 // pred_region
        %s10338 = smul.u32 4, %s20
      $region60: #{tpu_custom_call.1} parent=55 // pred_fallthru
        _
    $region56: #{tpu_custom_call.1} parent=5 // pred_fallthru
      _
    %p10339 = scmp.le.s32.totalorder 2, %s15
    // Predicated region
    $region61: #{tpu_custom_call.1} parent=5 // pred_check
      %p10340 = pneg %p10339
    $region62: #{tpu_custom_call.1} parent=5 // pred_check_branch
      %10342 = sbr.rel (%p10340) target = $region64
    $region63: #{tpu_custom_call.1} parent=5 // pred_region
      %s10343 = ssub.s32 %s15, 2
      // Predicated region
      $region65: #{tpu_custom_call.1} parent=63 // pred_check
        %p10344 = pneg %p238
      $region66: #{tpu_custom_call.1} parent=63 // pred_check_branch
        %10346 = sbr.rel (%p10344) target = $region68
      $region67: #{tpu_custom_call.1} parent=63 // pred_region
        %s10347 = smul.u32 4, %s21
        %p10348 = scmp.lt.s32.totalorder %s10347, 7
        %s10349 = scalar_select %p10348, %s10347, 7
        %s10350 = smul.addr %s10349, 32
        %s10351 = smul.addr %s10350, 8
        %s10352 = scalar_lea.vmem %s9, %s10351
      $region68: #{tpu_custom_call.1} parent=63 // pred_fallthru
        _
    $region64: #{tpu_custom_call.1} parent=5 // pred_fallthru
      _
  $region6: #{tpu_custom_call.1} parent=0 // loop_footer
    %s19 = sadd.s32 1, %s15
  $region7: #{tpu_custom_call.1} parent=0 // loop_footer_branch
    %14 = sbr.rel target = $region3
  $region8: #{tpu_custom_call.1} parent=0 // loop_exit
    _

</llo_original>
